<compile_context>
chip_gen: v7x
topology: tpu7x:2x2x1
jax: 0.10.0
libtpu: 0.0.40
codegen_flags: <defaults>
</compile_context>

<pallas_src>
import math

import numpy as np
import jax
import jax.numpy as jnp
from jax.experimental import pallas as pl
from jax.experimental.pallas import tpu as pltpu

LN_EPS = 1e-5


# ----------------------------------------------------------------------------
# zigzag scan-path generation (pure numpy port of the reference code)
# ----------------------------------------------------------------------------
def reverse_permut_np(permutation):
    n = len(permutation)
    reverse = np.array([0] * n)
    for i in range(n):
        reverse[permutation[i]] = i
    return reverse


def zigzag_path(N):
    def zigzag_path_lr(N, start_row=0, start_col=0, dir_row=1, dir_col=1):
        path = []
        for i in range(N):
            for j in range(N):
                col = j if i % 2 == 0 else N - 1 - j
                path.append((start_row + dir_row * i) * N + start_col + dir_col * col)
        return path

    def zigzag_path_tb(N, start_row=0, start_col=0, dir_row=1, dir_col=1):
        path = []
        for j in range(N):
            for i in range(N):
                row = i if j % 2 == 0 else N - 1 - i
                path.append((start_row + dir_row * row) * N + start_col + dir_col * j)
        return path

    paths = []
    for start_row, start_col, dir_row, dir_col in [(0, 0, 1, 1), (0, N - 1, 1, -1),
                                                   (N - 1, 0, -1, 1), (N - 1, N - 1, -1, -1)]:
        paths.append(zigzag_path_lr(N, start_row, start_col, dir_row, dir_col))
        paths.append(zigzag_path_tb(N, start_row, start_col, dir_row, dir_col))
    return [np.array(_p) for _p in paths]


def zigzag4_path(N):
    def zigzag_path_lr(N, start_row=0, start_col=0, dir_row=1, dir_col=1):
        path = []
        for i in range(N):
            for j in range(N):
                col = j if i % 2 == 0 else N - 1 - j
                path.append((start_row + dir_row * i) * N + start_col + dir_col * col)
        return path

    def zigzag_path_tb(N, start_row=0, start_col=0, dir_row=1, dir_col=1):
        path = []
        for j in range(N):
            for i in range(N):
                row = i if j % 2 == 0 else N - 1 - i
                path.append((start_row + dir_row * row) * N + start_col + dir_col * j)
        return path

    half_N = N // 2
    paths = []
    for start_row, start_col, dir_row, dir_col in [(0, 0, 1, 1), (0, half_N - 1, 1, -1),
                                                   (half_N - 1, 0, -1, 1),
                                                   (half_N - 1, half_N - 1, -1, -1)]:
        paths.append(zigzag_path_lr(half_N, start_row, start_col, dir_row, dir_col))
        paths.append(zigzag_path_tb(half_N, start_row, start_col, dir_row, dir_col))
    offset_dict = {'0': 0, '1': half_N, '2': 2 * half_N * half_N, '3': (2 * half_N + 1) * half_N}
    codebooks = {}
    for group, offset in offset_dict.items():
        code_dict = {}
        for row in range(half_N):
            for col in range(half_N):
                key = row * half_N + col
                code_dict[f'{key}'] = key + offset + row * half_N
        codebooks[group] = code_dict
    group_path_dicts = {}
    for group, code_dict in codebooks.items():
        group_path_dicts[group] = []
        for _index, path in enumerate(paths):
            group_path = list(map(lambda x: code_dict[f'{x}'], path))
            group_path_dicts[group].append(np.array(group_path))
    return group_path_dicts


def zigzag_3p_path(N):
    half_N = N // 2
    path_4q = []
    group_path_dicts = zigzag4_path(N)
    group_index_pairs = [[('0', 6), ('1', 4), ('2', 2), ('3', 0)],
                         [('0', 7), ('1', 5), ('2', 3), ('3', 1)],
                         [('0', 0), ('1', 2), ('2', 4), ('3', 6)],
                         [('0', 1), ('1', 3), ('2', 5), ('3', 7)]]
    for group_index_pair in group_index_pairs:
        group_paths = []
        for group, index in group_index_pair:
            group_path = group_path_dicts[group][index].reshape(half_N, half_N)
            group_paths.append(group_path)
        path_4q.append(np.stack([np.stack(group_paths[:2], axis=1),
                                 np.stack(group_paths[2:], axis=1)], axis=0).reshape(N * N))
    return path_4q + zigzag_path(N)


def generate_zigzag_forw_back(num_patches, scan_type="zigzagN12"):
    side = int(math.sqrt(num_patches))
    zigzag_num = int(scan_type.replace("zigzagN", ""))
    _zz_paths = zigzag_3p_path(N=side)
    if zigzag_num == 8:
        _zz_paths = _zz_paths[4:]
    zz_paths = _zz_paths[:zigzag_num]
    assert len(zz_paths) == zigzag_num
    zz_paths_rev = [reverse_permut_np(_) for _ in zz_paths]
    return zz_paths, zz_paths_rev


# ----------------------------------------------------------------------------
# in-kernel math helpers (only exp/log/abs/where -> always lowerable)
# ----------------------------------------------------------------------------
def _sigmoid(x):
    return 1.0 / (1.0 + jnp.exp(-x))


def _softplus(x):
    return jnp.maximum(x, 0.0) + jnp.log(1.0 + jnp.exp(-jnp.abs(x)))


def _erf_approx(x):
    # Abramowitz & Stegun 7.1.26, |err| < 1.5e-7 (exact-GELU without an erf primitive)
    a1, a2, a3, a4, a5 = 0.254829592, -0.284496736, 1.421413741, -1.453152027, 1.061405429
    p = 0.3275911
    ax = jnp.abs(x)
    t = 1.0 / (1.0 + p * ax)
    poly = ((((a5 * t + a4) * t + a3) * t + a2) * t + a1) * t
    y = 1.0 - poly * jnp.exp(-ax * ax)
    return jnp.where(x >= 0.0, y, -y)


# ----------------------------------------------------------------------------
# Kernel 1: LayerNorm (affine folded into weight) + linear projection
# ----------------------------------------------------------------------------
def _ln_linear_kernel(x_ref, w_ref, b_ref, o_ref):
    x = x_ref[...].astype(jnp.float32)
    m = jnp.mean(x, axis=-1, keepdims=True)
    s2 = jnp.mean(x * x, axis=-1, keepdims=True)
    xn = (x - m) * jax.lax.rsqrt(s2 - m * m + LN_EPS)
    out = jnp.dot(xn, w_ref[...].astype(jnp.float32), preferred_element_type=jnp.float32)
    o_ref[...] = (out + b_ref[...].astype(jnp.float32)).astype(o_ref.dtype)


def _ln_linear(x, w, b, *, block_rows=512):
    nr, fin = x.shape
    fout = w.shape[1]
    tm = min(block_rows, nr)
    return pl.pallas_call(
        _ln_linear_kernel,
        out_shape=jax.ShapeDtypeStruct((nr, fout), x.dtype),
        grid_spec=pltpu.PrefetchScalarGridSpec(
            num_scalar_prefetch=0, grid=(pl.cdiv(nr, tm),),
            in_specs=[pl.BlockSpec((tm, fin), lambda i: (i, 0)),
                      pl.BlockSpec((fin, fout), lambda i: (0, 0)),
                      pl.BlockSpec((1, fout), lambda i: (0, 0))],
            out_specs=pl.BlockSpec((tm, fout), lambda i: (i, 0))),
        compiler_params=pltpu.CompilerParams(dimension_semantics=("parallel",)),
    )(x, w, b.reshape(1, fout))


# ----------------------------------------------------------------------------
# Kernel 2: both depthwise 3x3 convs (+bias) + SiLU, per batch
# ----------------------------------------------------------------------------
def _dwconv_silu_kernel(xp_ref, cp_ref, wx_ref, bx_ref, wc_ref, bc_ref, ox_ref, oc_ref):
    h, w, c = ox_ref.shape

    def conv_silu(p_ref, w_ref, b_ref):
        acc = jnp.zeros((h, w, c), jnp.float32) + b_ref[...].astype(jnp.float32)
        for ky in range(3):
            for kx in range(3):
                tap = w_ref[pl.ds(ky * 3 + kx, 1), :].astype(jnp.float32)      # (1, C)
                acc = acc + p_ref[ky:ky + h, kx:kx + w, :].astype(jnp.float32) * tap
        return acc * _sigmoid(acc)

    ox_ref[...] = conv_silu(xp_ref, wx_ref, bx_ref).astype(ox_ref.dtype)
    oc_ref[...] = conv_silu(cp_ref, wc_ref, bc_ref).astype(oc_ref.dtype)


def _dwconv_silu(xpad, cpad, wx, bx, wc, bc):
    b, hp, wp, c = xpad.shape
    h, w = hp - 2, wp - 2
    out_shape = (jax.ShapeDtypeStruct((b, h, w, c), xpad.dtype),
                 jax.ShapeDtypeStruct((b, h, w, c), xpad.dtype))
    return pl.pallas_call(
        _dwconv_silu_kernel,
        out_shape=out_shape,
        grid_spec=pltpu.PrefetchScalarGridSpec(
            num_scalar_prefetch=0, grid=(b,),
            in_specs=[pl.BlockSpec((None, hp, wp, c), lambda i: (i, 0, 0, 0)),
                      pl.BlockSpec((None, hp, wp, c), lambda i: (i, 0, 0, 0)),
                      pl.BlockSpec((9, c), lambda i: (0, 0)),
                      pl.BlockSpec((1, c), lambda i: (0, 0)),
                      pl.BlockSpec((9, c), lambda i: (0, 0)),
                      pl.BlockSpec((1, c), lambda i: (0, 0))],
            out_specs=[pl.BlockSpec((None, h, w, c), lambda i: (i, 0, 0, 0)),
                       pl.BlockSpec((None, h, w, c), lambda i: (i, 0, 0, 0))]),
        compiler_params=pltpu.CompilerParams(dimension_semantics=("parallel",)),
    )(xpad, cpad, wx.reshape(9, c), bx.reshape(1, c), wc.reshape(9, c), bc.reshape(1, c))


# ----------------------------------------------------------------------------
# Kernel 3: x_proj / dt_proj + softplus + selective scan, fused, per batch
# ----------------------------------------------------------------------------
def _scan_kernel(xs_ref, cs_ref, xprojT_ref, dtwT_ref, A_ref, dtb_ref, Dp_ref,
                 y_ref, dts_s, b_s, c_s):
    L, Din = xs_ref.shape
    N = A_ref.shape[0]
    R = dtwT_ref.shape[0]

    s = xs_ref[...].astype(jnp.float32) + cs_ref[...].astype(jnp.float32)       # (L, Din)
    xdbl = jnp.dot(s, xprojT_ref[...].astype(jnp.float32),
                   preferred_element_type=jnp.float32)                          # (L, R+2N)
    dts_s[...] = jnp.dot(xdbl[:, :R], dtwT_ref[...].astype(jnp.float32),
                         preferred_element_type=jnp.float32)                    # (L, Din)
    b_s[...] = xdbl[:, R:R + N]
    c_s[...] = xdbl[:, R + N:R + 2 * N]

    A = A_ref[...].astype(jnp.float32)                                          # (N, Din)
    dtb = dtb_ref[...].astype(jnp.float32)                                      # (1, Din)
    Dp = Dp_ref[...].astype(jnp.float32)                                        # (1, Din)
    eye_n = (jax.lax.broadcasted_iota(jnp.int32, (N, N), 0) ==
             jax.lax.broadcasted_iota(jnp.int32, (N, N), 1)).astype(jnp.float32)

    def step(l, h):
        u = xs_ref[pl.ds(l, 1), :].astype(jnp.float32)                          # (1, Din)
        dt = dts_s[pl.ds(l, 1), :]                                              # (1, Din)
        Bl = b_s[pl.ds(l, 1), :]                                                # (1, N)
        Cl = c_s[pl.ds(l, 1), :]                                                # (1, N)
        delta = _softplus(dt + dtb)                                             # (1, Din)
        dA = jnp.exp(A * delta)                                                 # (N, Din)
        b_col = jnp.sum(eye_n * Bl, axis=-1, keepdims=True)                     # (N, 1)
        h = dA * h + b_col * (delta * u)                                        # (N, Din)
        y_l = jnp.dot(Cl, h, preferred_element_type=jnp.float32) + Dp * u       # (1, Din)
        y_ref[pl.ds(l, 1), :] = y_l.astype(y_ref.dtype)
        return h

    jax.lax.fori_loop(0, L, step, jnp.zeros((N, Din), jnp.float32))


def _selective_scan(xs, cs, xprojT, dtwT, A_nd, dt_bias, Ds):
    b, L, Din = xs.shape
    N = A_nd.shape[0]
    R = dtwT.shape[0]
    return pl.pallas_call(
        _scan_kernel,
        out_shape=jax.ShapeDtypeStruct((b, L, Din), jnp.float32),
        grid_spec=pltpu.PrefetchScalarGridSpec(
            num_scalar_prefetch=0, grid=(b,),
            in_specs=[pl.BlockSpec((None, L, Din), lambda i: (i, 0, 0)),
                      pl.BlockSpec((None, L, Din), lambda i: (i, 0, 0)),
                      pl.BlockSpec((Din, R + 2 * N), lambda i: (0, 0)),
                      pl.BlockSpec((R, Din), lambda i: (0, 0)),
                      pl.BlockSpec((N, Din), lambda i: (0, 0)),
                      pl.BlockSpec((1, Din), lambda i: (0, 0)),
                      pl.BlockSpec((1, Din), lambda i: (0, 0))],
            out_specs=pl.BlockSpec((None, L, Din), lambda i: (i, 0, 0)),
            scratch_shapes=[pltpu.VMEM((L, Din), jnp.float32),
                            pltpu.VMEM((L, N), jnp.float32),
                            pltpu.VMEM((L, N), jnp.float32)]),
        compiler_params=pltpu.CompilerParams(dimension_semantics=("parallel",)),
    )(xs, cs, xprojT, dtwT, A_nd, dt_bias.reshape(1, Din), Ds.reshape(1, Din))


# ----------------------------------------------------------------------------
# Kernel 4: out_norm + SiLU(z) gate + out_proj + residual
# ----------------------------------------------------------------------------
def _gate_outproj_kernel(y_ref, z_ref, xin_ref, g_ref, bta_ref, w_ref, o_ref):
    y = y_ref[...].astype(jnp.float32)
    m = jnp.mean(y, axis=-1, keepdims=True)
    s2 = jnp.mean(y * y, axis=-1, keepdims=True)
    yn = (y - m) * jax.lax.rsqrt(s2 - m * m + LN_EPS)
    yn = yn * g_ref[...].astype(jnp.float32) + bta_ref[...].astype(jnp.float32)
    z = z_ref[...].astype(jnp.float32)
    gated = yn * (z * _sigmoid(z))
    out = jnp.dot(gated, w_ref[...].astype(jnp.float32), preferred_element_type=jnp.float32)
    o_ref[...] = (xin_ref[...].astype(jnp.float32) + out).astype(o_ref.dtype)


def _gate_outproj(y, z, x_in, g_on, b_on, w_t, *, block_rows=512):
    nr, din = y.shape
    dm = w_t.shape[1]
    tm = min(block_rows, nr)
    return pl.pallas_call(
        _gate_outproj_kernel,
        out_shape=jax.ShapeDtypeStruct((nr, dm), x_in.dtype),
        grid_spec=pltpu.PrefetchScalarGridSpec(
            num_scalar_prefetch=0, grid=(pl.cdiv(nr, tm),),
            in_specs=[pl.BlockSpec((tm, din), lambda i: (i, 0)),
                      pl.BlockSpec((tm, din), lambda i: (i, 0)),
                      pl.BlockSpec((tm, dm), lambda i: (i, 0)),
                      pl.BlockSpec((1, din), lambda i: (0, 0)),
                      pl.BlockSpec((1, din), lambda i: (0, 0)),
                      pl.BlockSpec((din, dm), lambda i: (0, 0))],
            out_specs=pl.BlockSpec((tm, dm), lambda i: (i, 0))),
        compiler_params=pltpu.CompilerParams(dimension_semantics=("parallel",)),
    )(y, z, x_in, g_on.reshape(1, din), b_on.reshape(1, din), w_t)


# ----------------------------------------------------------------------------
# Kernel 5: MLP branch -- LN2 (folded into fc1) + exact GELU + fc2 + residual
# ----------------------------------------------------------------------------
def _mlp_kernel(x_ref, w1_ref, b1_ref, w2_ref, b2_ref, o_ref):
    x = x_ref[...].astype(jnp.float32)
    m = jnp.mean(x, axis=-1, keepdims=True)
    s2 = jnp.mean(x * x, axis=-1, keepdims=True)
    xn = (x - m) * jax.lax.rsqrt(s2 - m * m + LN_EPS)
    h = jnp.dot(xn, w1_ref[...].astype(jnp.float32), preferred_element_type=jnp.float32)
    h = h + b1_ref[...].astype(jnp.float32)
    h = 0.5 * h * (1.0 + _erf_approx(h * 0.7071067811865476))
    out = jnp.dot(h, w2_ref[...].astype(jnp.float32), preferred_element_type=jnp.float32)
    o_ref[...] = (x + out + b2_ref[...].astype(jnp.float32)).astype(o_ref.dtype)


def _mlp(x, w1, b1, w2, b2, *, block_rows=512):
    nr, dm = x.shape
    dh = w1.shape[1]
    tm = min(block_rows, nr)
    return pl.pallas_call(
        _mlp_kernel,
        out_shape=jax.ShapeDtypeStruct((nr, dm), x.dtype),
        grid_spec=pltpu.PrefetchScalarGridSpec(
            num_scalar_prefetch=0, grid=(pl.cdiv(nr, tm),),
            in_specs=[pl.BlockSpec((tm, dm), lambda i: (i, 0)),
                      pl.BlockSpec((dm, dh), lambda i: (0, 0)),
                      pl.BlockSpec((1, dh), lambda i: (0, 0)),
                      pl.BlockSpec((dh, dm), lambda i: (0, 0)),
                      pl.BlockSpec((1, dm), lambda i: (0, 0))],
            out_specs=pl.BlockSpec((tm, dm), lambda i: (i, 0))),
        compiler_params=pltpu.CompilerParams(dimension_semantics=("parallel",)),
    )(x, w1, b1.reshape(1, dh), w2, b2.reshape(1, dm))


# ----------------------------------------------------------------------------
# Full VSSBlockBS forward (channel_first=False, post_norm=False, condition=None)
# ----------------------------------------------------------------------------
def vss_block_forward(x, p, perm, perm_rev):
    B, H, W, Dm = x.shape
    Din = p["W_in"].shape[0] // 2
    N = p["A_logs"].shape[1]
    L = H * W
    Nr = B * L
    xr = x.reshape(Nr, Dm)

    # stage 1: LN(x) -> [in_proj | con_proj]   (condition is None -> c = x, same LN)
    Wcat = jnp.concatenate([p["W_in"], p["W_con"]], axis=0)            # (3Din, Dm)
    Wf = p["ln1_g"][:, None] * Wcat.T                                  # (Dm, 3Din)
    bf = p["ln1_b"] @ Wcat.T                                           # (3Din,)
    proj = _ln_linear(xr, Wf, bf)                                      # (Nr, 3Din)
    x_part = proj[:, :Din].reshape(B, H, W, Din)
    z_pre = proj[:, Din:2 * Din]                                       # (Nr, Din)
    c_lin = proj[:, 2 * Din:].reshape(B, H, W, Din)

    # stage 2: depthwise 3x3 conv + bias + SiLU (both branches in one kernel)
    xpad = jnp.pad(x_part, ((0, 0), (1, 1), (1, 1), (0, 0)))
    cpad = jnp.pad(c_lin, ((0, 0), (1, 1), (1, 1), (0, 0)))
    x_act, c_act = _dwconv_silu(xpad, cpad, p["wx"], p["bx"], p["wc"], p["bc"])

    # stage 3: zigzag scan-order gather (XLA glue), then fused x_proj/dt_proj + selective scan
    xs = jnp.take(x_act.reshape(B, L, Din), perm, axis=1)
    cs = jnp.take(c_act.reshape(B, L, Din), perm, axis=1)
    A_nd = (-jnp.exp(p["A_logs"])).T                                   # (N, Din)
    ys = _selective_scan(xs, cs, p["x_proj_w"].T, p["dt_w"].T, A_nd,
                         p["dt_bias"], p["Ds"])                        # (B, L, Din), scan order
    y = jnp.take(ys, perm_rev, axis=1).reshape(Nr, Din)                # back to spatial order

    # stage 4: out_norm + SiLU(z) gate + out_proj + residual
    x1 = _gate_outproj(y, z_pre, xr, p["on_g"], p["on_b"], p["W_out"].T)

    # stage 5: MLP branch (LN2 folded into fc1) + residual
    W1f = p["ln2_g"][:, None] * p["W1"].T
    b1f = p["ln2_b"] @ p["W1"].T + p["b1"]
    x2 = _mlp(x1, W1f, b1f, p["W2"].T, p["b2"])
    return x2.reshape(B, H, W, Dm)


# ----------------------------------------------------------------------------
# Pure-JAX reference mirroring the PyTorch forward
# ----------------------------------------------------------------------------
def _ref_layernorm(x, g, b):
    m = jnp.mean(x, axis=-1, keepdims=True)
    v = jnp.mean((x - m) ** 2, axis=-1, keepdims=True)
    return (x - m) / jnp.sqrt(v + LN_EPS) * g + b


def _reference_forward(x, p, perm, perm_rev):
    B, H, W, Dm = x.shape
    Din = p["W_in"].shape[0] // 2
    N = p["A_logs"].shape[1]
    R = p["dt_w"].shape[1]
    L = H * W

    xn = _ref_layernorm(x, p["ln1_g"], p["ln1_b"])
    xz = xn @ p["W_in"].T
    c = xn @ p["W_con"].T
    x_p, z = jnp.split(xz, 2, axis=-1)
    z = jax.nn.silu(z)

    def dwconv(t, w, b):
        tp = jnp.pad(t, ((0, 0), (1, 1), (1, 1), (0, 0)))
        out = jnp.zeros_like(t) + b
        for ky in range(3):
            for kx in range(3):
                out = out + tp[:, ky:ky + H, kx:kx + W, :] * w[ky, kx, :]
        return out

    x_c = jax.nn.silu(dwconv(x_p, p["wx"], p["bx"]))
    c_c = jax.nn.silu(dwconv(c, p["wc"], p["bc"]))

    xs = x_c.reshape(B, L, Din)[:, perm, :]
    cs = c_c.reshape(B, L, Din)[:, perm, :]
    xdbl = (xs + cs) @ p["x_proj_w"].T
    dts_r, Bs, Cs = xdbl[..., :R], xdbl[..., R:R + N], xdbl[..., R + N:R + 2 * N]
    dts = dts_r @ p["dt_w"].T

    A = -jnp.exp(p["A_logs"])
    delta = jax.nn.softplus(dts + p["dt_bias"])
    dA = jnp.exp(delta[..., None] * A)
    dBu = delta[..., None] * Bs[:, :, None, :] * xs[..., None]

    def scan_step(h, inp):
        dA_l, dBu_l, C_l = inp
        h = dA_l * h + dBu_l
        return h, jnp.sum(h * C_l[:, None, :], axis=-1)

    h0 = jnp.zeros((B, Din, N), jnp.float32)
    _, ys = jax.lax.scan(scan_step, h0,
                         (jnp.moveaxis(dA, 1, 0), jnp.moveaxis(dBu, 1, 0), jnp.moveaxis(Cs, 1, 0)))
    ys = jnp.moveaxis(ys, 0, 1) + p["Ds"] * xs

    y = ys[:, perm_rev, :]
    y = _ref_layernorm(y, p["on_g"], p["on_b"]).reshape(B, H, W, Din)
    y = y * z
    x1 = x + y @ p["W_out"].T

    x1n = _ref_layernorm(x1, p["ln2_g"], p["ln2_b"])
    h1 = jax.nn.gelu(x1n @ p["W1"].T + p["b1"], approximate=False)
    return x1 + h1 @ p["W2"].T + p["b2"]


# ----------------------------------------------------------------------------
if __name__ == "__main__":
    jax.config.update("jax_default_matmul_precision", "highest")

    B, H, W = 2, 8, 8
    Dm = 32                                # hidden_dim
    Din = int(2.0 * Dm)                    # ssm_ratio = 2.0 -> d_inner = 64
    N = 16                                 # ssm_d_state
    R = max(1, math.ceil(Dm / 16))         # dt_rank 'auto' -> 2
    Dh = int(Dm * 4.0)                     # mlp hidden = 128
    L = H * W
    scan_idx = 0

    zz_paths, zz_paths_rev = generate_zigzag_forw_back(L, scan_type="zigzagN12")
    perm = jnp.asarray(zz_paths[scan_idx], dtype=jnp.int32)
    perm_rev = jnp.asarray(zz_paths_rev[scan_idx], dtype=jnp.int32)

    keys = jax.random.split(jax.random.PRNGKey(0), 24)

    def nrm(k, shape, scale):
        return scale * jax.random.normal(k, shape, dtype=jnp.float32)

    p = {
        "ln1_g": 1.0 + nrm(keys[0], (Dm,), 0.1),
        "ln1_b": nrm(keys[1], (Dm,), 0.1),
        "W_in": nrm(keys[2], (2 * Din, Dm), (1.0 / Dm) ** 0.5),
        "W_con": nrm(keys[3], (Din, Dm), (1.0 / Dm) ** 0.5),
        "wx": nrm(keys[4], (3, 3, Din), 0.25),
        "bx": nrm(keys[5], (Din,), 0.1),
        "wc": nrm(keys[6], (3, 3, Din), 0.25),
        "bc": nrm(keys[7], (Din,), 0.1),
        "x_proj_w": nrm(keys[8], (R + 2 * N, Din), (1.0 / Din) ** 0.5),
        "dt_w": nrm(keys[9], (Din, R), (1.0 / R) ** 0.5),
        "dt_bias": nrm(keys[10], (Din,), 0.5),
        "A_logs": jnp.tile(jnp.log(jnp.arange(1, N + 1, dtype=jnp.float32))[None, :], (Din, 1)),
        "Ds": jnp.ones((Din,), jnp.float32),
        "on_g": 1.0 + nrm(keys[11], (Din,), 0.1),
        "on_b": nrm(keys[12], (Din,), 0.1),
        "W_out": nrm(keys[13], (Dm, Din), (1.0 / Din) ** 0.5),
        "ln2_g": 1.0 + nrm(keys[14], (Dm,), 0.1),
        "ln2_b": nrm(keys[15], (Dm,), 0.1),
        "W1": nrm(keys[16], (Dh, Dm), (1.0 / Dm) ** 0.5),
        "b1": nrm(keys[17], (Dh,), 0.1),
        "W2": nrm(keys[18], (Dm, Dh), (1.0 / Dh) ** 0.5),
        "b2": nrm(keys[19], (Dm,), 0.1),
    }
    x = nrm(keys[20], (B, H, W, Dm), 1.0)

    fwd = jax.jit(vss_block_forward)
    y = jax.block_until_ready(fwd(x, p, perm, perm_rev))

    y_ref = _reference_forward(x, p, perm, perm_rev)
    assert y.shape == (B, H, W, Dm), y.shape
    err = float(jnp.max(jnp.abs(y - y_ref)))
    assert jnp.allclose(y, y_ref, atol=2e-3, rtol=2e-3), err
    print("KERNEL_OK")
</pallas_src>

<mosaic_0001>
module attributes {stable_mosaic.version = 11 : i64} {
  func.func @_ln_linear_kernel(%arg0: i32, %arg1: memref<128x32xf32, #tpu.memory_space<vmem>>, %arg2: memref<32x192xf32, #tpu.memory_space<vmem>>, %arg3: memref<1x192xf32, #tpu.memory_space<vmem>>, %arg4: memref<128x192xf32, #tpu.memory_space<vmem>>) attributes {dimension_semantics = [#tpu.dimension_semantics<parallel>], iteration_bounds = array<i64: 1>, scalar_prefetch = 0 : i64, scratch_operands = 0 : i64, tpu.core_type = #tpu.core_type<tc>, window_params = [{transform_indices = @transform_0, window_bounds = array<i64: 128, 32>}, {pipeline_mode = #tpu.pipeline_mode<synchronous>, transform_indices = @transform_1, window_bounds = array<i64: 32, 192>}, {pipeline_mode = #tpu.pipeline_mode<synchronous>, transform_indices = @transform_2, window_bounds = array<i64: 1, 192>}, {transform_indices = @transform_3, window_bounds = array<i64: 128, 192>}]} {
    %c0 = arith.constant 0 : index
    %c0_0 = arith.constant 0 : index
    %0 = vector.load %arg1[%c0, %c0_0] : memref<128x32xf32, #tpu.memory_space<vmem>>, vector<128x32xf32>
    %cst = arith.constant dense<0.000000e+00> : vector<128xf32>
    %1 = vector.multi_reduction <add>, %0, %cst [1] : vector<128x32xf32> to vector<128xf32>
    %2 = vector.shape_cast %1 : vector<128xf32> to vector<128x1xf32>
    %cst_1 = arith.constant 3.200000e+01 : f32
    %3 = vector.broadcast %cst_1 : f32 to vector<128x1xf32>
    %4 = arith.divf %2, %3 : vector<128x1xf32>
    %5 = arith.mulf %0, %0 : vector<128x32xf32>
    %cst_2 = arith.constant dense<0.000000e+00> : vector<128xf32>
    %6 = vector.multi_reduction <add>, %5, %cst_2 [1] : vector<128x32xf32> to vector<128xf32>
    %7 = vector.shape_cast %6 : vector<128xf32> to vector<128x1xf32>
    %cst_3 = arith.constant 3.200000e+01 : f32
    %8 = vector.broadcast %cst_3 : f32 to vector<128x1xf32>
    %9 = arith.divf %7, %8 : vector<128x1xf32>
    %10 = vector.broadcast %4 : vector<128x1xf32> to vector<128x32xf32>
    %11 = arith.subf %0, %10 : vector<128x32xf32>
    %12 = arith.mulf %4, %4 : vector<128x1xf32>
    %13 = arith.subf %9, %12 : vector<128x1xf32>
    %cst_4 = arith.constant 9.99999974E-6 : f32
    %14 = vector.broadcast %cst_4 : f32 to vector<128x1xf32>
    %15 = arith.addf %13, %14 : vector<128x1xf32>
    %16 = math.rsqrt %15 : vector<128x1xf32>
    %17 = vector.broadcast %16 : vector<128x1xf32> to vector<128x32xf32>
    %18 = arith.mulf %11, %17 : vector<128x32xf32>
    %c0_5 = arith.constant 0 : index
    %c0_6 = arith.constant 0 : index
    %19 = vector.load %arg2[%c0_5, %c0_6] : memref<32x192xf32, #tpu.memory_space<vmem>>, vector<32x192xf32>
    %cst_7 = arith.constant dense<0.000000e+00> : vector<128x192xf32>
    %20 = tpu.matmul %18, %19, %cst_7 {dimension_numbers = #tpu.dot_dimension_numbers<[1], [0], [0], [1], [0, 0, 1, 1], [], []>, precision = #tpu.contract_precision<fp32>} : vector<128x32xf32>, vector<32x192xf32>, vector<128x192xf32> -> vector<128x192xf32>
    %c0_8 = arith.constant 0 : index
    %c0_9 = arith.constant 0 : index
    %21 = vector.load %arg3[%c0_8, %c0_9] : memref<1x192xf32, #tpu.memory_space<vmem>>, vector<1x192xf32>
    %22 = vector.broadcast %21 : vector<1x192xf32> to vector<128x192xf32>
    %23 = arith.addf %20, %22 : vector<128x192xf32>
    %c0_10 = arith.constant 0 : index
    %c0_11 = arith.constant 0 : index
    %24 = vector.load %arg4[%c0_10, %c0_11] : memref<128x192xf32, #tpu.memory_space<vmem>>, vector<128x192xf32>
    tpu.vector_store %arg4[%c0_10, %c0_11], %23 {strides = array<i32>} : memref<128x192xf32, #tpu.memory_space<vmem>>, vector<128x192xf32>,
    return
  }
  func.func @transform_0(%arg0: i32) -> (i32, i32) {
    %c0_i32 = arith.constant 0 : i32
    %c0_i32_0 = arith.constant 0 : i32
    return %arg0, %c0_i32 : i32, i32
  }
  func.func @transform_1(%arg0: i32) -> (i32, i32) {
    %c0_i32 = arith.constant 0 : i32
    %c0_i32_0 = arith.constant 0 : i32
    %c0_i32_1 = arith.constant 0 : i32
    return %c0_i32, %c0_i32_0 : i32, i32
  }
  func.func @transform_2(%arg0: i32) -> (i32, i32) {
    %c0_i32 = arith.constant 0 : i32
    %c0_i32_0 = arith.constant 0 : i32
    %c0_i32_1 = arith.constant 0 : i32
    return %c0_i32, %c0_i32_0 : i32, i32
  }
  func.func @transform_3(%arg0: i32) -> (i32, i32) {
    %c0_i32 = arith.constant 0 : i32
    %c0_i32_0 = arith.constant 0 : i32
    return %arg0, %c0_i32 : i32, i32
  }
}

module attributes {stable_mosaic.version = 11 : i64} {
  func.func @_dwconv_silu_kernel(%arg0: i32, %arg1: memref<1x10x10x64xf32, #tpu.memory_space<vmem>>, %arg2: memref<1x10x10x64xf32, #tpu.memory_space<vmem>>, %arg3: memref<9x64xf32, #tpu.memory_space<vmem>>, %arg4: memref<1x64xf32, #tpu.memory_space<vmem>>, %arg5: memref<9x64xf32, #tpu.memory_space<vmem>>, %arg6: memref<1x64xf32, #tpu.memory_space<vmem>>, %arg7: memref<1x8x8x64xf32, #tpu.memory_space<vmem>>, %arg8: memref<1x8x8x64xf32, #tpu.memory_space<vmem>>) attributes {dimension_semantics = [#tpu.dimension_semantics<parallel>], iteration_bounds = array<i64: 2>, scalar_prefetch = 0 : i64, scratch_operands = 0 : i64, tpu.core_type = #tpu.core_type<tc>, window_params = [{transform_indices = @transform_0, window_bounds = array<i64: 1, 10, 10, 64>}, {transform_indices = @transform_1, window_bounds = array<i64: 1, 10, 10, 64>}, {pipeline_mode = #tpu.pipeline_mode<synchronous>, transform_indices = @transform_2, window_bounds = array<i64: 9, 64>}, {pipeline_mode = #tpu.pipeline_mode<synchronous>, transform_indices = @transform_3, window_bounds = array<i64: 1, 64>}, {pipeline_mode = #tpu.pipeline_mode<synchronous>, transform_indices = @transform_4, window_bounds = array<i64: 9, 64>}, {pipeline_mode = #tpu.pipeline_mode<synchronous>, transform_indices = @transform_5, window_bounds = array<i64: 1, 64>}, {transform_indices = @transform_6, window_bounds = array<i64: 1, 8, 8, 64>}, {transform_indices = @transform_7, window_bounds = array<i64: 1, 8, 8, 64>}]} {
    %cst = arith.constant 0.000000e+00 : f32
    %0 = vector.broadcast %cst : f32 to vector<8x8x64xf32>
    %c0 = arith.constant 0 : index
    %c0_0 = arith.constant 0 : index
    %1 = vector.load %arg4[%c0, %c0_0] : memref<1x64xf32, #tpu.memory_space<vmem>>, vector<1x64xf32>
    %2 = vector.shape_cast %1 : vector<1x64xf32> to vector<1x1x64xf32>
    %3 = vector.broadcast %2 : vector<1x1x64xf32> to vector<8x8x64xf32>
    %4 = arith.addf %0, %3 : vector<8x8x64xf32>
    %c0_1 = arith.constant 0 : index
    %c0_2 = arith.constant 0 : index
    %5 = vector.load %arg3[%c0_1, %c0_2] : memref<9x64xf32, #tpu.memory_space<vmem>>, vector<1x64xf32>
    %c0_3 = arith.constant 0 : index
    %c0_4 = arith.constant 0 : index
    %c0_5 = arith.constant 0 : index
    %c0_6 = arith.constant 0 : index
    %6 = vector.load %arg1[%c0_3, %c0_4, %c0_5, %c0_6] : memref<1x10x10x64xf32, #tpu.memory_space<vmem>>, vector<1x8x8x64xf32>
    %7 = vector.shape_cast %6 : vector<1x8x8x64xf32> to vector<8x8x64xf32>
    %8 = vector.shape_cast %5 : vector<1x64xf32> to vector<1x1x64xf32>
    %9 = vector.broadcast %8 : vector<1x1x64xf32> to vector<8x8x64xf32>
    %10 = arith.mulf %7, %9 : vector<8x8x64xf32>
    %11 = arith.addf %4, %10 : vector<8x8x64xf32>
    %c1 = arith.constant 1 : index
    %c0_7 = arith.constant 0 : index
    %12 = vector.load %arg3[%c1, %c0_7] : memref<9x64xf32, #tpu.memory_space<vmem>>, vector<1x64xf32>
    %c0_8 = arith.constant 0 : index
    %c0_9 = arith.constant 0 : index
    %c1_10 = arith.constant 1 : index
    %c0_11 = arith.constant 0 : index
    %13 = vector.load %arg1[%c0_8, %c0_9, %c1_10, %c0_11] : memref<1x10x10x64xf32, #tpu.memory_space<vmem>>, vector<1x8x8x64xf32>
    %14 = vector.shape_cast %13 : vector<1x8x8x64xf32> to vector<8x8x64xf32>
    %15 = vector.shape_cast %12 : vector<1x64xf32> to vector<1x1x64xf32>
    %16 = vector.broadcast %15 : vector<1x1x64xf32> to vector<8x8x64xf32>
    %17 = arith.mulf %14, %16 : vector<8x8x64xf32>
    %18 = arith.addf %11, %17 : vector<8x8x64xf32>
    %c2 = arith.constant 2 : index
    %c0_12 = arith.constant 0 : index
    %19 = vector.load %arg3[%c2, %c0_12] : memref<9x64xf32, #tpu.memory_space<vmem>>, vector<1x64xf32>
    %c0_13 = arith.constant 0 : index
    %c0_14 = arith.constant 0 : index
    %c2_15 = arith.constant 2 : index
    %c0_16 = arith.constant 0 : index
    %20 = vector.load %arg1[%c0_13, %c0_14, %c2_15, %c0_16] : memref<1x10x10x64xf32, #tpu.memory_space<vmem>>, vector<1x8x8x64xf32>
    %21 = vector.shape_cast %20 : vector<1x8x8x64xf32> to vector<8x8x64xf32>
    %22 = vector.shape_cast %19 : vector<1x64xf32> to vector<1x1x64xf32>
    %23 = vector.broadcast %22 : vector<1x1x64xf32> to vector<8x8x64xf32>
    %24 = arith.mulf %21, %23 : vector<8x8x64xf32>
    %25 = arith.addf %18, %24 : vector<8x8x64xf32>
    %c3 = arith.constant 3 : index
    %c0_17 = arith.constant 0 : index
    %26 = vector.load %arg3[%c3, %c0_17] : memref<9x64xf32, #tpu.memory_space<vmem>>, vector<1x64xf32>
    %c0_18 = arith.constant 0 : index
    %c1_19 = arith.constant 1 : index
    %c0_20 = arith.constant 0 : index
    %c0_21 = arith.constant 0 : index
    %27 = vector.load %arg1[%c0_18, %c1_19, %c0_20, %c0_21] : memref<1x10x10x64xf32, #tpu.memory_space<vmem>>, vector<1x8x8x64xf32>
    %28 = vector.shape_cast %27 : vector<1x8x8x64xf32> to vector<8x8x64xf32>
    %29 = vector.shape_cast %26 : vector<1x64xf32> to vector<1x1x64xf32>
    %30 = vector.broadcast %29 : vector<1x1x64xf32> to vector<8x8x64xf32>
    %31 = arith.mulf %28, %30 : vector<8x8x64xf32>
    %32 = arith.addf %25, %31 : vector<8x8x64xf32>
    %c4 = arith.constant 4 : index
    %c0_22 = arith.constant 0 : index
    %33 = vector.load %arg3[%c4, %c0_22] : memref<9x64xf32, #tpu.memory_space<vmem>>, vector<1x64xf32>
    %c0_23 = arith.constant 0 : index
    %c1_24 = arith.constant 1 : index
    %c1_25 = arith.constant 1 : index
    %c0_26 = arith.constant 0 : index
    %34 = vector.load %arg1[%c0_23, %c1_24, %c1_25, %c0_26] : memref<1x10x10x64xf32, #tpu.memory_space<vmem>>, vector<1x8x8x64xf32>
    %35 = vector.shape_cast %34 : vector<1x8x8x64xf32> to vector<8x8x64xf32>
    %36 = vector.shape_cast %33 : vector<1x64xf32> to vector<1x1x64xf32>
    %37 = vector.broadcast %36 : vector<1x1x64xf32> to vector<8x8x64xf32>
    %38 = arith.mulf %35, %37 : vector<8x8x64xf32>
    %39 = arith.addf %32, %38 : vector<8x8x64xf32>
    %c5 = arith.constant 5 : index
    %c0_27 = arith.constant 0 : index
    %40 = vector.load %arg3[%c5, %c0_27] : memref<9x64xf32, #tpu.memory_space<vmem>>, vector<1x64xf32>
    %c0_28 = arith.constant 0 : index
    %c1_29 = arith.constant 1 : index
    %c2_30 = arith.constant 2 : index
    %c0_31 = arith.constant 0 : index
    %41 = vector.load %arg1[%c0_28, %c1_29, %c2_30, %c0_31] : memref<1x10x10x64xf32, #tpu.memory_space<vmem>>, vector<1x8x8x64xf32>
    %42 = vector.shape_cast %41 : vector<1x8x8x64xf32> to vector<8x8x64xf32>
    %43 = vector.shape_cast %40 : vector<1x64xf32> to vector<1x1x64xf32>
    %44 = vector.broadcast %43 : vector<1x1x64xf32> to vector<8x8x64xf32>
    %45 = arith.mulf %42, %44 : vector<8x8x64xf32>
    %46 = arith.addf %39, %45 : vector<8x8x64xf32>
    %c6 = arith.constant 6 : index
    %c0_32 = arith.constant 0 : index
    %47 = vector.load %arg3[%c6, %c0_32] : memref<9x64xf32, #tpu.memory_space<vmem>>, vector<1x64xf32>
    %c0_33 = arith.constant 0 : index
    %c2_34 = arith.constant 2 : index
    %c0_35 = arith.constant 0 : index
    %c0_36 = arith.constant 0 : index
    %48 = vector.load %arg1[%c0_33, %c2_34, %c0_35, %c0_36] : memref<1x10x10x64xf32, #tpu.memory_space<vmem>>, vector<1x8x8x64xf32>
    %49 = vector.shape_cast %48 : vector<1x8x8x64xf32> to vector<8x8x64xf32>
    %50 = vector.shape_cast %47 : vector<1x64xf32> to vector<1x1x64xf32>
    %51 = vector.broadcast %50 : vector<1x1x64xf32> to vector<8x8x64xf32>
    %52 = arith.mulf %49, %51 : vector<8x8x64xf32>
    %53 = arith.addf %46, %52 : vector<8x8x64xf32>
    %c7 = arith.constant 7 : index
    %c0_37 = arith.constant 0 : index
    %54 = vector.load %arg3[%c7, %c0_37] : memref<9x64xf32, #tpu.memory_space<vmem>>, vector<1x64xf32>
    %c0_38 = arith.constant 0 : index
    %c2_39 = arith.constant 2 : index
    %c1_40 = arith.constant 1 : index
    %c0_41 = arith.constant 0 : index
    %55 = vector.load %arg1[%c0_38, %c2_39, %c1_40, %c0_41] : memref<1x10x10x64xf32, #tpu.memory_space<vmem>>, vector<1x8x8x64xf32>
    %56 = vector.shape_cast %55 : vector<1x8x8x64xf32> to vector<8x8x64xf32>
    %57 = vector.shape_cast %54 : vector<1x64xf32> to vector<1x1x64xf32>
    %58 = vector.broadcast %57 : vector<1x1x64xf32> to vector<8x8x64xf32>
    %59 = arith.mulf %56, %58 : vector<8x8x64xf32>
    %60 = arith.addf %53, %59 : vector<8x8x64xf32>
    %c8 = arith.constant 8 : index
    %c0_42 = arith.constant 0 : index
    %61 = vector.load %arg3[%c8, %c0_42] : memref<9x64xf32, #tpu.memory_space<vmem>>, vector<1x64xf32>
    %c0_43 = arith.constant 0 : index
    %c2_44 = arith.constant 2 : index
    %c2_45 = arith.constant 2 : index
    %c0_46 = arith.constant 0 : index
    %62 = vector.load %arg1[%c0_43, %c2_44, %c2_45, %c0_46] : memref<1x10x10x64xf32, #tpu.memory_space<vmem>>, vector<1x8x8x64xf32>
    %63 = vector.shape_cast %62 : vector<1x8x8x64xf32> to vector<8x8x64xf32>
    %64 = vector.shape_cast %61 : vector<1x64xf32> to vector<1x1x64xf32>
    %65 = vector.broadcast %64 : vector<1x1x64xf32> to vector<8x8x64xf32>
    %66 = arith.mulf %63, %65 : vector<8x8x64xf32>
    %67 = arith.addf %60, %66 : vector<8x8x64xf32>
    %cst_47 = arith.constant 0.000000e+00 : f32
    %68 = vector.broadcast %cst_47 : f32 to vector<8x8x64xf32>
    %69 = arith.subf %68, %67 : vector<8x8x64xf32>
    %70 = math.exp %69 : vector<8x8x64xf32>
    %cst_48 = arith.constant 1.000000e+00 : f32
    %71 = vector.broadcast %cst_48 : f32 to vector<8x8x64xf32>
    %72 = arith.addf %71, %70 : vector<8x8x64xf32>
    %cst_49 = arith.constant 1.000000e+00 : f32
    %73 = vector.broadcast %cst_49 : f32 to vector<8x8x64xf32>
    %74 = arith.divf %73, %72 : vector<8x8x64xf32>
    %75 = arith.mulf %67, %74 : vector<8x8x64xf32>
    %c0_50 = arith.constant 0 : index
    %c0_51 = arith.constant 0 : index
    %c0_52 = arith.constant 0 : index
    %c0_53 = arith.constant 0 : index
    %76 = vector.load %arg7[%c0_50, %c0_51, %c0_52, %c0_53] : memref<1x8x8x64xf32, #tpu.memory_space<vmem>>, vector<1x8x8x64xf32>
    %77 = vector.shape_cast %76 : vector<1x8x8x64xf32> to vector<8x8x64xf32>
    %78 = vector.shape_cast %75 : vector<8x8x64xf32> to vector<1x8x8x64xf32>
    tpu.vector_store %arg7[%c0_50, %c0_51, %c0_52, %c0_53], %78 {strides = array<i32>} : memref<1x8x8x64xf32, #tpu.memory_space<vmem>>, vector<1x8x8x64xf32>,
    %cst_54 = arith.constant 0.000000e+00 : f32
    %79 = vector.broadcast %cst_54 : f32 to vector<8x8x64xf32>
    %c0_55 = arith.constant 0 : index
    %c0_56 = arith.constant 0 : index
    %80 = vector.load %arg6[%c0_55, %c0_56] : memref<1x64xf32, #tpu.memory_space<vmem>>, vector<1x64xf32>
    %81 = vector.shape_cast %80 : vector<1x64xf32> to vector<1x1x64xf32>
    %82 = vector.broadcast %81 : vector<1x1x64xf32> to vector<8x8x64xf32>
    %83 = arith.addf %79, %82 : vector<8x8x64xf32>
    %c0_57 = arith.constant 0 : index
    %c0_58 = arith.constant 0 : index
    %84 = vector.load %arg5[%c0_57, %c0_58] : memref<9x64xf32, #tpu.memory_space<vmem>>, vector<1x64xf32>
    %c0_59 = arith.constant 0 : index
    %c0_60 = arith.constant 0 : index
    %c0_61 = arith.constant 0 : index
    %c0_62 = arith.constant 0 : index
    %85 = vector.load %arg2[%c0_59, %c0_60, %c0_61, %c0_62] : memref<1x10x10x64xf32, #tpu.memory_space<vmem>>, vector<1x8x8x64xf32>
    %86 = vector.shape_cast %85 : vector<1x8x8x64xf32> to vector<8x8x64xf32>
    %87 = vector.shape_cast %84 : vector<1x64xf32> to vector<1x1x64xf32>
    %88 = vector.broadcast %87 : vector<1x1x64xf32> to vector<8x8x64xf32>
    %89 = arith.mulf %86, %88 : vector<8x8x64xf32>
    %90 = arith.addf %83, %89 : vector<8x8x64xf32>
    %c1_63 = arith.constant 1 : index
    %c0_64 = arith.constant 0 : index
    %91 = vector.load %arg5[%c1_63, %c0_64] : memref<9x64xf32, #tpu.memory_space<vmem>>, vector<1x64xf32>
    %c0_65 = arith.constant 0 : index
    %c0_66 = arith.constant 0 : index
    %c1_67 = arith.constant 1 : index
    %c0_68 = arith.constant 0 : index
    %92 = vector.load %arg2[%c0_65, %c0_66, %c1_67, %c0_68] : memref<1x10x10x64xf32, #tpu.memory_space<vmem>>, vector<1x8x8x64xf32>
    %93 = vector.shape_cast %92 : vector<1x8x8x64xf32> to vector<8x8x64xf32>
    %94 = vector.shape_cast %91 : vector<1x64xf32> to vector<1x1x64xf32>
    %95 = vector.broadcast %94 : vector<1x1x64xf32> to vector<8x8x64xf32>
    %96 = arith.mulf %93, %95 : vector<8x8x64xf32>
    %97 = arith.addf %90, %96 : vector<8x8x64xf32>
    %c2_69 = arith.constant 2 : index
    %c0_70 = arith.constant 0 : index
    %98 = vector.load %arg5[%c2_69, %c0_70] : memref<9x64xf32, #tpu.memory_space<vmem>>, vector<1x64xf32>
    %c0_71 = arith.constant 0 : index
    %c0_72 = arith.constant 0 : index
    %c2_73 = arith.constant 2 : index
    %c0_74 = arith.constant 0 : index
    %99 = vector.load %arg2[%c0_71, %c0_72, %c2_73, %c0_74] : memref<1x10x10x64xf32, #tpu.memory_space<vmem>>, vector<1x8x8x64xf32>
    %100 = vector.shape_cast %99 : vector<1x8x8x64xf32> to vector<8x8x64xf32>
    %101 = vector.shape_cast %98 : vector<1x64xf32> to vector<1x1x64xf32>
    %102 = vector.broadcast %101 : vector<1x1x64xf32> to vector<8x8x64xf32>
    %103 = arith.mulf %100, %102 : vector<8x8x64xf32>
    %104 = arith.addf %97, %103 : vector<8x8x64xf32>
    %c3_75 = arith.constant 3 : index
    %c0_76 = arith.constant 0 : index
    %105 = vector.load %arg5[%c3_75, %c0_76] : memref<9x64xf32, #tpu.memory_space<vmem>>, vector<1x64xf32>
    %c0_77 = arith.constant 0 : index
    %c1_78 = arith.constant 1 : index
    %c0_79 = arith.constant 0 : index
    %c0_80 = arith.constant 0 : index
    %106 = vector.load %arg2[%c0_77, %c1_78, %c0_79, %c0_80] : memref<1x10x10x64xf32, #tpu.memory_space<vmem>>, vector<1x8x8x64xf32>
    %107 = vector.shape_cast %106 : vector<1x8x8x64xf32> to vector<8x8x64xf32>
    %108 = vector.shape_cast %105 : vector<1x64xf32> to vector<1x1x64xf32>
    %109 = vector.broadcast %108 : vector<1x1x64xf32> to vector<8x8x64xf32>
    %110 = arith.mulf %107, %109 : vector<8x8x64xf32>
    %111 = arith.addf %104, %110 : vector<8x8x64xf32>
    %c4_81 = arith.constant 4 : index
    %c0_82 = arith.constant 0 : index
    %112 = vector.load %arg5[%c4_81, %c0_82] : memref<9x64xf32, #tpu.memory_space<vmem>>, vector<1x64xf32>
    %c0_83 = arith.constant 0 : index
    %c1_84 = arith.constant 1 : index
    %c1_85 = arith.constant 1 : index
    %c0_86 = arith.constant 0 : index
    %113 = vector.load %arg2[%c0_83, %c1_84, %c1_85, %c0_86] : memref<1x10x10x64xf32, #tpu.memory_space<vmem>>, vector<1x8x8x64xf32>
    %114 = vector.shape_cast %113 : vector<1x8x8x64xf32> to vector<8x8x64xf32>
    %115 = vector.shape_cast %112 : vector<1x64xf32> to vector<1x1x64xf32>
    %116 = vector.broadcast %115 : vector<1x1x64xf32> to vector<8x8x64xf32>
    %117 = arith.mulf %114, %116 : vector<8x8x64xf32>
    %118 = arith.addf %111, %117 : vector<8x8x64xf32>
    %c5_87 = arith.constant 5 : index
    %c0_88 = arith.constant 0 : index
    %119 = vector.load %arg5[%c5_87, %c0_88] : memref<9x64xf32, #tpu.memory_space<vmem>>, vector<1x64xf32>
    %c0_89 = arith.constant 0 : index
    %c1_90 = arith.constant 1 : index
    %c2_91 = arith.constant 2 : index
    %c0_92 = arith.constant 0 : index
    %120 = vector.load %arg2[%c0_89, %c1_90, %c2_91, %c0_92] : memref<1x10x10x64xf32, #tpu.memory_space<vmem>>, vector<1x8x8x64xf32>
    %121 = vector.shape_cast %120 : vector<1x8x8x64xf32> to vector<8x8x64xf32>
    %122 = vector.shape_cast %119 : vector<1x64xf32> to vector<1x1x64xf32>
    %123 = vector.broadcast %122 : vector<1x1x64xf32> to vector<8x8x64xf32>
    %124 = arith.mulf %121, %123 : vector<8x8x64xf32>
    %125 = arith.addf %118, %124 : vector<8x8x64xf32>
    %c6_93 = arith.constant 6 : index
    %c0_94 = arith.constant 0 : index
    %126 = vector.load %arg5[%c6_93, %c0_94] : memref<9x64xf32, #tpu.memory_space<vmem>>, vector<1x64xf32>
    %c0_95 = arith.constant 0 : index
    %c2_96 = arith.constant 2 : index
    %c0_97 = arith.constant 0 : index
    %c0_98 = arith.constant 0 : index
    %127 = vector.load %arg2[%c0_95, %c2_96, %c0_97, %c0_98] : memref<1x10x10x64xf32, #tpu.memory_space<vmem>>, vector<1x8x8x64xf32>
    %128 = vector.shape_cast %127 : vector<1x8x8x64xf32> to vector<8x8x64xf32>
    %129 = vector.shape_cast %126 : vector<1x64xf32> to vector<1x1x64xf32>
    %130 = vector.broadcast %129 : vector<1x1x64xf32> to vector<8x8x64xf32>
    %131 = arith.mulf %128, %130 : vector<8x8x64xf32>
    %132 = arith.addf %125, %131 : vector<8x8x64xf32>
    %c7_99 = arith.constant 7 : index
    %c0_100 = arith.constant 0 : index
    %133 = vector.load %arg5[%c7_99, %c0_100] : memref<9x64xf32, #tpu.memory_space<vmem>>, vector<1x64xf32>
    %c0_101 = arith.constant 0 : index
    %c2_102 = arith.constant 2 : index
    %c1_103 = arith.constant 1 : index
    %c0_104 = arith.constant 0 : index
    %134 = vector.load %arg2[%c0_101, %c2_102, %c1_103, %c0_104] : memref<1x10x10x64xf32, #tpu.memory_space<vmem>>, vector<1x8x8x64xf32>
    %135 = vector.shape_cast %134 : vector<1x8x8x64xf32> to vector<8x8x64xf32>
    %136 = vector.shape_cast %133 : vector<1x64xf32> to vector<1x1x64xf32>
    %137 = vector.broadcast %136 : vector<1x1x64xf32> to vector<8x8x64xf32>
    %138 = arith.mulf %135, %137 : vector<8x8x64xf32>
    %139 = arith.addf %132, %138 : vector<8x8x64xf32>
    %c8_105 = arith.constant 8 : index
    %c0_106 = arith.constant 0 : index
    %140 = vector.load %arg5[%c8_105, %c0_106] : memref<9x64xf32, #tpu.memory_space<vmem>>, vector<1x64xf32>
    %c0_107 = arith.constant 0 : index
    %c2_108 = arith.constant 2 : index
    %c2_109 = arith.constant 2 : index
    %c0_110 = arith.constant 0 : index
    %141 = vector.load %arg2[%c0_107, %c2_108, %c2_109, %c0_110] : memref<1x10x10x64xf32, #tpu.memory_space<vmem>>, vector<1x8x8x64xf32>
    %142 = vector.shape_cast %141 : vector<1x8x8x64xf32> to vector<8x8x64xf32>
    %143 = vector.shape_cast %140 : vector<1x64xf32> to vector<1x1x64xf32>
    %144 = vector.broadcast %143 : vector<1x1x64xf32> to vector<8x8x64xf32>
    %145 = arith.mulf %142, %144 : vector<8x8x64xf32>
    %146 = arith.addf %139, %145 : vector<8x8x64xf32>
    %cst_111 = arith.constant 0.000000e+00 : f32
    %147 = vector.broadcast %cst_111 : f32 to vector<8x8x64xf32>
    %148 = arith.subf %147, %146 : vector<8x8x64xf32>
    %149 = math.exp %148 : vector<8x8x64xf32>
    %cst_112 = arith.constant 1.000000e+00 : f32
    %150 = vector.broadcast %cst_112 : f32 to vector<8x8x64xf32>
    %151 = arith.addf %150, %149 : vector<8x8x64xf32>
    %cst_113 = arith.constant 1.000000e+00 : f32
    %152 = vector.broadcast %cst_113 : f32 to vector<8x8x64xf32>
    %153 = arith.divf %152, %151 : vector<8x8x64xf32>
    %154 = arith.mulf %146, %153 : vector<8x8x64xf32>
    %c0_114 = arith.constant 0 : index
    %c0_115 = arith.constant 0 : index
    %c0_116 = arith.constant 0 : index
    %c0_117 = arith.constant 0 : index
    %155 = vector.load %arg8[%c0_114, %c0_115, %c0_116, %c0_117] : memref<1x8x8x64xf32, #tpu.memory_space<vmem>>, vector<1x8x8x64xf32>
    %156 = vector.shape_cast %155 : vector<1x8x8x64xf32> to vector<8x8x64xf32>
    %157 = vector.shape_cast %154 : vector<8x8x64xf32> to vector<1x8x8x64xf32>
    tpu.vector_store %arg8[%c0_114, %c0_115, %c0_116, %c0_117], %157 {strides = array<i32>} : memref<1x8x8x64xf32, #tpu.memory_space<vmem>>, vector<1x8x8x64xf32>,
    return
  }
  func.func @transform_0(%arg0: i32) -> (i32, i32, i32, i32) {
    %c0_i32 = arith.constant 0 : i32
    %c0_i32_0 = arith.constant 0 : i32
    %c0_i32_1 = arith.constant 0 : i32
    %c0_i32_2 = arith.constant 0 : i32
    return %arg0, %c0_i32, %c0_i32_0, %c0_i32_1 : i32, i32, i32, i32
  }
  func.func @transform_1(%arg0: i32) -> (i32, i32, i32, i32) {
    %c0_i32 = arith.constant 0 : i32
    %c0_i32_0 = arith.constant 0 : i32
    %c0_i32_1 = arith.constant 0 : i32
    %c0_i32_2 = arith.constant 0 : i32
    return %arg0, %c0_i32, %c0_i32_0, %c0_i32_1 : i32, i32, i32, i32
  }
  func.func @transform_2(%arg0: i32) -> (i32, i32) {
    %c0_i32 = arith.constant 0 : i32
    %c0_i32_0 = arith.constant 0 : i32
    %c0_i32_1 = arith.constant 0 : i32
    return %c0_i32, %c0_i32_0 : i32, i32
  }
  func.func @transform_3(%arg0: i32) -> (i32, i32) {
    %c0_i32 = arith.constant 0 : i32
    %c0_i32_0 = arith.constant 0 : i32
    %c0_i32_1 = arith.constant 0 : i32
    return %c0_i32, %c0_i32_0 : i32, i32
  }
  func.func @transform_4(%arg0: i32) -> (i32, i32) {
    %c0_i32 = arith.constant 0 : i32
    %c0_i32_0 = arith.constant 0 : i32
    %c0_i32_1 = arith.constant 0 : i32
    return %c0_i32, %c0_i32_0 : i32, i32
  }
  func.func @transform_5(%arg0: i32) -> (i32, i32) {
    %c0_i32 = arith.constant 0 : i32
    %c0_i32_0 = arith.constant 0 : i32
    %c0_i32_1 = arith.constant 0 : i32
    return %c0_i32, %c0_i32_0 : i32, i32
  }
  func.func @transform_6(%arg0: i32) -> (i32, i32, i32, i32) {
    %c0_i32 = arith.constant 0 : i32
    %c0_i32_0 = arith.constant 0 : i32
    %c0_i32_1 = arith.constant 0 : i32
    %c0_i32_2 = arith.constant 0 : i32
    return %arg0, %c0_i32, %c0_i32_0, %c0_i32_1 : i32, i32, i32, i32
  }
  func.func @transform_7(%arg0: i32) -> (i32, i32, i32, i32) {
    %c0_i32 = arith.constant 0 : i32
    %c0_i32_0 = arith.constant 0 : i32
    %c0_i32_1 = arith.constant 0 : i32
    %c0_i32_2 = arith.constant 0 : i32
    return %arg0, %c0_i32, %c0_i32_0, %c0_i32_1 : i32, i32, i32, i32
  }
}

module attributes {stable_mosaic.version = 11 : i64} {
  func.func @_scan_kernel(%arg0: i32, %arg1: memref<1x64x64xf32, #tpu.memory_space<vmem>>, %arg2: memref<1x64x64xf32, #tpu.memory_space<vmem>>, %arg3: memref<64x34xf32, #tpu.memory_space<vmem>>, %arg4: memref<2x64xf32, #tpu.memory_space<vmem>>, %arg5: memref<16x64xf32, #tpu.memory_space<vmem>>, %arg6: memref<1x64xf32, #tpu.memory_space<vmem>>, %arg7: memref<1x64xf32, #tpu.memory_space<vmem>>, %arg8: memref<1x64x64xf32, #tpu.memory_space<vmem>>, %arg9: memref<64x64xf32, #tpu.memory_space<vmem>>, %arg10: memref<64x16xf32, #tpu.memory_space<vmem>>, %arg11: memref<64x16xf32, #tpu.memory_space<vmem>>) attributes {dimension_semantics = [#tpu.dimension_semantics<parallel>], iteration_bounds = array<i64: 2>, scalar_prefetch = 0 : i64, scratch_operands = 3 : i64, tpu.core_type = #tpu.core_type<tc>, window_params = [{transform_indices = @transform_0, window_bounds = array<i64: 1, 64, 64>}, {transform_indices = @transform_1, window_bounds = array<i64: 1, 64, 64>}, {pipeline_mode = #tpu.pipeline_mode<synchronous>, transform_indices = @transform_2, window_bounds = array<i64: 64, 34>}, {pipeline_mode = #tpu.pipeline_mode<synchronous>, transform_indices = @transform_3, window_bounds = array<i64: 2, 64>}, {pipeline_mode = #tpu.pipeline_mode<synchronous>, transform_indices = @transform_4, window_bounds = array<i64: 16, 64>}, {pipeline_mode = #tpu.pipeline_mode<synchronous>, transform_indices = @transform_5, window_bounds = array<i64: 1, 64>}, {pipeline_mode = #tpu.pipeline_mode<synchronous>, transform_indices = @transform_6, window_bounds = array<i64: 1, 64>}, {transform_indices = @transform_7, window_bounds = array<i64: 1, 64, 64>}]} {
    %c0 = arith.constant 0 : index
    %c0_0 = arith.constant 0 : index
    %c0_1 = arith.constant 0 : index
    %0 = vector.load %arg1[%c0, %c0_0, %c0_1] : memref<1x64x64xf32, #tpu.memory_space<vmem>>, vector<1x64x64xf32>
    %1 = vector.shape_cast %0 : vector<1x64x64xf32> to vector<64x64xf32>
    %c0_2 = arith.constant 0 : index
    %c0_3 = arith.constant 0 : index
    %c0_4 = arith.constant 0 : index
    %2 = vector.load %arg2[%c0_2, %c0_3, %c0_4] : memref<1x64x64xf32, #tpu.memory_space<vmem>>, vector<1x64x64xf32>
    %3 = vector.shape_cast %2 : vector<1x64x64xf32> to vector<64x64xf32>
    %4 = arith.addf %1, %3 : vector<64x64xf32>
    %c0_5 = arith.constant 0 : index
    %c0_6 = arith.constant 0 : index
    %5 = vector.load %arg3[%c0_5, %c0_6] : memref<64x34xf32, #tpu.memory_space<vmem>>, vector<64x34xf32>
    %cst = arith.constant dense<0.000000e+00> : vector<64x34xf32>
    %6 = tpu.matmul %4, %5, %cst {dimension_numbers = #tpu.dot_dimension_numbers<[1], [0], [0], [1], [0, 0, 1, 1], [], []>, precision = #tpu.contract_precision<fp32>} : vector<64x64xf32>, vector<64x34xf32>, vector<64x34xf32> -> vector<64x34xf32>
    %7 = vector.extract_strided_slice %6 {offsets = [0, 0], sizes = [64, 2], strides = [1, 1]} : vector<64x34xf32> to vector<64x2xf32>
    %c0_7 = arith.constant 0 : index
    %c0_8 = arith.constant 0 : index
    %8 = vector.load %arg4[%c0_7, %c0_8] : memref<2x64xf32, #tpu.memory_space<vmem>>, vector<2x64xf32>
    %cst_9 = arith.constant dense<0.000000e+00> : vector<64x64xf32>
    %9 = tpu.matmul %7, %8, %cst_9 {dimension_numbers = #tpu.dot_dimension_numbers<[1], [0], [0], [1], [0, 0, 1, 1], [], []>, precision = #tpu.contract_precision<fp32>} : vector<64x2xf32>, vector<2x64xf32>, vector<64x64xf32> -> vector<64x64xf32>
    %c0_10 = arith.constant 0 : index
    %c0_11 = arith.constant 0 : index
    %10 = vector.load %arg9[%c0_10, %c0_11] : memref<64x64xf32, #tpu.memory_space<vmem>>, vector<64x64xf32>
    tpu.vector_store %arg9[%c0_10, %c0_11], %9 {strides = array<i32>} : memref<64x64xf32, #tpu.memory_space<vmem>>, vector<64x64xf32>,
    %11 = vector.extract_strided_slice %6 {offsets = [0, 2], sizes = [64, 16], strides = [1, 1]} : vector<64x34xf32> to vector<64x16xf32>
    %c0_12 = arith.constant 0 : index
    %c0_13 = arith.constant 0 : index
    %12 = vector.load %arg10[%c0_12, %c0_13] : memref<64x16xf32, #tpu.memory_space<vmem>>, vector<64x16xf32>
    tpu.vector_store %arg10[%c0_12, %c0_13], %11 {strides = array<i32>} : memref<64x16xf32, #tpu.memory_space<vmem>>, vector<64x16xf32>,
    %13 = vector.extract_strided_slice %6 {offsets = [0, 18], sizes = [64, 16], strides = [1, 1]} : vector<64x34xf32> to vector<64x16xf32>
    %c0_14 = arith.constant 0 : index
    %c0_15 = arith.constant 0 : index
    %14 = vector.load %arg11[%c0_14, %c0_15] : memref<64x16xf32, #tpu.memory_space<vmem>>, vector<64x16xf32>
    tpu.vector_store %arg11[%c0_14, %c0_15], %13 {strides = array<i32>} : memref<64x16xf32, #tpu.memory_space<vmem>>, vector<64x16xf32>,
    %c0_16 = arith.constant 0 : index
    %c0_17 = arith.constant 0 : index
    %15 = vector.load %arg5[%c0_16, %c0_17] : memref<16x64xf32, #tpu.memory_space<vmem>>, vector<16x64xf32>
    %c0_18 = arith.constant 0 : index
    %c0_19 = arith.constant 0 : index
    %16 = vector.load %arg6[%c0_18, %c0_19] : memref<1x64xf32, #tpu.memory_space<vmem>>, vector<1x64xf32>
    %c0_20 = arith.constant 0 : index
    %c0_21 = arith.constant 0 : index
    %17 = vector.load %arg7[%c0_20, %c0_21] : memref<1x64xf32, #tpu.memory_space<vmem>>, vector<1x64xf32>
    %18 = tpu.iota {dimensions = array<i32: 0>} : vector<16x16xi32>
    %19 = tpu.iota {dimensions = array<i32: 1>} : vector<16x16xi32>
    %20 = arith.cmpi eq, %18, %19 : vector<16x16xi32>
    %21 = arith.extui %20 : vector<16x16xi1> to vector<16x16xi32>
    %22 = arith.sitofp %21 : vector<16x16xi32> to vector<16x16xf32>
    %cst_22 = arith.constant 0.000000e+00 : f32
    %23 = vector.broadcast %cst_22 : f32 to vector<16x64xf32>
    %c0_i32 = arith.constant 0 : i32
    %c64_i32 = arith.constant 64 : i32
    %24 = arith.addi %c0_i32, %c64_i32 : i32
    %c1_i32 = arith.constant 1 : i32
    %25 = scf.for %arg12 = %c0_i32 to %24 step %c1_i32 iter_args(%arg13 = %23) -> (vector<16x64xf32>)  : i32 {
      %c0_24 = arith.constant 0 : index
      %26 = arith.index_cast %arg12 : i32 to index
      %c0_25 = arith.constant 0 : index
      %27 = vector.load %arg1[%c0_24, %26, %c0_25] : memref<1x64x64xf32, #tpu.memory_space<vmem>>, vector<1x1x64xf32>
      %28 = vector.shape_cast %27 : vector<1x1x64xf32> to vector<1x64xf32>
      %29 = arith.index_cast %arg12 : i32 to index
      %c0_26 = arith.constant 0 : index
      %30 = vector.load %arg9[%29, %c0_26] : memref<64x64xf32, #tpu.memory_space<vmem>>, vector<1x64xf32>
      %31 = arith.index_cast %arg12 : i32 to index
      %c0_27 = arith.constant 0 : index
      %32 = vector.load %arg10[%31, %c0_27] : memref<64x16xf32, #tpu.memory_space<vmem>>, vector<1x16xf32>
      %33 = arith.index_cast %arg12 : i32 to index
      %c0_28 = arith.constant 0 : index
      %34 = vector.load %arg11[%33, %c0_28] : memref<64x16xf32, #tpu.memory_space<vmem>>, vector<1x16xf32>
      %35 = arith.addf %30, %16 : vector<1x64xf32>
      %cst_29 = arith.constant 0.000000e+00 : f32
      %36 = vector.broadcast %cst_29 : f32 to vector<1x64xf32>
      %37 = arith.maximumf %35, %36 : vector<1x64xf32>
      %38 = math.absf %35 : vector<1x64xf32>
      %cst_30 = arith.constant 0.000000e+00 : f32
      %39 = vector.broadcast %cst_30 : f32 to vector<1x64xf32>
      %40 = arith.subf %39, %38 : vector<1x64xf32>
      %41 = math.exp %40 : vector<1x64xf32>
      %cst_31 = arith.constant 1.000000e+00 : f32
      %42 = vector.broadcast %cst_31 : f32 to vector<1x64xf32>
      %43 = arith.addf %42, %41 : vector<1x64xf32>
      %44 = math.log %43 : vector<1x64xf32>
      %45 = arith.addf %37, %44 : vector<1x64xf32>
      %46 = vector.broadcast %45 : vector<1x64xf32> to vector<16x64xf32>
      %47 = arith.mulf %15, %46 : vector<16x64xf32>
      %48 = math.exp %47 : vector<16x64xf32>
      %49 = vector.broadcast %32 : vector<1x16xf32> to vector<16x16xf32>
      %50 = arith.mulf %22, %49 : vector<16x16xf32>
      %cst_32 = arith.constant dense<0.000000e+00> : vector<16xf32>
      %51 = vector.multi_reduction <add>, %50, %cst_32 [1] : vector<16x16xf32> to vector<16xf32>
      %52 = vector.shape_cast %51 : vector<16xf32> to vector<16x1xf32>
      %53 = arith.mulf %48, %arg13 : vector<16x64xf32>
      %54 = arith.mulf %45, %28 : vector<1x64xf32>
      %55 = vector.broadcast %52 : vector<16x1xf32> to vector<16x64xf32>
      %56 = vector.broadcast %54 : vector<1x64xf32> to vector<16x64xf32>
      %57 = arith.mulf %55, %56 : vector<16x64xf32>
      %58 = arith.addf %53, %57 : vector<16x64xf32>
      %cst_33 = arith.constant dense<0.000000e+00> : vector<1x64xf32>
      %59 = tpu.matmul %34, %58, %cst_33 {dimension_numbers = #tpu.dot_dimension_numbers<[1], [0], [0], [1], [0, 0, 1, 1], [], []>, precision = #tpu.contract_precision<fp32>} : vector<1x16xf32>, vector<16x64xf32>, vector<1x64xf32> -> vector<1x64xf32>
      %60 = arith.mulf %17, %28 : vector<1x64xf32>
      %61 = arith.addf %59, %60 : vector<1x64xf32>
      %c0_34 = arith.constant 0 : index
      %62 = arith.index_cast %arg12 : i32 to index
      %c0_35 = arith.constant 0 : index
      %63 = vector.load %arg8[%c0_34, %62, %c0_35] : memref<1x64x64xf32, #tpu.memory_space<vmem>>, vector<1x1x64xf32>
      %64 = vector.shape_cast %63 : vector<1x1x64xf32> to vector<1x64xf32>
      %65 = vector.shape_cast %61 : vector<1x64xf32> to vector<1x1x64xf32>
      tpu.vector_store %arg8[%c0_34, %62, %c0_35], %65 {strides = array<i32>} : memref<1x64x64xf32, #tpu.memory_space<vmem>>, vector<1x1x64xf32>,
      scf.yield %58 : vector<16x64xf32>
    }
    %c64_i32_23 = arith.constant 64 : i32
    return
  }
  func.func @transform_0(%arg0: i32) -> (i32, i32, i32) {
    %c0_i32 = arith.constant 0 : i32
    %c0_i32_0 = arith.constant 0 : i32
    %c0_i32_1 = arith.constant 0 : i32
    return %arg0, %c0_i32, %c0_i32_0 : i32, i32, i32
  }
  func.func @transform_1(%arg0: i32) -> (i32, i32, i32) {
    %c0_i32 = arith.constant 0 : i32
    %c0_i32_0 = arith.constant 0 : i32
    %c0_i32_1 = arith.constant 0 : i32
    return %arg0, %c0_i32, %c0_i32_0 : i32, i32, i32
  }
  func.func @transform_2(%arg0: i32) -> (i32, i32) {
    %c0_i32 = arith.constant 0 : i32
    %c0_i32_0 = arith.constant 0 : i32
    %c0_i32_1 = arith.constant 0 : i32
    return %c0_i32, %c0_i32_0 : i32, i32
  }
  func.func @transform_3(%arg0: i32) -> (i32, i32) {
    %c0_i32 = arith.constant 0 : i32
    %c0_i32_0 = arith.constant 0 : i32
    %c0_i32_1 = arith.constant 0 : i32
    return %c0_i32, %c0_i32_0 : i32, i32
  }
  func.func @transform_4(%arg0: i32) -> (i32, i32) {
    %c0_i32 = arith.constant 0 : i32
    %c0_i32_0 = arith.constant 0 : i32
    %c0_i32_1 = arith.constant 0 : i32
    return %c0_i32, %c0_i32_0 : i32, i32
  }
  func.func @transform_5(%arg0: i32) -> (i32, i32) {
    %c0_i32 = arith.constant 0 : i32
    %c0_i32_0 = arith.constant 0 : i32
    %c0_i32_1 = arith.constant 0 : i32
    return %c0_i32, %c0_i32_0 : i32, i32
  }
  func.func @transform_6(%arg0: i32) -> (i32, i32) {
    %c0_i32 = arith.constant 0 : i32
    %c0_i32_0 = arith.constant 0 : i32
    %c0_i32_1 = arith.constant 0 : i32
    return %c0_i32, %c0_i32_0 : i32, i32
  }
  func.func @transform_7(%arg0: i32) -> (i32, i32, i32) {
    %c0_i32 = arith.constant 0 : i32
    %c0_i32_0 = arith.constant 0 : i32
    %c0_i32_1 = arith.constant 0 : i32
    return %arg0, %c0_i32, %c0_i32_0 : i32, i32, i32
  }
}

module attributes {stable_mosaic.version = 11 : i64} {
  func.func @_gate_outproj_kernel(%arg0: i32, %arg1: memref<128x64xf32, #tpu.memory_space<vmem>>, %arg2: memref<128x64xf32, #tpu.memory_space<vmem>>, %arg3: memref<128x32xf32, #tpu.memory_space<vmem>>, %arg4: memref<1x64xf32, #tpu.memory_space<vmem>>, %arg5: memref<1x64xf32, #tpu.memory_space<vmem>>, %arg6: memref<64x32xf32, #tpu.memory_space<vmem>>, %arg7: memref<128x32xf32, #tpu.memory_space<vmem>>) attributes {dimension_semantics = [#tpu.dimension_semantics<parallel>], iteration_bounds = array<i64: 1>, scalar_prefetch = 0 : i64, scratch_operands = 0 : i64, tpu.core_type = #tpu.core_type<tc>, window_params = [{transform_indices = @transform_0, window_bounds = array<i64: 128, 64>}, {transform_indices = @transform_1, window_bounds = array<i64: 128, 64>}, {transform_indices = @transform_2, window_bounds = array<i64: 128, 32>}, {pipeline_mode = #tpu.pipeline_mode<synchronous>, transform_indices = @transform_3, window_bounds = array<i64: 1, 64>}, {pipeline_mode = #tpu.pipeline_mode<synchronous>, transform_indices = @transform_4, window_bounds = array<i64: 1, 64>}, {pipeline_mode = #tpu.pipeline_mode<synchronous>, transform_indices = @transform_5, window_bounds = array<i64: 64, 32>}, {transform_indices = @transform_6, window_bounds = array<i64: 128, 32>}]} {
    %c0 = arith.constant 0 : index
    %c0_0 = arith.constant 0 : index
    %0 = vector.load %arg1[%c0, %c0_0] : memref<128x64xf32, #tpu.memory_space<vmem>>, vector<128x64xf32>
    %cst = arith.constant dense<0.000000e+00> : vector<128xf32>
    %1 = vector.multi_reduction <add>, %0, %cst [1] : vector<128x64xf32> to vector<128xf32>
    %2 = vector.shape_cast %1 : vector<128xf32> to vector<128x1xf32>
    %cst_1 = arith.constant 6.400000e+01 : f32
    %3 = vector.broadcast %cst_1 : f32 to vector<128x1xf32>
    %4 = arith.divf %2, %3 : vector<128x1xf32>
    %5 = arith.mulf %0, %0 : vector<128x64xf32>
    %cst_2 = arith.constant dense<0.000000e+00> : vector<128xf32>
    %6 = vector.multi_reduction <add>, %5, %cst_2 [1] : vector<128x64xf32> to vector<128xf32>
    %7 = vector.shape_cast %6 : vector<128xf32> to vector<128x1xf32>
    %cst_3 = arith.constant 6.400000e+01 : f32
    %8 = vector.broadcast %cst_3 : f32 to vector<128x1xf32>
    %9 = arith.divf %7, %8 : vector<128x1xf32>
    %10 = vector.broadcast %4 : vector<128x1xf32> to vector<128x64xf32>
    %11 = arith.subf %0, %10 : vector<128x64xf32>
    %12 = arith.mulf %4, %4 : vector<128x1xf32>
    %13 = arith.subf %9, %12 : vector<128x1xf32>
    %cst_4 = arith.constant 9.99999974E-6 : f32
    %14 = vector.broadcast %cst_4 : f32 to vector<128x1xf32>
    %15 = arith.addf %13, %14 : vector<128x1xf32>
    %16 = math.rsqrt %15 : vector<128x1xf32>
    %17 = vector.broadcast %16 : vector<128x1xf32> to vector<128x64xf32>
    %18 = arith.mulf %11, %17 : vector<128x64xf32>
    %c0_5 = arith.constant 0 : index
    %c0_6 = arith.constant 0 : index
    %19 = vector.load %arg4[%c0_5, %c0_6] : memref<1x64xf32, #tpu.memory_space<vmem>>, vector<1x64xf32>
    %20 = vector.broadcast %19 : vector<1x64xf32> to vector<128x64xf32>
    %21 = arith.mulf %18, %20 : vector<128x64xf32>
    %c0_7 = arith.constant 0 : index
    %c0_8 = arith.constant 0 : index
    %22 = vector.load %arg5[%c0_7, %c0_8] : memref<1x64xf32, #tpu.memory_space<vmem>>, vector<1x64xf32>
    %23 = vector.broadcast %22 : vector<1x64xf32> to vector<128x64xf32>
    %24 = arith.addf %21, %23 : vector<128x64xf32>
    %c0_9 = arith.constant 0 : index
    %c0_10 = arith.constant 0 : index
    %25 = vector.load %arg2[%c0_9, %c0_10] : memref<128x64xf32, #tpu.memory_space<vmem>>, vector<128x64xf32>
    %cst_11 = arith.constant 0.000000e+00 : f32
    %26 = vector.broadcast %cst_11 : f32 to vector<128x64xf32>
    %27 = arith.subf %26, %25 : vector<128x64xf32>
    %28 = math.exp %27 : vector<128x64xf32>
    %cst_12 = arith.constant 1.000000e+00 : f32
    %29 = vector.broadcast %cst_12 : f32 to vector<128x64xf32>
    %30 = arith.addf %29, %28 : vector<128x64xf32>
    %cst_13 = arith.constant 1.000000e+00 : f32
    %31 = vector.broadcast %cst_13 : f32 to vector<128x64xf32>
    %32 = arith.divf %31, %30 : vector<128x64xf32>
    %33 = arith.mulf %25, %32 : vector<128x64xf32>
    %34 = arith.mulf %24, %33 : vector<128x64xf32>
    %c0_14 = arith.constant 0 : index
    %c0_15 = arith.constant 0 : index
    %35 = vector.load %arg6[%c0_14, %c0_15] : memref<64x32xf32, #tpu.memory_space<vmem>>, vector<64x32xf32>
    %cst_16 = arith.constant dense<0.000000e+00> : vector<128x32xf32>
    %36 = tpu.matmul %34, %35, %cst_16 {dimension_numbers = #tpu.dot_dimension_numbers<[1], [0], [0], [1], [0, 0, 1, 1], [], []>, precision = #tpu.contract_precision<fp32>} : vector<128x64xf32>, vector<64x32xf32>, vector<128x32xf32> -> vector<128x32xf32>
    %c0_17 = arith.constant 0 : index
    %c0_18 = arith.constant 0 : index
    %37 = vector.load %arg3[%c0_17, %c0_18] : memref<128x32xf32, #tpu.memory_space<vmem>>, vector<128x32xf32>
    %38 = arith.addf %37, %36 : vector<128x32xf32>
    %c0_19 = arith.constant 0 : index
    %c0_20 = arith.constant 0 : index
    %39 = vector.load %arg7[%c0_19, %c0_20] : memref<128x32xf32, #tpu.memory_space<vmem>>, vector<128x32xf32>
    tpu.vector_store %arg7[%c0_19, %c0_20], %38 {strides = array<i32>} : memref<128x32xf32, #tpu.memory_space<vmem>>, vector<128x32xf32>,
    return
  }
  func.func @transform_0(%arg0: i32) -> (i32, i32) {
    %c0_i32 = arith.constant 0 : i32
    %c0_i32_0 = arith.constant 0 : i32
    return %arg0, %c0_i32 : i32, i32
  }
  func.func @transform_1(%arg0: i32) -> (i32, i32) {
    %c0_i32 = arith.constant 0 : i32
    %c0_i32_0 = arith.constant 0 : i32
    return %arg0, %c0_i32 : i32, i32
  }
  func.func @transform_2(%arg0: i32) -> (i32, i32) {
    %c0_i32 = arith.constant 0 : i32
    %c0_i32_0 = arith.constant 0 : i32
    return %arg0, %c0_i32 : i32, i32
  }
  func.func @transform_3(%arg0: i32) -> (i32, i32) {
    %c0_i32 = arith.constant 0 : i32
    %c0_i32_0 = arith.constant 0 : i32
    %c0_i32_1 = arith.constant 0 : i32
    return %c0_i32, %c0_i32_0 : i32, i32
  }
  func.func @transform_4(%arg0: i32) -> (i32, i32) {
    %c0_i32 = arith.constant 0 : i32
    %c0_i32_0 = arith.constant 0 : i32
    %c0_i32_1 = arith.constant 0 : i32
    return %c0_i32, %c0_i32_0 : i32, i32
  }
  func.func @transform_5(%arg0: i32) -> (i32, i32) {
    %c0_i32 = arith.constant 0 : i32
    %c0_i32_0 = arith.constant 0 : i32
    %c0_i32_1 = arith.constant 0 : i32
    return %c0_i32, %c0_i32_0 : i32, i32
  }
  func.func @transform_6(%arg0: i32) -> (i32, i32) {
    %c0_i32 = arith.constant 0 : i32
    %c0_i32_0 = arith.constant 0 : i32
    return %arg0, %c0_i32 : i32, i32
  }
}

module attributes {stable_mosaic.version = 11 : i64} {
  func.func @_mlp_kernel(%arg0: i32, %arg1: memref<128x32xf32, #tpu.memory_space<vmem>>, %arg2: memref<32x128xf32, #tpu.memory_space<vmem>>, %arg3: memref<1x128xf32, #tpu.memory_space<vmem>>, %arg4: memref<128x32xf32, #tpu.memory_space<vmem>>, %arg5: memref<1x32xf32, #tpu.memory_space<vmem>>, %arg6: memref<128x32xf32, #tpu.memory_space<vmem>>) attributes {dimension_semantics = [#tpu.dimension_semantics<parallel>], iteration_bounds = array<i64: 1>, scalar_prefetch = 0 : i64, scratch_operands = 0 : i64, tpu.core_type = #tpu.core_type<tc>, window_params = [{transform_indices = @transform_0, window_bounds = array<i64: 128, 32>}, {pipeline_mode = #tpu.pipeline_mode<synchronous>, transform_indices = @transform_1, window_bounds = array<i64: 32, 128>}, {pipeline_mode = #tpu.pipeline_mode<synchronous>, transform_indices = @transform_2, window_bounds = array<i64: 1, 128>}, {pipeline_mode = #tpu.pipeline_mode<synchronous>, transform_indices = @transform_3, window_bounds = array<i64: 128, 32>}, {pipeline_mode = #tpu.pipeline_mode<synchronous>, transform_indices = @transform_4, window_bounds = array<i64: 1, 32>}, {transform_indices = @transform_5, window_bounds = array<i64: 128, 32>}]} {
    %c0 = arith.constant 0 : index
    %c0_0 = arith.constant 0 : index
    %0 = vector.load %arg1[%c0, %c0_0] : memref<128x32xf32, #tpu.memory_space<vmem>>, vector<128x32xf32>
    %cst = arith.constant dense<0.000000e+00> : vector<128xf32>
    %1 = vector.multi_reduction <add>, %0, %cst [1] : vector<128x32xf32> to vector<128xf32>
    %2 = vector.shape_cast %1 : vector<128xf32> to vector<128x1xf32>
    %cst_1 = arith.constant 3.200000e+01 : f32
    %3 = vector.broadcast %cst_1 : f32 to vector<128x1xf32>
    %4 = arith.divf %2, %3 : vector<128x1xf32>
    %5 = arith.mulf %0, %0 : vector<128x32xf32>
    %cst_2 = arith.constant dense<0.000000e+00> : vector<128xf32>
    %6 = vector.multi_reduction <add>, %5, %cst_2 [1] : vector<128x32xf32> to vector<128xf32>
    %7 = vector.shape_cast %6 : vector<128xf32> to vector<128x1xf32>
    %cst_3 = arith.constant 3.200000e+01 : f32
    %8 = vector.broadcast %cst_3 : f32 to vector<128x1xf32>
    %9 = arith.divf %7, %8 : vector<128x1xf32>
    %10 = vector.broadcast %4 : vector<128x1xf32> to vector<128x32xf32>
    %11 = arith.subf %0, %10 : vector<128x32xf32>
    %12 = arith.mulf %4, %4 : vector<128x1xf32>
    %13 = arith.subf %9, %12 : vector<128x1xf32>
    %cst_4 = arith.constant 9.99999974E-6 : f32
    %14 = vector.broadcast %cst_4 : f32 to vector<128x1xf32>
    %15 = arith.addf %13, %14 : vector<128x1xf32>
    %16 = math.rsqrt %15 : vector<128x1xf32>
    %17 = vector.broadcast %16 : vector<128x1xf32> to vector<128x32xf32>
    %18 = arith.mulf %11, %17 : vector<128x32xf32>
    %c0_5 = arith.constant 0 : index
    %c0_6 = arith.constant 0 : index
    %19 = vector.load %arg2[%c0_5, %c0_6] : memref<32x128xf32, #tpu.memory_space<vmem>>, vector<32x128xf32>
    %cst_7 = arith.constant dense<0.000000e+00> : vector<128x128xf32>
    %20 = tpu.matmul %18, %19, %cst_7 {dimension_numbers = #tpu.dot_dimension_numbers<[1], [0], [0], [1], [0, 0, 1, 1], [], []>, precision = #tpu.contract_precision<fp32>} : vector<128x32xf32>, vector<32x128xf32>, vector<128x128xf32> -> vector<128x128xf32>
    %c0_8 = arith.constant 0 : index
    %c0_9 = arith.constant 0 : index
    %21 = vector.load %arg3[%c0_8, %c0_9] : memref<1x128xf32, #tpu.memory_space<vmem>>, vector<1x128xf32>
    %22 = vector.broadcast %21 : vector<1x128xf32> to vector<128x128xf32>
    %23 = arith.addf %20, %22 : vector<128x128xf32>
    %cst_10 = arith.constant 5.000000e-01 : f32
    %24 = vector.broadcast %cst_10 : f32 to vector<128x128xf32>
    %25 = arith.mulf %24, %23 : vector<128x128xf32>
    %cst_11 = arith.constant 0.707106769 : f32
    %26 = vector.broadcast %cst_11 : f32 to vector<128x128xf32>
    %27 = arith.mulf %23, %26 : vector<128x128xf32>
    %28 = math.absf %27 : vector<128x128xf32>
    %cst_12 = arith.constant 0.327591091 : f32
    %29 = vector.broadcast %cst_12 : f32 to vector<128x128xf32>
    %30 = arith.mulf %29, %28 : vector<128x128xf32>
    %cst_13 = arith.constant 1.000000e+00 : f32
    %31 = vector.broadcast %cst_13 : f32 to vector<128x128xf32>
    %32 = arith.addf %31, %30 : vector<128x128xf32>
    %cst_14 = arith.constant 1.000000e+00 : f32
    %33 = vector.broadcast %cst_14 : f32 to vector<128x128xf32>
    %34 = arith.divf %33, %32 : vector<128x128xf32>
    %cst_15 = arith.constant 1.06140542 : f32
    %35 = vector.broadcast %cst_15 : f32 to vector<128x128xf32>
    %36 = arith.mulf %35, %34 : vector<128x128xf32>
    %cst_16 = arith.constant -1.45315206 : f32
    %37 = vector.broadcast %cst_16 : f32 to vector<128x128xf32>
    %38 = arith.addf %36, %37 : vector<128x128xf32>
    %39 = arith.mulf %38, %34 : vector<128x128xf32>
    %cst_17 = arith.constant 1.42141378 : f32
    %40 = vector.broadcast %cst_17 : f32 to vector<128x128xf32>
    %41 = arith.addf %39, %40 : vector<128x128xf32>
    %42 = arith.mulf %41, %34 : vector<128x128xf32>
    %cst_18 = arith.constant -0.284496725 : f32
    %43 = vector.broadcast %cst_18 : f32 to vector<128x128xf32>
    %44 = arith.addf %42, %43 : vector<128x128xf32>
    %45 = arith.mulf %44, %34 : vector<128x128xf32>
    %cst_19 = arith.constant 0.254829586 : f32
    %46 = vector.broadcast %cst_19 : f32 to vector<128x128xf32>
    %47 = arith.addf %45, %46 : vector<128x128xf32>
    %48 = arith.mulf %47, %34 : vector<128x128xf32>
    %cst_20 = arith.constant 0.000000e+00 : f32
    %49 = vector.broadcast %cst_20 : f32 to vector<128x128xf32>
    %50 = arith.subf %49, %28 : vector<128x128xf32>
    %51 = arith.mulf %50, %28 : vector<128x128xf32>
    %52 = math.exp %51 : vector<128x128xf32>
    %53 = arith.mulf %48, %52 : vector<128x128xf32>
    %cst_21 = arith.constant 1.000000e+00 : f32
    %54 = vector.broadcast %cst_21 : f32 to vector<128x128xf32>
    %55 = arith.subf %54, %53 : vector<128x128xf32>
    %cst_22 = arith.constant 0.000000e+00 : f32
    %56 = vector.broadcast %cst_22 : f32 to vector<128x128xf32>
    %57 = arith.cmpf oge, %27, %56 : vector<128x128xf32>
    %cst_23 = arith.constant 0.000000e+00 : f32
    %58 = vector.broadcast %cst_23 : f32 to vector<128x128xf32>
    %59 = arith.subf %58, %55 : vector<128x128xf32>
    %60 = arith.select %57, %55, %59 : vector<128x128xi1>, vector<128x128xf32>
    %cst_24 = arith.constant 1.000000e+00 : f32
    %61 = vector.broadcast %cst_24 : f32 to vector<128x128xf32>
    %62 = arith.addf %61, %60 : vector<128x128xf32>
    %63 = arith.mulf %25, %62 : vector<128x128xf32>
    %c0_25 = arith.constant 0 : index
    %c0_26 = arith.constant 0 : index
    %64 = vector.load %arg4[%c0_25, %c0_26] : memref<128x32xf32, #tpu.memory_space<vmem>>, vector<128x32xf32>
    %cst_27 = arith.constant dense<0.000000e+00> : vector<128x32xf32>
    %65 = tpu.matmul %63, %64, %cst_27 {dimension_numbers = #tpu.dot_dimension_numbers<[1], [0], [0], [1], [0, 0, 1, 1], [], []>, precision = #tpu.contract_precision<fp32>} : vector<128x128xf32>, vector<128x32xf32>, vector<128x32xf32> -> vector<128x32xf32>
    %66 = arith.addf %0, %65 : vector<128x32xf32>
    %c0_28 = arith.constant 0 : index
    %c0_29 = arith.constant 0 : index
    %67 = vector.load %arg5[%c0_28, %c0_29] : memref<1x32xf32, #tpu.memory_space<vmem>>, vector<1x32xf32>
    %68 = vector.broadcast %67 : vector<1x32xf32> to vector<128x32xf32>
    %69 = arith.addf %66, %68 : vector<128x32xf32>
    %c0_30 = arith.constant 0 : index
    %c0_31 = arith.constant 0 : index
    %70 = vector.load %arg6[%c0_30, %c0_31] : memref<128x32xf32, #tpu.memory_space<vmem>>, vector<128x32xf32>
    tpu.vector_store %arg6[%c0_30, %c0_31], %69 {strides = array<i32>} : memref<128x32xf32, #tpu.memory_space<vmem>>, vector<128x32xf32>,
    return
  }
  func.func @transform_0(%arg0: i32) -> (i32, i32) {
    %c0_i32 = arith.constant 0 : i32
    %c0_i32_0 = arith.constant 0 : i32
    return %arg0, %c0_i32 : i32, i32
  }
  func.func @transform_1(%arg0: i32) -> (i32, i32) {
    %c0_i32 = arith.constant 0 : i32
    %c0_i32_0 = arith.constant 0 : i32
    %c0_i32_1 = arith.constant 0 : i32
    return %c0_i32, %c0_i32_0 : i32, i32
  }
  func.func @transform_2(%arg0: i32) -> (i32, i32) {
    %c0_i32 = arith.constant 0 : i32
    %c0_i32_0 = arith.constant 0 : i32
    %c0_i32_1 = arith.constant 0 : i32
    return %c0_i32, %c0_i32_0 : i32, i32
  }
  func.func @transform_3(%arg0: i32) -> (i32, i32) {
    %c0_i32 = arith.constant 0 : i32
    %c0_i32_0 = arith.constant 0 : i32
    %c0_i32_1 = arith.constant 0 : i32
    return %c0_i32, %c0_i32_0 : i32, i32
  }
  func.func @transform_4(%arg0: i32) -> (i32, i32) {
    %c0_i32 = arith.constant 0 : i32
    %c0_i32_0 = arith.constant 0 : i32
    %c0_i32_1 = arith.constant 0 : i32
    return %c0_i32, %c0_i32_0 : i32, i32
  }
  func.func @transform_5(%arg0: i32) -> (i32, i32) {
    %c0_i32 = arith.constant 0 : i32
    %c0_i32_0 = arith.constant 0 : i32
    return %arg0, %c0_i32 : i32, i32
  }
}

</mosaic_0001>

<llo_original>
// kernel: vss_block_forward.5
$region0: #{vss_block_forward.5}
  #allocation0 [shape = 'u32[]', space=smem, size = 0x4, offset = 0x4, fixed_abs, tag = 'smem constant byte address 0x4 - core index']
  #allocation1 [shape = 'u32[144,128]{1,0:T(1,128)}', space=vmem, size = 0x12000, scoped, tag = 'internal scratch']
  %s0 = inlined_call_operand.vmem [shape: f32[128,32], index: 0, kind: input, shape index: {}]
  %s1 = inlined_call_operand.vmem [shape: f32[32,192], index: 1, kind: input, shape index: {}]
  %s2 = inlined_call_operand.vmem [shape: f32[1,192], index: 2, kind: input, shape index: {}]
  %s3 = inlined_call_operand.vmem [shape: f32[128,192], index: 3, kind: output, shape index: {}]
  %s4 = sld [smem:[#allocation0]]
  $region22: #{vss_block_forward.5} parent=0
    _
  %s6 = ssub.s32 1, %s4
  %s7 = scalar_select 0, %s6, %s4
  // Predicated region
  $region2: #{vss_block_forward.5} parent=0 // pred_check
    _
  $region3: #{vss_block_forward.5} parent=0 // pred_check_branch
    %9 = sbr.rel (0) target = $region5
  $region4: #{vss_block_forward.5} parent=0 // pred_region
    _
  $region5: #{vss_block_forward.5} parent=0 // pred_fallthru
    _
  // Predicated region
  $region6: #{vss_block_forward.5} parent=0 // pred_check
    _
  $region7: #{vss_block_forward.5} parent=0 // pred_check_branch
    %11 = sbr.rel (0) target = $region9
  $region8: #{vss_block_forward.5} parent=0 // pred_region
    _
  $region9: #{vss_block_forward.5} parent=0 // pred_fallthru
    _
  // Predicated region
  $region10: #{vss_block_forward.5} parent=0 // pred_check
    _
  $region11: #{vss_block_forward.5} parent=0 // pred_check_branch
    %13 = sbr.rel (0) target = $region13
  $region12: #{vss_block_forward.5} parent=0 // pred_region
    _
  $region13: #{vss_block_forward.5} parent=0 // pred_fallthru
    _
  %v14 = vld [vmem:[%s0] sm:$0xff]
  %v15 = vld [vmem:[%s0 + $0x8] sm:$0xff]
  %v16 = vld [vmem:[%s0 + $0x10] sm:$0xff]
  %v17 = vld [vmem:[%s0 + $0x18] sm:$0xff]
  %v18 = vld [vmem:[%s0 + $0x20] sm:$0xff]
  %v19 = vld [vmem:[%s0 + $0x28] sm:$0xff]
  %v20 = vld [vmem:[%s0 + $0x30] sm:$0xff]
  %v21 = vld [vmem:[%s0 + $0x38] sm:$0xff]
  %v22 = vld [vmem:[%s0 + $0x40] sm:$0xff]
  %v23 = vld [vmem:[%s0 + $0x48] sm:$0xff]
  %v24 = vld [vmem:[%s0 + $0x50] sm:$0xff]
  %v25 = vld [vmem:[%s0 + $0x58] sm:$0xff]
  %v26 = vld [vmem:[%s0 + $0x60] sm:$0xff]
  %v27 = vld [vmem:[%s0 + $0x68] sm:$0xff]
  %v28 = vld [vmem:[%s0 + $0x70] sm:$0xff]
  %v29 = vld [vmem:[%s0 + $0x78] sm:$0xff]
  %vm30 = vcmask 261120
  %v31 = vsel %vm30, %v14, 0.0
  %32 = vadd.xlane.f32.xlu0 %v31
  %v33 = vpop.xlane.xlu0 %32
  %v34 = vsel %vm30, %v15, 0.0
  %35 = vadd.xlane.f32.xlu0 %v34
  %v36 = vpop.xlane.xlu0 %35
  %v37 = vsel %vm30, %v16, 0.0
  %38 = vadd.xlane.f32.xlu0 %v37
  %v39 = vpop.xlane.xlu0 %38
  %v40 = vsel %vm30, %v17, 0.0
  %41 = vadd.xlane.f32.xlu0 %v40
  %v42 = vpop.xlane.xlu0 %41
  %v43 = vsel %vm30, %v18, 0.0
  %44 = vadd.xlane.f32.xlu0 %v43
  %v45 = vpop.xlane.xlu0 %44
  %v46 = vsel %vm30, %v19, 0.0
  %47 = vadd.xlane.f32.xlu0 %v46
  %v48 = vpop.xlane.xlu0 %47
  %v49 = vsel %vm30, %v20, 0.0
  %50 = vadd.xlane.f32.xlu0 %v49
  %v51 = vpop.xlane.xlu0 %50
  %v52 = vsel %vm30, %v21, 0.0
  %53 = vadd.xlane.f32.xlu0 %v52
  %v54 = vpop.xlane.xlu0 %53
  %v55 = vsel %vm30, %v22, 0.0
  %56 = vadd.xlane.f32.xlu0 %v55
  %v57 = vpop.xlane.xlu0 %56
  %v58 = vsel %vm30, %v23, 0.0
  %59 = vadd.xlane.f32.xlu0 %v58
  %v60 = vpop.xlane.xlu0 %59
  %v61 = vsel %vm30, %v24, 0.0
  %62 = vadd.xlane.f32.xlu0 %v61
  %v63 = vpop.xlane.xlu0 %62
  %v64 = vsel %vm30, %v25, 0.0
  %65 = vadd.xlane.f32.xlu0 %v64
  %v66 = vpop.xlane.xlu0 %65
  %v67 = vsel %vm30, %v26, 0.0
  %68 = vadd.xlane.f32.xlu0 %v67
  %v69 = vpop.xlane.xlu0 %68
  %v70 = vsel %vm30, %v27, 0.0
  %71 = vadd.xlane.f32.xlu0 %v70
  %v72 = vpop.xlane.xlu0 %71
  %v73 = vsel %vm30, %v28, 0.0
  %74 = vadd.xlane.f32.xlu0 %v73
  %v75 = vpop.xlane.xlu0 %74
  %v76 = vsel %vm30, %v29, 0.0
  %77 = vadd.xlane.f32.xlu0 %v76
  %v78 = vpop.xlane.xlu0 %77
  %v79 = vrcp.pop 32.0
  %v80 = vmul.f32 %v33, %v79
  %v81 = vmul.f32 %v36, %v79
  %v82 = vmul.f32 %v39, %v79
  %v83 = vmul.f32 %v42, %v79
  %v84 = vmul.f32 %v45, %v79
  %v85 = vmul.f32 %v48, %v79
  %v86 = vmul.f32 %v51, %v79
  %v87 = vmul.f32 %v54, %v79
  %v88 = vmul.f32 %v57, %v79
  %v89 = vmul.f32 %v60, %v79
  %v90 = vmul.f32 %v63, %v79
  %v91 = vmul.f32 %v66, %v79
  %v92 = vmul.f32 %v69, %v79
  %v93 = vmul.f32 %v72, %v79
  %v94 = vmul.f32 %v75, %v79
  %v95 = vmul.f32 %v78, %v79
  %v96 = vmul.f32 %v14, %v14
  %v97 = vmul.f32 %v15, %v15
  %v98 = vmul.f32 %v16, %v16
  %v99 = vmul.f32 %v17, %v17
  %v100 = vmul.f32 %v18, %v18
  %v101 = vmul.f32 %v19, %v19
  %v102 = vmul.f32 %v20, %v20
  %v103 = vmul.f32 %v21, %v21
  %v104 = vmul.f32 %v22, %v22
  %v105 = vmul.f32 %v23, %v23
  %v106 = vmul.f32 %v24, %v24
  %v107 = vmul.f32 %v25, %v25
  %v108 = vmul.f32 %v26, %v26
  %v109 = vmul.f32 %v27, %v27
  %v110 = vmul.f32 %v28, %v28
  %v111 = vmul.f32 %v29, %v29
  %v112 = vsel %vm30, %v96, 0.0
  %113 = vadd.xlane.f32.xlu0 %v112
  %v114 = vpop.xlane.xlu0 %113
  %v115 = vsel %vm30, %v97, 0.0
  %116 = vadd.xlane.f32.xlu0 %v115
  %v117 = vpop.xlane.xlu0 %116
  %v118 = vsel %vm30, %v98, 0.0
  %119 = vadd.xlane.f32.xlu0 %v118
  %v120 = vpop.xlane.xlu0 %119
  %v121 = vsel %vm30, %v99, 0.0
  %122 = vadd.xlane.f32.xlu0 %v121
  %v123 = vpop.xlane.xlu0 %122
  %v124 = vsel %vm30, %v100, 0.0
  %125 = vadd.xlane.f32.xlu0 %v124
  %v126 = vpop.xlane.xlu0 %125
  %v127 = vsel %vm30, %v101, 0.0
  %128 = vadd.xlane.f32.xlu0 %v127
  %v129 = vpop.xlane.xlu0 %128
  %v130 = vsel %vm30, %v102, 0.0
  %131 = vadd.xlane.f32.xlu0 %v130
  %v132 = vpop.xlane.xlu0 %131
  %v133 = vsel %vm30, %v103, 0.0
  %134 = vadd.xlane.f32.xlu0 %v133
  %v135 = vpop.xlane.xlu0 %134
  %v136 = vsel %vm30, %v104, 0.0
  %137 = vadd.xlane.f32.xlu0 %v136
  %v138 = vpop.xlane.xlu0 %137
  %v139 = vsel %vm30, %v105, 0.0
  %140 = vadd.xlane.f32.xlu0 %v139
  %v141 = vpop.xlane.xlu0 %140
  %v142 = vsel %vm30, %v106, 0.0
  %143 = vadd.xlane.f32.xlu0 %v142
  %v144 = vpop.xlane.xlu0 %143
  %v145 = vsel %vm30, %v107, 0.0
  %146 = vadd.xlane.f32.xlu0 %v145
  %v147 = vpop.xlane.xlu0 %146
  %v148 = vsel %vm30, %v108, 0.0
  %149 = vadd.xlane.f32.xlu0 %v148
  %v150 = vpop.xlane.xlu0 %149
  %v151 = vsel %vm30, %v109, 0.0
  %152 = vadd.xlane.f32.xlu0 %v151
  %v153 = vpop.xlane.xlu0 %152
  %v154 = vsel %vm30, %v110, 0.0
  %155 = vadd.xlane.f32.xlu0 %v154
  %v156 = vpop.xlane.xlu0 %155
  %v157 = vsel %vm30, %v111, 0.0
  %158 = vadd.xlane.f32.xlu0 %v157
  %v159 = vpop.xlane.xlu0 %158
  %v160 = vmul.f32 %v114, %v79
  %v161 = vmul.f32 %v117, %v79
  %v162 = vmul.f32 %v120, %v79
  %v163 = vmul.f32 %v123, %v79
  %v164 = vmul.f32 %v126, %v79
  %v165 = vmul.f32 %v129, %v79
  %v166 = vmul.f32 %v132, %v79
  %v167 = vmul.f32 %v135, %v79
  %v168 = vmul.f32 %v138, %v79
  %v169 = vmul.f32 %v141, %v79
  %v170 = vmul.f32 %v144, %v79
  %v171 = vmul.f32 %v147, %v79
  %v172 = vmul.f32 %v150, %v79
  %v173 = vmul.f32 %v153, %v79
  %v174 = vmul.f32 %v156, %v79
  %v175 = vmul.f32 %v159, %v79
  %v176 = vsub.f32 %v14, %v80
  %v177 = vsub.f32 %v15, %v81
  %v178 = vsub.f32 %v16, %v82
  %v179 = vsub.f32 %v17, %v83
  %v180 = vsub.f32 %v18, %v84
  %v181 = vsub.f32 %v19, %v85
  %v182 = vsub.f32 %v20, %v86
  %v183 = vsub.f32 %v21, %v87
  %v184 = vsub.f32 %v22, %v88
  %v185 = vsub.f32 %v23, %v89
  %v186 = vsub.f32 %v24, %v90
  %v187 = vsub.f32 %v25, %v91
  %v188 = vsub.f32 %v26, %v92
  %v189 = vsub.f32 %v27, %v93
  %v190 = vsub.f32 %v28, %v94
  %v191 = vsub.f32 %v29, %v95
  %v192 = vmul.f32 %v80, %v80
  %v193 = vmul.f32 %v81, %v81
  %v194 = vmul.f32 %v82, %v82
  %v195 = vmul.f32 %v83, %v83
  %v196 = vmul.f32 %v84, %v84
  %v197 = vmul.f32 %v85, %v85
  %v198 = vmul.f32 %v86, %v86
  %v199 = vmul.f32 %v87, %v87
  %v200 = vmul.f32 %v88, %v88
  %v201 = vmul.f32 %v89, %v89
  %v202 = vmul.f32 %v90, %v90
  %v203 = vmul.f32 %v91, %v91
  %v204 = vmul.f32 %v92, %v92
  %v205 = vmul.f32 %v93, %v93
  %v206 = vmul.f32 %v94, %v94
  %v207 = vmul.f32 %v95, %v95
  %v208 = vsub.f32 %v160, %v192
  %v209 = vsub.f32 %v161, %v193
  %v210 = vsub.f32 %v162, %v194
  %v211 = vsub.f32 %v163, %v195
  %v212 = vsub.f32 %v164, %v196
  %v213 = vsub.f32 %v165, %v197
  %v214 = vsub.f32 %v166, %v198
  %v215 = vsub.f32 %v167, %v199
  %v216 = vsub.f32 %v168, %v200
  %v217 = vsub.f32 %v169, %v201
  %v218 = vsub.f32 %v170, %v202
  %v219 = vsub.f32 %v171, %v203
  %v220 = vsub.f32 %v172, %v204
  %v221 = vsub.f32 %v173, %v205
  %v222 = vsub.f32 %v174, %v206
  %v223 = vsub.f32 %v175, %v207
  %v224 = vadd.f32 %v208, 1e-05
  %v225 = vadd.f32 %v209, 1e-05
  %v226 = vadd.f32 %v210, 1e-05
  %v227 = vadd.f32 %v211, 1e-05
  %v228 = vadd.f32 %v212, 1e-05
  %v229 = vadd.f32 %v213, 1e-05
  %v230 = vadd.f32 %v214, 1e-05
  %v231 = vadd.f32 %v215, 1e-05
  %v232 = vadd.f32 %v216, 1e-05
  %v233 = vadd.f32 %v217, 1e-05
  %v234 = vadd.f32 %v218, 1e-05
  %v235 = vadd.f32 %v219, 1e-05
  %v236 = vadd.f32 %v220, 1e-05
  %v237 = vadd.f32 %v221, 1e-05
  %v238 = vadd.f32 %v222, 1e-05
  %v239 = vadd.f32 %v223, 1e-05
  %v240 = vrsqrt.pop %v224
  %v241 = vrsqrt.pop %v225
  %v242 = vrsqrt.pop %v226
  %v243 = vrsqrt.pop %v227
  %v244 = vrsqrt.pop %v228
  %v245 = vrsqrt.pop %v229
  %v246 = vrsqrt.pop %v230
  %v247 = vrsqrt.pop %v231
  %v248 = vrsqrt.pop %v232
  %v249 = vrsqrt.pop %v233
  %v250 = vrsqrt.pop %v234
  %v251 = vrsqrt.pop %v235
  %v252 = vrsqrt.pop %v236
  %v253 = vrsqrt.pop %v237
  %v254 = vrsqrt.pop %v238
  %v255 = vrsqrt.pop %v239
  %v256 = vmul.f32 %v176, %v240
  %v257 = vmul.f32 %v177, %v241
  %v258 = vmul.f32 %v178, %v242
  %v259 = vmul.f32 %v179, %v243
  %v260 = vmul.f32 %v180, %v244
  %v261 = vmul.f32 %v181, %v245
  %v262 = vmul.f32 %v182, %v246
  %v263 = vmul.f32 %v183, %v247
  %v264 = vmul.f32 %v184, %v248
  %v265 = vmul.f32 %v185, %v249
  %v266 = vmul.f32 %v186, %v250
  %v267 = vmul.f32 %v187, %v251
  %v268 = vmul.f32 %v188, %v252
  %v269 = vmul.f32 %v189, %v253
  %v270 = vmul.f32 %v190, %v254
  %v271 = vmul.f32 %v191, %v255
  %v272 = vld [vmem:[%s1] sm:$0xff]
  %v273 = vld [vmem:[%s1 + $0x8] sm:$0xff]
  %v274 = vld [vmem:[%s1 + $0x10] sm:$0xff]
  %v275 = vld [vmem:[%s1 + $0x18] sm:$0xff]
  %v276 = vld [vmem:[%s1 + $0x20] sm:$0xff]
  %v277 = vld [vmem:[%s1 + $0x28] sm:$0xff]
  %v278 = vld [vmem:[%s1 + $0x30] sm:$0xff]
  %v279 = vld [vmem:[%s1 + $0x38] sm:$0xff]
  %v280 = vld [vmem:[%s2] sm:$0x3]
  %v282 = vlaneseq
  %v283 = vshrl.u32 %v282, 7
  %v284 = vsub.s32 0, %v283
  %v285 = vrot.slane %v280, %v284
  %v286 = vlaneseq
  %v287 = vshrl.u32 %v286, 7
  %v288 = vsub.s32 1, %v287
  %v289 = vrot.slane %v280, %v288
  %v293 = vsel %vm30, %v256, 0
  %v296 = vsel %vm30, %v257, 0
  %v299 = vsel %vm30, %v258, 0
  %v302 = vsel %vm30, %v259, 0
  %v305 = vsel %vm30, %v260, 0
  %v308 = vsel %vm30, %v261, 0
  %v311 = vsel %vm30, %v262, 0
  %v314 = vsel %vm30, %v263, 0
  %v317 = vsel %vm30, %v264, 0
  %v320 = vsel %vm30, %v265, 0
  %v323 = vsel %vm30, %v266, 0
  %v326 = vsel %vm30, %v267, 0
  %v329 = vsel %vm30, %v268, 0
  %v332 = vsel %vm30, %v269, 0
  %v335 = vsel %vm30, %v270, 0
  %v338 = vsel %vm30, %v271, 0
  %v340 = vand.u32 %v273, 4294901760
  %341 = vmatprep.subr.mxu0 %v340
  %v342 = vand.u32 %v272, 4294901760
  %343 = vmatpush1.msra.mxu0 %v342
  %v344 = vand.u32 %v275, 4294901760
  %345 = vmatprep.subr.mxu0 %v344
  %v346 = vand.u32 %v274, 4294901760
  %347 = vmatpush1.msra.mxu0 %v346
  %v348 = vand.u32 %v277, 4294901760
  %349 = vmatprep.subr.mxu0 %v348
  %v350 = vand.u32 %v276, 4294901760
  %351 = vmatpush1.msra.mxu0 %v350
  %v352 = vand.u32 %v279, 4294901760
  %353 = vmatprep.subr.mxu0 %v352
  %v354 = vand.u32 %v278, 4294901760
  %355 = vmatpush1.msra.mxu0 %v354
  %356 = vmatprep.subr.mxu0 0.0
  %357 = vmatpush1.msra.mxu0 0.0
  %358 = vmatprep.subr.mxu0 0.0
  %359 = vmatpush1.msra.mxu0 0.0
  %360 = vmatprep.subr.mxu0 0.0
  %361 = vmatpush1.msra.mxu0 0.0
  %362 = vmatprep.subr.mxu0 0.0
  %363 = vmatpush1.msra.mxu0 0.0
  %364 = vmatprep.subr.mxu0 0.0
  %365 = vmatpush1.msra.mxu0 0.0
  %366 = vmatprep.subr.mxu0 0.0
  %367 = vmatpush1.msra.mxu0 0.0
  %368 = vmatprep.subr.mxu0 0.0
  %369 = vmatpush1.msra.mxu0 0.0
  %370 = vmatprep.subr.mxu0 0.0
  %371 = vmatpush1.msra.mxu0 0.0
  %372 = vmatprep.subr.mxu0 0.0
  %373 = vmatpush1.msra.mxu0 0.0
  %374 = vmatprep.subr.mxu0 0.0
  %375 = vmatpush1.msra.mxu0 0.0
  %376 = vmatprep.subr.mxu0 0.0
  %377 = vmatpush1.msra.mxu0 0.0
  %378 = vmatprep.subr.mxu0 0.0
  %379 = vmatpush1.msra.mxu0 0.0
  %380 = vmatprep.subr.mxu0 0.0
  %381 = vmatpush1.msra.mxu0 0.0
  %382 = vmatprep.subr.mxu0 0.0
  %383 = vmatpush1.msra.mxu0 0.0
  %384 = vmatprep.subr.mxu0 0.0
  %385 = vmatpush1.msra.mxu0 0.0
  %386 = vmatprep.subr.mxu0 0.0
  %387 = vmatpush1.msra.mxu0 0.0
  %388 = vmatprep.subr.mxu0 0.0
  %389 = vmatpush1.msra.mxu0 0.0
  %390 = vmatprep.subr.mxu0 0.0
  %391 = vmatpush1.msra.mxu0 0.0
  %392 = vmatprep.subr.mxu0 0.0
  %393 = vmatpush1.msra.mxu0 0.0
  %394 = vmatprep.subr.mxu0 0.0
  %395 = vmatpush1.msra.mxu0 0.0
  %396 = vmatprep.subr.mxu0 0.0
  %397 = vmatpush1.msra.mxu0 0.0
  %398 = vmatprep.subr.mxu0 0.0
  %399 = vmatpush1.msra.mxu0 0.0
  %400 = vmatprep.subr.mxu0 0.0
  %401 = vmatpush1.msra.mxu0 0.0
  %402 = vmatprep.subr.mxu0 0.0
  %403 = vmatpush1.msra.mxu0 0.0
  %404 = vmatprep.subr.mxu0 0.0
  %405 = vmatpush1.msra.mxu0 0.0
  %406 = vmatprep.subr.mxu0 0.0
  %407 = vmatpush1.msra.mxu0 0.0
  %408 = vmatprep.subr.mxu0 0.0
  %409 = vmatpush1.msra.mxu0 0.0
  %410 = vmatprep.subr.mxu0 0.0
  %411 = vmatpush1.msra.mxu0 0.0
  %412 = vmatprep.mubr.f32.mxu0 0.0
  %v413 = vand.u32 %v293, 4294901760
  %v414 = vsub.f32 %v293, %v413
  %v415 = vand.u32 %v414, 4294901760
  %v416 = vsub.f32 %v414, %v415
  %v417 = vand.u32 %v416, 4294901760
  %418 = vmatmul.mubr.f32.gmra.mrb[0].mxu0 %v417
  %v419 = vpop.f32.mrb[0].mxu0
  %v420 = vadd.f32 %v285, %v419
  %v421 = vpop.f32.mrb[0].mxu0
  %v422 = vadd.f32 %v289, %v421
  %423 = vmatprep.mubr.f32.mxu0 0.0
  %v424 = vand.u32 %v296, 4294901760
  %v425 = vsub.f32 %v296, %v424
  %v426 = vand.u32 %v425, 4294901760
  %v427 = vsub.f32 %v425, %v426
  %v428 = vand.u32 %v427, 4294901760
  %429 = vmatmul.mubr.f32.gmra.mrb[0].mxu0 %v428
  %v430 = vpop.f32.mrb[0].mxu0
  %v431 = vadd.f32 %v285, %v430
  %v432 = vpop.f32.mrb[0].mxu0
  %v433 = vadd.f32 %v289, %v432
  %434 = vmatprep.mubr.f32.mxu0 0.0
  %v435 = vand.u32 %v299, 4294901760
  %v436 = vsub.f32 %v299, %v435
  %v437 = vand.u32 %v436, 4294901760
  %v438 = vsub.f32 %v436, %v437
  %v439 = vand.u32 %v438, 4294901760
  %440 = vmatmul.mubr.f32.gmra.mrb[0].mxu0 %v439
  %v441 = vpop.f32.mrb[0].mxu0
  %v442 = vadd.f32 %v285, %v441
  %v443 = vpop.f32.mrb[0].mxu0
  %v444 = vadd.f32 %v289, %v443
  %445 = vmatprep.mubr.f32.mxu0 0.0
  %v446 = vand.u32 %v302, 4294901760
  %v447 = vsub.f32 %v302, %v446
  %v448 = vand.u32 %v447, 4294901760
  %v449 = vsub.f32 %v447, %v448
  %v450 = vand.u32 %v449, 4294901760
  %451 = vmatmul.mubr.f32.gmra.mrb[0].mxu0 %v450
  %v452 = vpop.f32.mrb[0].mxu0
  %v453 = vadd.f32 %v285, %v452
  %v454 = vpop.f32.mrb[0].mxu0
  %v455 = vadd.f32 %v289, %v454
  %456 = vmatprep.mubr.f32.mxu0 0.0
  %v457 = vand.u32 %v305, 4294901760
  %v458 = vsub.f32 %v305, %v457
  %v459 = vand.u32 %v458, 4294901760
  %v460 = vsub.f32 %v458, %v459
  %v461 = vand.u32 %v460, 4294901760
  %462 = vmatmul.mubr.f32.gmra.mrb[0].mxu0 %v461
  %v463 = vpop.f32.mrb[0].mxu0
  %v464 = vadd.f32 %v285, %v463
  %v465 = vpop.f32.mrb[0].mxu0
  %v466 = vadd.f32 %v289, %v465
  %467 = vmatprep.mubr.f32.mxu0 0.0
  %v468 = vand.u32 %v308, 4294901760
  %v469 = vsub.f32 %v308, %v468
  %v470 = vand.u32 %v469, 4294901760
  %v471 = vsub.f32 %v469, %v470
  %v472 = vand.u32 %v471, 4294901760
  %473 = vmatmul.mubr.f32.gmra.mrb[0].mxu0 %v472
  %v474 = vpop.f32.mrb[0].mxu0
  %v475 = vadd.f32 %v285, %v474
  %v476 = vpop.f32.mrb[0].mxu0
  %v477 = vadd.f32 %v289, %v476
  %478 = vmatprep.mubr.f32.mxu0 0.0
  %v479 = vand.u32 %v311, 4294901760
  %v480 = vsub.f32 %v311, %v479
  %v481 = vand.u32 %v480, 4294901760
  %v482 = vsub.f32 %v480, %v481
  %v483 = vand.u32 %v482, 4294901760
  %484 = vmatmul.mubr.f32.gmra.mrb[0].mxu0 %v483
  %v485 = vpop.f32.mrb[0].mxu0
  %v486 = vadd.f32 %v285, %v485
  %v487 = vpop.f32.mrb[0].mxu0
  %v488 = vadd.f32 %v289, %v487
  %489 = vmatprep.mubr.f32.mxu0 0.0
  %v490 = vand.u32 %v314, 4294901760
  %v491 = vsub.f32 %v314, %v490
  %v492 = vand.u32 %v491, 4294901760
  %v493 = vsub.f32 %v491, %v492
  %v494 = vand.u32 %v493, 4294901760
  %495 = vmatmul.mubr.f32.gmra.mrb[0].mxu0 %v494
  %v496 = vpop.f32.mrb[0].mxu0
  %v497 = vadd.f32 %v285, %v496
  %v498 = vpop.f32.mrb[0].mxu0
  %v499 = vadd.f32 %v289, %v498
  %500 = vmatprep.mubr.f32.mxu0 0.0
  %v501 = vand.u32 %v317, 4294901760
  %v502 = vsub.f32 %v317, %v501
  %v503 = vand.u32 %v502, 4294901760
  %v504 = vsub.f32 %v502, %v503
  %v505 = vand.u32 %v504, 4294901760
  %506 = vmatmul.mubr.f32.gmra.mrb[0].mxu0 %v505
  %v507 = vpop.f32.mrb[0].mxu0
  %v508 = vadd.f32 %v285, %v507
  %v509 = vpop.f32.mrb[0].mxu0
  %v510 = vadd.f32 %v289, %v509
  %511 = vmatprep.mubr.f32.mxu0 0.0
  %v512 = vand.u32 %v320, 4294901760
  %v513 = vsub.f32 %v320, %v512
  %v514 = vand.u32 %v513, 4294901760
  %v515 = vsub.f32 %v513, %v514
  %v516 = vand.u32 %v515, 4294901760
  %517 = vmatmul.mubr.f32.gmra.mrb[0].mxu0 %v516
  %v518 = vpop.f32.mrb[0].mxu0
  %v519 = vadd.f32 %v285, %v518
  %v520 = vpop.f32.mrb[0].mxu0
  %v521 = vadd.f32 %v289, %v520
  %522 = vmatprep.mubr.f32.mxu0 0.0
  %v523 = vand.u32 %v323, 4294901760
  %v524 = vsub.f32 %v323, %v523
  %v525 = vand.u32 %v524, 4294901760
  %v526 = vsub.f32 %v524, %v525
  %v527 = vand.u32 %v526, 4294901760
  %528 = vmatmul.mubr.f32.gmra.mrb[0].mxu0 %v527
  %v529 = vpop.f32.mrb[0].mxu0
  %v530 = vadd.f32 %v285, %v529
  %v531 = vpop.f32.mrb[0].mxu0
  %v532 = vadd.f32 %v289, %v531
  %533 = vmatprep.mubr.f32.mxu0 0.0
  %v534 = vand.u32 %v326, 4294901760
  %v535 = vsub.f32 %v326, %v534
  %v536 = vand.u32 %v535, 4294901760
  %v537 = vsub.f32 %v535, %v536
  %v538 = vand.u32 %v537, 4294901760
  %539 = vmatmul.mubr.f32.gmra.mrb[0].mxu0 %v538
  %v540 = vpop.f32.mrb[0].mxu0
  %v541 = vadd.f32 %v285, %v540
  %v542 = vpop.f32.mrb[0].mxu0
  %v543 = vadd.f32 %v289, %v542
  %544 = vmatprep.mubr.f32.mxu0 0.0
  %v545 = vand.u32 %v329, 4294901760
  %v546 = vsub.f32 %v329, %v545
  %v547 = vand.u32 %v546, 4294901760
  %v548 = vsub.f32 %v546, %v547
  %v549 = vand.u32 %v548, 4294901760
  %550 = vmatmul.mubr.f32.gmra.mrb[0].mxu0 %v549
  %v551 = vpop.f32.mrb[0].mxu0
  %v552 = vadd.f32 %v285, %v551
  %v553 = vpop.f32.mrb[0].mxu0
  %v554 = vadd.f32 %v289, %v553
  %555 = vmatprep.mubr.f32.mxu0 0.0
  %v556 = vand.u32 %v332, 4294901760
  %v557 = vsub.f32 %v332, %v556
  %v558 = vand.u32 %v557, 4294901760
  %v559 = vsub.f32 %v557, %v558
  %v560 = vand.u32 %v559, 4294901760
  %561 = vmatmul.mubr.f32.gmra.mrb[0].mxu0 %v560
  %v562 = vpop.f32.mrb[0].mxu0
  %v563 = vadd.f32 %v285, %v562
  %v564 = vpop.f32.mrb[0].mxu0
  %v565 = vadd.f32 %v289, %v564
  %566 = vmatprep.mubr.f32.mxu0 0.0
  %v567 = vand.u32 %v335, 4294901760
  %v568 = vsub.f32 %v335, %v567
  %v569 = vand.u32 %v568, 4294901760
  %v570 = vsub.f32 %v568, %v569
  %v571 = vand.u32 %v570, 4294901760
  %572 = vmatmul.mubr.f32.gmra.mrb[0].mxu0 %v571
  %v573 = vpop.f32.mrb[0].mxu0
  %v574 = vadd.f32 %v285, %v573
  %v575 = vpop.f32.mrb[0].mxu0
  %v576 = vadd.f32 %v289, %v575
  %577 = vmatprep.mubr.f32.mxu0 0.0
  %v578 = vand.u32 %v338, 4294901760
  %v579 = vsub.f32 %v338, %v578
  %v580 = vand.u32 %v579, 4294901760
  %v581 = vsub.f32 %v579, %v580
  %v582 = vand.u32 %v581, 4294901760
  %583 = vmatmul.mubr.f32.gmra.mrb[0].mxu0 %v582
  %v584 = vpop.f32.mrb[0].mxu0
  %v585 = vadd.f32 %v285, %v584
  %v586 = vpop.f32.mrb[0].mxu0
  %v587 = vadd.f32 %v289, %v586
  %588 = vdwg.mxu0
  %v589 = vand.u32 %v273, 4294901760
  %v590 = vsub.f32 %v273, %v589
  %v591 = vand.u32 %v590, 4294901760
  %v592 = vsub.f32 %v590, %v591
  %v593 = vand.u32 %v592, 4294901760
  %594 = vmatprep.subr.mxu0 %v593
  %v595 = vand.u32 %v272, 4294901760
  %v596 = vsub.f32 %v272, %v595
  %v597 = vand.u32 %v596, 4294901760
  %v598 = vsub.f32 %v596, %v597
  %v599 = vand.u32 %v598, 4294901760
  %600 = vmatpush1.msra.mxu0 %v599
  %v601 = vand.u32 %v275, 4294901760
  %v602 = vsub.f32 %v275, %v601
  %v603 = vand.u32 %v602, 4294901760
  %v604 = vsub.f32 %v602, %v603
  %v605 = vand.u32 %v604, 4294901760
  %606 = vmatprep.subr.mxu0 %v605
  %v607 = vand.u32 %v274, 4294901760
  %v608 = vsub.f32 %v274, %v607
  %v609 = vand.u32 %v608, 4294901760
  %v610 = vsub.f32 %v608, %v609
  %v611 = vand.u32 %v610, 4294901760
  %612 = vmatpush1.msra.mxu0 %v611
  %v613 = vand.u32 %v277, 4294901760
  %v614 = vsub.f32 %v277, %v613
  %v615 = vand.u32 %v614, 4294901760
  %v616 = vsub.f32 %v614, %v615
  %v617 = vand.u32 %v616, 4294901760
  %618 = vmatprep.subr.mxu0 %v617
  %v619 = vand.u32 %v276, 4294901760
  %v620 = vsub.f32 %v276, %v619
  %v621 = vand.u32 %v620, 4294901760
  %v622 = vsub.f32 %v620, %v621
  %v623 = vand.u32 %v622, 4294901760
  %624 = vmatpush1.msra.mxu0 %v623
  %v625 = vand.u32 %v279, 4294901760
  %v626 = vsub.f32 %v279, %v625
  %v627 = vand.u32 %v626, 4294901760
  %v628 = vsub.f32 %v626, %v627
  %v629 = vand.u32 %v628, 4294901760
  %630 = vmatprep.subr.mxu0 %v629
  %v631 = vand.u32 %v278, 4294901760
  %v632 = vsub.f32 %v278, %v631
  %v633 = vand.u32 %v632, 4294901760
  %v634 = vsub.f32 %v632, %v633
  %v635 = vand.u32 %v634, 4294901760
  %636 = vmatpush1.msra.mxu0 %v635
  %637 = vmatprep.subr.mxu0 0.0
  %638 = vmatpush1.msra.mxu0 0.0
  %639 = vmatprep.subr.mxu0 0.0
  %640 = vmatpush1.msra.mxu0 0.0
  %641 = vmatprep.subr.mxu0 0.0
  %642 = vmatpush1.msra.mxu0 0.0
  %643 = vmatprep.subr.mxu0 0.0
  %644 = vmatpush1.msra.mxu0 0.0
  %645 = vmatprep.subr.mxu0 0.0
  %646 = vmatpush1.msra.mxu0 0.0
  %647 = vmatprep.subr.mxu0 0.0
  %648 = vmatpush1.msra.mxu0 0.0
  %649 = vmatprep.subr.mxu0 0.0
  %650 = vmatpush1.msra.mxu0 0.0
  %651 = vmatprep.subr.mxu0 0.0
  %652 = vmatpush1.msra.mxu0 0.0
  %653 = vmatprep.subr.mxu0 0.0
  %654 = vmatpush1.msra.mxu0 0.0
  %655 = vmatprep.subr.mxu0 0.0
  %656 = vmatpush1.msra.mxu0 0.0
  %657 = vmatprep.subr.mxu0 0.0
  %658 = vmatpush1.msra.mxu0 0.0
  %659 = vmatprep.subr.mxu0 0.0
  %660 = vmatpush1.msra.mxu0 0.0
  %661 = vmatprep.subr.mxu0 0.0
  %662 = vmatpush1.msra.mxu0 0.0
  %663 = vmatprep.subr.mxu0 0.0
  %664 = vmatpush1.msra.mxu0 0.0
  %665 = vmatprep.subr.mxu0 0.0
  %666 = vmatpush1.msra.mxu0 0.0
  %667 = vmatprep.subr.mxu0 0.0
  %668 = vmatpush1.msra.mxu0 0.0
  %669 = vmatprep.subr.mxu0 0.0
  %670 = vmatpush1.msra.mxu0 0.0
  %671 = vmatprep.subr.mxu0 0.0
  %672 = vmatpush1.msra.mxu0 0.0
  %673 = vmatprep.subr.mxu0 0.0
  %674 = vmatpush1.msra.mxu0 0.0
  %675 = vmatprep.subr.mxu0 0.0
  %676 = vmatpush1.msra.mxu0 0.0
  %677 = vmatprep.subr.mxu0 0.0
  %678 = vmatpush1.msra.mxu0 0.0
  %679 = vmatprep.subr.mxu0 0.0
  %680 = vmatpush1.msra.mxu0 0.0
  %681 = vmatprep.subr.mxu0 0.0
  %682 = vmatpush1.msra.mxu0 0.0
  %683 = vmatprep.subr.mxu0 0.0
  %684 = vmatpush1.msra.mxu0 0.0
  %685 = vmatprep.subr.mxu0 0.0
  %686 = vmatpush1.msra.mxu0 0.0
  %687 = vmatprep.subr.mxu0 0.0
  %688 = vmatpush1.msra.mxu0 0.0
  %689 = vmatprep.subr.mxu0 0.0
  %690 = vmatpush1.msra.mxu0 0.0
  %691 = vmatprep.subr.mxu0 0.0
  %692 = vmatpush1.msra.mxu0 0.0
  %693 = vmatprep.mubr.f32.mxu0 0.0
  %v694 = vand.u32 %v293, 4294901760
  %695 = vmatmul.mubr.f32.gmra.mrb[0].mxu0 %v694
  %v696 = vpop.f32.mrb[0].mxu0
  %v697 = vadd.f32 %v420, %v696
  %v698 = vpop.f32.mrb[0].mxu0
  %v699 = vadd.f32 %v422, %v698
  %700 = vmatprep.mubr.f32.mxu0 0.0
  %v701 = vand.u32 %v296, 4294901760
  %702 = vmatmul.mubr.f32.gmra.mrb[0].mxu0 %v701
  %v703 = vpop.f32.mrb[0].mxu0
  %v704 = vadd.f32 %v431, %v703
  %v705 = vpop.f32.mrb[0].mxu0
  %v706 = vadd.f32 %v433, %v705
  %707 = vmatprep.mubr.f32.mxu0 0.0
  %v708 = vand.u32 %v299, 4294901760
  %709 = vmatmul.mubr.f32.gmra.mrb[0].mxu0 %v708
  %v710 = vpop.f32.mrb[0].mxu0
  %v711 = vadd.f32 %v442, %v710
  %v712 = vpop.f32.mrb[0].mxu0
  %v713 = vadd.f32 %v444, %v712
  %714 = vmatprep.mubr.f32.mxu0 0.0
  %v715 = vand.u32 %v302, 4294901760
  %716 = vmatmul.mubr.f32.gmra.mrb[0].mxu0 %v715
  %v717 = vpop.f32.mrb[0].mxu0
  %v718 = vadd.f32 %v453, %v717
  %v719 = vpop.f32.mrb[0].mxu0
  %v720 = vadd.f32 %v455, %v719
  %721 = vmatprep.mubr.f32.mxu0 0.0
  %v722 = vand.u32 %v305, 4294901760
  %723 = vmatmul.mubr.f32.gmra.mrb[0].mxu0 %v722
  %v724 = vpop.f32.mrb[0].mxu0
  %v725 = vadd.f32 %v464, %v724
  %v726 = vpop.f32.mrb[0].mxu0
  %v727 = vadd.f32 %v466, %v726
  %728 = vmatprep.mubr.f32.mxu0 0.0
  %v729 = vand.u32 %v308, 4294901760
  %730 = vmatmul.mubr.f32.gmra.mrb[0].mxu0 %v729
  %v731 = vpop.f32.mrb[0].mxu0
  %v732 = vadd.f32 %v475, %v731
  %v733 = vpop.f32.mrb[0].mxu0
  %v734 = vadd.f32 %v477, %v733
  %735 = vmatprep.mubr.f32.mxu0 0.0
  %v736 = vand.u32 %v311, 4294901760
  %737 = vmatmul.mubr.f32.gmra.mrb[0].mxu0 %v736
  %v738 = vpop.f32.mrb[0].mxu0
  %v739 = vadd.f32 %v486, %v738
  %v740 = vpop.f32.mrb[0].mxu0
  %v741 = vadd.f32 %v488, %v740
  %742 = vmatprep.mubr.f32.mxu0 0.0
  %v743 = vand.u32 %v314, 4294901760
  %744 = vmatmul.mubr.f32.gmra.mrb[0].mxu0 %v743
  %v745 = vpop.f32.mrb[0].mxu0
  %v746 = vadd.f32 %v497, %v745
  %v747 = vpop.f32.mrb[0].mxu0
  %v748 = vadd.f32 %v499, %v747
  %749 = vmatprep.mubr.f32.mxu0 0.0
  %v750 = vand.u32 %v317, 4294901760
  %751 = vmatmul.mubr.f32.gmra.mrb[0].mxu0 %v750
  %v752 = vpop.f32.mrb[0].mxu0
  %v753 = vadd.f32 %v508, %v752
  %v754 = vpop.f32.mrb[0].mxu0
  %v755 = vadd.f32 %v510, %v754
  %756 = vmatprep.mubr.f32.mxu0 0.0
  %v757 = vand.u32 %v320, 4294901760
  %758 = vmatmul.mubr.f32.gmra.mrb[0].mxu0 %v757
  %v759 = vpop.f32.mrb[0].mxu0
  %v760 = vadd.f32 %v519, %v759
  %v761 = vpop.f32.mrb[0].mxu0
  %v762 = vadd.f32 %v521, %v761
  %763 = vmatprep.mubr.f32.mxu0 0.0
  %v764 = vand.u32 %v323, 4294901760
  %765 = vmatmul.mubr.f32.gmra.mrb[0].mxu0 %v764
  %v766 = vpop.f32.mrb[0].mxu0
  %v767 = vadd.f32 %v530, %v766
  %v768 = vpop.f32.mrb[0].mxu0
  %v769 = vadd.f32 %v532, %v768
  %770 = vmatprep.mubr.f32.mxu0 0.0
  %v771 = vand.u32 %v326, 4294901760
  %772 = vmatmul.mubr.f32.gmra.mrb[0].mxu0 %v771
  %v773 = vpop.f32.mrb[0].mxu0
  %v774 = vadd.f32 %v541, %v773
  %v775 = vpop.f32.mrb[0].mxu0
  %v776 = vadd.f32 %v543, %v775
  %777 = vmatprep.mubr.f32.mxu0 0.0
  %v778 = vand.u32 %v329, 4294901760
  %779 = vmatmul.mubr.f32.gmra.mrb[0].mxu0 %v778
  %v780 = vpop.f32.mrb[0].mxu0
  %v781 = vadd.f32 %v552, %v780
  %v782 = vpop.f32.mrb[0].mxu0
  %v783 = vadd.f32 %v554, %v782
  %784 = vmatprep.mubr.f32.mxu0 0.0
  %v785 = vand.u32 %v332, 4294901760
  %786 = vmatmul.mubr.f32.gmra.mrb[0].mxu0 %v785
  %v787 = vpop.f32.mrb[0].mxu0
  %v788 = vadd.f32 %v563, %v787
  %v789 = vpop.f32.mrb[0].mxu0
  %v790 = vadd.f32 %v565, %v789
  %791 = vmatprep.mubr.f32.mxu0 0.0
  %v792 = vand.u32 %v335, 4294901760
  %793 = vmatmul.mubr.f32.gmra.mrb[0].mxu0 %v792
  %v794 = vpop.f32.mrb[0].mxu0
  %v795 = vadd.f32 %v574, %v794
  %v796 = vpop.f32.mrb[0].mxu0
  %v797 = vadd.f32 %v576, %v796
  %798 = vmatprep.mubr.f32.mxu0 0.0
  %v799 = vand.u32 %v338, 4294901760
  %800 = vmatmul.mubr.f32.gmra.mrb[0].mxu0 %v799
  %v801 = vpop.f32.mrb[0].mxu0
  %v802 = vadd.f32 %v585, %v801
  %v803 = vpop.f32.mrb[0].mxu0
  %v804 = vadd.f32 %v587, %v803
  %805 = vdwg.mxu0
  %v806 = vand.u32 %v273, 4294901760
  %v807 = vsub.f32 %v273, %v806
  %808 = vmatprep.subr.mxu0 %v807
  %v809 = vand.u32 %v272, 4294901760
  %v810 = vsub.f32 %v272, %v809
  %811 = vmatpush1.msra.mxu0 %v810
  %v812 = vand.u32 %v275, 4294901760
  %v813 = vsub.f32 %v275, %v812
  %814 = vmatprep.subr.mxu0 %v813
  %v815 = vand.u32 %v274, 4294901760
  %v816 = vsub.f32 %v274, %v815
  %817 = vmatpush1.msra.mxu0 %v816
  %v818 = vand.u32 %v277, 4294901760
  %v819 = vsub.f32 %v277, %v818
  %820 = vmatprep.subr.mxu0 %v819
  %v821 = vand.u32 %v276, 4294901760
  %v822 = vsub.f32 %v276, %v821
  %823 = vmatpush1.msra.mxu0 %v822
  %v824 = vand.u32 %v279, 4294901760
  %v825 = vsub.f32 %v279, %v824
  %826 = vmatprep.subr.mxu0 %v825
  %v827 = vand.u32 %v278, 4294901760
  %v828 = vsub.f32 %v278, %v827
  %829 = vmatpush1.msra.mxu0 %v828
  %830 = vmatprep.subr.mxu0 0.0
  %831 = vmatpush1.msra.mxu0 0.0
  %832 = vmatprep.subr.mxu0 0.0
  %833 = vmatpush1.msra.mxu0 0.0
  %834 = vmatprep.subr.mxu0 0.0
  %835 = vmatpush1.msra.mxu0 0.0
  %836 = vmatprep.subr.mxu0 0.0
  %837 = vmatpush1.msra.mxu0 0.0
  %838 = vmatprep.subr.mxu0 0.0
  %839 = vmatpush1.msra.mxu0 0.0
  %840 = vmatprep.subr.mxu0 0.0
  %841 = vmatpush1.msra.mxu0 0.0
  %842 = vmatprep.subr.mxu0 0.0
  %843 = vmatpush1.msra.mxu0 0.0
  %844 = vmatprep.subr.mxu0 0.0
  %845 = vmatpush1.msra.mxu0 0.0
  %846 = vmatprep.subr.mxu0 0.0
  %847 = vmatpush1.msra.mxu0 0.0
  %848 = vmatprep.subr.mxu0 0.0
  %849 = vmatpush1.msra.mxu0 0.0
  %850 = vmatprep.subr.mxu0 0.0
  %851 = vmatpush1.msra.mxu0 0.0
  %852 = vmatprep.subr.mxu0 0.0
  %853 = vmatpush1.msra.mxu0 0.0
  %854 = vmatprep.subr.mxu0 0.0
  %855 = vmatpush1.msra.mxu0 0.0
  %856 = vmatprep.subr.mxu0 0.0
  %857 = vmatpush1.msra.mxu0 0.0
  %858 = vmatprep.subr.mxu0 0.0
  %859 = vmatpush1.msra.mxu0 0.0
  %860 = vmatprep.subr.mxu0 0.0
  %861 = vmatpush1.msra.mxu0 0.0
  %862 = vmatprep.subr.mxu0 0.0
  %863 = vmatpush1.msra.mxu0 0.0
  %864 = vmatprep.subr.mxu0 0.0
  %865 = vmatpush1.msra.mxu0 0.0
  %866 = vmatprep.subr.mxu0 0.0
  %867 = vmatpush1.msra.mxu0 0.0
  %868 = vmatprep.subr.mxu0 0.0
  %869 = vmatpush1.msra.mxu0 0.0
  %870 = vmatprep.subr.mxu0 0.0
  %871 = vmatpush1.msra.mxu0 0.0
  %872 = vmatprep.subr.mxu0 0.0
  %873 = vmatpush1.msra.mxu0 0.0
  %874 = vmatprep.subr.mxu0 0.0
  %875 = vmatpush1.msra.mxu0 0.0
  %876 = vmatprep.subr.mxu0 0.0
  %877 = vmatpush1.msra.mxu0 0.0
  %878 = vmatprep.subr.mxu0 0.0
  %879 = vmatpush1.msra.mxu0 0.0
  %880 = vmatprep.subr.mxu0 0.0
  %881 = vmatpush1.msra.mxu0 0.0
  %882 = vmatprep.subr.mxu0 0.0
  %883 = vmatpush1.msra.mxu0 0.0
  %884 = vmatprep.subr.mxu0 0.0
  %885 = vmatpush1.msra.mxu0 0.0
  %886 = vmatprep.mubr.f32.mxu0 0.0
  %v887 = vand.u32 %v293, 4294901760
  %v888 = vsub.f32 %v293, %v887
  %889 = vmatmul.mubr.f32.gmra.mrb[0].mxu0 %v888
  %v890 = vpop.f32.mrb[0].mxu0
  %v891 = vadd.f32 %v697, %v890
  %v892 = vpop.f32.mrb[0].mxu0
  %v893 = vadd.f32 %v699, %v892
  %894 = vmatprep.mubr.f32.mxu0 0.0
  %v895 = vand.u32 %v296, 4294901760
  %v896 = vsub.f32 %v296, %v895
  %897 = vmatmul.mubr.f32.gmra.mrb[0].mxu0 %v896
  %v898 = vpop.f32.mrb[0].mxu0
  %v899 = vadd.f32 %v704, %v898
  %v900 = vpop.f32.mrb[0].mxu0
  %v901 = vadd.f32 %v706, %v900
  %902 = vmatprep.mubr.f32.mxu0 0.0
  %v903 = vand.u32 %v299, 4294901760
  %v904 = vsub.f32 %v299, %v903
  %905 = vmatmul.mubr.f32.gmra.mrb[0].mxu0 %v904
  %v906 = vpop.f32.mrb[0].mxu0
  %v907 = vadd.f32 %v711, %v906
  %v908 = vpop.f32.mrb[0].mxu0
  %v909 = vadd.f32 %v713, %v908
  %910 = vmatprep.mubr.f32.mxu0 0.0
  %v911 = vand.u32 %v302, 4294901760
  %v912 = vsub.f32 %v302, %v911
  %913 = vmatmul.mubr.f32.gmra.mrb[0].mxu0 %v912
  %v914 = vpop.f32.mrb[0].mxu0
  %v915 = vadd.f32 %v718, %v914
  %v916 = vpop.f32.mrb[0].mxu0
  %v917 = vadd.f32 %v720, %v916
  %918 = vmatprep.mubr.f32.mxu0 0.0
  %v919 = vand.u32 %v305, 4294901760
  %v920 = vsub.f32 %v305, %v919
  %921 = vmatmul.mubr.f32.gmra.mrb[0].mxu0 %v920
  %v922 = vpop.f32.mrb[0].mxu0
  %v923 = vadd.f32 %v725, %v922
  %v924 = vpop.f32.mrb[0].mxu0
  %v925 = vadd.f32 %v727, %v924
  %926 = vmatprep.mubr.f32.mxu0 0.0
  %v927 = vand.u32 %v308, 4294901760
  %v928 = vsub.f32 %v308, %v927
  %929 = vmatmul.mubr.f32.gmra.mrb[0].mxu0 %v928
  %v930 = vpop.f32.mrb[0].mxu0
  %v931 = vadd.f32 %v732, %v930
  %v932 = vpop.f32.mrb[0].mxu0
  %v933 = vadd.f32 %v734, %v932
  %934 = vmatprep.mubr.f32.mxu0 0.0
  %v935 = vand.u32 %v311, 4294901760
  %v936 = vsub.f32 %v311, %v935
  %937 = vmatmul.mubr.f32.gmra.mrb[0].mxu0 %v936
  %v938 = vpop.f32.mrb[0].mxu0
  %v939 = vadd.f32 %v739, %v938
  %v940 = vpop.f32.mrb[0].mxu0
  %v941 = vadd.f32 %v741, %v940
  %942 = vmatprep.mubr.f32.mxu0 0.0
  %v943 = vand.u32 %v314, 4294901760
  %v944 = vsub.f32 %v314, %v943
  %945 = vmatmul.mubr.f32.gmra.mrb[0].mxu0 %v944
  %v946 = vpop.f32.mrb[0].mxu0
  %v947 = vadd.f32 %v746, %v946
  %v948 = vpop.f32.mrb[0].mxu0
  %v949 = vadd.f32 %v748, %v948
  %950 = vmatprep.mubr.f32.mxu0 0.0
  %v951 = vand.u32 %v317, 4294901760
  %v952 = vsub.f32 %v317, %v951
  %953 = vmatmul.mubr.f32.gmra.mrb[0].mxu0 %v952
  %v954 = vpop.f32.mrb[0].mxu0
  %v955 = vadd.f32 %v753, %v954
  %v956 = vpop.f32.mrb[0].mxu0
  %v957 = vadd.f32 %v755, %v956
  %958 = vmatprep.mubr.f32.mxu0 0.0
  %v959 = vand.u32 %v320, 4294901760
  %v960 = vsub.f32 %v320, %v959
  %961 = vmatmul.mubr.f32.gmra.mrb[0].mxu0 %v960
  %v962 = vpop.f32.mrb[0].mxu0
  %v963 = vadd.f32 %v760, %v962
  %v964 = vpop.f32.mrb[0].mxu0
  %v965 = vadd.f32 %v762, %v964
  %966 = vmatprep.mubr.f32.mxu0 0.0
  %v967 = vand.u32 %v323, 4294901760
  %v968 = vsub.f32 %v323, %v967
  %969 = vmatmul.mubr.f32.gmra.mrb[0].mxu0 %v968
  %v970 = vpop.f32.mrb[0].mxu0
  %v971 = vadd.f32 %v767, %v970
  %v972 = vpop.f32.mrb[0].mxu0
  %v973 = vadd.f32 %v769, %v972
  %974 = vmatprep.mubr.f32.mxu0 0.0
  %v975 = vand.u32 %v326, 4294901760
  %v976 = vsub.f32 %v326, %v975
  %977 = vmatmul.mubr.f32.gmra.mrb[0].mxu0 %v976
  %v978 = vpop.f32.mrb[0].mxu0
  %v979 = vadd.f32 %v774, %v978
  %v980 = vpop.f32.mrb[0].mxu0
  %v981 = vadd.f32 %v776, %v980
  %982 = vmatprep.mubr.f32.mxu0 0.0
  %v983 = vand.u32 %v329, 4294901760
  %v984 = vsub.f32 %v329, %v983
  %985 = vmatmul.mubr.f32.gmra.mrb[0].mxu0 %v984
  %v986 = vpop.f32.mrb[0].mxu0
  %v987 = vadd.f32 %v781, %v986
  %v988 = vpop.f32.mrb[0].mxu0
  %v989 = vadd.f32 %v783, %v988
  %990 = vmatprep.mubr.f32.mxu0 0.0
  %v991 = vand.u32 %v332, 4294901760
  %v992 = vsub.f32 %v332, %v991
  %993 = vmatmul.mubr.f32.gmra.mrb[0].mxu0 %v992
  %v994 = vpop.f32.mrb[0].mxu0
  %v995 = vadd.f32 %v788, %v994
  %v996 = vpop.f32.mrb[0].mxu0
  %v997 = vadd.f32 %v790, %v996
  %998 = vmatprep.mubr.f32.mxu0 0.0
  %v999 = vand.u32 %v335, 4294901760
  %v1000 = vsub.f32 %v335, %v999
  %1001 = vmatmul.mubr.f32.gmra.mrb[0].mxu0 %v1000
  %v1002 = vpop.f32.mrb[0].mxu0
  %v1003 = vadd.f32 %v795, %v1002
  %v1004 = vpop.f32.mrb[0].mxu0
  %v1005 = vadd.f32 %v797, %v1004
  %1006 = vmatprep.mubr.f32.mxu0 0.0
  %v1007 = vand.u32 %v338, 4294901760
  %v1008 = vsub.f32 %v338, %v1007
  %1009 = vmatmul.mubr.f32.gmra.mrb[0].mxu0 %v1008
  %v1010 = vpop.f32.mrb[0].mxu0
  %v1011 = vadd.f32 %v802, %v1010
  %v1012 = vpop.f32.mrb[0].mxu0
  %v1013 = vadd.f32 %v804, %v1012
  %1014 = vdwg.mxu0
  %v1015 = vand.u32 %v273, 4294901760
  %1016 = vmatprep.subr.mxu0 %v1015
  %v1017 = vand.u32 %v272, 4294901760
  %1018 = vmatpush1.msra.mxu0 %v1017
  %v1019 = vand.u32 %v275, 4294901760
  %1020 = vmatprep.subr.mxu0 %v1019
  %v1021 = vand.u32 %v274, 4294901760
  %1022 = vmatpush1.msra.mxu0 %v1021
  %v1023 = vand.u32 %v277, 4294901760
  %1024 = vmatprep.subr.mxu0 %v1023
  %v1025 = vand.u32 %v276, 4294901760
  %1026 = vmatpush1.msra.mxu0 %v1025
  %v1027 = vand.u32 %v279, 4294901760
  %1028 = vmatprep.subr.mxu0 %v1027
  %v1029 = vand.u32 %v278, 4294901760
  %1030 = vmatpush1.msra.mxu0 %v1029
  %1031 = vmatprep.subr.mxu0 0.0
  %1032 = vmatpush1.msra.mxu0 0.0
  %1033 = vmatprep.subr.mxu0 0.0
  %1034 = vmatpush1.msra.mxu0 0.0
  %1035 = vmatprep.subr.mxu0 0.0
  %1036 = vmatpush1.msra.mxu0 0.0
  %1037 = vmatprep.subr.mxu0 0.0
  %1038 = vmatpush1.msra.mxu0 0.0
  %1039 = vmatprep.subr.mxu0 0.0
  %1040 = vmatpush1.msra.mxu0 0.0
  %1041 = vmatprep.subr.mxu0 0.0
  %1042 = vmatpush1.msra.mxu0 0.0
  %1043 = vmatprep.subr.mxu0 0.0
  %1044 = vmatpush1.msra.mxu0 0.0
  %1045 = vmatprep.subr.mxu0 0.0
  %1046 = vmatpush1.msra.mxu0 0.0
  %1047 = vmatprep.subr.mxu0 0.0
  %1048 = vmatpush1.msra.mxu0 0.0
  %1049 = vmatprep.subr.mxu0 0.0
  %1050 = vmatpush1.msra.mxu0 0.0
  %1051 = vmatprep.subr.mxu0 0.0
  %1052 = vmatpush1.msra.mxu0 0.0
  %1053 = vmatprep.subr.mxu0 0.0
  %1054 = vmatpush1.msra.mxu0 0.0
  %1055 = vmatprep.subr.mxu0 0.0
  %1056 = vmatpush1.msra.mxu0 0.0
  %1057 = vmatprep.subr.mxu0 0.0
  %1058 = vmatpush1.msra.mxu0 0.0
  %1059 = vmatprep.subr.mxu0 0.0
  %1060 = vmatpush1.msra.mxu0 0.0
  %1061 = vmatprep.subr.mxu0 0.0
  %1062 = vmatpush1.msra.mxu0 0.0
  %1063 = vmatprep.subr.mxu0 0.0
  %1064 = vmatpush1.msra.mxu0 0.0
  %1065 = vmatprep.subr.mxu0 0.0
  %1066 = vmatpush1.msra.mxu0 0.0
  %1067 = vmatprep.subr.mxu0 0.0
  %1068 = vmatpush1.msra.mxu0 0.0
  %1069 = vmatprep.subr.mxu0 0.0
  %1070 = vmatpush1.msra.mxu0 0.0
  %1071 = vmatprep.subr.mxu0 0.0
  %1072 = vmatpush1.msra.mxu0 0.0
  %1073 = vmatprep.subr.mxu0 0.0
  %1074 = vmatpush1.msra.mxu0 0.0
  %1075 = vmatprep.subr.mxu0 0.0
  %1076 = vmatpush1.msra.mxu0 0.0
  %1077 = vmatprep.subr.mxu0 0.0
  %1078 = vmatpush1.msra.mxu0 0.0
  %1079 = vmatprep.subr.mxu0 0.0
  %1080 = vmatpush1.msra.mxu0 0.0
  %1081 = vmatprep.subr.mxu0 0.0
  %1082 = vmatpush1.msra.mxu0 0.0
  %1083 = vmatprep.subr.mxu0 0.0
  %1084 = vmatpush1.msra.mxu0 0.0
  %1085 = vmatprep.subr.mxu0 0.0
  %1086 = vmatpush1.msra.mxu0 0.0
  %1087 = vmatprep.mubr.f32.mxu0 0.0
  %v1088 = vand.u32 %v293, 4294901760
  %v1089 = vsub.f32 %v293, %v1088
  %v1090 = vand.u32 %v1089, 4294901760
  %1091 = vmatmul.mubr.f32.gmra.mrb[0].mxu0 %v1090
  %v1092 = vpop.f32.mrb[0].mxu0
  %v1093 = vadd.f32 %v891, %v1092
  %v1094 = vpop.f32.mrb[0].mxu0
  %v1095 = vadd.f32 %v893, %v1094
  %1096 = vmatprep.mubr.f32.mxu0 0.0
  %v1097 = vand.u32 %v296, 4294901760
  %v1098 = vsub.f32 %v296, %v1097
  %v1099 = vand.u32 %v1098, 4294901760
  %1100 = vmatmul.mubr.f32.gmra.mrb[0].mxu0 %v1099
  %v1101 = vpop.f32.mrb[0].mxu0
  %v1102 = vadd.f32 %v899, %v1101
  %v1103 = vpop.f32.mrb[0].mxu0
  %v1104 = vadd.f32 %v901, %v1103
  %1105 = vmatprep.mubr.f32.mxu0 0.0
  %v1106 = vand.u32 %v299, 4294901760
  %v1107 = vsub.f32 %v299, %v1106
  %v1108 = vand.u32 %v1107, 4294901760
  %1109 = vmatmul.mubr.f32.gmra.mrb[0].mxu0 %v1108
  %v1110 = vpop.f32.mrb[0].mxu0
  %v1111 = vadd.f32 %v907, %v1110
  %v1112 = vpop.f32.mrb[0].mxu0
  %v1113 = vadd.f32 %v909, %v1112
  %1114 = vmatprep.mubr.f32.mxu0 0.0
  %v1115 = vand.u32 %v302, 4294901760
  %v1116 = vsub.f32 %v302, %v1115
  %v1117 = vand.u32 %v1116, 4294901760
  %1118 = vmatmul.mubr.f32.gmra.mrb[0].mxu0 %v1117
  %v1119 = vpop.f32.mrb[0].mxu0
  %v1120 = vadd.f32 %v915, %v1119
  %v1121 = vpop.f32.mrb[0].mxu0
  %v1122 = vadd.f32 %v917, %v1121
  %1123 = vmatprep.mubr.f32.mxu0 0.0
  %v1124 = vand.u32 %v305, 4294901760
  %v1125 = vsub.f32 %v305, %v1124
  %v1126 = vand.u32 %v1125, 4294901760
  %1127 = vmatmul.mubr.f32.gmra.mrb[0].mxu0 %v1126
  %v1128 = vpop.f32.mrb[0].mxu0
  %v1129 = vadd.f32 %v923, %v1128
  %v1130 = vpop.f32.mrb[0].mxu0
  %v1131 = vadd.f32 %v925, %v1130
  %1132 = vmatprep.mubr.f32.mxu0 0.0
  %v1133 = vand.u32 %v308, 4294901760
  %v1134 = vsub.f32 %v308, %v1133
  %v1135 = vand.u32 %v1134, 4294901760
  %1136 = vmatmul.mubr.f32.gmra.mrb[0].mxu0 %v1135
  %v1137 = vpop.f32.mrb[0].mxu0
  %v1138 = vadd.f32 %v931, %v1137
  %v1139 = vpop.f32.mrb[0].mxu0
  %v1140 = vadd.f32 %v933, %v1139
  %1141 = vmatprep.mubr.f32.mxu0 0.0
  %v1142 = vand.u32 %v311, 4294901760
  %v1143 = vsub.f32 %v311, %v1142
  %v1144 = vand.u32 %v1143, 4294901760
  %1145 = vmatmul.mubr.f32.gmra.mrb[0].mxu0 %v1144
  %v1146 = vpop.f32.mrb[0].mxu0
  %v1147 = vadd.f32 %v939, %v1146
  %v1148 = vpop.f32.mrb[0].mxu0
  %v1149 = vadd.f32 %v941, %v1148
  %1150 = vmatprep.mubr.f32.mxu0 0.0
  %v1151 = vand.u32 %v314, 4294901760
  %v1152 = vsub.f32 %v314, %v1151
  %v1153 = vand.u32 %v1152, 4294901760
  %1154 = vmatmul.mubr.f32.gmra.mrb[0].mxu0 %v1153
  %v1155 = vpop.f32.mrb[0].mxu0
  %v1156 = vadd.f32 %v947, %v1155
  %v1157 = vpop.f32.mrb[0].mxu0
  %v1158 = vadd.f32 %v949, %v1157
  %1159 = vmatprep.mubr.f32.mxu0 0.0
  %v1160 = vand.u32 %v317, 4294901760
  %v1161 = vsub.f32 %v317, %v1160
  %v1162 = vand.u32 %v1161, 4294901760
  %1163 = vmatmul.mubr.f32.gmra.mrb[0].mxu0 %v1162
  %v1164 = vpop.f32.mrb[0].mxu0
  %v1165 = vadd.f32 %v955, %v1164
  %v1166 = vpop.f32.mrb[0].mxu0
  %v1167 = vadd.f32 %v957, %v1166
  %1168 = vmatprep.mubr.f32.mxu0 0.0
  %v1169 = vand.u32 %v320, 4294901760
  %v1170 = vsub.f32 %v320, %v1169
  %v1171 = vand.u32 %v1170, 4294901760
  %1172 = vmatmul.mubr.f32.gmra.mrb[0].mxu0 %v1171
  %v1173 = vpop.f32.mrb[0].mxu0
  %v1174 = vadd.f32 %v963, %v1173
  %v1175 = vpop.f32.mrb[0].mxu0
  %v1176 = vadd.f32 %v965, %v1175
  %1177 = vmatprep.mubr.f32.mxu0 0.0
  %v1178 = vand.u32 %v323, 4294901760
  %v1179 = vsub.f32 %v323, %v1178
  %v1180 = vand.u32 %v1179, 4294901760
  %1181 = vmatmul.mubr.f32.gmra.mrb[0].mxu0 %v1180
  %v1182 = vpop.f32.mrb[0].mxu0
  %v1183 = vadd.f32 %v971, %v1182
  %v1184 = vpop.f32.mrb[0].mxu0
  %v1185 = vadd.f32 %v973, %v1184
  %1186 = vmatprep.mubr.f32.mxu0 0.0
  %v1187 = vand.u32 %v326, 4294901760
  %v1188 = vsub.f32 %v326, %v1187
  %v1189 = vand.u32 %v1188, 4294901760
  %1190 = vmatmul.mubr.f32.gmra.mrb[0].mxu0 %v1189
  %v1191 = vpop.f32.mrb[0].mxu0
  %v1192 = vadd.f32 %v979, %v1191
  %v1193 = vpop.f32.mrb[0].mxu0
  %v1194 = vadd.f32 %v981, %v1193
  %1195 = vmatprep.mubr.f32.mxu0 0.0
  %v1196 = vand.u32 %v329, 4294901760
  %v1197 = vsub.f32 %v329, %v1196
  %v1198 = vand.u32 %v1197, 4294901760
  %1199 = vmatmul.mubr.f32.gmra.mrb[0].mxu0 %v1198
  %v1200 = vpop.f32.mrb[0].mxu0
  %v1201 = vadd.f32 %v987, %v1200
  %v1202 = vpop.f32.mrb[0].mxu0
  %v1203 = vadd.f32 %v989, %v1202
  %1204 = vmatprep.mubr.f32.mxu0 0.0
  %v1205 = vand.u32 %v332, 4294901760
  %v1206 = vsub.f32 %v332, %v1205
  %v1207 = vand.u32 %v1206, 4294901760
  %1208 = vmatmul.mubr.f32.gmra.mrb[0].mxu0 %v1207
  %v1209 = vpop.f32.mrb[0].mxu0
  %v1210 = vadd.f32 %v995, %v1209
  %v1211 = vpop.f32.mrb[0].mxu0
  %v1212 = vadd.f32 %v997, %v1211
  %1213 = vmatprep.mubr.f32.mxu0 0.0
  %v1214 = vand.u32 %v335, 4294901760
  %v1215 = vsub.f32 %v335, %v1214
  %v1216 = vand.u32 %v1215, 4294901760
  %1217 = vmatmul.mubr.f32.gmra.mrb[0].mxu0 %v1216
  %v1218 = vpop.f32.mrb[0].mxu0
  %v1219 = vadd.f32 %v1003, %v1218
  %v1220 = vpop.f32.mrb[0].mxu0
  %v1221 = vadd.f32 %v1005, %v1220
  %1222 = vmatprep.mubr.f32.mxu0 0.0
  %v1223 = vand.u32 %v338, 4294901760
  %v1224 = vsub.f32 %v338, %v1223
  %v1225 = vand.u32 %v1224, 4294901760
  %1226 = vmatmul.mubr.f32.gmra.mrb[0].mxu0 %v1225
  %v1227 = vpop.f32.mrb[0].mxu0
  %v1228 = vadd.f32 %v1011, %v1227
  %v1229 = vpop.f32.mrb[0].mxu0
  %v1230 = vadd.f32 %v1013, %v1229
  %1231 = vdwg.mxu0
  %v1232 = vand.u32 %v273, 4294901760
  %v1233 = vsub.f32 %v273, %v1232
  %v1234 = vand.u32 %v1233, 4294901760
  %1235 = vmatprep.subr.mxu0 %v1234
  %v1236 = vand.u32 %v272, 4294901760
  %v1237 = vsub.f32 %v272, %v1236
  %v1238 = vand.u32 %v1237, 4294901760
  %1239 = vmatpush1.msra.mxu0 %v1238
  %v1240 = vand.u32 %v275, 4294901760
  %v1241 = vsub.f32 %v275, %v1240
  %v1242 = vand.u32 %v1241, 4294901760
  %1243 = vmatprep.subr.mxu0 %v1242
  %v1244 = vand.u32 %v274, 4294901760
  %v1245 = vsub.f32 %v274, %v1244
  %v1246 = vand.u32 %v1245, 4294901760
  %1247 = vmatpush1.msra.mxu0 %v1246
  %v1248 = vand.u32 %v277, 4294901760
  %v1249 = vsub.f32 %v277, %v1248
  %v1250 = vand.u32 %v1249, 4294901760
  %1251 = vmatprep.subr.mxu0 %v1250
  %v1252 = vand.u32 %v276, 4294901760
  %v1253 = vsub.f32 %v276, %v1252
  %v1254 = vand.u32 %v1253, 4294901760
  %1255 = vmatpush1.msra.mxu0 %v1254
  %v1256 = vand.u32 %v279, 4294901760
  %v1257 = vsub.f32 %v279, %v1256
  %v1258 = vand.u32 %v1257, 4294901760
  %1259 = vmatprep.subr.mxu0 %v1258
  %v1260 = vand.u32 %v278, 4294901760
  %v1261 = vsub.f32 %v278, %v1260
  %v1262 = vand.u32 %v1261, 4294901760
  %1263 = vmatpush1.msra.mxu0 %v1262
  %1264 = vmatprep.subr.mxu0 0.0
  %1265 = vmatpush1.msra.mxu0 0.0
  %1266 = vmatprep.subr.mxu0 0.0
  %1267 = vmatpush1.msra.mxu0 0.0
  %1268 = vmatprep.subr.mxu0 0.0
  %1269 = vmatpush1.msra.mxu0 0.0
  %1270 = vmatprep.subr.mxu0 0.0
  %1271 = vmatpush1.msra.mxu0 0.0
  %1272 = vmatprep.subr.mxu0 0.0
  %1273 = vmatpush1.msra.mxu0 0.0
  %1274 = vmatprep.subr.mxu0 0.0
  %1275 = vmatpush1.msra.mxu0 0.0
  %1276 = vmatprep.subr.mxu0 0.0
  %1277 = vmatpush1.msra.mxu0 0.0
  %1278 = vmatprep.subr.mxu0 0.0
  %1279 = vmatpush1.msra.mxu0 0.0
  %1280 = vmatprep.subr.mxu0 0.0
  %1281 = vmatpush1.msra.mxu0 0.0
  %1282 = vmatprep.subr.mxu0 0.0
  %1283 = vmatpush1.msra.mxu0 0.0
  %1284 = vmatprep.subr.mxu0 0.0
  %1285 = vmatpush1.msra.mxu0 0.0
  %1286 = vmatprep.subr.mxu0 0.0
  %1287 = vmatpush1.msra.mxu0 0.0
  %1288 = vmatprep.subr.mxu0 0.0
  %1289 = vmatpush1.msra.mxu0 0.0
  %1290 = vmatprep.subr.mxu0 0.0
  %1291 = vmatpush1.msra.mxu0 0.0
  %1292 = vmatprep.subr.mxu0 0.0
  %1293 = vmatpush1.msra.mxu0 0.0
  %1294 = vmatprep.subr.mxu0 0.0
  %1295 = vmatpush1.msra.mxu0 0.0
  %1296 = vmatprep.subr.mxu0 0.0
  %1297 = vmatpush1.msra.mxu0 0.0
  %1298 = vmatprep.subr.mxu0 0.0
  %1299 = vmatpush1.msra.mxu0 0.0
  %1300 = vmatprep.subr.mxu0 0.0
  %1301 = vmatpush1.msra.mxu0 0.0
  %1302 = vmatprep.subr.mxu0 0.0
  %1303 = vmatpush1.msra.mxu0 0.0
  %1304 = vmatprep.subr.mxu0 0.0
  %1305 = vmatpush1.msra.mxu0 0.0
  %1306 = vmatprep.subr.mxu0 0.0
  %1307 = vmatpush1.msra.mxu0 0.0
  %1308 = vmatprep.subr.mxu0 0.0
  %1309 = vmatpush1.msra.mxu0 0.0
  %1310 = vmatprep.subr.mxu0 0.0
  %1311 = vmatpush1.msra.mxu0 0.0
  %1312 = vmatprep.subr.mxu0 0.0
  %1313 = vmatpush1.msra.mxu0 0.0
  %1314 = vmatprep.subr.mxu0 0.0
  %1315 = vmatpush1.msra.mxu0 0.0
  %1316 = vmatprep.subr.mxu0 0.0
  %1317 = vmatpush1.msra.mxu0 0.0
  %1318 = vmatprep.subr.mxu0 0.0
  %1319 = vmatpush1.msra.mxu0 0.0
  %1320 = vmatprep.mubr.f32.mxu0 0.0
  %v1321 = vand.u32 %v293, 4294901760
  %1322 = vmatmul.mubr.f32.gmra.mrb[0].mxu0 %v1321
  %v1323 = vpop.f32.mrb[0].mxu0
  %v1324 = vadd.f32 %v1093, %v1323
  %v1325 = vpop.f32.mrb[0].mxu0
  %v1326 = vadd.f32 %v1095, %v1325
  %1327 = vmatprep.mubr.f32.mxu0 0.0
  %v1328 = vand.u32 %v296, 4294901760
  %1329 = vmatmul.mubr.f32.gmra.mrb[0].mxu0 %v1328
  %v1330 = vpop.f32.mrb[0].mxu0
  %v1331 = vadd.f32 %v1102, %v1330
  %v1332 = vpop.f32.mrb[0].mxu0
  %v1333 = vadd.f32 %v1104, %v1332
  %1334 = vmatprep.mubr.f32.mxu0 0.0
  %v1335 = vand.u32 %v299, 4294901760
  %1336 = vmatmul.mubr.f32.gmra.mrb[0].mxu0 %v1335
  %v1337 = vpop.f32.mrb[0].mxu0
  %v1338 = vadd.f32 %v1111, %v1337
  %v1339 = vpop.f32.mrb[0].mxu0
  %v1340 = vadd.f32 %v1113, %v1339
  %1341 = vmatprep.mubr.f32.mxu0 0.0
  %v1342 = vand.u32 %v302, 4294901760
  %1343 = vmatmul.mubr.f32.gmra.mrb[0].mxu0 %v1342
  %v1344 = vpop.f32.mrb[0].mxu0
  %v1345 = vadd.f32 %v1120, %v1344
  %v1346 = vpop.f32.mrb[0].mxu0
  %v1347 = vadd.f32 %v1122, %v1346
  %1348 = vmatprep.mubr.f32.mxu0 0.0
  %v1349 = vand.u32 %v305, 4294901760
  %1350 = vmatmul.mubr.f32.gmra.mrb[0].mxu0 %v1349
  %v1351 = vpop.f32.mrb[0].mxu0
  %v1352 = vadd.f32 %v1129, %v1351
  %v1353 = vpop.f32.mrb[0].mxu0
  %v1354 = vadd.f32 %v1131, %v1353
  %1355 = vmatprep.mubr.f32.mxu0 0.0
  %v1356 = vand.u32 %v308, 4294901760
  %1357 = vmatmul.mubr.f32.gmra.mrb[0].mxu0 %v1356
  %v1358 = vpop.f32.mrb[0].mxu0
  %v1359 = vadd.f32 %v1138, %v1358
  %v1360 = vpop.f32.mrb[0].mxu0
  %v1361 = vadd.f32 %v1140, %v1360
  %1362 = vmatprep.mubr.f32.mxu0 0.0
  %v1363 = vand.u32 %v311, 4294901760
  %1364 = vmatmul.mubr.f32.gmra.mrb[0].mxu0 %v1363
  %v1365 = vpop.f32.mrb[0].mxu0
  %v1366 = vadd.f32 %v1147, %v1365
  %v1367 = vpop.f32.mrb[0].mxu0
  %v1368 = vadd.f32 %v1149, %v1367
  %1369 = vmatprep.mubr.f32.mxu0 0.0
  %v1370 = vand.u32 %v314, 4294901760
  %1371 = vmatmul.mubr.f32.gmra.mrb[0].mxu0 %v1370
  %v1372 = vpop.f32.mrb[0].mxu0
  %v1373 = vadd.f32 %v1156, %v1372
  %v1374 = vpop.f32.mrb[0].mxu0
  %v1375 = vadd.f32 %v1158, %v1374
  %1376 = vmatprep.mubr.f32.mxu0 0.0
  %v1377 = vand.u32 %v317, 4294901760
  %1378 = vmatmul.mubr.f32.gmra.mrb[0].mxu0 %v1377
  %v1379 = vpop.f32.mrb[0].mxu0
  %v1380 = vadd.f32 %v1165, %v1379
  %v1381 = vpop.f32.mrb[0].mxu0
  %v1382 = vadd.f32 %v1167, %v1381
  %1383 = vmatprep.mubr.f32.mxu0 0.0
  %v1384 = vand.u32 %v320, 4294901760
  %1385 = vmatmul.mubr.f32.gmra.mrb[0].mxu0 %v1384
  %v1386 = vpop.f32.mrb[0].mxu0
  %v1387 = vadd.f32 %v1174, %v1386
  %v1388 = vpop.f32.mrb[0].mxu0
  %v1389 = vadd.f32 %v1176, %v1388
  %1390 = vmatprep.mubr.f32.mxu0 0.0
  %v1391 = vand.u32 %v323, 4294901760
  %1392 = vmatmul.mubr.f32.gmra.mrb[0].mxu0 %v1391
  %v1393 = vpop.f32.mrb[0].mxu0
  %v1394 = vadd.f32 %v1183, %v1393
  %v1395 = vpop.f32.mrb[0].mxu0
  %v1396 = vadd.f32 %v1185, %v1395
  %1397 = vmatprep.mubr.f32.mxu0 0.0
  %v1398 = vand.u32 %v326, 4294901760
  %1399 = vmatmul.mubr.f32.gmra.mrb[0].mxu0 %v1398
  %v1400 = vpop.f32.mrb[0].mxu0
  %v1401 = vadd.f32 %v1192, %v1400
  %v1402 = vpop.f32.mrb[0].mxu0
  %v1403 = vadd.f32 %v1194, %v1402
  %1404 = vmatprep.mubr.f32.mxu0 0.0
  %v1405 = vand.u32 %v329, 4294901760
  %1406 = vmatmul.mubr.f32.gmra.mrb[0].mxu0 %v1405
  %v1407 = vpop.f32.mrb[0].mxu0
  %v1408 = vadd.f32 %v1201, %v1407
  %v1409 = vpop.f32.mrb[0].mxu0
  %v1410 = vadd.f32 %v1203, %v1409
  %1411 = vmatprep.mubr.f32.mxu0 0.0
  %v1412 = vand.u32 %v332, 4294901760
  %1413 = vmatmul.mubr.f32.gmra.mrb[0].mxu0 %v1412
  %v1414 = vpop.f32.mrb[0].mxu0
  %v1415 = vadd.f32 %v1210, %v1414
  %v1416 = vpop.f32.mrb[0].mxu0
  %v1417 = vadd.f32 %v1212, %v1416
  %1418 = vmatprep.mubr.f32.mxu0 0.0
  %v1419 = vand.u32 %v335, 4294901760
  %1420 = vmatmul.mubr.f32.gmra.mrb[0].mxu0 %v1419
  %v1421 = vpop.f32.mrb[0].mxu0
  %v1422 = vadd.f32 %v1219, %v1421
  %v1423 = vpop.f32.mrb[0].mxu0
  %v1424 = vadd.f32 %v1221, %v1423
  %1425 = vmatprep.mubr.f32.mxu0 0.0
  %v1426 = vand.u32 %v338, 4294901760
  %1427 = vmatmul.mubr.f32.gmra.mrb[0].mxu0 %v1426
  %v1428 = vpop.f32.mrb[0].mxu0
  %v1429 = vadd.f32 %v1228, %v1428
  %v1430 = vpop.f32.mrb[0].mxu0
  %v1431 = vadd.f32 %v1230, %v1430
  %1432 = vdwg.mxu0
  %v1433 = vand.u32 %v273, 4294901760
  %1434 = vmatprep.subr.mxu0 %v1433
  %v1435 = vand.u32 %v272, 4294901760
  %1436 = vmatpush1.msra.mxu0 %v1435
  %v1437 = vand.u32 %v275, 4294901760
  %1438 = vmatprep.subr.mxu0 %v1437
  %v1439 = vand.u32 %v274, 4294901760
  %1440 = vmatpush1.msra.mxu0 %v1439
  %v1441 = vand.u32 %v277, 4294901760
  %1442 = vmatprep.subr.mxu0 %v1441
  %v1443 = vand.u32 %v276, 4294901760
  %1444 = vmatpush1.msra.mxu0 %v1443
  %v1445 = vand.u32 %v279, 4294901760
  %1446 = vmatprep.subr.mxu0 %v1445
  %v1447 = vand.u32 %v278, 4294901760
  %1448 = vmatpush1.msra.mxu0 %v1447
  %1449 = vmatprep.subr.mxu0 0.0
  %1450 = vmatpush1.msra.mxu0 0.0
  %1451 = vmatprep.subr.mxu0 0.0
  %1452 = vmatpush1.msra.mxu0 0.0
  %1453 = vmatprep.subr.mxu0 0.0
  %1454 = vmatpush1.msra.mxu0 0.0
  %1455 = vmatprep.subr.mxu0 0.0
  %1456 = vmatpush1.msra.mxu0 0.0
  %1457 = vmatprep.subr.mxu0 0.0
  %1458 = vmatpush1.msra.mxu0 0.0
  %1459 = vmatprep.subr.mxu0 0.0
  %1460 = vmatpush1.msra.mxu0 0.0
  %1461 = vmatprep.subr.mxu0 0.0
  %1462 = vmatpush1.msra.mxu0 0.0
  %1463 = vmatprep.subr.mxu0 0.0
  %1464 = vmatpush1.msra.mxu0 0.0
  %1465 = vmatprep.subr.mxu0 0.0
  %1466 = vmatpush1.msra.mxu0 0.0
  %1467 = vmatprep.subr.mxu0 0.0
  %1468 = vmatpush1.msra.mxu0 0.0
  %1469 = vmatprep.subr.mxu0 0.0
  %1470 = vmatpush1.msra.mxu0 0.0
  %1471 = vmatprep.subr.mxu0 0.0
  %1472 = vmatpush1.msra.mxu0 0.0
  %1473 = vmatprep.subr.mxu0 0.0
  %1474 = vmatpush1.msra.mxu0 0.0
  %1475 = vmatprep.subr.mxu0 0.0
  %1476 = vmatpush1.msra.mxu0 0.0
  %1477 = vmatprep.subr.mxu0 0.0
  %1478 = vmatpush1.msra.mxu0 0.0
  %1479 = vmatprep.subr.mxu0 0.0
  %1480 = vmatpush1.msra.mxu0 0.0
  %1481 = vmatprep.subr.mxu0 0.0
  %1482 = vmatpush1.msra.mxu0 0.0
  %1483 = vmatprep.subr.mxu0 0.0
  %1484 = vmatpush1.msra.mxu0 0.0
  %1485 = vmatprep.subr.mxu0 0.0
  %1486 = vmatpush1.msra.mxu0 0.0
  %1487 = vmatprep.subr.mxu0 0.0
  %1488 = vmatpush1.msra.mxu0 0.0
  %1489 = vmatprep.subr.mxu0 0.0
  %1490 = vmatpush1.msra.mxu0 0.0
  %1491 = vmatprep.subr.mxu0 0.0
  %1492 = vmatpush1.msra.mxu0 0.0
  %1493 = vmatprep.subr.mxu0 0.0
  %1494 = vmatpush1.msra.mxu0 0.0
  %1495 = vmatprep.subr.mxu0 0.0
  %1496 = vmatpush1.msra.mxu0 0.0
  %1497 = vmatprep.subr.mxu0 0.0
  %1498 = vmatpush1.msra.mxu0 0.0
  %1499 = vmatprep.subr.mxu0 0.0
  %1500 = vmatpush1.msra.mxu0 0.0
  %1501 = vmatprep.subr.mxu0 0.0
  %1502 = vmatpush1.msra.mxu0 0.0
  %1503 = vmatprep.subr.mxu0 0.0
  %1504 = vmatpush1.msra.mxu0 0.0
  %1505 = vmatprep.mubr.f32.mxu0 0.0
  %v1506 = vand.u32 %v293, 4294901760
  %1507 = vmatmul.mubr.f32.gmra.mrb[0].mxu0 %v1506
  %v1508 = vpop.f32.mrb[0].mxu0
  %v1509 = vadd.f32 %v1324, %v1508
  %v1510 = vpop.f32.mrb[0].mxu0
  %v1511 = vadd.f32 %v1326, %v1510
  %1512 = vmatprep.mubr.f32.mxu0 0.0
  %v1513 = vand.u32 %v296, 4294901760
  %1514 = vmatmul.mubr.f32.gmra.mrb[0].mxu0 %v1513
  %v1515 = vpop.f32.mrb[0].mxu0
  %v1516 = vadd.f32 %v1331, %v1515
  %v1517 = vpop.f32.mrb[0].mxu0
  %v1518 = vadd.f32 %v1333, %v1517
  %1519 = vmatprep.mubr.f32.mxu0 0.0
  %v1520 = vand.u32 %v299, 4294901760
  %1521 = vmatmul.mubr.f32.gmra.mrb[0].mxu0 %v1520
  %v1522 = vpop.f32.mrb[0].mxu0
  %v1523 = vadd.f32 %v1338, %v1522
  %v1524 = vpop.f32.mrb[0].mxu0
  %v1525 = vadd.f32 %v1340, %v1524
  %1526 = vmatprep.mubr.f32.mxu0 0.0
  %v1527 = vand.u32 %v302, 4294901760
  %1528 = vmatmul.mubr.f32.gmra.mrb[0].mxu0 %v1527
  %v1529 = vpop.f32.mrb[0].mxu0
  %v1530 = vadd.f32 %v1345, %v1529
  %v1531 = vpop.f32.mrb[0].mxu0
  %v1532 = vadd.f32 %v1347, %v1531
  %1533 = vmatprep.mubr.f32.mxu0 0.0
  %v1534 = vand.u32 %v305, 4294901760
  %1535 = vmatmul.mubr.f32.gmra.mrb[0].mxu0 %v1534
  %v1536 = vpop.f32.mrb[0].mxu0
  %v1537 = vadd.f32 %v1352, %v1536
  %v1538 = vpop.f32.mrb[0].mxu0
  %v1539 = vadd.f32 %v1354, %v1538
  %1540 = vmatprep.mubr.f32.mxu0 0.0
  %v1541 = vand.u32 %v308, 4294901760
  %1542 = vmatmul.mubr.f32.gmra.mrb[0].mxu0 %v1541
  %v1543 = vpop.f32.mrb[0].mxu0
  %v1544 = vadd.f32 %v1359, %v1543
  %v1545 = vpop.f32.mrb[0].mxu0
  %v1546 = vadd.f32 %v1361, %v1545
  %1547 = vmatprep.mubr.f32.mxu0 0.0
  %v1548 = vand.u32 %v311, 4294901760
  %1549 = vmatmul.mubr.f32.gmra.mrb[0].mxu0 %v1548
  %v1550 = vpop.f32.mrb[0].mxu0
  %v1551 = vadd.f32 %v1366, %v1550
  %v1552 = vpop.f32.mrb[0].mxu0
  %v1553 = vadd.f32 %v1368, %v1552
  %1554 = vmatprep.mubr.f32.mxu0 0.0
  %v1555 = vand.u32 %v314, 4294901760
  %1556 = vmatmul.mubr.f32.gmra.mrb[0].mxu0 %v1555
  %v1557 = vpop.f32.mrb[0].mxu0
  %v1558 = vadd.f32 %v1373, %v1557
  %v1559 = vpop.f32.mrb[0].mxu0
  %v1560 = vadd.f32 %v1375, %v1559
  %1561 = vmatprep.mubr.f32.mxu0 0.0
  %v1562 = vand.u32 %v317, 4294901760
  %1563 = vmatmul.mubr.f32.gmra.mrb[0].mxu0 %v1562
  %v1564 = vpop.f32.mrb[0].mxu0
  %v1565 = vadd.f32 %v1380, %v1564
  %v1566 = vpop.f32.mrb[0].mxu0
  %v1567 = vadd.f32 %v1382, %v1566
  %1568 = vmatprep.mubr.f32.mxu0 0.0
  %v1569 = vand.u32 %v320, 4294901760
  %1570 = vmatmul.mubr.f32.gmra.mrb[0].mxu0 %v1569
  %v1571 = vpop.f32.mrb[0].mxu0
  %v1572 = vadd.f32 %v1387, %v1571
  %v1573 = vpop.f32.mrb[0].mxu0
  %v1574 = vadd.f32 %v1389, %v1573
  %1575 = vmatprep.mubr.f32.mxu0 0.0
  %v1576 = vand.u32 %v323, 4294901760
  %1577 = vmatmul.mubr.f32.gmra.mrb[0].mxu0 %v1576
  %v1578 = vpop.f32.mrb[0].mxu0
  %v1579 = vadd.f32 %v1394, %v1578
  %v1580 = vpop.f32.mrb[0].mxu0
  %v1581 = vadd.f32 %v1396, %v1580
  %1582 = vmatprep.mubr.f32.mxu0 0.0
  %v1583 = vand.u32 %v326, 4294901760
  %1584 = vmatmul.mubr.f32.gmra.mrb[0].mxu0 %v1583
  %v1585 = vpop.f32.mrb[0].mxu0
  %v1586 = vadd.f32 %v1401, %v1585
  %v1587 = vpop.f32.mrb[0].mxu0
  %v1588 = vadd.f32 %v1403, %v1587
  %1589 = vmatprep.mubr.f32.mxu0 0.0
  %v1590 = vand.u32 %v329, 4294901760
  %1591 = vmatmul.mubr.f32.gmra.mrb[0].mxu0 %v1590
  %v1592 = vpop.f32.mrb[0].mxu0
  %v1593 = vadd.f32 %v1408, %v1592
  %v1594 = vpop.f32.mrb[0].mxu0
  %v1595 = vadd.f32 %v1410, %v1594
  %1596 = vmatprep.mubr.f32.mxu0 0.0
  %v1597 = vand.u32 %v332, 4294901760
  %1598 = vmatmul.mubr.f32.gmra.mrb[0].mxu0 %v1597
  %v1599 = vpop.f32.mrb[0].mxu0
  %v1600 = vadd.f32 %v1415, %v1599
  %v1601 = vpop.f32.mrb[0].mxu0
  %v1602 = vadd.f32 %v1417, %v1601
  %1603 = vmatprep.mubr.f32.mxu0 0.0
  %v1604 = vand.u32 %v335, 4294901760
  %1605 = vmatmul.mubr.f32.gmra.mrb[0].mxu0 %v1604
  %v1606 = vpop.f32.mrb[0].mxu0
  %v1607 = vadd.f32 %v1422, %v1606
  %v1608 = vpop.f32.mrb[0].mxu0
  %v1609 = vadd.f32 %v1424, %v1608
  %1610 = vmatprep.mubr.f32.mxu0 0.0
  %v1611 = vand.u32 %v338, 4294901760
  %1612 = vmatmul.mubr.f32.gmra.mrb[0].mxu0 %v1611
  %v1613 = vpop.f32.mrb[0].mxu0
  %v1614 = vadd.f32 %v1429, %v1613
  %v1615 = vpop.f32.mrb[0].mxu0
  %v1616 = vadd.f32 %v1431, %v1615
  %1617 = vdwg.mxu0
  %1618 = vst [vmem:[%s3] sm:$0xff] %v1509
  %vm1619 = vcmask 523264
  %1620 = vst.msk [vmem:[%s3 + $0x8] sm:$0xff] %vm1619, %v1511
  %1621 = vst [vmem:[%s3 + $0x10] sm:$0xff] %v1516
  %1622 = vst.msk [vmem:[%s3 + $0x18] sm:$0xff] %vm1619, %v1518
  %1623 = vst [vmem:[%s3 + $0x20] sm:$0xff] %v1523
  %1624 = vst.msk [vmem:[%s3 + $0x28] sm:$0xff] %vm1619, %v1525
  %1625 = vst [vmem:[%s3 + $0x30] sm:$0xff] %v1530
  %1626 = vst.msk [vmem:[%s3 + $0x38] sm:$0xff] %vm1619, %v1532
  %1627 = vst [vmem:[%s3 + $0x40] sm:$0xff] %v1537
  %1628 = vst.msk [vmem:[%s3 + $0x48] sm:$0xff] %vm1619, %v1539
  %1629 = vst [vmem:[%s3 + $0x50] sm:$0xff] %v1544
  %1630 = vst.msk [vmem:[%s3 + $0x58] sm:$0xff] %vm1619, %v1546
  %1631 = vst [vmem:[%s3 + $0x60] sm:$0xff] %v1551
  %1632 = vst.msk [vmem:[%s3 + $0x68] sm:$0xff] %vm1619, %v1553
  %1633 = vst [vmem:[%s3 + $0x70] sm:$0xff] %v1558
  %1634 = vst.msk [vmem:[%s3 + $0x78] sm:$0xff] %vm1619, %v1560
  %1635 = vst [vmem:[%s3 + $0x80] sm:$0xff] %v1565
  %1636 = vst.msk [vmem:[%s3 + $0x88] sm:$0xff] %vm1619, %v1567
  %1637 = vst [vmem:[%s3 + $0x90] sm:$0xff] %v1572
  %1638 = vst.msk [vmem:[%s3 + $0x98] sm:$0xff] %vm1619, %v1574
  %1639 = vst [vmem:[%s3 + $0xa0] sm:$0xff] %v1579
  %1640 = vst.msk [vmem:[%s3 + $0xa8] sm:$0xff] %vm1619, %v1581
  %1641 = vst [vmem:[%s3 + $0xb0] sm:$0xff] %v1586
  %1642 = vst.msk [vmem:[%s3 + $0xb8] sm:$0xff] %vm1619, %v1588
  %1643 = vst [vmem:[%s3 + $0xc0] sm:$0xff] %v1593
  %1644 = vst.msk [vmem:[%s3 + $0xc8] sm:$0xff] %vm1619, %v1595
  %1645 = vst [vmem:[%s3 + $0xd0] sm:$0xff] %v1600
  %1646 = vst.msk [vmem:[%s3 + $0xd8] sm:$0xff] %vm1619, %v1602
  %1647 = vst [vmem:[%s3 + $0xe0] sm:$0xff] %v1607
  %1648 = vst.msk [vmem:[%s3 + $0xe8] sm:$0xff] %vm1619, %v1609
  %1649 = vst [vmem:[%s3 + $0xf0] sm:$0xff] %v1614
  %1650 = vst.msk [vmem:[%s3 + $0xf8] sm:$0xff] %vm1619, %v1616
  // Predicated region
  $region14: #{vss_block_forward.5} parent=0 // pred_check
    _
  $region15: #{vss_block_forward.5} parent=0 // pred_check_branch
    %1652 = sbr.rel (0) target = $region17
  $region16: #{vss_block_forward.5} parent=0 // pred_region
    _
  $region17: #{vss_block_forward.5} parent=0 // pred_fallthru
    _
  // Predicated region
  $region18: #{vss_block_forward.5} parent=0 // pred_check
    _
  $region19: #{vss_block_forward.5} parent=0 // pred_check_branch
    %1654 = sbr.rel (0) target = $region21
  $region20: #{vss_block_forward.5} parent=0 // pred_region
    _
  $region21: #{vss_block_forward.5} parent=0 // pred_fallthru
    _

// kernel: vss_block_forward.6
$region0: #{vss_block_forward.6}
  #allocation0 [shape = 'u32[]', space=smem, size = 0x4, offset = 0x4, fixed_abs, tag = 'smem constant byte address 0x4 - core index']
  #allocation1 [shape = 'u32[144,128]{1,0:T(1,128)}', space=vmem, size = 0x12000, scoped, tag = 'internal scratch']
  %s0 = inlined_call_operand.vmem [shape: f32[2,10,10,64], index: 0, kind: input, shape index: {}]
  %s1 = inlined_call_operand.vmem [shape: f32[2,10,10,64], index: 1, kind: input, shape index: {}]
  %s2 = inlined_call_operand.vmem [shape: f32[9,64], index: 2, kind: input, shape index: {}]
  %s3 = inlined_call_operand.vmem [shape: f32[1,64], index: 3, kind: input, shape index: {}]
  %s4 = inlined_call_operand.vmem [shape: f32[9,64], index: 4, kind: input, shape index: {}]
  %s5 = inlined_call_operand.vmem [shape: f32[1,64], index: 5, kind: input, shape index: {}]
  %s6 = inlined_call_operand.vmem [shape: f32[2,8,8,64], index: 6, kind: output, shape index: {0}]
  %s7 = inlined_call_operand.vmem [shape: f32[2,8,8,64], index: 7, kind: output, shape index: {1}]
  %8 = xla_tuple %s6, %s7
  %s9 = sld [smem:[#allocation0]]
  $region65: #{vss_block_forward.6} parent=0
    _
  %s11 = ssub.s32 1, %s9
  %s12 = scalar_select 0, %s11, %s9
  loop: start=0, step=1, limit=4
  $region2: #{vss_block_forward.6} parent=0 // loop_pre_header
    _
  $region3: #{vss_block_forward.6} parent=0 // loop_header
    %s14 = sphi 0, %s18
    %p15 = scmp.ge.s32.totalorder %s14, 4
    %s24 = sphi 0, %s26
    %s27 = sphi 0, %s24
    %s28 = sphi 0, %s27
    %s44 = sphi 0, %s28
    %s50 = sphi 0, %s52
    %s53 = sphi 0, %s50
    %s54 = sphi 0, %s53
    %s70 = sphi 0, %s54
    %s74 = sphi 0, %s74
    %s76 = sphi 0, %s74
    %s77 = sphi 0, %s76
    %s91 = sphi 0, %s77
    %s95 = sphi 0, %s95
    %s97 = sphi 0, %s95
    %s98 = sphi 0, %s97
    %s112 = sphi 0, %s98
    %s116 = sphi 0, %s116
    %s118 = sphi 0, %s116
    %s119 = sphi 0, %s118
    %s133 = sphi 0, %s119
    %s137 = sphi 0, %s137
    %s139 = sphi 0, %s137
    %s140 = sphi 0, %s139
    %s154 = sphi 0, %s140
    %s160 = sphi 0, %s162
    %s163 = sphi 0, %s160
    %s164 = sphi 0, %s163
    %s180 = sphi 0, %s164
    %s186 = sphi 0, %s188
    %s189 = sphi 0, %s186
    %s190 = sphi 0, %s189
    %s206 = sphi 0, %s190
  $region4: #{vss_block_forward.6} parent=0 // loop_header_branch
    %17 = sbr.rel (%p15) target = $region8
  $region5: #{vss_block_forward.6} parent=0 // loop_body
    %s19 = ssub.s32 %s14, 1
    %s20 = ssub.s32 %s14, 2
    %s21 = sadd.s32 %s14, 1
    %s22 = ssub.s32 %s14, %s21
    %p23 = scmp.eq.s32.totalorder %s22, 0
    %s25 = sadd.s32 %s24, 1
    %s26 = scalar_select %p23, %s24, %s25
    %p29 = pneg %p23
    %p30 = scmp.eq.s32.totalorder %s14, 1
    %p31 = por %p29, %p30
    %p32 = scmp.ne.s32.totalorder %s24, %s27
    %p33 = scmp.eq.s32.totalorder %s14, 0
    %p34 = por %p32, %p33
    %p35 = scmp.ne.s32.totalorder %s24, %s27
    %p36 = scmp.eq.s32.totalorder %s19, 1
    %p37 = por %p35, %p36
    %p38 = scmp.ne.s32.totalorder %s27, %s28
    %p39 = scmp.eq.s32.totalorder %s19, 0
    %p40 = por %p38, %p39
    %p41 = scmp.ne.s32.totalorder %s27, %s28
    %p42 = scmp.eq.s32.totalorder %s20, 1
    %p43 = por %p41, %p42
    %p45 = scmp.ne.s32.totalorder %s28, %s44
    %p46 = scmp.eq.s32.totalorder %s20, 0
    %p47 = por %p45, %p46
    %s48 = ssub.s32 %s14, %s21
    %p49 = scmp.eq.s32.totalorder %s48, 0
    %s51 = sadd.s32 %s50, 1
    %s52 = scalar_select %p49, %s50, %s51
    %p55 = pneg %p49
    %p56 = scmp.eq.s32.totalorder %s14, 1
    %p57 = por %p55, %p56
    %p58 = scmp.ne.s32.totalorder %s50, %s53
    %p59 = scmp.eq.s32.totalorder %s14, 0
    %p60 = por %p58, %p59
    %p61 = scmp.ne.s32.totalorder %s50, %s53
    %p62 = scmp.eq.s32.totalorder %s19, 1
    %p63 = por %p61, %p62
    %p64 = scmp.ne.s32.totalorder %s53, %s54
    %p65 = scmp.eq.s32.totalorder %s19, 0
    %p66 = por %p64, %p65
    %p67 = scmp.ne.s32.totalorder %s53, %s54
    %p68 = scmp.eq.s32.totalorder %s20, 1
    %p69 = por %p67, %p68
    %p71 = scmp.ne.s32.totalorder %s54, %s70
    %p72 = scmp.eq.s32.totalorder %s20, 0
    %p73 = por %p71, %p72
    %s75 = sadd.s32 %s74, 1
    %p78 = scmp.eq.s32.totalorder %s14, 1
    %p79 = scmp.ne.s32.totalorder %s74, %s76
    %p80 = scmp.eq.s32.totalorder %s14, 0
    %p81 = por %p79, %p80
    %p82 = scmp.ne.s32.totalorder %s74, %s76
    %p83 = scmp.eq.s32.totalorder %s19, 1
    %p84 = por %p82, %p83
    %p85 = scmp.ne.s32.totalorder %s76, %s77
    %p86 = scmp.eq.s32.totalorder %s19, 0
    %p87 = por %p85, %p86
    %p88 = scmp.ne.s32.totalorder %s76, %s77
    %p89 = scmp.eq.s32.totalorder %s20, 1
    %p90 = por %p88, %p89
    %p92 = scmp.ne.s32.totalorder %s77, %s91
    %p93 = scmp.eq.s32.totalorder %s20, 0
    %p94 = por %p92, %p93
    %s96 = sadd.s32 %s95, 1
    %p99 = scmp.eq.s32.totalorder %s14, 1
    %p100 = scmp.ne.s32.totalorder %s95, %s97
    %p101 = scmp.eq.s32.totalorder %s14, 0
    %p102 = por %p100, %p101
    %p103 = scmp.ne.s32.totalorder %s95, %s97
    %p104 = scmp.eq.s32.totalorder %s19, 1
    %p105 = por %p103, %p104
    %p106 = scmp.ne.s32.totalorder %s97, %s98
    %p107 = scmp.eq.s32.totalorder %s19, 0
    %p108 = por %p106, %p107
    %p109 = scmp.ne.s32.totalorder %s97, %s98
    %p110 = scmp.eq.s32.totalorder %s20, 1
    %p111 = por %p109, %p110
    %p113 = scmp.ne.s32.totalorder %s98, %s112
    %p114 = scmp.eq.s32.totalorder %s20, 0
    %p115 = por %p113, %p114
    %s117 = sadd.s32 %s116, 1
    %p120 = scmp.eq.s32.totalorder %s14, 1
    %p121 = scmp.ne.s32.totalorder %s116, %s118
    %p122 = scmp.eq.s32.totalorder %s14, 0
    %p123 = por %p121, %p122
    %p124 = scmp.ne.s32.totalorder %s116, %s118
    %p125 = scmp.eq.s32.totalorder %s19, 1
    %p126 = por %p124, %p125
    %p127 = scmp.ne.s32.totalorder %s118, %s119
    %p128 = scmp.eq.s32.totalorder %s19, 0
    %p129 = por %p127, %p128
    %p130 = scmp.ne.s32.totalorder %s118, %s119
    %p131 = scmp.eq.s32.totalorder %s20, 1
    %p132 = por %p130, %p131
    %p134 = scmp.ne.s32.totalorder %s119, %s133
    %p135 = scmp.eq.s32.totalorder %s20, 0
    %p136 = por %p134, %p135
    %s138 = sadd.s32 %s137, 1
    %p141 = scmp.eq.s32.totalorder %s14, 1
    %p142 = scmp.ne.s32.totalorder %s137, %s139
    %p143 = scmp.eq.s32.totalorder %s14, 0
    %p144 = por %p142, %p143
    %p145 = scmp.ne.s32.totalorder %s137, %s139
    %p146 = scmp.eq.s32.totalorder %s19, 1
    %p147 = por %p145, %p146
    %p148 = scmp.ne.s32.totalorder %s139, %s140
    %p149 = scmp.eq.s32.totalorder %s19, 0
    %p150 = por %p148, %p149
    %p151 = scmp.ne.s32.totalorder %s139, %s140
    %p152 = scmp.eq.s32.totalorder %s20, 1
    %p153 = por %p151, %p152
    %p155 = scmp.ne.s32.totalorder %s140, %s154
    %p156 = scmp.eq.s32.totalorder %s20, 0
    %p157 = por %p155, %p156
    %s158 = ssub.s32 %s14, %s21
    %p159 = scmp.eq.s32.totalorder %s158, 0
    %s161 = sadd.s32 %s160, 1
    %s162 = scalar_select %p159, %s160, %s161
    %p165 = pneg %p159
    %p166 = scmp.eq.s32.totalorder %s14, 1
    %p167 = por %p165, %p166
    %p168 = scmp.ne.s32.totalorder %s160, %s163
    %p169 = scmp.eq.s32.totalorder %s14, 0
    %p170 = por %p168, %p169
    %p171 = scmp.ne.s32.totalorder %s160, %s163
    %p172 = scmp.eq.s32.totalorder %s19, 1
    %p173 = por %p171, %p172
    %p174 = scmp.ne.s32.totalorder %s163, %s164
    %p175 = scmp.eq.s32.totalorder %s19, 0
    %p176 = por %p174, %p175
    %p177 = scmp.ne.s32.totalorder %s163, %s164
    %p178 = scmp.eq.s32.totalorder %s20, 1
    %p179 = por %p177, %p178
    %p181 = scmp.ne.s32.totalorder %s164, %s180
    %p182 = scmp.eq.s32.totalorder %s20, 0
    %p183 = por %p181, %p182
    %s184 = ssub.s32 %s14, %s21
    %p185 = scmp.eq.s32.totalorder %s184, 0
    %s187 = sadd.s32 %s186, 1
    %s188 = scalar_select %p185, %s186, %s187
    %p191 = pneg %p185
    %p192 = scmp.eq.s32.totalorder %s14, 1
    %p193 = por %p191, %p192
    %p194 = scmp.ne.s32.totalorder %s186, %s189
    %p195 = scmp.eq.s32.totalorder %s14, 0
    %p196 = por %p194, %p195
    %p197 = scmp.ne.s32.totalorder %s186, %s189
    %p198 = scmp.eq.s32.totalorder %s19, 1
    %p199 = por %p197, %p198
    %p200 = scmp.ne.s32.totalorder %s189, %s190
    %p201 = scmp.eq.s32.totalorder %s19, 0
    %p202 = por %p200, %p201
    %p203 = scmp.ne.s32.totalorder %s189, %s190
    %p204 = scmp.eq.s32.totalorder %s20, 1
    %p205 = por %p203, %p204
    %p207 = scmp.ne.s32.totalorder %s190, %s206
    %p208 = scmp.eq.s32.totalorder %s20, 0
    %p209 = por %p207, %p208
    %p210 = scmp.le.s32.totalorder 1, %s14
    %p211 = scmp.lt.s32.totalorder %s14, 3
    %p212 = pnand %p210, %p211
    %p213 = pneg %p212
    // Predicated region
    $region9: #{vss_block_forward.6} parent=5 // pred_check
      _
    $region10: #{vss_block_forward.6} parent=5 // pred_check_branch
      %215 = sbr.rel (%p212) target = $region12
    $region11: #{vss_block_forward.6} parent=5 // pred_region
      %s216 = ssub.s32 %s14, 1
      // Predicated region
      $region13: #{vss_block_forward.6} parent=11 // pred_check
        %p217 = pneg %p87
      $region14: #{vss_block_forward.6} parent=11 // pred_check_branch
        %219 = sbr.rel (%p217) target = $region16
      $region15: #{vss_block_forward.6} parent=11 // pred_region
        _
      $region16: #{vss_block_forward.6} parent=11 // pred_fallthru
        _
      // Predicated region
      $region17: #{vss_block_forward.6} parent=11 // pred_check
        %p220 = pneg %p108
      $region18: #{vss_block_forward.6} parent=11 // pred_check_branch
        %222 = sbr.rel (%p220) target = $region20
      $region19: #{vss_block_forward.6} parent=11 // pred_region
        _
      $region20: #{vss_block_forward.6} parent=11 // pred_fallthru
        _
      // Predicated region
      $region21: #{vss_block_forward.6} parent=11 // pred_check
        %p223 = pneg %p129
      $region22: #{vss_block_forward.6} parent=11 // pred_check_branch
        %225 = sbr.rel (%p223) target = $region24
      $region23: #{vss_block_forward.6} parent=11 // pred_region
        _
      $region24: #{vss_block_forward.6} parent=11 // pred_fallthru
        _
      // Predicated region
      $region25: #{vss_block_forward.6} parent=11 // pred_check
        %p226 = pneg %p150
      $region26: #{vss_block_forward.6} parent=11 // pred_check_branch
        %228 = sbr.rel (%p226) target = $region28
      $region27: #{vss_block_forward.6} parent=11 // pred_region
        _
      $region28: #{vss_block_forward.6} parent=11 // pred_fallthru
        _
    $region12: #{vss_block_forward.6} parent=5 // pred_fallthru
      _
    %p229 = scmp.lt.s32.totalorder %s14, 2
    // Predicated region
    $region29: #{vss_block_forward.6} parent=5 // pred_check
      %p230 = pneg %p229
    $region30: #{vss_block_forward.6} parent=5 // pred_check_branch
      %232 = sbr.rel (%p230) target = $region32
    $region31: #{vss_block_forward.6} parent=5 // pred_region
      // Predicated region
      $region33: #{vss_block_forward.6} parent=31 // pred_check
        %p233 = pneg %p34
      $region34: #{vss_block_forward.6} parent=31 // pred_check_branch
        %235 = sbr.rel (%p233) target = $region36
      $region35: #{vss_block_forward.6} parent=31 // pred_region
        %p236 = scmp.lt.s32.totalorder %s14, 1
        %s237 = scalar_select %p236, %s14, 1
        %s238 = smul.addr %s237, 20
        %s239 = smul.addr %s238, 8
        %s240 = scalar_lea.vmem %s0, %s239
      $region36: #{vss_block_forward.6} parent=31 // pred_fallthru
        _
      // Predicated region
      $region37: #{vss_block_forward.6} parent=31 // pred_check
        %p241 = pneg %p60
      $region38: #{vss_block_forward.6} parent=31 // pred_check_branch
        %243 = sbr.rel (%p241) target = $region40
      $region39: #{vss_block_forward.6} parent=31 // pred_region
        %p244 = scmp.lt.s32.totalorder %s14, 1
        %s245 = scalar_select %p244, %s14, 1
        %s246 = smul.addr %s245, 20
        %s247 = smul.addr %s246, 8
        %s248 = scalar_lea.vmem %s1, %s247
      $region40: #{vss_block_forward.6} parent=31 // pred_fallthru
        _
    $region32: #{vss_block_forward.6} parent=5 // pred_fallthru
      _
    %p249 = scmp.le.s32.totalorder 1, %s14
    %p250 = scmp.lt.s32.totalorder %s14, 3
    %p251 = pnand %p249, %p250
    %p252 = pneg %p251
    // Predicated region
    $region41: #{vss_block_forward.6} parent=5 // pred_check
      _
    $region42: #{vss_block_forward.6} parent=5 // pred_check_branch
      %254 = sbr.rel (%p251) target = $region44
    $region43: #{vss_block_forward.6} parent=5 // pred_region
      %s255 = ssub.s32 %s14, 1
      %p256 = scmp.lt.s32.totalorder %s19, 1
      %s257 = scalar_select %p256, %s19, 1
      %s258 = smul.addr %s257, 20
      %s259 = smul.addr %s258, 8
      %s260 = scalar_lea.vmem %s0, %s259
      %p261 = pneg %p40
      %p262 = pneg %p37
      %p263 = scmp.lt.s32.totalorder %s19, 1
      %s264 = scalar_select %p263, %s19, 1
      %s265 = smul.addr %s264, 20
      %s266 = smul.addr %s265, 8
      %s267 = scalar_lea.vmem %s1, %s266
      %p268 = pneg %p66
      %p269 = pneg %p63
      %p270 = pneg %p87
      %p271 = pneg %p84
      %p272 = pneg %p108
      %p273 = pneg %p105
      %p274 = pneg %p129
      %p275 = pneg %p126
      %p276 = pneg %p150
      %p277 = pneg %p147
      %p278 = pneg %p176
      %p279 = pneg %p173
      %p280 = scmp.lt.s32.totalorder %s19, 1
      %s281 = scalar_select %p280, %s19, 1
      %s282 = smul.addr %s281, 8
      %s283 = smul.addr %s282, 8
      %s284 = scalar_lea.vmem %s6, %s283
      %p285 = pneg %p202
      %p286 = pneg %p199
      %p287 = scmp.lt.s32.totalorder %s19, 1
      %s288 = scalar_select %p287, %s19, 1
      %s289 = smul.addr %s288, 8
      %s290 = smul.addr %s289, 8
      %s291 = scalar_lea.vmem %s7, %s290
      %p292 = scmp.lt.s32.totalorder %s19, 1
      %s293 = scalar_select %p292, %s19, 1
      %s294 = smul.addr %s293, 20
      %s295 = smul.addr %s294, 8
      %s296 = scalar_lea.vmem %s0, %s295
      %p297 = scmp.lt.s32.totalorder %s19, 1
      %s298 = scalar_select %p297, %s19, 1
      %s299 = smul.addr %s298, 20
      %s300 = smul.addr %s299, 8
      %s301 = scalar_lea.vmem %s1, %s300
      %p302 = scmp.lt.s32.totalorder %s19, 1
      %s303 = scalar_select %p302, %s19, 1
      %s304 = smul.addr %s303, 8
      %s305 = smul.addr %s304, 8
      %s306 = scalar_lea.vmem %s6, %s305
      %p307 = scmp.lt.s32.totalorder %s19, 1
      %s308 = scalar_select %p307, %s19, 1
      %s309 = smul.addr %s308, 8
      %s310 = smul.addr %s309, 8
      %s311 = scalar_lea.vmem %s7, %s310
      %v312 = vld [vmem:[%s3] sm:$0x1]
      %v314 = vlaneseq
      %v315 = vshrl.u32 %v314, 7
      %v316 = vsub.s32 0, %v315
      %v317 = vrot.slane %v312, %v316
      %v319 = vadd.f32 %v317, 0.0
      %v320 = vld [vmem:[%s2] sm:$0x1]
      %v321 = vld [vmem:[%s296] sm:$0xff]
      %v322 = vld [vmem:[%s296 + $0x10] sm:$0xff]
      %v323 = vld [vmem:[%s296 + $0x20] sm:$0xff]
      %v324 = vld [vmem:[%s296 + $0x30] sm:$0xff]
      %v325 = vld [vmem:[%s296 + $0x40] sm:$0xff]
      %v326 = vld [vmem:[%s296 + $0x50] sm:$0xff]
      %v327 = vld [vmem:[%s296 + $0x60] sm:$0xff]
      %v328 = vld [vmem:[%s296 + $0x70] sm:$0xff]
      %v329 = vlaneseq
      %v330 = vshrl.u32 %v329, 7
      %v331 = vsub.s32 0, %v330
      %v332 = vrot.slane %v320, %v331
      %v333 = vmul.f32 %v321, %v332
      %v334 = vmul.f32 %v322, %v332
      %v335 = vmul.f32 %v323, %v332
      %v336 = vmul.f32 %v324, %v332
      %v337 = vmul.f32 %v325, %v332
      %v338 = vmul.f32 %v326, %v332
      %v339 = vmul.f32 %v327, %v332
      %v340 = vmul.f32 %v328, %v332
      %v341 = vadd.f32 %v319, %v333
      %v342 = vadd.f32 %v319, %v334
      %v343 = vadd.f32 %v319, %v335
      %v344 = vadd.f32 %v319, %v336
      %v345 = vadd.f32 %v319, %v337
      %v346 = vadd.f32 %v319, %v338
      %v347 = vadd.f32 %v319, %v339
      %v348 = vadd.f32 %v319, %v340
      %v349 = vld [vmem:[%s2 + $0x1] sm:$0x1]
      %v350 = vld [vmem:[%s296 + $0x1] sm:$0xff]
      %v351 = vld [vmem:[%s296 + $0x11] sm:$0xff]
      %v352 = vld [vmem:[%s296 + $0x21] sm:$0xff]
      %v353 = vld [vmem:[%s296 + $0x31] sm:$0xff]
      %v354 = vld [vmem:[%s296 + $0x41] sm:$0xff]
      %v355 = vld [vmem:[%s296 + $0x51] sm:$0xff]
      %v356 = vld [vmem:[%s296 + $0x61] sm:$0xff]
      %v357 = vld [vmem:[%s296 + $0x71] sm:$0xff]
      %v358 = vlaneseq
      %v359 = vshrl.u32 %v358, 7
      %v360 = vsub.s32 0, %v359
      %v361 = vrot.slane %v349, %v360
      %v362 = vmul.f32 %v350, %v361
      %v363 = vmul.f32 %v351, %v361
      %v364 = vmul.f32 %v352, %v361
      %v365 = vmul.f32 %v353, %v361
      %v366 = vmul.f32 %v354, %v361
      %v367 = vmul.f32 %v355, %v361
      %v368 = vmul.f32 %v356, %v361
      %v369 = vmul.f32 %v357, %v361
      %v370 = vadd.f32 %v341, %v362
      %v371 = vadd.f32 %v342, %v363
      %v372 = vadd.f32 %v343, %v364
      %v373 = vadd.f32 %v344, %v365
      %v374 = vadd.f32 %v345, %v366
      %v375 = vadd.f32 %v346, %v367
      %v376 = vadd.f32 %v347, %v368
      %v377 = vadd.f32 %v348, %v369
      %v378 = vld [vmem:[%s2 + $0x2] sm:$0x1]
      %v379 = vld [vmem:[%s296 + $0x2] sm:$0xff]
      %v380 = vld [vmem:[%s296 + $0x12] sm:$0xff]
      %v381 = vld [vmem:[%s296 + $0x22] sm:$0xff]
      %v382 = vld [vmem:[%s296 + $0x32] sm:$0xff]
      %v383 = vld [vmem:[%s296 + $0x42] sm:$0xff]
      %v384 = vld [vmem:[%s296 + $0x52] sm:$0xff]
      %v385 = vld [vmem:[%s296 + $0x62] sm:$0xff]
      %v386 = vld [vmem:[%s296 + $0x72] sm:$0xff]
      %v387 = vlaneseq
      %v388 = vshrl.u32 %v387, 7
      %v389 = vsub.s32 0, %v388
      %v390 = vrot.slane %v378, %v389
      %v391 = vmul.f32 %v379, %v390
      %v392 = vmul.f32 %v380, %v390
      %v393 = vmul.f32 %v381, %v390
      %v394 = vmul.f32 %v382, %v390
      %v395 = vmul.f32 %v383, %v390
      %v396 = vmul.f32 %v384, %v390
      %v397 = vmul.f32 %v385, %v390
      %v398 = vmul.f32 %v386, %v390
      %v399 = vadd.f32 %v370, %v391
      %v400 = vadd.f32 %v371, %v392
      %v401 = vadd.f32 %v372, %v393
      %v402 = vadd.f32 %v373, %v394
      %v403 = vadd.f32 %v374, %v395
      %v404 = vadd.f32 %v375, %v396
      %v405 = vadd.f32 %v376, %v397
      %v406 = vadd.f32 %v377, %v398
      %v407 = vld [vmem:[%s2 + $0x3] sm:$0x1]
      %s408 = scalar_lea.vmem %s296, 16
      %v409 = vld [vmem:[%s408] sm:$0xff]
      %v410 = vld [vmem:[%s408 + $0x10] sm:$0xff]
      %v411 = vld [vmem:[%s408 + $0x20] sm:$0xff]
      %v412 = vld [vmem:[%s408 + $0x30] sm:$0xff]
      %v413 = vld [vmem:[%s408 + $0x40] sm:$0xff]
      %v414 = vld [vmem:[%s408 + $0x50] sm:$0xff]
      %v415 = vld [vmem:[%s408 + $0x60] sm:$0xff]
      %v416 = vld [vmem:[%s408 + $0x70] sm:$0xff]
      %v417 = vlaneseq
      %v418 = vshrl.u32 %v417, 7
      %v419 = vsub.s32 0, %v418
      %v420 = vrot.slane %v407, %v419
      %v421 = vmul.f32 %v409, %v420
      %v422 = vmul.f32 %v410, %v420
      %v423 = vmul.f32 %v411, %v420
      %v424 = vmul.f32 %v412, %v420
      %v425 = vmul.f32 %v413, %v420
      %v426 = vmul.f32 %v414, %v420
      %v427 = vmul.f32 %v415, %v420
      %v428 = vmul.f32 %v416, %v420
      %v429 = vadd.f32 %v399, %v421
      %v430 = vadd.f32 %v400, %v422
      %v431 = vadd.f32 %v401, %v423
      %v432 = vadd.f32 %v402, %v424
      %v433 = vadd.f32 %v403, %v425
      %v434 = vadd.f32 %v404, %v426
      %v435 = vadd.f32 %v405, %v427
      %v436 = vadd.f32 %v406, %v428
      %v437 = vld [vmem:[%s2 + $0x4] sm:$0x1]
      %v438 = vld [vmem:[%s408 + $0x1] sm:$0xff]
      %v439 = vld [vmem:[%s408 + $0x11] sm:$0xff]
      %v440 = vld [vmem:[%s408 + $0x21] sm:$0xff]
      %v441 = vld [vmem:[%s408 + $0x31] sm:$0xff]
      %v442 = vld [vmem:[%s408 + $0x41] sm:$0xff]
      %v443 = vld [vmem:[%s408 + $0x51] sm:$0xff]
      %v444 = vld [vmem:[%s408 + $0x61] sm:$0xff]
      %v445 = vld [vmem:[%s408 + $0x71] sm:$0xff]
      %v446 = vlaneseq
      %v447 = vshrl.u32 %v446, 7
      %v448 = vsub.s32 0, %v447
      %v449 = vrot.slane %v437, %v448
      %v450 = vmul.f32 %v438, %v449
      %v451 = vmul.f32 %v439, %v449
      %v452 = vmul.f32 %v440, %v449
      %v453 = vmul.f32 %v441, %v449
      %v454 = vmul.f32 %v442, %v449
      %v455 = vmul.f32 %v443, %v449
      %v456 = vmul.f32 %v444, %v449
      %v457 = vmul.f32 %v445, %v449
      %v458 = vadd.f32 %v429, %v450
      %v459 = vadd.f32 %v430, %v451
      %v460 = vadd.f32 %v431, %v452
      %v461 = vadd.f32 %v432, %v453
      %v462 = vadd.f32 %v433, %v454
      %v463 = vadd.f32 %v434, %v455
      %v464 = vadd.f32 %v435, %v456
      %v465 = vadd.f32 %v436, %v457
      %v466 = vld [vmem:[%s2 + $0x5] sm:$0x1]
      %v467 = vld [vmem:[%s408 + $0x2] sm:$0xff]
      %v468 = vld [vmem:[%s408 + $0x12] sm:$0xff]
      %v469 = vld [vmem:[%s408 + $0x22] sm:$0xff]
      %v470 = vld [vmem:[%s408 + $0x32] sm:$0xff]
      %v471 = vld [vmem:[%s408 + $0x42] sm:$0xff]
      %v472 = vld [vmem:[%s408 + $0x52] sm:$0xff]
      %v473 = vld [vmem:[%s408 + $0x62] sm:$0xff]
      %v474 = vld [vmem:[%s408 + $0x72] sm:$0xff]
      %v475 = vlaneseq
      %v476 = vshrl.u32 %v475, 7
      %v477 = vsub.s32 0, %v476
      %v478 = vrot.slane %v466, %v477
      %v479 = vmul.f32 %v467, %v478
      %v480 = vmul.f32 %v468, %v478
      %v481 = vmul.f32 %v469, %v478
      %v482 = vmul.f32 %v470, %v478
      %v483 = vmul.f32 %v471, %v478
      %v484 = vmul.f32 %v472, %v478
      %v485 = vmul.f32 %v473, %v478
      %v486 = vmul.f32 %v474, %v478
      %v487 = vadd.f32 %v458, %v479
      %v488 = vadd.f32 %v459, %v480
      %v489 = vadd.f32 %v460, %v481
      %v490 = vadd.f32 %v461, %v482
      %v491 = vadd.f32 %v462, %v483
      %v492 = vadd.f32 %v463, %v484
      %v493 = vadd.f32 %v464, %v485
      %v494 = vadd.f32 %v465, %v486
      %v495 = vld [vmem:[%s2 + $0x6] sm:$0x1]
      %s496 = scalar_lea.vmem %s296, 32
      %v497 = vld [vmem:[%s496] sm:$0xff]
      %v498 = vld [vmem:[%s496 + $0x10] sm:$0xff]
      %v499 = vld [vmem:[%s496 + $0x20] sm:$0xff]
      %v500 = vld [vmem:[%s496 + $0x30] sm:$0xff]
      %v501 = vld [vmem:[%s496 + $0x40] sm:$0xff]
      %v502 = vld [vmem:[%s496 + $0x50] sm:$0xff]
      %v503 = vld [vmem:[%s496 + $0x60] sm:$0xff]
      %v504 = vld [vmem:[%s496 + $0x70] sm:$0xff]
      %v505 = vlaneseq
      %v506 = vshrl.u32 %v505, 7
      %v507 = vsub.s32 0, %v506
      %v508 = vrot.slane %v495, %v507
      %v509 = vmul.f32 %v497, %v508
      %v510 = vmul.f32 %v498, %v508
      %v511 = vmul.f32 %v499, %v508
      %v512 = vmul.f32 %v500, %v508
      %v513 = vmul.f32 %v501, %v508
      %v514 = vmul.f32 %v502, %v508
      %v515 = vmul.f32 %v503, %v508
      %v516 = vmul.f32 %v504, %v508
      %v517 = vadd.f32 %v487, %v509
      %v518 = vadd.f32 %v488, %v510
      %v519 = vadd.f32 %v489, %v511
      %v520 = vadd.f32 %v490, %v512
      %v521 = vadd.f32 %v491, %v513
      %v522 = vadd.f32 %v492, %v514
      %v523 = vadd.f32 %v493, %v515
      %v524 = vadd.f32 %v494, %v516
      %v525 = vld [vmem:[%s2 + $0x7] sm:$0x1]
      %v526 = vld [vmem:[%s496 + $0x1] sm:$0xff]
      %v527 = vld [vmem:[%s496 + $0x11] sm:$0xff]
      %v528 = vld [vmem:[%s496 + $0x21] sm:$0xff]
      %v529 = vld [vmem:[%s496 + $0x31] sm:$0xff]
      %v530 = vld [vmem:[%s496 + $0x41] sm:$0xff]
      %v531 = vld [vmem:[%s496 + $0x51] sm:$0xff]
      %v532 = vld [vmem:[%s496 + $0x61] sm:$0xff]
      %v533 = vld [vmem:[%s496 + $0x71] sm:$0xff]
      %v534 = vlaneseq
      %v535 = vshrl.u32 %v534, 7
      %v536 = vsub.s32 0, %v535
      %v537 = vrot.slane %v525, %v536
      %v538 = vmul.f32 %v526, %v537
      %v539 = vmul.f32 %v527, %v537
      %v540 = vmul.f32 %v528, %v537
      %v541 = vmul.f32 %v529, %v537
      %v542 = vmul.f32 %v530, %v537
      %v543 = vmul.f32 %v531, %v537
      %v544 = vmul.f32 %v532, %v537
      %v545 = vmul.f32 %v533, %v537
      %v546 = vadd.f32 %v517, %v538
      %v547 = vadd.f32 %v518, %v539
      %v548 = vadd.f32 %v519, %v540
      %v549 = vadd.f32 %v520, %v541
      %v550 = vadd.f32 %v521, %v542
      %v551 = vadd.f32 %v522, %v543
      %v552 = vadd.f32 %v523, %v544
      %v553 = vadd.f32 %v524, %v545
      %v554 = vld [vmem:[%s2 + $0x8] sm:$0x1]
      %v555 = vld [vmem:[%s496 + $0x2] sm:$0xff]
      %v556 = vld [vmem:[%s496 + $0x12] sm:$0xff]
      %v557 = vld [vmem:[%s496 + $0x22] sm:$0xff]
      %v558 = vld [vmem:[%s496 + $0x32] sm:$0xff]
      %v559 = vld [vmem:[%s496 + $0x42] sm:$0xff]
      %v560 = vld [vmem:[%s496 + $0x52] sm:$0xff]
      %v561 = vld [vmem:[%s496 + $0x62] sm:$0xff]
      %v562 = vld [vmem:[%s496 + $0x72] sm:$0xff]
      %v563 = vlaneseq
      %v564 = vshrl.u32 %v563, 7
      %v565 = vsub.s32 0, %v564
      %v566 = vrot.slane %v554, %v565
      %v567 = vmul.f32 %v555, %v566
      %v568 = vmul.f32 %v556, %v566
      %v569 = vmul.f32 %v557, %v566
      %v570 = vmul.f32 %v558, %v566
      %v571 = vmul.f32 %v559, %v566
      %v572 = vmul.f32 %v560, %v566
      %v573 = vmul.f32 %v561, %v566
      %v574 = vmul.f32 %v562, %v566
      %v575 = vadd.f32 %v546, %v567
      %v576 = vadd.f32 %v547, %v568
      %v577 = vadd.f32 %v548, %v569
      %v578 = vadd.f32 %v549, %v570
      %v579 = vadd.f32 %v550, %v571
      %v580 = vadd.f32 %v551, %v572
      %v581 = vadd.f32 %v552, %v573
      %v582 = vadd.f32 %v553, %v574
      %v583 = vsub.f32 0.0, %v575
      %v584 = vsub.f32 0.0, %v576
      %v585 = vsub.f32 0.0, %v577
      %v586 = vsub.f32 0.0, %v578
      %v587 = vsub.f32 0.0, %v579
      %v588 = vsub.f32 0.0, %v580
      %v589 = vsub.f32 0.0, %v581
      %v590 = vsub.f32 0.0, %v582
      %v591 = vmul.f32 %v583, 1.442695
      %v592 = vpow.pop %v591
      %v593 = vmul.f32 %v584, 1.442695
      %v594 = vpow.pop %v593
      %v595 = vmul.f32 %v585, 1.442695
      %v596 = vpow.pop %v595
      %v597 = vmul.f32 %v586, 1.442695
      %v598 = vpow.pop %v597
      %v599 = vmul.f32 %v587, 1.442695
      %v600 = vpow.pop %v599
      %v601 = vmul.f32 %v588, 1.442695
      %v602 = vpow.pop %v601
      %v603 = vmul.f32 %v589, 1.442695
      %v604 = vpow.pop %v603
      %v605 = vmul.f32 %v590, 1.442695
      %v606 = vpow.pop %v605
      %v607 = vadd.f32 %v592, 1.0
      %v608 = vadd.f32 %v594, 1.0
      %v609 = vadd.f32 %v596, 1.0
      %v610 = vadd.f32 %v598, 1.0
      %v611 = vadd.f32 %v600, 1.0
      %v612 = vadd.f32 %v602, 1.0
      %v613 = vadd.f32 %v604, 1.0
      %v614 = vadd.f32 %v606, 1.0
      %v615 = vrcp.pop %v607
      %v616 = vmul.f32 1.0, %v615
      %v617 = vrcp.pop %v608
      %v618 = vmul.f32 1.0, %v617
      %v619 = vrcp.pop %v609
      %v620 = vmul.f32 1.0, %v619
      %v621 = vrcp.pop %v610
      %v622 = vmul.f32 1.0, %v621
      %v623 = vrcp.pop %v611
      %v624 = vmul.f32 1.0, %v623
      %v625 = vrcp.pop %v612
      %v626 = vmul.f32 1.0, %v625
      %v627 = vrcp.pop %v613
      %v628 = vmul.f32 1.0, %v627
      %v629 = vrcp.pop %v614
      %v630 = vmul.f32 1.0, %v629
      %v631 = vmul.f32 %v575, %v616
      %v632 = vmul.f32 %v576, %v618
      %v633 = vmul.f32 %v577, %v620
      %v634 = vmul.f32 %v578, %v622
      %v635 = vmul.f32 %v579, %v624
      %v636 = vmul.f32 %v580, %v626
      %v637 = vmul.f32 %v581, %v628
      %v638 = vmul.f32 %v582, %v630
      %vm639 = vcmask 523264
      %640 = vst.msk [vmem:[%s306] sm:$0xff] %vm639, %v631
      %641 = vst.msk [vmem:[%s306 + $0x8] sm:$0xff] %vm639, %v632
      %642 = vst.msk [vmem:[%s306 + $0x10] sm:$0xff] %vm639, %v633
      %643 = vst.msk [vmem:[%s306 + $0x18] sm:$0xff] %vm639, %v634
      %644 = vst.msk [vmem:[%s306 + $0x20] sm:$0xff] %vm639, %v635
      %645 = vst.msk [vmem:[%s306 + $0x28] sm:$0xff] %vm639, %v636
      %646 = vst.msk [vmem:[%s306 + $0x30] sm:$0xff] %vm639, %v637
      %647 = vst.msk [vmem:[%s306 + $0x38] sm:$0xff] %vm639, %v638
      %v648 = vld [vmem:[%s5] sm:$0x1]
      %v650 = vlaneseq
      %v651 = vshrl.u32 %v650, 7
      %v652 = vsub.s32 0, %v651
      %v653 = vrot.slane %v648, %v652
      %v655 = vadd.f32 %v653, 0.0
      %v656 = vld [vmem:[%s4] sm:$0x1]
      %v657 = vld [vmem:[%s301] sm:$0xff]
      %v658 = vld [vmem:[%s301 + $0x10] sm:$0xff]
      %v659 = vld [vmem:[%s301 + $0x20] sm:$0xff]
      %v660 = vld [vmem:[%s301 + $0x30] sm:$0xff]
      %v661 = vld [vmem:[%s301 + $0x40] sm:$0xff]
      %v662 = vld [vmem:[%s301 + $0x50] sm:$0xff]
      %v663 = vld [vmem:[%s301 + $0x60] sm:$0xff]
      %v664 = vld [vmem:[%s301 + $0x70] sm:$0xff]
      %v665 = vlaneseq
      %v666 = vshrl.u32 %v665, 7
      %v667 = vsub.s32 0, %v666
      %v668 = vrot.slane %v656, %v667
      %v669 = vmul.f32 %v657, %v668
      %v670 = vmul.f32 %v658, %v668
      %v671 = vmul.f32 %v659, %v668
      %v672 = vmul.f32 %v660, %v668
      %v673 = vmul.f32 %v661, %v668
      %v674 = vmul.f32 %v662, %v668
      %v675 = vmul.f32 %v663, %v668
      %v676 = vmul.f32 %v664, %v668
      %v677 = vadd.f32 %v655, %v669
      %v678 = vadd.f32 %v655, %v670
      %v679 = vadd.f32 %v655, %v671
      %v680 = vadd.f32 %v655, %v672
      %v681 = vadd.f32 %v655, %v673
      %v682 = vadd.f32 %v655, %v674
      %v683 = vadd.f32 %v655, %v675
      %v684 = vadd.f32 %v655, %v676
      %v685 = vld [vmem:[%s4 + $0x1] sm:$0x1]
      %v686 = vld [vmem:[%s301 + $0x1] sm:$0xff]
      %v687 = vld [vmem:[%s301 + $0x11] sm:$0xff]
      %v688 = vld [vmem:[%s301 + $0x21] sm:$0xff]
      %v689 = vld [vmem:[%s301 + $0x31] sm:$0xff]
      %v690 = vld [vmem:[%s301 + $0x41] sm:$0xff]
      %v691 = vld [vmem:[%s301 + $0x51] sm:$0xff]
      %v692 = vld [vmem:[%s301 + $0x61] sm:$0xff]
      %v693 = vld [vmem:[%s301 + $0x71] sm:$0xff]
      %v694 = vlaneseq
      %v695 = vshrl.u32 %v694, 7
      %v696 = vsub.s32 0, %v695
      %v697 = vrot.slane %v685, %v696
      %v698 = vmul.f32 %v686, %v697
      %v699 = vmul.f32 %v687, %v697
      %v700 = vmul.f32 %v688, %v697
      %v701 = vmul.f32 %v689, %v697
      %v702 = vmul.f32 %v690, %v697
      %v703 = vmul.f32 %v691, %v697
      %v704 = vmul.f32 %v692, %v697
      %v705 = vmul.f32 %v693, %v697
      %v706 = vadd.f32 %v677, %v698
      %v707 = vadd.f32 %v678, %v699
      %v708 = vadd.f32 %v679, %v700
      %v709 = vadd.f32 %v680, %v701
      %v710 = vadd.f32 %v681, %v702
      %v711 = vadd.f32 %v682, %v703
      %v712 = vadd.f32 %v683, %v704
      %v713 = vadd.f32 %v684, %v705
      %v714 = vld [vmem:[%s4 + $0x2] sm:$0x1]
      %v715 = vld [vmem:[%s301 + $0x2] sm:$0xff]
      %v716 = vld [vmem:[%s301 + $0x12] sm:$0xff]
      %v717 = vld [vmem:[%s301 + $0x22] sm:$0xff]
      %v718 = vld [vmem:[%s301 + $0x32] sm:$0xff]
      %v719 = vld [vmem:[%s301 + $0x42] sm:$0xff]
      %v720 = vld [vmem:[%s301 + $0x52] sm:$0xff]
      %v721 = vld [vmem:[%s301 + $0x62] sm:$0xff]
      %v722 = vld [vmem:[%s301 + $0x72] sm:$0xff]
      %v723 = vlaneseq
      %v724 = vshrl.u32 %v723, 7
      %v725 = vsub.s32 0, %v724
      %v726 = vrot.slane %v714, %v725
      %v727 = vmul.f32 %v715, %v726
      %v728 = vmul.f32 %v716, %v726
      %v729 = vmul.f32 %v717, %v726
      %v730 = vmul.f32 %v718, %v726
      %v731 = vmul.f32 %v719, %v726
      %v732 = vmul.f32 %v720, %v726
      %v733 = vmul.f32 %v721, %v726
      %v734 = vmul.f32 %v722, %v726
      %v735 = vadd.f32 %v706, %v727
      %v736 = vadd.f32 %v707, %v728
      %v737 = vadd.f32 %v708, %v729
      %v738 = vadd.f32 %v709, %v730
      %v739 = vadd.f32 %v710, %v731
      %v740 = vadd.f32 %v711, %v732
      %v741 = vadd.f32 %v712, %v733
      %v742 = vadd.f32 %v713, %v734
      %v743 = vld [vmem:[%s4 + $0x3] sm:$0x1]
      %s744 = scalar_lea.vmem %s301, 16
      %v745 = vld [vmem:[%s744] sm:$0xff]
      %v746 = vld [vmem:[%s744 + $0x10] sm:$0xff]
      %v747 = vld [vmem:[%s744 + $0x20] sm:$0xff]
      %v748 = vld [vmem:[%s744 + $0x30] sm:$0xff]
      %v749 = vld [vmem:[%s744 + $0x40] sm:$0xff]
      %v750 = vld [vmem:[%s744 + $0x50] sm:$0xff]
      %v751 = vld [vmem:[%s744 + $0x60] sm:$0xff]
      %v752 = vld [vmem:[%s744 + $0x70] sm:$0xff]
      %v753 = vlaneseq
      %v754 = vshrl.u32 %v753, 7
      %v755 = vsub.s32 0, %v754
      %v756 = vrot.slane %v743, %v755
      %v757 = vmul.f32 %v745, %v756
      %v758 = vmul.f32 %v746, %v756
      %v759 = vmul.f32 %v747, %v756
      %v760 = vmul.f32 %v748, %v756
      %v761 = vmul.f32 %v749, %v756
      %v762 = vmul.f32 %v750, %v756
      %v763 = vmul.f32 %v751, %v756
      %v764 = vmul.f32 %v752, %v756
      %v765 = vadd.f32 %v735, %v757
      %v766 = vadd.f32 %v736, %v758
      %v767 = vadd.f32 %v737, %v759
      %v768 = vadd.f32 %v738, %v760
      %v769 = vadd.f32 %v739, %v761
      %v770 = vadd.f32 %v740, %v762
      %v771 = vadd.f32 %v741, %v763
      %v772 = vadd.f32 %v742, %v764
      %v773 = vld [vmem:[%s4 + $0x4] sm:$0x1]
      %v774 = vld [vmem:[%s744 + $0x1] sm:$0xff]
      %v775 = vld [vmem:[%s744 + $0x11] sm:$0xff]
      %v776 = vld [vmem:[%s744 + $0x21] sm:$0xff]
      %v777 = vld [vmem:[%s744 + $0x31] sm:$0xff]
      %v778 = vld [vmem:[%s744 + $0x41] sm:$0xff]
      %v779 = vld [vmem:[%s744 + $0x51] sm:$0xff]
      %v780 = vld [vmem:[%s744 + $0x61] sm:$0xff]
      %v781 = vld [vmem:[%s744 + $0x71] sm:$0xff]
      %v782 = vlaneseq
      %v783 = vshrl.u32 %v782, 7
      %v784 = vsub.s32 0, %v783
      %v785 = vrot.slane %v773, %v784
      %v786 = vmul.f32 %v774, %v785
      %v787 = vmul.f32 %v775, %v785
      %v788 = vmul.f32 %v776, %v785
      %v789 = vmul.f32 %v777, %v785
      %v790 = vmul.f32 %v778, %v785
      %v791 = vmul.f32 %v779, %v785
      %v792 = vmul.f32 %v780, %v785
      %v793 = vmul.f32 %v781, %v785
      %v794 = vadd.f32 %v765, %v786
      %v795 = vadd.f32 %v766, %v787
      %v796 = vadd.f32 %v767, %v788
      %v797 = vadd.f32 %v768, %v789
      %v798 = vadd.f32 %v769, %v790
      %v799 = vadd.f32 %v770, %v791
      %v800 = vadd.f32 %v771, %v792
      %v801 = vadd.f32 %v772, %v793
      %v802 = vld [vmem:[%s4 + $0x5] sm:$0x1]
      %v803 = vld [vmem:[%s744 + $0x2] sm:$0xff]
      %v804 = vld [vmem:[%s744 + $0x12] sm:$0xff]
      %v805 = vld [vmem:[%s744 + $0x22] sm:$0xff]
      %v806 = vld [vmem:[%s744 + $0x32] sm:$0xff]
      %v807 = vld [vmem:[%s744 + $0x42] sm:$0xff]
      %v808 = vld [vmem:[%s744 + $0x52] sm:$0xff]
      %v809 = vld [vmem:[%s744 + $0x62] sm:$0xff]
      %v810 = vld [vmem:[%s744 + $0x72] sm:$0xff]
      %v811 = vlaneseq
      %v812 = vshrl.u32 %v811, 7
      %v813 = vsub.s32 0, %v812
      %v814 = vrot.slane %v802, %v813
      %v815 = vmul.f32 %v803, %v814
      %v816 = vmul.f32 %v804, %v814
      %v817 = vmul.f32 %v805, %v814
      %v818 = vmul.f32 %v806, %v814
      %v819 = vmul.f32 %v807, %v814
      %v820 = vmul.f32 %v808, %v814
      %v821 = vmul.f32 %v809, %v814
      %v822 = vmul.f32 %v810, %v814
      %v823 = vadd.f32 %v794, %v815
      %v824 = vadd.f32 %v795, %v816
      %v825 = vadd.f32 %v796, %v817
      %v826 = vadd.f32 %v797, %v818
      %v827 = vadd.f32 %v798, %v819
      %v828 = vadd.f32 %v799, %v820
      %v829 = vadd.f32 %v800, %v821
      %v830 = vadd.f32 %v801, %v822
      %v831 = vld [vmem:[%s4 + $0x6] sm:$0x1]
      %s832 = scalar_lea.vmem %s301, 32
      %v833 = vld [vmem:[%s832] sm:$0xff]
      %v834 = vld [vmem:[%s832 + $0x10] sm:$0xff]
      %v835 = vld [vmem:[%s832 + $0x20] sm:$0xff]
      %v836 = vld [vmem:[%s832 + $0x30] sm:$0xff]
      %v837 = vld [vmem:[%s832 + $0x40] sm:$0xff]
      %v838 = vld [vmem:[%s832 + $0x50] sm:$0xff]
      %v839 = vld [vmem:[%s832 + $0x60] sm:$0xff]
      %v840 = vld [vmem:[%s832 + $0x70] sm:$0xff]
      %v841 = vlaneseq
      %v842 = vshrl.u32 %v841, 7
      %v843 = vsub.s32 0, %v842
      %v844 = vrot.slane %v831, %v843
      %v845 = vmul.f32 %v833, %v844
      %v846 = vmul.f32 %v834, %v844
      %v847 = vmul.f32 %v835, %v844
      %v848 = vmul.f32 %v836, %v844
      %v849 = vmul.f32 %v837, %v844
      %v850 = vmul.f32 %v838, %v844
      %v851 = vmul.f32 %v839, %v844
      %v852 = vmul.f32 %v840, %v844
      %v853 = vadd.f32 %v823, %v845
      %v854 = vadd.f32 %v824, %v846
      %v855 = vadd.f32 %v825, %v847
      %v856 = vadd.f32 %v826, %v848
      %v857 = vadd.f32 %v827, %v849
      %v858 = vadd.f32 %v828, %v850
      %v859 = vadd.f32 %v829, %v851
      %v860 = vadd.f32 %v830, %v852
      %v861 = vld [vmem:[%s4 + $0x7] sm:$0x1]
      %v862 = vld [vmem:[%s832 + $0x1] sm:$0xff]
      %v863 = vld [vmem:[%s832 + $0x11] sm:$0xff]
      %v864 = vld [vmem:[%s832 + $0x21] sm:$0xff]
      %v865 = vld [vmem:[%s832 + $0x31] sm:$0xff]
      %v866 = vld [vmem:[%s832 + $0x41] sm:$0xff]
      %v867 = vld [vmem:[%s832 + $0x51] sm:$0xff]
      %v868 = vld [vmem:[%s832 + $0x61] sm:$0xff]
      %v869 = vld [vmem:[%s832 + $0x71] sm:$0xff]
      %v870 = vlaneseq
      %v871 = vshrl.u32 %v870, 7
      %v872 = vsub.s32 0, %v871
      %v873 = vrot.slane %v861, %v872
      %v874 = vmul.f32 %v862, %v873
      %v875 = vmul.f32 %v863, %v873
      %v876 = vmul.f32 %v864, %v873
      %v877 = vmul.f32 %v865, %v873
      %v878 = vmul.f32 %v866, %v873
      %v879 = vmul.f32 %v867, %v873
      %v880 = vmul.f32 %v868, %v873
      %v881 = vmul.f32 %v869, %v873
      %v882 = vadd.f32 %v853, %v874
      %v883 = vadd.f32 %v854, %v875
      %v884 = vadd.f32 %v855, %v876
      %v885 = vadd.f32 %v856, %v877
      %v886 = vadd.f32 %v857, %v878
      %v887 = vadd.f32 %v858, %v879
      %v888 = vadd.f32 %v859, %v880
      %v889 = vadd.f32 %v860, %v881
      %v890 = vld [vmem:[%s4 + $0x8] sm:$0x1]
      %v891 = vld [vmem:[%s832 + $0x2] sm:$0xff]
      %v892 = vld [vmem:[%s832 + $0x12] sm:$0xff]
      %v893 = vld [vmem:[%s832 + $0x22] sm:$0xff]
      %v894 = vld [vmem:[%s832 + $0x32] sm:$0xff]
      %v895 = vld [vmem:[%s832 + $0x42] sm:$0xff]
      %v896 = vld [vmem:[%s832 + $0x52] sm:$0xff]
      %v897 = vld [vmem:[%s832 + $0x62] sm:$0xff]
      %v898 = vld [vmem:[%s832 + $0x72] sm:$0xff]
      %v899 = vlaneseq
      %v900 = vshrl.u32 %v899, 7
      %v901 = vsub.s32 0, %v900
      %v902 = vrot.slane %v890, %v901
      %v903 = vmul.f32 %v891, %v902
      %v904 = vmul.f32 %v892, %v902
      %v905 = vmul.f32 %v893, %v902
      %v906 = vmul.f32 %v894, %v902
      %v907 = vmul.f32 %v895, %v902
      %v908 = vmul.f32 %v896, %v902
      %v909 = vmul.f32 %v897, %v902
      %v910 = vmul.f32 %v898, %v902
      %v911 = vadd.f32 %v882, %v903
      %v912 = vadd.f32 %v883, %v904
      %v913 = vadd.f32 %v884, %v905
      %v914 = vadd.f32 %v885, %v906
      %v915 = vadd.f32 %v886, %v907
      %v916 = vadd.f32 %v887, %v908
      %v917 = vadd.f32 %v888, %v909
      %v918 = vadd.f32 %v889, %v910
      %v919 = vsub.f32 0.0, %v911
      %v920 = vsub.f32 0.0, %v912
      %v921 = vsub.f32 0.0, %v913
      %v922 = vsub.f32 0.0, %v914
      %v923 = vsub.f32 0.0, %v915
      %v924 = vsub.f32 0.0, %v916
      %v925 = vsub.f32 0.0, %v917
      %v926 = vsub.f32 0.0, %v918
      %v927 = vmul.f32 %v919, 1.442695
      %v928 = vpow.pop %v927
      %v929 = vmul.f32 %v920, 1.442695
      %v930 = vpow.pop %v929
      %v931 = vmul.f32 %v921, 1.442695
      %v932 = vpow.pop %v931
      %v933 = vmul.f32 %v922, 1.442695
      %v934 = vpow.pop %v933
      %v935 = vmul.f32 %v923, 1.442695
      %v936 = vpow.pop %v935
      %v937 = vmul.f32 %v924, 1.442695
      %v938 = vpow.pop %v937
      %v939 = vmul.f32 %v925, 1.442695
      %v940 = vpow.pop %v939
      %v941 = vmul.f32 %v926, 1.442695
      %v942 = vpow.pop %v941
      %v943 = vadd.f32 %v928, 1.0
      %v944 = vadd.f32 %v930, 1.0
      %v945 = vadd.f32 %v932, 1.0
      %v946 = vadd.f32 %v934, 1.0
      %v947 = vadd.f32 %v936, 1.0
      %v948 = vadd.f32 %v938, 1.0
      %v949 = vadd.f32 %v940, 1.0
      %v950 = vadd.f32 %v942, 1.0
      %v951 = vrcp.pop %v943
      %v952 = vmul.f32 1.0, %v951
      %v953 = vrcp.pop %v944
      %v954 = vmul.f32 1.0, %v953
      %v955 = vrcp.pop %v945
      %v956 = vmul.f32 1.0, %v955
      %v957 = vrcp.pop %v946
      %v958 = vmul.f32 1.0, %v957
      %v959 = vrcp.pop %v947
      %v960 = vmul.f32 1.0, %v959
      %v961 = vrcp.pop %v948
      %v962 = vmul.f32 1.0, %v961
      %v963 = vrcp.pop %v949
      %v964 = vmul.f32 1.0, %v963
      %v965 = vrcp.pop %v950
      %v966 = vmul.f32 1.0, %v965
      %v967 = vmul.f32 %v911, %v952
      %v968 = vmul.f32 %v912, %v954
      %v969 = vmul.f32 %v913, %v956
      %v970 = vmul.f32 %v914, %v958
      %v971 = vmul.f32 %v915, %v960
      %v972 = vmul.f32 %v916, %v962
      %v973 = vmul.f32 %v917, %v964
      %v974 = vmul.f32 %v918, %v966
      %975 = vst.msk [vmem:[%s311] sm:$0xff] %vm639, %v967
      %976 = vst.msk [vmem:[%s311 + $0x8] sm:$0xff] %vm639, %v968
      %977 = vst.msk [vmem:[%s311 + $0x10] sm:$0xff] %vm639, %v969
      %978 = vst.msk [vmem:[%s311 + $0x18] sm:$0xff] %vm639, %v970
      %979 = vst.msk [vmem:[%s311 + $0x20] sm:$0xff] %vm639, %v971
      %980 = vst.msk [vmem:[%s311 + $0x28] sm:$0xff] %vm639, %v972
      %981 = vst.msk [vmem:[%s311 + $0x30] sm:$0xff] %vm639, %v973
      %982 = vst.msk [vmem:[%s311 + $0x38] sm:$0xff] %vm639, %v974
      %p983 = scmp.lt.s32.totalorder %s19, 1
      %s984 = scalar_select %p983, %s19, 1
      %s985 = smul.addr %s984, 8
      %s986 = smul.addr %s985, 8
      %s987 = scalar_lea.vmem %s6, %s986
      %p988 = scmp.lt.s32.totalorder %s19, 1
      %s989 = scalar_select %p988, %s19, 1
      %s990 = smul.addr %s989, 8
      %s991 = smul.addr %s990, 8
      %s992 = scalar_lea.vmem %s7, %s991
      // Predicated region
      $region45: #{vss_block_forward.6} parent=43 // pred_check
        %p993 = pneg %p173
      $region46: #{vss_block_forward.6} parent=43 // pred_check_branch
        %995 = sbr.rel (%p993) target = $region48
      $region47: #{vss_block_forward.6} parent=43 // pred_region
        _
      $region48: #{vss_block_forward.6} parent=43 // pred_fallthru
        _
      // Predicated region
      $region49: #{vss_block_forward.6} parent=43 // pred_check
        %p996 = pneg %p199
      $region50: #{vss_block_forward.6} parent=43 // pred_check_branch
        %998 = sbr.rel (%p996) target = $region52
      $region51: #{vss_block_forward.6} parent=43 // pred_region
        _
      $region52: #{vss_block_forward.6} parent=43 // pred_fallthru
        _
    $region44: #{vss_block_forward.6} parent=5 // pred_fallthru
      _
    %p999 = scmp.le.s32.totalorder 2, %s14
    // Predicated region
    $region53: #{vss_block_forward.6} parent=5 // pred_check
      %p1000 = pneg %p999
    $region54: #{vss_block_forward.6} parent=5 // pred_check_branch
      %1002 = sbr.rel (%p1000) target = $region56
    $region55: #{vss_block_forward.6} parent=5 // pred_region
      %s1003 = ssub.s32 %s14, 2
      // Predicated region
      $region57: #{vss_block_forward.6} parent=55 // pred_check
        %p1004 = pneg %p179
      $region58: #{vss_block_forward.6} parent=55 // pred_check_branch
        %1006 = sbr.rel (%p1004) target = $region60
      $region59: #{vss_block_forward.6} parent=55 // pred_region
        %p1007 = scmp.lt.s32.totalorder %s20, 1
        %s1008 = scalar_select %p1007, %s20, 1
        %s1009 = smul.addr %s1008, 8
        %s1010 = smul.addr %s1009, 8
        %s1011 = scalar_lea.vmem %s6, %s1010
      $region60: #{vss_block_forward.6} parent=55 // pred_fallthru
        _
      // Predicated region
      $region61: #{vss_block_forward.6} parent=55 // pred_check
        %p1012 = pneg %p205
      $region62: #{vss_block_forward.6} parent=55 // pred_check_branch
        %1014 = sbr.rel (%p1012) target = $region64
      $region63: #{vss_block_forward.6} parent=55 // pred_region
        %p1015 = scmp.lt.s32.totalorder %s20, 1
        %s1016 = scalar_select %p1015, %s20, 1
        %s1017 = smul.addr %s1016, 8
        %s1018 = smul.addr %s1017, 8
        %s1019 = scalar_lea.vmem %s7, %s1018
      $region64: #{vss_block_forward.6} parent=55 // pred_fallthru
        _
    $region56: #{vss_block_forward.6} parent=5 // pred_fallthru
      _
  $region6: #{vss_block_forward.6} parent=0 // loop_footer
    %s18 = sadd.s32 1, %s14
  $region7: #{vss_block_forward.6} parent=0 // loop_footer_branch
    %13 = sbr.rel target = $region3
  $region8: #{vss_block_forward.6} parent=0 // loop_exit
    _

// kernel: vss_block_forward.7
$region0: #{vss_block_forward.7}
  #allocation0 [shape = 'u32[]', space=smem, size = 0x4, offset = 0x4, fixed_abs, tag = 'smem constant byte address 0x4 - core index']
  #allocation1 [shape = 'u32[144,128]{1,0:T(1,128)}', space=vmem, size = 0x12000, scoped, tag = 'internal scratch']
  #allocation2 [shape = 'f32[64,64]{1,0:T(8,128)}', space=vmem, size = 0x8000, scoped, tag = 'scratch operand']
  #allocation3 [shape = 'f32[64,16]{1,0:T(8,128)}', space=vmem, size = 0x8000, scoped, tag = 'scratch operand']
  #allocation4 [shape = 'f32[64,16]{1,0:T(8,128)}', space=vmem, size = 0x8000, scoped, tag = 'scratch operand']
  %s0 = inlined_call_operand.vmem [shape: f32[2,64,64], index: 0, kind: input, shape index: {}]
  %s1 = inlined_call_operand.vmem [shape: f32[2,64,64], index: 1, kind: input, shape index: {}]
  %s2 = inlined_call_operand.vmem [shape: f32[64,34], index: 2, kind: input, shape index: {}]
  %s3 = inlined_call_operand.vmem [shape: f32[2,64], index: 3, kind: input, shape index: {}]
  %s4 = inlined_call_operand.vmem [shape: f32[16,64], index: 4, kind: input, shape index: {}]
  %s5 = inlined_call_operand.vmem [shape: f32[1,64], index: 5, kind: input, shape index: {}]
  %s6 = inlined_call_operand.vmem [shape: f32[1,64], index: 6, kind: input, shape index: {}]
  %s7 = inlined_call_operand.vmem [shape: f32[2,64,64], index: 7, kind: output, shape index: {}]
  %s8 = sld [smem:[#allocation0]]
  $region68: #{vss_block_forward.7} parent=0
    _
  %s10 = ssub.s32 1, %s8
  %s11 = scalar_select 0, %s10, %s8
  loop: start=0, step=1, limit=4
  $region2: #{vss_block_forward.7} parent=0 // loop_pre_header
    _
  $region3: #{vss_block_forward.7} parent=0 // loop_header
    %s13 = sphi 0, %s17
    %p14 = scmp.ge.s32.totalorder %s13, 4
    %s23 = sphi 0, %s25
    %s26 = sphi 0, %s23
    %s27 = sphi 0, %s26
    %s43 = sphi 0, %s27
    %s49 = sphi 0, %s51
    %s52 = sphi 0, %s49
    %s53 = sphi 0, %s52
    %s69 = sphi 0, %s53
    %s73 = sphi 0, %s73
    %s75 = sphi 0, %s73
    %s76 = sphi 0, %s75
    %s90 = sphi 0, %s76
    %s94 = sphi 0, %s94
    %s96 = sphi 0, %s94
    %s97 = sphi 0, %s96
    %s111 = sphi 0, %s97
    %s115 = sphi 0, %s115
    %s117 = sphi 0, %s115
    %s118 = sphi 0, %s117
    %s132 = sphi 0, %s118
    %s136 = sphi 0, %s136
    %s138 = sphi 0, %s136
    %s139 = sphi 0, %s138
    %s153 = sphi 0, %s139
    %s157 = sphi 0, %s157
    %s159 = sphi 0, %s157
    %s160 = sphi 0, %s159
    %s174 = sphi 0, %s160
    %s180 = sphi 0, %s182
    %s183 = sphi 0, %s180
    %s184 = sphi 0, %s183
    %s200 = sphi 0, %s184
  $region4: #{vss_block_forward.7} parent=0 // loop_header_branch
    %16 = sbr.rel (%p14) target = $region8
  $region5: #{vss_block_forward.7} parent=0 // loop_body
    %s18 = ssub.s32 %s13, 1
    %s19 = ssub.s32 %s13, 2
    %s20 = sadd.s32 %s13, 1
    %s21 = ssub.s32 %s13, %s20
    %p22 = scmp.eq.s32.totalorder %s21, 0
    %s24 = sadd.s32 %s23, 1
    %s25 = scalar_select %p22, %s23, %s24
    %p28 = pneg %p22
    %p29 = scmp.eq.s32.totalorder %s13, 1
    %p30 = por %p28, %p29
    %p31 = scmp.ne.s32.totalorder %s23, %s26
    %p32 = scmp.eq.s32.totalorder %s13, 0
    %p33 = por %p31, %p32
    %p34 = scmp.ne.s32.totalorder %s23, %s26
    %p35 = scmp.eq.s32.totalorder %s18, 1
    %p36 = por %p34, %p35
    %p37 = scmp.ne.s32.totalorder %s26, %s27
    %p38 = scmp.eq.s32.totalorder %s18, 0
    %p39 = por %p37, %p38
    %p40 = scmp.ne.s32.totalorder %s26, %s27
    %p41 = scmp.eq.s32.totalorder %s19, 1
    %p42 = por %p40, %p41
    %p44 = scmp.ne.s32.totalorder %s27, %s43
    %p45 = scmp.eq.s32.totalorder %s19, 0
    %p46 = por %p44, %p45
    %s47 = ssub.s32 %s13, %s20
    %p48 = scmp.eq.s32.totalorder %s47, 0
    %s50 = sadd.s32 %s49, 1
    %s51 = scalar_select %p48, %s49, %s50
    %p54 = pneg %p48
    %p55 = scmp.eq.s32.totalorder %s13, 1
    %p56 = por %p54, %p55
    %p57 = scmp.ne.s32.totalorder %s49, %s52
    %p58 = scmp.eq.s32.totalorder %s13, 0
    %p59 = por %p57, %p58
    %p60 = scmp.ne.s32.totalorder %s49, %s52
    %p61 = scmp.eq.s32.totalorder %s18, 1
    %p62 = por %p60, %p61
    %p63 = scmp.ne.s32.totalorder %s52, %s53
    %p64 = scmp.eq.s32.totalorder %s18, 0
    %p65 = por %p63, %p64
    %p66 = scmp.ne.s32.totalorder %s52, %s53
    %p67 = scmp.eq.s32.totalorder %s19, 1
    %p68 = por %p66, %p67
    %p70 = scmp.ne.s32.totalorder %s53, %s69
    %p71 = scmp.eq.s32.totalorder %s19, 0
    %p72 = por %p70, %p71
    %s74 = sadd.s32 %s73, 1
    %p77 = scmp.eq.s32.totalorder %s13, 1
    %p78 = scmp.ne.s32.totalorder %s73, %s75
    %p79 = scmp.eq.s32.totalorder %s13, 0
    %p80 = por %p78, %p79
    %p81 = scmp.ne.s32.totalorder %s73, %s75
    %p82 = scmp.eq.s32.totalorder %s18, 1
    %p83 = por %p81, %p82
    %p84 = scmp.ne.s32.totalorder %s75, %s76
    %p85 = scmp.eq.s32.totalorder %s18, 0
    %p86 = por %p84, %p85
    %p87 = scmp.ne.s32.totalorder %s75, %s76
    %p88 = scmp.eq.s32.totalorder %s19, 1
    %p89 = por %p87, %p88
    %p91 = scmp.ne.s32.totalorder %s76, %s90
    %p92 = scmp.eq.s32.totalorder %s19, 0
    %p93 = por %p91, %p92
    %s95 = sadd.s32 %s94, 1
    %p98 = scmp.eq.s32.totalorder %s13, 1
    %p99 = scmp.ne.s32.totalorder %s94, %s96
    %p100 = scmp.eq.s32.totalorder %s13, 0
    %p101 = por %p99, %p100
    %p102 = scmp.ne.s32.totalorder %s94, %s96
    %p103 = scmp.eq.s32.totalorder %s18, 1
    %p104 = por %p102, %p103
    %p105 = scmp.ne.s32.totalorder %s96, %s97
    %p106 = scmp.eq.s32.totalorder %s18, 0
    %p107 = por %p105, %p106
    %p108 = scmp.ne.s32.totalorder %s96, %s97
    %p109 = scmp.eq.s32.totalorder %s19, 1
    %p110 = por %p108, %p109
    %p112 = scmp.ne.s32.totalorder %s97, %s111
    %p113 = scmp.eq.s32.totalorder %s19, 0
    %p114 = por %p112, %p113
    %s116 = sadd.s32 %s115, 1
    %p119 = scmp.eq.s32.totalorder %s13, 1
    %p120 = scmp.ne.s32.totalorder %s115, %s117
    %p121 = scmp.eq.s32.totalorder %s13, 0
    %p122 = por %p120, %p121
    %p123 = scmp.ne.s32.totalorder %s115, %s117
    %p124 = scmp.eq.s32.totalorder %s18, 1
    %p125 = por %p123, %p124
    %p126 = scmp.ne.s32.totalorder %s117, %s118
    %p127 = scmp.eq.s32.totalorder %s18, 0
    %p128 = por %p126, %p127
    %p129 = scmp.ne.s32.totalorder %s117, %s118
    %p130 = scmp.eq.s32.totalorder %s19, 1
    %p131 = por %p129, %p130
    %p133 = scmp.ne.s32.totalorder %s118, %s132
    %p134 = scmp.eq.s32.totalorder %s19, 0
    %p135 = por %p133, %p134
    %s137 = sadd.s32 %s136, 1
    %p140 = scmp.eq.s32.totalorder %s13, 1
    %p141 = scmp.ne.s32.totalorder %s136, %s138
    %p142 = scmp.eq.s32.totalorder %s13, 0
    %p143 = por %p141, %p142
    %p144 = scmp.ne.s32.totalorder %s136, %s138
    %p145 = scmp.eq.s32.totalorder %s18, 1
    %p146 = por %p144, %p145
    %p147 = scmp.ne.s32.totalorder %s138, %s139
    %p148 = scmp.eq.s32.totalorder %s18, 0
    %p149 = por %p147, %p148
    %p150 = scmp.ne.s32.totalorder %s138, %s139
    %p151 = scmp.eq.s32.totalorder %s19, 1
    %p152 = por %p150, %p151
    %p154 = scmp.ne.s32.totalorder %s139, %s153
    %p155 = scmp.eq.s32.totalorder %s19, 0
    %p156 = por %p154, %p155
    %s158 = sadd.s32 %s157, 1
    %p161 = scmp.eq.s32.totalorder %s13, 1
    %p162 = scmp.ne.s32.totalorder %s157, %s159
    %p163 = scmp.eq.s32.totalorder %s13, 0
    %p164 = por %p162, %p163
    %p165 = scmp.ne.s32.totalorder %s157, %s159
    %p166 = scmp.eq.s32.totalorder %s18, 1
    %p167 = por %p165, %p166
    %p168 = scmp.ne.s32.totalorder %s159, %s160
    %p169 = scmp.eq.s32.totalorder %s18, 0
    %p170 = por %p168, %p169
    %p171 = scmp.ne.s32.totalorder %s159, %s160
    %p172 = scmp.eq.s32.totalorder %s19, 1
    %p173 = por %p171, %p172
    %p175 = scmp.ne.s32.totalorder %s160, %s174
    %p176 = scmp.eq.s32.totalorder %s19, 0
    %p177 = por %p175, %p176
    %s178 = ssub.s32 %s13, %s20
    %p179 = scmp.eq.s32.totalorder %s178, 0
    %s181 = sadd.s32 %s180, 1
    %s182 = scalar_select %p179, %s180, %s181
    %p185 = pneg %p179
    %p186 = scmp.eq.s32.totalorder %s13, 1
    %p187 = por %p185, %p186
    %p188 = scmp.ne.s32.totalorder %s180, %s183
    %p189 = scmp.eq.s32.totalorder %s13, 0
    %p190 = por %p188, %p189
    %p191 = scmp.ne.s32.totalorder %s180, %s183
    %p192 = scmp.eq.s32.totalorder %s18, 1
    %p193 = por %p191, %p192
    %p194 = scmp.ne.s32.totalorder %s183, %s184
    %p195 = scmp.eq.s32.totalorder %s18, 0
    %p196 = por %p194, %p195
    %p197 = scmp.ne.s32.totalorder %s183, %s184
    %p198 = scmp.eq.s32.totalorder %s19, 1
    %p199 = por %p197, %p198
    %p201 = scmp.ne.s32.totalorder %s184, %s200
    %p202 = scmp.eq.s32.totalorder %s19, 0
    %p203 = por %p201, %p202
    %p204 = scmp.le.s32.totalorder 1, %s13
    %p205 = scmp.lt.s32.totalorder %s13, 3
    %p206 = pnand %p204, %p205
    %p207 = pneg %p206
    // Predicated region
    $region9: #{vss_block_forward.7} parent=5 // pred_check
      _
    $region10: #{vss_block_forward.7} parent=5 // pred_check_branch
      %209 = sbr.rel (%p206) target = $region12
    $region11: #{vss_block_forward.7} parent=5 // pred_region
      %s210 = ssub.s32 %s13, 1
      // Predicated region
      $region13: #{vss_block_forward.7} parent=11 // pred_check
        %p211 = pneg %p86
      $region14: #{vss_block_forward.7} parent=11 // pred_check_branch
        %213 = sbr.rel (%p211) target = $region16
      $region15: #{vss_block_forward.7} parent=11 // pred_region
        _
      $region16: #{vss_block_forward.7} parent=11 // pred_fallthru
        _
      // Predicated region
      $region17: #{vss_block_forward.7} parent=11 // pred_check
        %p214 = pneg %p107
      $region18: #{vss_block_forward.7} parent=11 // pred_check_branch
        %216 = sbr.rel (%p214) target = $region20
      $region19: #{vss_block_forward.7} parent=11 // pred_region
        _
      $region20: #{vss_block_forward.7} parent=11 // pred_fallthru
        _
      // Predicated region
      $region21: #{vss_block_forward.7} parent=11 // pred_check
        %p217 = pneg %p128
      $region22: #{vss_block_forward.7} parent=11 // pred_check_branch
        %219 = sbr.rel (%p217) target = $region24
      $region23: #{vss_block_forward.7} parent=11 // pred_region
        _
      $region24: #{vss_block_forward.7} parent=11 // pred_fallthru
        _
      // Predicated region
      $region25: #{vss_block_forward.7} parent=11 // pred_check
        %p220 = pneg %p149
      $region26: #{vss_block_forward.7} parent=11 // pred_check_branch
        %222 = sbr.rel (%p220) target = $region28
      $region27: #{vss_block_forward.7} parent=11 // pred_region
        _
      $region28: #{vss_block_forward.7} parent=11 // pred_fallthru
        _
      // Predicated region
      $region29: #{vss_block_forward.7} parent=11 // pred_check
        %p223 = pneg %p170
      $region30: #{vss_block_forward.7} parent=11 // pred_check_branch
        %225 = sbr.rel (%p223) target = $region32
      $region31: #{vss_block_forward.7} parent=11 // pred_region
        _
      $region32: #{vss_block_forward.7} parent=11 // pred_fallthru
        _
    $region12: #{vss_block_forward.7} parent=5 // pred_fallthru
      _
    %p226 = scmp.lt.s32.totalorder %s13, 2
    // Predicated region
    $region33: #{vss_block_forward.7} parent=5 // pred_check
      %p227 = pneg %p226
    $region34: #{vss_block_forward.7} parent=5 // pred_check_branch
      %229 = sbr.rel (%p227) target = $region36
    $region35: #{vss_block_forward.7} parent=5 // pred_region
      // Predicated region
      $region37: #{vss_block_forward.7} parent=35 // pred_check
        %p230 = pneg %p33
      $region38: #{vss_block_forward.7} parent=35 // pred_check_branch
        %232 = sbr.rel (%p230) target = $region40
      $region39: #{vss_block_forward.7} parent=35 // pred_region
        %p233 = scmp.lt.s32.totalorder %s13, 1
        %s234 = scalar_select %p233, %s13, 1
        %s235 = smul.addr %s234, 8
        %s236 = smul.addr %s235, 8
        %s237 = scalar_lea.vmem %s0, %s236
      $region40: #{vss_block_forward.7} parent=35 // pred_fallthru
        _
      // Predicated region
      $region41: #{vss_block_forward.7} parent=35 // pred_check
        %p238 = pneg %p59
      $region42: #{vss_block_forward.7} parent=35 // pred_check_branch
        %240 = sbr.rel (%p238) target = $region44
      $region43: #{vss_block_forward.7} parent=35 // pred_region
        %p241 = scmp.lt.s32.totalorder %s13, 1
        %s242 = scalar_select %p241, %s13, 1
        %s243 = smul.addr %s242, 8
        %s244 = smul.addr %s243, 8
        %s245 = scalar_lea.vmem %s1, %s244
      $region44: #{vss_block_forward.7} parent=35 // pred_fallthru
        _
    $region36: #{vss_block_forward.7} parent=5 // pred_fallthru
      _
    %p246 = scmp.le.s32.totalorder 1, %s13
    %p247 = scmp.lt.s32.totalorder %s13, 3
    %p248 = pnand %p246, %p247
    %p249 = pneg %p248
    // Predicated region
    $region45: #{vss_block_forward.7} parent=5 // pred_check
      _
    $region46: #{vss_block_forward.7} parent=5 // pred_check_branch
      %251 = sbr.rel (%p248) target = $region48
    $region47: #{vss_block_forward.7} parent=5 // pred_region
      %s252 = ssub.s32 %s13, 1
      %p253 = scmp.lt.s32.totalorder %s18, 1
      %s254 = scalar_select %p253, %s18, 1
      %s255 = smul.addr %s254, 8
      %s256 = smul.addr %s255, 8
      %s257 = scalar_lea.vmem %s0, %s256
      %p258 = pneg %p39
      %p259 = pneg %p36
      %p260 = scmp.lt.s32.totalorder %s18, 1
      %s261 = scalar_select %p260, %s18, 1
      %s262 = smul.addr %s261, 8
      %s263 = smul.addr %s262, 8
      %s264 = scalar_lea.vmem %s1, %s263
      %p265 = pneg %p65
      %p266 = pneg %p62
      %p267 = pneg %p86
      %p268 = pneg %p83
      %p269 = pneg %p107
      %p270 = pneg %p104
      %p271 = pneg %p128
      %p272 = pneg %p125
      %p273 = pneg %p149
      %p274 = pneg %p146
      %p275 = pneg %p170
      %p276 = pneg %p167
      %p277 = pneg %p196
      %p278 = pneg %p193
      %p279 = scmp.lt.s32.totalorder %s18, 1
      %s280 = scalar_select %p279, %s18, 1
      %s281 = smul.addr %s280, 8
      %s282 = smul.addr %s281, 8
      %s283 = scalar_lea.vmem %s7, %s282
      %p284 = scmp.lt.s32.totalorder %s18, 1
      %s285 = scalar_select %p284, %s18, 1
      %s286 = smul.addr %s285, 8
      %s287 = smul.addr %s286, 8
      %s288 = scalar_lea.vmem %s0, %s287
      %p289 = scmp.lt.s32.totalorder %s18, 1
      %s290 = scalar_select %p289, %s18, 1
      %s291 = smul.addr %s290, 8
      %s292 = smul.addr %s291, 8
      %s293 = scalar_lea.vmem %s1, %s292
      %p294 = scmp.lt.s32.totalorder %s18, 1
      %s295 = scalar_select %p294, %s18, 1
      %s296 = smul.addr %s295, 8
      %s297 = smul.addr %s296, 8
      %s298 = scalar_lea.vmem %s7, %s297
      %v299 = vld [vmem:[%s288] sm:$0xff]
      %v300 = vld [vmem:[%s288 + $0x8] sm:$0xff]
      %v301 = vld [vmem:[%s288 + $0x10] sm:$0xff]
      %v302 = vld [vmem:[%s288 + $0x18] sm:$0xff]
      %v303 = vld [vmem:[%s288 + $0x20] sm:$0xff]
      %v304 = vld [vmem:[%s288 + $0x28] sm:$0xff]
      %v305 = vld [vmem:[%s288 + $0x30] sm:$0xff]
      %v306 = vld [vmem:[%s288 + $0x38] sm:$0xff]
      %v307 = vld [vmem:[%s293] sm:$0xff]
      %v308 = vld [vmem:[%s293 + $0x8] sm:$0xff]
      %v309 = vld [vmem:[%s293 + $0x10] sm:$0xff]
      %v310 = vld [vmem:[%s293 + $0x18] sm:$0xff]
      %v311 = vld [vmem:[%s293 + $0x20] sm:$0xff]
      %v312 = vld [vmem:[%s293 + $0x28] sm:$0xff]
      %v313 = vld [vmem:[%s293 + $0x30] sm:$0xff]
      %v314 = vld [vmem:[%s293 + $0x38] sm:$0xff]
      %v315 = vadd.f32 %v299, %v307
      %v316 = vadd.f32 %v300, %v308
      %v317 = vadd.f32 %v301, %v309
      %v318 = vadd.f32 %v302, %v310
      %v319 = vadd.f32 %v303, %v311
      %v320 = vadd.f32 %v304, %v312
      %v321 = vadd.f32 %v305, %v313
      %v322 = vadd.f32 %v306, %v314
      %v323 = vld [vmem:[%s2] sm:$0xff]
      %v324 = vld [vmem:[%s2 + $0x8] sm:$0xff]
      %v325 = vld [vmem:[%s2 + $0x10] sm:$0xff]
      %v326 = vld [vmem:[%s2 + $0x18] sm:$0xff]
      %v327 = vld [vmem:[%s2 + $0x20] sm:$0xff]
      %v328 = vld [vmem:[%s2 + $0x28] sm:$0xff]
      %v329 = vld [vmem:[%s2 + $0x30] sm:$0xff]
      %v330 = vld [vmem:[%s2 + $0x38] sm:$0xff]
      %vm331 = vcmask 523264
      %v333 = vsel %vm331, %v315, 0
      %v336 = vsel %vm331, %v316, 0
      %v339 = vsel %vm331, %v317, 0
      %v342 = vsel %vm331, %v318, 0
      %v345 = vsel %vm331, %v319, 0
      %v348 = vsel %vm331, %v320, 0
      %v351 = vsel %vm331, %v321, 0
      %v354 = vsel %vm331, %v322, 0
      %356 = vmatprep.subr.mxu0 0.0
      %v357 = vand.u32 %v323, 4294901760
      %358 = vmatpush1.msra.mxu0 %v357
      %359 = vmatprep.subr.mxu0 0.0
      %v360 = vand.u32 %v324, 4294901760
      %361 = vmatpush1.msra.mxu0 %v360
      %362 = vmatprep.subr.mxu0 0.0
      %v363 = vand.u32 %v325, 4294901760
      %364 = vmatpush1.msra.mxu0 %v363
      %365 = vmatprep.subr.mxu0 0.0
      %v366 = vand.u32 %v326, 4294901760
      %367 = vmatpush1.msra.mxu0 %v366
      %368 = vmatprep.subr.mxu0 0.0
      %v369 = vand.u32 %v327, 4294901760
      %370 = vmatpush1.msra.mxu0 %v369
      %371 = vmatprep.subr.mxu0 0.0
      %v372 = vand.u32 %v328, 4294901760
      %373 = vmatpush1.msra.mxu0 %v372
      %374 = vmatprep.subr.mxu0 0.0
      %v375 = vand.u32 %v329, 4294901760
      %376 = vmatpush1.msra.mxu0 %v375
      %377 = vmatprep.subr.mxu0 0.0
      %v378 = vand.u32 %v330, 4294901760
      %379 = vmatpush1.msra.mxu0 %v378
      %380 = vmatprep.subr.mxu0 0.0
      %381 = vmatpush1.msra.mxu0 0.0
      %382 = vmatprep.subr.mxu0 0.0
      %383 = vmatpush1.msra.mxu0 0.0
      %384 = vmatprep.subr.mxu0 0.0
      %385 = vmatpush1.msra.mxu0 0.0
      %386 = vmatprep.subr.mxu0 0.0
      %387 = vmatpush1.msra.mxu0 0.0
      %388 = vmatprep.subr.mxu0 0.0
      %389 = vmatpush1.msra.mxu0 0.0
      %390 = vmatprep.subr.mxu0 0.0
      %391 = vmatpush1.msra.mxu0 0.0
      %392 = vmatprep.subr.mxu0 0.0
      %393 = vmatpush1.msra.mxu0 0.0
      %394 = vmatprep.subr.mxu0 0.0
      %395 = vmatpush1.msra.mxu0 0.0
      %396 = vmatprep.subr.mxu0 0.0
      %397 = vmatpush1.msra.mxu0 0.0
      %398 = vmatprep.subr.mxu0 0.0
      %399 = vmatpush1.msra.mxu0 0.0
      %400 = vmatprep.subr.mxu0 0.0
      %401 = vmatpush1.msra.mxu0 0.0
      %402 = vmatprep.subr.mxu0 0.0
      %403 = vmatpush1.msra.mxu0 0.0
      %404 = vmatprep.subr.mxu0 0.0
      %405 = vmatpush1.msra.mxu0 0.0
      %406 = vmatprep.subr.mxu0 0.0
      %407 = vmatpush1.msra.mxu0 0.0
      %408 = vmatprep.subr.mxu0 0.0
      %409 = vmatpush1.msra.mxu0 0.0
      %410 = vmatprep.subr.mxu0 0.0
      %411 = vmatpush1.msra.mxu0 0.0
      %412 = vmatprep.subr.mxu0 0.0
      %413 = vmatpush1.msra.mxu0 0.0
      %414 = vmatprep.subr.mxu0 0.0
      %415 = vmatpush1.msra.mxu0 0.0
      %416 = vmatprep.subr.mxu0 0.0
      %417 = vmatpush1.msra.mxu0 0.0
      %418 = vmatprep.subr.mxu0 0.0
      %419 = vmatpush1.msra.mxu0 0.0
      %420 = vmatprep.subr.mxu0 0.0
      %421 = vmatpush1.msra.mxu0 0.0
      %422 = vmatprep.subr.mxu0 0.0
      %423 = vmatpush1.msra.mxu0 0.0
      %424 = vmatprep.subr.mxu0 0.0
      %425 = vmatpush1.msra.mxu0 0.0
      %426 = vmatprep.subr.mxu0 0.0
      %427 = vmatpush1.msra.mxu0 0.0
      %428 = vmatprep.mubr.f32.mxu0 0.0
      %v429 = vand.u32 %v333, 4294901760
      %v430 = vsub.f32 %v333, %v429
      %v431 = vand.u32 %v430, 4294901760
      %v432 = vsub.f32 %v430, %v431
      %v433 = vand.u32 %v432, 4294901760
      %434 = vmatmul.mubr.f32.gmra.mrb[0].mxu0 %v433
      %v435 = vpop.f32.mrb[0].mxu0
      %v436 = vadd.f32 0.0, %v435
      %v437 = vpop.f32.mrb[0].mxu0
      %438 = vmatprep.mubr.f32.mxu0 0.0
      %v439 = vand.u32 %v336, 4294901760
      %v440 = vsub.f32 %v336, %v439
      %v441 = vand.u32 %v440, 4294901760
      %v442 = vsub.f32 %v440, %v441
      %v443 = vand.u32 %v442, 4294901760
      %444 = vmatmul.mubr.f32.gmra.mrb[0].mxu0 %v443
      %v445 = vpop.f32.mrb[0].mxu0
      %v446 = vadd.f32 0.0, %v445
      %v447 = vpop.f32.mrb[0].mxu0
      %448 = vmatprep.mubr.f32.mxu0 0.0
      %v449 = vand.u32 %v339, 4294901760
      %v450 = vsub.f32 %v339, %v449
      %v451 = vand.u32 %v450, 4294901760
      %v452 = vsub.f32 %v450, %v451
      %v453 = vand.u32 %v452, 4294901760
      %454 = vmatmul.mubr.f32.gmra.mrb[0].mxu0 %v453
      %v455 = vpop.f32.mrb[0].mxu0
      %v456 = vadd.f32 0.0, %v455
      %v457 = vpop.f32.mrb[0].mxu0
      %458 = vmatprep.mubr.f32.mxu0 0.0
      %v459 = vand.u32 %v342, 4294901760
      %v460 = vsub.f32 %v342, %v459
      %v461 = vand.u32 %v460, 4294901760
      %v462 = vsub.f32 %v460, %v461
      %v463 = vand.u32 %v462, 4294901760
      %464 = vmatmul.mubr.f32.gmra.mrb[0].mxu0 %v463
      %v465 = vpop.f32.mrb[0].mxu0
      %v466 = vadd.f32 0.0, %v465
      %v467 = vpop.f32.mrb[0].mxu0
      %468 = vmatprep.mubr.f32.mxu0 0.0
      %v469 = vand.u32 %v345, 4294901760
      %v470 = vsub.f32 %v345, %v469
      %v471 = vand.u32 %v470, 4294901760
      %v472 = vsub.f32 %v470, %v471
      %v473 = vand.u32 %v472, 4294901760
      %474 = vmatmul.mubr.f32.gmra.mrb[0].mxu0 %v473
      %v475 = vpop.f32.mrb[0].mxu0
      %v476 = vadd.f32 0.0, %v475
      %v477 = vpop.f32.mrb[0].mxu0
      %478 = vmatprep.mubr.f32.mxu0 0.0
      %v479 = vand.u32 %v348, 4294901760
      %v480 = vsub.f32 %v348, %v479
      %v481 = vand.u32 %v480, 4294901760
      %v482 = vsub.f32 %v480, %v481
      %v483 = vand.u32 %v482, 4294901760
      %484 = vmatmul.mubr.f32.gmra.mrb[0].mxu0 %v483
      %v485 = vpop.f32.mrb[0].mxu0
      %v486 = vadd.f32 0.0, %v485
      %v487 = vpop.f32.mrb[0].mxu0
      %488 = vmatprep.mubr.f32.mxu0 0.0
      %v489 = vand.u32 %v351, 4294901760
      %v490 = vsub.f32 %v351, %v489
      %v491 = vand.u32 %v490, 4294901760
      %v492 = vsub.f32 %v490, %v491
      %v493 = vand.u32 %v492, 4294901760
      %494 = vmatmul.mubr.f32.gmra.mrb[0].mxu0 %v493
      %v495 = vpop.f32.mrb[0].mxu0
      %v496 = vadd.f32 0.0, %v495
      %v497 = vpop.f32.mrb[0].mxu0
      %498 = vmatprep.mubr.f32.mxu0 0.0
      %v499 = vand.u32 %v354, 4294901760
      %v500 = vsub.f32 %v354, %v499
      %v501 = vand.u32 %v500, 4294901760
      %v502 = vsub.f32 %v500, %v501
      %v503 = vand.u32 %v502, 4294901760
      %504 = vmatmul.mubr.f32.gmra.mrb[0].mxu0 %v503
      %v505 = vpop.f32.mrb[0].mxu0
      %v506 = vadd.f32 0.0, %v505
      %v507 = vpop.f32.mrb[0].mxu0
      %508 = vdwg.mxu0
      %509 = vmatprep.subr.mxu0 0.0
      %v510 = vand.u32 %v323, 4294901760
      %v511 = vsub.f32 %v323, %v510
      %v512 = vand.u32 %v511, 4294901760
      %v513 = vsub.f32 %v511, %v512
      %v514 = vand.u32 %v513, 4294901760
      %515 = vmatpush1.msra.mxu0 %v514
      %516 = vmatprep.subr.mxu0 0.0
      %v517 = vand.u32 %v324, 4294901760
      %v518 = vsub.f32 %v324, %v517
      %v519 = vand.u32 %v518, 4294901760
      %v520 = vsub.f32 %v518, %v519
      %v521 = vand.u32 %v520, 4294901760
      %522 = vmatpush1.msra.mxu0 %v521
      %523 = vmatprep.subr.mxu0 0.0
      %v524 = vand.u32 %v325, 4294901760
      %v525 = vsub.f32 %v325, %v524
      %v526 = vand.u32 %v525, 4294901760
      %v527 = vsub.f32 %v525, %v526
      %v528 = vand.u32 %v527, 4294901760
      %529 = vmatpush1.msra.mxu0 %v528
      %530 = vmatprep.subr.mxu0 0.0
      %v531 = vand.u32 %v326, 4294901760
      %v532 = vsub.f32 %v326, %v531
      %v533 = vand.u32 %v532, 4294901760
      %v534 = vsub.f32 %v532, %v533
      %v535 = vand.u32 %v534, 4294901760
      %536 = vmatpush1.msra.mxu0 %v535
      %537 = vmatprep.subr.mxu0 0.0
      %v538 = vand.u32 %v327, 4294901760
      %v539 = vsub.f32 %v327, %v538
      %v540 = vand.u32 %v539, 4294901760
      %v541 = vsub.f32 %v539, %v540
      %v542 = vand.u32 %v541, 4294901760
      %543 = vmatpush1.msra.mxu0 %v542
      %544 = vmatprep.subr.mxu0 0.0
      %v545 = vand.u32 %v328, 4294901760
      %v546 = vsub.f32 %v328, %v545
      %v547 = vand.u32 %v546, 4294901760
      %v548 = vsub.f32 %v546, %v547
      %v549 = vand.u32 %v548, 4294901760
      %550 = vmatpush1.msra.mxu0 %v549
      %551 = vmatprep.subr.mxu0 0.0
      %v552 = vand.u32 %v329, 4294901760
      %v553 = vsub.f32 %v329, %v552
      %v554 = vand.u32 %v553, 4294901760
      %v555 = vsub.f32 %v553, %v554
      %v556 = vand.u32 %v555, 4294901760
      %557 = vmatpush1.msra.mxu0 %v556
      %558 = vmatprep.subr.mxu0 0.0
      %v559 = vand.u32 %v330, 4294901760
      %v560 = vsub.f32 %v330, %v559
      %v561 = vand.u32 %v560, 4294901760
      %v562 = vsub.f32 %v560, %v561
      %v563 = vand.u32 %v562, 4294901760
      %564 = vmatpush1.msra.mxu0 %v563
      %565 = vmatprep.subr.mxu0 0.0
      %566 = vmatpush1.msra.mxu0 0.0
      %567 = vmatprep.subr.mxu0 0.0
      %568 = vmatpush1.msra.mxu0 0.0
      %569 = vmatprep.subr.mxu0 0.0
      %570 = vmatpush1.msra.mxu0 0.0
      %571 = vmatprep.subr.mxu0 0.0
      %572 = vmatpush1.msra.mxu0 0.0
      %573 = vmatprep.subr.mxu0 0.0
      %574 = vmatpush1.msra.mxu0 0.0
      %575 = vmatprep.subr.mxu0 0.0
      %576 = vmatpush1.msra.mxu0 0.0
      %577 = vmatprep.subr.mxu0 0.0
      %578 = vmatpush1.msra.mxu0 0.0
      %579 = vmatprep.subr.mxu0 0.0
      %580 = vmatpush1.msra.mxu0 0.0
      %581 = vmatprep.subr.mxu0 0.0
      %582 = vmatpush1.msra.mxu0 0.0
      %583 = vmatprep.subr.mxu0 0.0
      %584 = vmatpush1.msra.mxu0 0.0
      %585 = vmatprep.subr.mxu0 0.0
      %586 = vmatpush1.msra.mxu0 0.0
      %587 = vmatprep.subr.mxu0 0.0
      %588 = vmatpush1.msra.mxu0 0.0
      %589 = vmatprep.subr.mxu0 0.0
      %590 = vmatpush1.msra.mxu0 0.0
      %591 = vmatprep.subr.mxu0 0.0
      %592 = vmatpush1.msra.mxu0 0.0
      %593 = vmatprep.subr.mxu0 0.0
      %594 = vmatpush1.msra.mxu0 0.0
      %595 = vmatprep.subr.mxu0 0.0
      %596 = vmatpush1.msra.mxu0 0.0
      %597 = vmatprep.subr.mxu0 0.0
      %598 = vmatpush1.msra.mxu0 0.0
      %599 = vmatprep.subr.mxu0 0.0
      %600 = vmatpush1.msra.mxu0 0.0
      %601 = vmatprep.subr.mxu0 0.0
      %602 = vmatpush1.msra.mxu0 0.0
      %603 = vmatprep.subr.mxu0 0.0
      %604 = vmatpush1.msra.mxu0 0.0
      %605 = vmatprep.subr.mxu0 0.0
      %606 = vmatpush1.msra.mxu0 0.0
      %607 = vmatprep.subr.mxu0 0.0
      %608 = vmatpush1.msra.mxu0 0.0
      %609 = vmatprep.subr.mxu0 0.0
      %610 = vmatpush1.msra.mxu0 0.0
      %611 = vmatprep.subr.mxu0 0.0
      %612 = vmatpush1.msra.mxu0 0.0
      %613 = vmatprep.mubr.f32.mxu0 0.0
      %v614 = vand.u32 %v333, 4294901760
      %615 = vmatmul.mubr.f32.gmra.mrb[0].mxu0 %v614
      %v616 = vpop.f32.mrb[0].mxu0
      %v617 = vadd.f32 %v436, %v616
      %v618 = vpop.f32.mrb[0].mxu0
      %619 = vmatprep.mubr.f32.mxu0 0.0
      %v620 = vand.u32 %v336, 4294901760
      %621 = vmatmul.mubr.f32.gmra.mrb[0].mxu0 %v620
      %v622 = vpop.f32.mrb[0].mxu0
      %v623 = vadd.f32 %v446, %v622
      %v624 = vpop.f32.mrb[0].mxu0
      %625 = vmatprep.mubr.f32.mxu0 0.0
      %v626 = vand.u32 %v339, 4294901760
      %627 = vmatmul.mubr.f32.gmra.mrb[0].mxu0 %v626
      %v628 = vpop.f32.mrb[0].mxu0
      %v629 = vadd.f32 %v456, %v628
      %v630 = vpop.f32.mrb[0].mxu0
      %631 = vmatprep.mubr.f32.mxu0 0.0
      %v632 = vand.u32 %v342, 4294901760
      %633 = vmatmul.mubr.f32.gmra.mrb[0].mxu0 %v632
      %v634 = vpop.f32.mrb[0].mxu0
      %v635 = vadd.f32 %v466, %v634
      %v636 = vpop.f32.mrb[0].mxu0
      %637 = vmatprep.mubr.f32.mxu0 0.0
      %v638 = vand.u32 %v345, 4294901760
      %639 = vmatmul.mubr.f32.gmra.mrb[0].mxu0 %v638
      %v640 = vpop.f32.mrb[0].mxu0
      %v641 = vadd.f32 %v476, %v640
      %v642 = vpop.f32.mrb[0].mxu0
      %643 = vmatprep.mubr.f32.mxu0 0.0
      %v644 = vand.u32 %v348, 4294901760
      %645 = vmatmul.mubr.f32.gmra.mrb[0].mxu0 %v644
      %v646 = vpop.f32.mrb[0].mxu0
      %v647 = vadd.f32 %v486, %v646
      %v648 = vpop.f32.mrb[0].mxu0
      %649 = vmatprep.mubr.f32.mxu0 0.0
      %v650 = vand.u32 %v351, 4294901760
      %651 = vmatmul.mubr.f32.gmra.mrb[0].mxu0 %v650
      %v652 = vpop.f32.mrb[0].mxu0
      %v653 = vadd.f32 %v496, %v652
      %v654 = vpop.f32.mrb[0].mxu0
      %655 = vmatprep.mubr.f32.mxu0 0.0
      %v656 = vand.u32 %v354, 4294901760
      %657 = vmatmul.mubr.f32.gmra.mrb[0].mxu0 %v656
      %v658 = vpop.f32.mrb[0].mxu0
      %v659 = vadd.f32 %v506, %v658
      %v660 = vpop.f32.mrb[0].mxu0
      %661 = vdwg.mxu0
      %662 = vmatprep.subr.mxu0 0.0
      %v663 = vand.u32 %v323, 4294901760
      %v664 = vsub.f32 %v323, %v663
      %665 = vmatpush1.msra.mxu0 %v664
      %666 = vmatprep.subr.mxu0 0.0
      %v667 = vand.u32 %v324, 4294901760
      %v668 = vsub.f32 %v324, %v667
      %669 = vmatpush1.msra.mxu0 %v668
      %670 = vmatprep.subr.mxu0 0.0
      %v671 = vand.u32 %v325, 4294901760
      %v672 = vsub.f32 %v325, %v671
      %673 = vmatpush1.msra.mxu0 %v672
      %674 = vmatprep.subr.mxu0 0.0
      %v675 = vand.u32 %v326, 4294901760
      %v676 = vsub.f32 %v326, %v675
      %677 = vmatpush1.msra.mxu0 %v676
      %678 = vmatprep.subr.mxu0 0.0
      %v679 = vand.u32 %v327, 4294901760
      %v680 = vsub.f32 %v327, %v679
      %681 = vmatpush1.msra.mxu0 %v680
      %682 = vmatprep.subr.mxu0 0.0
      %v683 = vand.u32 %v328, 4294901760
      %v684 = vsub.f32 %v328, %v683
      %685 = vmatpush1.msra.mxu0 %v684
      %686 = vmatprep.subr.mxu0 0.0
      %v687 = vand.u32 %v329, 4294901760
      %v688 = vsub.f32 %v329, %v687
      %689 = vmatpush1.msra.mxu0 %v688
      %690 = vmatprep.subr.mxu0 0.0
      %v691 = vand.u32 %v330, 4294901760
      %v692 = vsub.f32 %v330, %v691
      %693 = vmatpush1.msra.mxu0 %v692
      %694 = vmatprep.subr.mxu0 0.0
      %695 = vmatpush1.msra.mxu0 0.0
      %696 = vmatprep.subr.mxu0 0.0
      %697 = vmatpush1.msra.mxu0 0.0
      %698 = vmatprep.subr.mxu0 0.0
      %699 = vmatpush1.msra.mxu0 0.0
      %700 = vmatprep.subr.mxu0 0.0
      %701 = vmatpush1.msra.mxu0 0.0
      %702 = vmatprep.subr.mxu0 0.0
      %703 = vmatpush1.msra.mxu0 0.0
      %704 = vmatprep.subr.mxu0 0.0
      %705 = vmatpush1.msra.mxu0 0.0
      %706 = vmatprep.subr.mxu0 0.0
      %707 = vmatpush1.msra.mxu0 0.0
      %708 = vmatprep.subr.mxu0 0.0
      %709 = vmatpush1.msra.mxu0 0.0
      %710 = vmatprep.subr.mxu0 0.0
      %711 = vmatpush1.msra.mxu0 0.0
      %712 = vmatprep.subr.mxu0 0.0
      %713 = vmatpush1.msra.mxu0 0.0
      %714 = vmatprep.subr.mxu0 0.0
      %715 = vmatpush1.msra.mxu0 0.0
      %716 = vmatprep.subr.mxu0 0.0
      %717 = vmatpush1.msra.mxu0 0.0
      %718 = vmatprep.subr.mxu0 0.0
      %719 = vmatpush1.msra.mxu0 0.0
      %720 = vmatprep.subr.mxu0 0.0
      %721 = vmatpush1.msra.mxu0 0.0
      %722 = vmatprep.subr.mxu0 0.0
      %723 = vmatpush1.msra.mxu0 0.0
      %724 = vmatprep.subr.mxu0 0.0
      %725 = vmatpush1.msra.mxu0 0.0
      %726 = vmatprep.subr.mxu0 0.0
      %727 = vmatpush1.msra.mxu0 0.0
      %728 = vmatprep.subr.mxu0 0.0
      %729 = vmatpush1.msra.mxu0 0.0
      %730 = vmatprep.subr.mxu0 0.0
      %731 = vmatpush1.msra.mxu0 0.0
      %732 = vmatprep.subr.mxu0 0.0
      %733 = vmatpush1.msra.mxu0 0.0
      %734 = vmatprep.subr.mxu0 0.0
      %735 = vmatpush1.msra.mxu0 0.0
      %736 = vmatprep.subr.mxu0 0.0
      %737 = vmatpush1.msra.mxu0 0.0
      %738 = vmatprep.subr.mxu0 0.0
      %739 = vmatpush1.msra.mxu0 0.0
      %740 = vmatprep.subr.mxu0 0.0
      %741 = vmatpush1.msra.mxu0 0.0
      %742 = vmatprep.mubr.f32.mxu0 0.0
      %v743 = vand.u32 %v333, 4294901760
      %v744 = vsub.f32 %v333, %v743
      %745 = vmatmul.mubr.f32.gmra.mrb[0].mxu0 %v744
      %v746 = vpop.f32.mrb[0].mxu0
      %v747 = vadd.f32 %v617, %v746
      %v748 = vpop.f32.mrb[0].mxu0
      %749 = vmatprep.mubr.f32.mxu0 0.0
      %v750 = vand.u32 %v336, 4294901760
      %v751 = vsub.f32 %v336, %v750
      %752 = vmatmul.mubr.f32.gmra.mrb[0].mxu0 %v751
      %v753 = vpop.f32.mrb[0].mxu0
      %v754 = vadd.f32 %v623, %v753
      %v755 = vpop.f32.mrb[0].mxu0
      %756 = vmatprep.mubr.f32.mxu0 0.0
      %v757 = vand.u32 %v339, 4294901760
      %v758 = vsub.f32 %v339, %v757
      %759 = vmatmul.mubr.f32.gmra.mrb[0].mxu0 %v758
      %v760 = vpop.f32.mrb[0].mxu0
      %v761 = vadd.f32 %v629, %v760
      %v762 = vpop.f32.mrb[0].mxu0
      %763 = vmatprep.mubr.f32.mxu0 0.0
      %v764 = vand.u32 %v342, 4294901760
      %v765 = vsub.f32 %v342, %v764
      %766 = vmatmul.mubr.f32.gmra.mrb[0].mxu0 %v765
      %v767 = vpop.f32.mrb[0].mxu0
      %v768 = vadd.f32 %v635, %v767
      %v769 = vpop.f32.mrb[0].mxu0
      %770 = vmatprep.mubr.f32.mxu0 0.0
      %v771 = vand.u32 %v345, 4294901760
      %v772 = vsub.f32 %v345, %v771
      %773 = vmatmul.mubr.f32.gmra.mrb[0].mxu0 %v772
      %v774 = vpop.f32.mrb[0].mxu0
      %v775 = vadd.f32 %v641, %v774
      %v776 = vpop.f32.mrb[0].mxu0
      %777 = vmatprep.mubr.f32.mxu0 0.0
      %v778 = vand.u32 %v348, 4294901760
      %v779 = vsub.f32 %v348, %v778
      %780 = vmatmul.mubr.f32.gmra.mrb[0].mxu0 %v779
      %v781 = vpop.f32.mrb[0].mxu0
      %v782 = vadd.f32 %v647, %v781
      %v783 = vpop.f32.mrb[0].mxu0
      %784 = vmatprep.mubr.f32.mxu0 0.0
      %v785 = vand.u32 %v351, 4294901760
      %v786 = vsub.f32 %v351, %v785
      %787 = vmatmul.mubr.f32.gmra.mrb[0].mxu0 %v786
      %v788 = vpop.f32.mrb[0].mxu0
      %v789 = vadd.f32 %v653, %v788
      %v790 = vpop.f32.mrb[0].mxu0
      %791 = vmatprep.mubr.f32.mxu0 0.0
      %v792 = vand.u32 %v354, 4294901760
      %v793 = vsub.f32 %v354, %v792
      %794 = vmatmul.mubr.f32.gmra.mrb[0].mxu0 %v793
      %v795 = vpop.f32.mrb[0].mxu0
      %v796 = vadd.f32 %v659, %v795
      %v797 = vpop.f32.mrb[0].mxu0
      %798 = vdwg.mxu0
      %799 = vmatprep.subr.mxu0 0.0
      %v800 = vand.u32 %v323, 4294901760
      %801 = vmatpush1.msra.mxu0 %v800
      %802 = vmatprep.subr.mxu0 0.0
      %v803 = vand.u32 %v324, 4294901760
      %804 = vmatpush1.msra.mxu0 %v803
      %805 = vmatprep.subr.mxu0 0.0
      %v806 = vand.u32 %v325, 4294901760
      %807 = vmatpush1.msra.mxu0 %v806
      %808 = vmatprep.subr.mxu0 0.0
      %v809 = vand.u32 %v326, 4294901760
      %810 = vmatpush1.msra.mxu0 %v809
      %811 = vmatprep.subr.mxu0 0.0
      %v812 = vand.u32 %v327, 4294901760
      %813 = vmatpush1.msra.mxu0 %v812
      %814 = vmatprep.subr.mxu0 0.0
      %v815 = vand.u32 %v328, 4294901760
      %816 = vmatpush1.msra.mxu0 %v815
      %817 = vmatprep.subr.mxu0 0.0
      %v818 = vand.u32 %v329, 4294901760
      %819 = vmatpush1.msra.mxu0 %v818
      %820 = vmatprep.subr.mxu0 0.0
      %v821 = vand.u32 %v330, 4294901760
      %822 = vmatpush1.msra.mxu0 %v821
      %823 = vmatprep.subr.mxu0 0.0
      %824 = vmatpush1.msra.mxu0 0.0
      %825 = vmatprep.subr.mxu0 0.0
      %826 = vmatpush1.msra.mxu0 0.0
      %827 = vmatprep.subr.mxu0 0.0
      %828 = vmatpush1.msra.mxu0 0.0
      %829 = vmatprep.subr.mxu0 0.0
      %830 = vmatpush1.msra.mxu0 0.0
      %831 = vmatprep.subr.mxu0 0.0
      %832 = vmatpush1.msra.mxu0 0.0
      %833 = vmatprep.subr.mxu0 0.0
      %834 = vmatpush1.msra.mxu0 0.0
      %835 = vmatprep.subr.mxu0 0.0
      %836 = vmatpush1.msra.mxu0 0.0
      %837 = vmatprep.subr.mxu0 0.0
      %838 = vmatpush1.msra.mxu0 0.0
      %839 = vmatprep.subr.mxu0 0.0
      %840 = vmatpush1.msra.mxu0 0.0
      %841 = vmatprep.subr.mxu0 0.0
      %842 = vmatpush1.msra.mxu0 0.0
      %843 = vmatprep.subr.mxu0 0.0
      %844 = vmatpush1.msra.mxu0 0.0
      %845 = vmatprep.subr.mxu0 0.0
      %846 = vmatpush1.msra.mxu0 0.0
      %847 = vmatprep.subr.mxu0 0.0
      %848 = vmatpush1.msra.mxu0 0.0
      %849 = vmatprep.subr.mxu0 0.0
      %850 = vmatpush1.msra.mxu0 0.0
      %851 = vmatprep.subr.mxu0 0.0
      %852 = vmatpush1.msra.mxu0 0.0
      %853 = vmatprep.subr.mxu0 0.0
      %854 = vmatpush1.msra.mxu0 0.0
      %855 = vmatprep.subr.mxu0 0.0
      %856 = vmatpush1.msra.mxu0 0.0
      %857 = vmatprep.subr.mxu0 0.0
      %858 = vmatpush1.msra.mxu0 0.0
      %859 = vmatprep.subr.mxu0 0.0
      %860 = vmatpush1.msra.mxu0 0.0
      %861 = vmatprep.subr.mxu0 0.0
      %862 = vmatpush1.msra.mxu0 0.0
      %863 = vmatprep.subr.mxu0 0.0
      %864 = vmatpush1.msra.mxu0 0.0
      %865 = vmatprep.subr.mxu0 0.0
      %866 = vmatpush1.msra.mxu0 0.0
      %867 = vmatprep.subr.mxu0 0.0
      %868 = vmatpush1.msra.mxu0 0.0
      %869 = vmatprep.subr.mxu0 0.0
      %870 = vmatpush1.msra.mxu0 0.0
      %871 = vmatprep.mubr.f32.mxu0 0.0
      %v872 = vand.u32 %v333, 4294901760
      %v873 = vsub.f32 %v333, %v872
      %v874 = vand.u32 %v873, 4294901760
      %875 = vmatmul.mubr.f32.gmra.mrb[0].mxu0 %v874
      %v876 = vpop.f32.mrb[0].mxu0
      %v877 = vadd.f32 %v747, %v876
      %v878 = vpop.f32.mrb[0].mxu0
      %879 = vmatprep.mubr.f32.mxu0 0.0
      %v880 = vand.u32 %v336, 4294901760
      %v881 = vsub.f32 %v336, %v880
      %v882 = vand.u32 %v881, 4294901760
      %883 = vmatmul.mubr.f32.gmra.mrb[0].mxu0 %v882
      %v884 = vpop.f32.mrb[0].mxu0
      %v885 = vadd.f32 %v754, %v884
      %v886 = vpop.f32.mrb[0].mxu0
      %887 = vmatprep.mubr.f32.mxu0 0.0
      %v888 = vand.u32 %v339, 4294901760
      %v889 = vsub.f32 %v339, %v888
      %v890 = vand.u32 %v889, 4294901760
      %891 = vmatmul.mubr.f32.gmra.mrb[0].mxu0 %v890
      %v892 = vpop.f32.mrb[0].mxu0
      %v893 = vadd.f32 %v761, %v892
      %v894 = vpop.f32.mrb[0].mxu0
      %895 = vmatprep.mubr.f32.mxu0 0.0
      %v896 = vand.u32 %v342, 4294901760
      %v897 = vsub.f32 %v342, %v896
      %v898 = vand.u32 %v897, 4294901760
      %899 = vmatmul.mubr.f32.gmra.mrb[0].mxu0 %v898
      %v900 = vpop.f32.mrb[0].mxu0
      %v901 = vadd.f32 %v768, %v900
      %v902 = vpop.f32.mrb[0].mxu0
      %903 = vmatprep.mubr.f32.mxu0 0.0
      %v904 = vand.u32 %v345, 4294901760
      %v905 = vsub.f32 %v345, %v904
      %v906 = vand.u32 %v905, 4294901760
      %907 = vmatmul.mubr.f32.gmra.mrb[0].mxu0 %v906
      %v908 = vpop.f32.mrb[0].mxu0
      %v909 = vadd.f32 %v775, %v908
      %v910 = vpop.f32.mrb[0].mxu0
      %911 = vmatprep.mubr.f32.mxu0 0.0
      %v912 = vand.u32 %v348, 4294901760
      %v913 = vsub.f32 %v348, %v912
      %v914 = vand.u32 %v913, 4294901760
      %915 = vmatmul.mubr.f32.gmra.mrb[0].mxu0 %v914
      %v916 = vpop.f32.mrb[0].mxu0
      %v917 = vadd.f32 %v782, %v916
      %v918 = vpop.f32.mrb[0].mxu0
      %919 = vmatprep.mubr.f32.mxu0 0.0
      %v920 = vand.u32 %v351, 4294901760
      %v921 = vsub.f32 %v351, %v920
      %v922 = vand.u32 %v921, 4294901760
      %923 = vmatmul.mubr.f32.gmra.mrb[0].mxu0 %v922
      %v924 = vpop.f32.mrb[0].mxu0
      %v925 = vadd.f32 %v789, %v924
      %v926 = vpop.f32.mrb[0].mxu0
      %927 = vmatprep.mubr.f32.mxu0 0.0
      %v928 = vand.u32 %v354, 4294901760
      %v929 = vsub.f32 %v354, %v928
      %v930 = vand.u32 %v929, 4294901760
      %931 = vmatmul.mubr.f32.gmra.mrb[0].mxu0 %v930
      %v932 = vpop.f32.mrb[0].mxu0
      %v933 = vadd.f32 %v796, %v932
      %v934 = vpop.f32.mrb[0].mxu0
      %935 = vdwg.mxu0
      %936 = vmatprep.subr.mxu0 0.0
      %v937 = vand.u32 %v323, 4294901760
      %v938 = vsub.f32 %v323, %v937
      %v939 = vand.u32 %v938, 4294901760
      %940 = vmatpush1.msra.mxu0 %v939
      %941 = vmatprep.subr.mxu0 0.0
      %v942 = vand.u32 %v324, 4294901760
      %v943 = vsub.f32 %v324, %v942
      %v944 = vand.u32 %v943, 4294901760
      %945 = vmatpush1.msra.mxu0 %v944
      %946 = vmatprep.subr.mxu0 0.0
      %v947 = vand.u32 %v325, 4294901760
      %v948 = vsub.f32 %v325, %v947
      %v949 = vand.u32 %v948, 4294901760
      %950 = vmatpush1.msra.mxu0 %v949
      %951 = vmatprep.subr.mxu0 0.0
      %v952 = vand.u32 %v326, 4294901760
      %v953 = vsub.f32 %v326, %v952
      %v954 = vand.u32 %v953, 4294901760
      %955 = vmatpush1.msra.mxu0 %v954
      %956 = vmatprep.subr.mxu0 0.0
      %v957 = vand.u32 %v327, 4294901760
      %v958 = vsub.f32 %v327, %v957
      %v959 = vand.u32 %v958, 4294901760
      %960 = vmatpush1.msra.mxu0 %v959
      %961 = vmatprep.subr.mxu0 0.0
      %v962 = vand.u32 %v328, 4294901760
      %v963 = vsub.f32 %v328, %v962
      %v964 = vand.u32 %v963, 4294901760
      %965 = vmatpush1.msra.mxu0 %v964
      %966 = vmatprep.subr.mxu0 0.0
      %v967 = vand.u32 %v329, 4294901760
      %v968 = vsub.f32 %v329, %v967
      %v969 = vand.u32 %v968, 4294901760
      %970 = vmatpush1.msra.mxu0 %v969
      %971 = vmatprep.subr.mxu0 0.0
      %v972 = vand.u32 %v330, 4294901760
      %v973 = vsub.f32 %v330, %v972
      %v974 = vand.u32 %v973, 4294901760
      %975 = vmatpush1.msra.mxu0 %v974
      %976 = vmatprep.subr.mxu0 0.0
      %977 = vmatpush1.msra.mxu0 0.0
      %978 = vmatprep.subr.mxu0 0.0
      %979 = vmatpush1.msra.mxu0 0.0
      %980 = vmatprep.subr.mxu0 0.0
      %981 = vmatpush1.msra.mxu0 0.0
      %982 = vmatprep.subr.mxu0 0.0
      %983 = vmatpush1.msra.mxu0 0.0
      %984 = vmatprep.subr.mxu0 0.0
      %985 = vmatpush1.msra.mxu0 0.0
      %986 = vmatprep.subr.mxu0 0.0
      %987 = vmatpush1.msra.mxu0 0.0
      %988 = vmatprep.subr.mxu0 0.0
      %989 = vmatpush1.msra.mxu0 0.0
      %990 = vmatprep.subr.mxu0 0.0
      %991 = vmatpush1.msra.mxu0 0.0
      %992 = vmatprep.subr.mxu0 0.0
      %993 = vmatpush1.msra.mxu0 0.0
      %994 = vmatprep.subr.mxu0 0.0
      %995 = vmatpush1.msra.mxu0 0.0
      %996 = vmatprep.subr.mxu0 0.0
      %997 = vmatpush1.msra.mxu0 0.0
      %998 = vmatprep.subr.mxu0 0.0
      %999 = vmatpush1.msra.mxu0 0.0
      %1000 = vmatprep.subr.mxu0 0.0
      %1001 = vmatpush1.msra.mxu0 0.0
      %1002 = vmatprep.subr.mxu0 0.0
      %1003 = vmatpush1.msra.mxu0 0.0
      %1004 = vmatprep.subr.mxu0 0.0
      %1005 = vmatpush1.msra.mxu0 0.0
      %1006 = vmatprep.subr.mxu0 0.0
      %1007 = vmatpush1.msra.mxu0 0.0
      %1008 = vmatprep.subr.mxu0 0.0
      %1009 = vmatpush1.msra.mxu0 0.0
      %1010 = vmatprep.subr.mxu0 0.0
      %1011 = vmatpush1.msra.mxu0 0.0
      %1012 = vmatprep.subr.mxu0 0.0
      %1013 = vmatpush1.msra.mxu0 0.0
      %1014 = vmatprep.subr.mxu0 0.0
      %1015 = vmatpush1.msra.mxu0 0.0
      %1016 = vmatprep.subr.mxu0 0.0
      %1017 = vmatpush1.msra.mxu0 0.0
      %1018 = vmatprep.subr.mxu0 0.0
      %1019 = vmatpush1.msra.mxu0 0.0
      %1020 = vmatprep.subr.mxu0 0.0
      %1021 = vmatpush1.msra.mxu0 0.0
      %1022 = vmatprep.subr.mxu0 0.0
      %1023 = vmatpush1.msra.mxu0 0.0
      %1024 = vmatprep.mubr.f32.mxu0 0.0
      %v1025 = vand.u32 %v333, 4294901760
      %1026 = vmatmul.mubr.f32.gmra.mrb[0].mxu0 %v1025
      %v1027 = vpop.f32.mrb[0].mxu0
      %v1028 = vadd.f32 %v877, %v1027
      %v1029 = vpop.f32.mrb[0].mxu0
      %1030 = vmatprep.mubr.f32.mxu0 0.0
      %v1031 = vand.u32 %v336, 4294901760
      %1032 = vmatmul.mubr.f32.gmra.mrb[0].mxu0 %v1031
      %v1033 = vpop.f32.mrb[0].mxu0
      %v1034 = vadd.f32 %v885, %v1033
      %v1035 = vpop.f32.mrb[0].mxu0
      %1036 = vmatprep.mubr.f32.mxu0 0.0
      %v1037 = vand.u32 %v339, 4294901760
      %1038 = vmatmul.mubr.f32.gmra.mrb[0].mxu0 %v1037
      %v1039 = vpop.f32.mrb[0].mxu0
      %v1040 = vadd.f32 %v893, %v1039
      %v1041 = vpop.f32.mrb[0].mxu0
      %1042 = vmatprep.mubr.f32.mxu0 0.0
      %v1043 = vand.u32 %v342, 4294901760
      %1044 = vmatmul.mubr.f32.gmra.mrb[0].mxu0 %v1043
      %v1045 = vpop.f32.mrb[0].mxu0
      %v1046 = vadd.f32 %v901, %v1045
      %v1047 = vpop.f32.mrb[0].mxu0
      %1048 = vmatprep.mubr.f32.mxu0 0.0
      %v1049 = vand.u32 %v345, 4294901760
      %1050 = vmatmul.mubr.f32.gmra.mrb[0].mxu0 %v1049
      %v1051 = vpop.f32.mrb[0].mxu0
      %v1052 = vadd.f32 %v909, %v1051
      %v1053 = vpop.f32.mrb[0].mxu0
      %1054 = vmatprep.mubr.f32.mxu0 0.0
      %v1055 = vand.u32 %v348, 4294901760
      %1056 = vmatmul.mubr.f32.gmra.mrb[0].mxu0 %v1055
      %v1057 = vpop.f32.mrb[0].mxu0
      %v1058 = vadd.f32 %v917, %v1057
      %v1059 = vpop.f32.mrb[0].mxu0
      %1060 = vmatprep.mubr.f32.mxu0 0.0
      %v1061 = vand.u32 %v351, 4294901760
      %1062 = vmatmul.mubr.f32.gmra.mrb[0].mxu0 %v1061
      %v1063 = vpop.f32.mrb[0].mxu0
      %v1064 = vadd.f32 %v925, %v1063
      %v1065 = vpop.f32.mrb[0].mxu0
      %1066 = vmatprep.mubr.f32.mxu0 0.0
      %v1067 = vand.u32 %v354, 4294901760
      %1068 = vmatmul.mubr.f32.gmra.mrb[0].mxu0 %v1067
      %v1069 = vpop.f32.mrb[0].mxu0
      %v1070 = vadd.f32 %v933, %v1069
      %v1071 = vpop.f32.mrb[0].mxu0
      %1072 = vdwg.mxu0
      %1073 = vmatprep.subr.mxu0 0.0
      %v1074 = vand.u32 %v323, 4294901760
      %1075 = vmatpush1.msra.mxu0 %v1074
      %1076 = vmatprep.subr.mxu0 0.0
      %v1077 = vand.u32 %v324, 4294901760
      %1078 = vmatpush1.msra.mxu0 %v1077
      %1079 = vmatprep.subr.mxu0 0.0
      %v1080 = vand.u32 %v325, 4294901760
      %1081 = vmatpush1.msra.mxu0 %v1080
      %1082 = vmatprep.subr.mxu0 0.0
      %v1083 = vand.u32 %v326, 4294901760
      %1084 = vmatpush1.msra.mxu0 %v1083
      %1085 = vmatprep.subr.mxu0 0.0
      %v1086 = vand.u32 %v327, 4294901760
      %1087 = vmatpush1.msra.mxu0 %v1086
      %1088 = vmatprep.subr.mxu0 0.0
      %v1089 = vand.u32 %v328, 4294901760
      %1090 = vmatpush1.msra.mxu0 %v1089
      %1091 = vmatprep.subr.mxu0 0.0
      %v1092 = vand.u32 %v329, 4294901760
      %1093 = vmatpush1.msra.mxu0 %v1092
      %1094 = vmatprep.subr.mxu0 0.0
      %v1095 = vand.u32 %v330, 4294901760
      %1096 = vmatpush1.msra.mxu0 %v1095
      %1097 = vmatprep.subr.mxu0 0.0
      %1098 = vmatpush1.msra.mxu0 0.0
      %1099 = vmatprep.subr.mxu0 0.0
      %1100 = vmatpush1.msra.mxu0 0.0
      %1101 = vmatprep.subr.mxu0 0.0
      %1102 = vmatpush1.msra.mxu0 0.0
      %1103 = vmatprep.subr.mxu0 0.0
      %1104 = vmatpush1.msra.mxu0 0.0
      %1105 = vmatprep.subr.mxu0 0.0
      %1106 = vmatpush1.msra.mxu0 0.0
      %1107 = vmatprep.subr.mxu0 0.0
      %1108 = vmatpush1.msra.mxu0 0.0
      %1109 = vmatprep.subr.mxu0 0.0
      %1110 = vmatpush1.msra.mxu0 0.0
      %1111 = vmatprep.subr.mxu0 0.0
      %1112 = vmatpush1.msra.mxu0 0.0
      %1113 = vmatprep.subr.mxu0 0.0
      %1114 = vmatpush1.msra.mxu0 0.0
      %1115 = vmatprep.subr.mxu0 0.0
      %1116 = vmatpush1.msra.mxu0 0.0
      %1117 = vmatprep.subr.mxu0 0.0
      %1118 = vmatpush1.msra.mxu0 0.0
      %1119 = vmatprep.subr.mxu0 0.0
      %1120 = vmatpush1.msra.mxu0 0.0
      %1121 = vmatprep.subr.mxu0 0.0
      %1122 = vmatpush1.msra.mxu0 0.0
      %1123 = vmatprep.subr.mxu0 0.0
      %1124 = vmatpush1.msra.mxu0 0.0
      %1125 = vmatprep.subr.mxu0 0.0
      %1126 = vmatpush1.msra.mxu0 0.0
      %1127 = vmatprep.subr.mxu0 0.0
      %1128 = vmatpush1.msra.mxu0 0.0
      %1129 = vmatprep.subr.mxu0 0.0
      %1130 = vmatpush1.msra.mxu0 0.0
      %1131 = vmatprep.subr.mxu0 0.0
      %1132 = vmatpush1.msra.mxu0 0.0
      %1133 = vmatprep.subr.mxu0 0.0
      %1134 = vmatpush1.msra.mxu0 0.0
      %1135 = vmatprep.subr.mxu0 0.0
      %1136 = vmatpush1.msra.mxu0 0.0
      %1137 = vmatprep.subr.mxu0 0.0
      %1138 = vmatpush1.msra.mxu0 0.0
      %1139 = vmatprep.subr.mxu0 0.0
      %1140 = vmatpush1.msra.mxu0 0.0
      %1141 = vmatprep.subr.mxu0 0.0
      %1142 = vmatpush1.msra.mxu0 0.0
      %1143 = vmatprep.subr.mxu0 0.0
      %1144 = vmatpush1.msra.mxu0 0.0
      %1145 = vmatprep.mubr.f32.mxu0 0.0
      %v1146 = vand.u32 %v333, 4294901760
      %1147 = vmatmul.mubr.f32.gmra.mrb[0].mxu0 %v1146
      %v1148 = vpop.f32.mrb[0].mxu0
      %v1149 = vadd.f32 %v1028, %v1148
      %v1150 = vpop.f32.mrb[0].mxu0
      %1151 = vmatprep.mubr.f32.mxu0 0.0
      %v1152 = vand.u32 %v336, 4294901760
      %1153 = vmatmul.mubr.f32.gmra.mrb[0].mxu0 %v1152
      %v1154 = vpop.f32.mrb[0].mxu0
      %v1155 = vadd.f32 %v1034, %v1154
      %v1156 = vpop.f32.mrb[0].mxu0
      %1157 = vmatprep.mubr.f32.mxu0 0.0
      %v1158 = vand.u32 %v339, 4294901760
      %1159 = vmatmul.mubr.f32.gmra.mrb[0].mxu0 %v1158
      %v1160 = vpop.f32.mrb[0].mxu0
      %v1161 = vadd.f32 %v1040, %v1160
      %v1162 = vpop.f32.mrb[0].mxu0
      %1163 = vmatprep.mubr.f32.mxu0 0.0
      %v1164 = vand.u32 %v342, 4294901760
      %1165 = vmatmul.mubr.f32.gmra.mrb[0].mxu0 %v1164
      %v1166 = vpop.f32.mrb[0].mxu0
      %v1167 = vadd.f32 %v1046, %v1166
      %v1168 = vpop.f32.mrb[0].mxu0
      %1169 = vmatprep.mubr.f32.mxu0 0.0
      %v1170 = vand.u32 %v345, 4294901760
      %1171 = vmatmul.mubr.f32.gmra.mrb[0].mxu0 %v1170
      %v1172 = vpop.f32.mrb[0].mxu0
      %v1173 = vadd.f32 %v1052, %v1172
      %v1174 = vpop.f32.mrb[0].mxu0
      %1175 = vmatprep.mubr.f32.mxu0 0.0
      %v1176 = vand.u32 %v348, 4294901760
      %1177 = vmatmul.mubr.f32.gmra.mrb[0].mxu0 %v1176
      %v1178 = vpop.f32.mrb[0].mxu0
      %v1179 = vadd.f32 %v1058, %v1178
      %v1180 = vpop.f32.mrb[0].mxu0
      %1181 = vmatprep.mubr.f32.mxu0 0.0
      %v1182 = vand.u32 %v351, 4294901760
      %1183 = vmatmul.mubr.f32.gmra.mrb[0].mxu0 %v1182
      %v1184 = vpop.f32.mrb[0].mxu0
      %v1185 = vadd.f32 %v1064, %v1184
      %v1186 = vpop.f32.mrb[0].mxu0
      %1187 = vmatprep.mubr.f32.mxu0 0.0
      %v1188 = vand.u32 %v354, 4294901760
      %1189 = vmatmul.mubr.f32.gmra.mrb[0].mxu0 %v1188
      %v1190 = vpop.f32.mrb[0].mxu0
      %v1191 = vadd.f32 %v1070, %v1190
      %v1192 = vpop.f32.mrb[0].mxu0
      %1193 = vdwg.mxu0
      %v1194 = vld [vmem:[%s3] sm:$0x3]
      %vm1195 = vcmask 15360
      %v1197 = vsel %vm1195, %v1149, 0
      %v1200 = vsel %vm1195, %v1155, 0
      %v1203 = vsel %vm1195, %v1161, 0
      %v1206 = vsel %vm1195, %v1167, 0
      %v1209 = vsel %vm1195, %v1173, 0
      %v1212 = vsel %vm1195, %v1179, 0
      %v1215 = vsel %vm1195, %v1185, 0
      %v1218 = vsel %vm1195, %v1191, 0
      %vm1220 = vcmask 1041408
      %v1222 = vsel %vm1220, %v1194, 0
      %1224 = vmatprep.subr.mxu0 0.0
      %v1225 = vand.u32 %v1222, 4294901760
      %1226 = vmatpush1.msra.mxu0 %v1225
      %1227 = vmatprep.subr.mxu0 0.0
      %1228 = vmatpush1.msra.mxu0 0.0
      %1229 = vmatprep.subr.mxu0 0.0
      %1230 = vmatpush1.msra.mxu0 0.0
      %1231 = vmatprep.subr.mxu0 0.0
      %1232 = vmatpush1.msra.mxu0 0.0
      %1233 = vmatprep.subr.mxu0 0.0
      %1234 = vmatpush1.msra.mxu0 0.0
      %1235 = vmatprep.subr.mxu0 0.0
      %1236 = vmatpush1.msra.mxu0 0.0
      %1237 = vmatprep.subr.mxu0 0.0
      %1238 = vmatpush1.msra.mxu0 0.0
      %1239 = vmatprep.subr.mxu0 0.0
      %1240 = vmatpush1.msra.mxu0 0.0
      %1241 = vmatprep.subr.mxu0 0.0
      %1242 = vmatpush1.msra.mxu0 0.0
      %1243 = vmatprep.subr.mxu0 0.0
      %1244 = vmatpush1.msra.mxu0 0.0
      %1245 = vmatprep.subr.mxu0 0.0
      %1246 = vmatpush1.msra.mxu0 0.0
      %1247 = vmatprep.subr.mxu0 0.0
      %1248 = vmatpush1.msra.mxu0 0.0
      %1249 = vmatprep.subr.mxu0 0.0
      %1250 = vmatpush1.msra.mxu0 0.0
      %1251 = vmatprep.subr.mxu0 0.0
      %1252 = vmatpush1.msra.mxu0 0.0
      %1253 = vmatprep.subr.mxu0 0.0
      %1254 = vmatpush1.msra.mxu0 0.0
      %1255 = vmatprep.subr.mxu0 0.0
      %1256 = vmatpush1.msra.mxu0 0.0
      %1257 = vmatprep.subr.mxu0 0.0
      %1258 = vmatpush1.msra.mxu0 0.0
      %1259 = vmatprep.subr.mxu0 0.0
      %1260 = vmatpush1.msra.mxu0 0.0
      %1261 = vmatprep.subr.mxu0 0.0
      %1262 = vmatpush1.msra.mxu0 0.0
      %1263 = vmatprep.subr.mxu0 0.0
      %1264 = vmatpush1.msra.mxu0 0.0
      %1265 = vmatprep.subr.mxu0 0.0
      %1266 = vmatpush1.msra.mxu0 0.0
      %1267 = vmatprep.subr.mxu0 0.0
      %1268 = vmatpush1.msra.mxu0 0.0
      %1269 = vmatprep.subr.mxu0 0.0
      %1270 = vmatpush1.msra.mxu0 0.0
      %1271 = vmatprep.subr.mxu0 0.0
      %1272 = vmatpush1.msra.mxu0 0.0
      %1273 = vmatprep.subr.mxu0 0.0
      %1274 = vmatpush1.msra.mxu0 0.0
      %1275 = vmatprep.subr.mxu0 0.0
      %1276 = vmatpush1.msra.mxu0 0.0
      %1277 = vmatprep.subr.mxu0 0.0
      %1278 = vmatpush1.msra.mxu0 0.0
      %1279 = vmatprep.subr.mxu0 0.0
      %1280 = vmatpush1.msra.mxu0 0.0
      %1281 = vmatprep.subr.mxu0 0.0
      %1282 = vmatpush1.msra.mxu0 0.0
      %1283 = vmatprep.subr.mxu0 0.0
      %1284 = vmatpush1.msra.mxu0 0.0
      %1285 = vmatprep.subr.mxu0 0.0
      %1286 = vmatpush1.msra.mxu0 0.0
      %1287 = vmatprep.subr.mxu0 0.0
      %1288 = vmatpush1.msra.mxu0 0.0
      %1289 = vmatprep.mubr.f32.mxu0 0.0
      %v1290 = vand.u32 %v1197, 4294901760
      %v1291 = vsub.f32 %v1197, %v1290
      %v1292 = vand.u32 %v1291, 4294901760
      %v1293 = vsub.f32 %v1291, %v1292
      %v1294 = vand.u32 %v1293, 4294901760
      %1295 = vmatmul.mubr.f32.gmra.mrb[0].mxu0 %v1294
      %v1296 = vpop.f32.mrb[0].mxu0
      %v1297 = vadd.f32 0.0, %v1296
      %v1298 = vpop.f32.mrb[0].mxu0
      %1299 = vmatprep.mubr.f32.mxu0 0.0
      %v1300 = vand.u32 %v1200, 4294901760
      %v1301 = vsub.f32 %v1200, %v1300
      %v1302 = vand.u32 %v1301, 4294901760
      %v1303 = vsub.f32 %v1301, %v1302
      %v1304 = vand.u32 %v1303, 4294901760
      %1305 = vmatmul.mubr.f32.gmra.mrb[0].mxu0 %v1304
      %v1306 = vpop.f32.mrb[0].mxu0
      %v1307 = vadd.f32 0.0, %v1306
      %v1308 = vpop.f32.mrb[0].mxu0
      %1309 = vmatprep.mubr.f32.mxu0 0.0
      %v1310 = vand.u32 %v1203, 4294901760
      %v1311 = vsub.f32 %v1203, %v1310
      %v1312 = vand.u32 %v1311, 4294901760
      %v1313 = vsub.f32 %v1311, %v1312
      %v1314 = vand.u32 %v1313, 4294901760
      %1315 = vmatmul.mubr.f32.gmra.mrb[0].mxu0 %v1314
      %v1316 = vpop.f32.mrb[0].mxu0
      %v1317 = vadd.f32 0.0, %v1316
      %v1318 = vpop.f32.mrb[0].mxu0
      %1319 = vmatprep.mubr.f32.mxu0 0.0
      %v1320 = vand.u32 %v1206, 4294901760
      %v1321 = vsub.f32 %v1206, %v1320
      %v1322 = vand.u32 %v1321, 4294901760
      %v1323 = vsub.f32 %v1321, %v1322
      %v1324 = vand.u32 %v1323, 4294901760
      %1325 = vmatmul.mubr.f32.gmra.mrb[0].mxu0 %v1324
      %v1326 = vpop.f32.mrb[0].mxu0
      %v1327 = vadd.f32 0.0, %v1326
      %v1328 = vpop.f32.mrb[0].mxu0
      %1329 = vmatprep.mubr.f32.mxu0 0.0
      %v1330 = vand.u32 %v1209, 4294901760
      %v1331 = vsub.f32 %v1209, %v1330
      %v1332 = vand.u32 %v1331, 4294901760
      %v1333 = vsub.f32 %v1331, %v1332
      %v1334 = vand.u32 %v1333, 4294901760
      %1335 = vmatmul.mubr.f32.gmra.mrb[0].mxu0 %v1334
      %v1336 = vpop.f32.mrb[0].mxu0
      %v1337 = vadd.f32 0.0, %v1336
      %v1338 = vpop.f32.mrb[0].mxu0
      %1339 = vmatprep.mubr.f32.mxu0 0.0
      %v1340 = vand.u32 %v1212, 4294901760
      %v1341 = vsub.f32 %v1212, %v1340
      %v1342 = vand.u32 %v1341, 4294901760
      %v1343 = vsub.f32 %v1341, %v1342
      %v1344 = vand.u32 %v1343, 4294901760
      %1345 = vmatmul.mubr.f32.gmra.mrb[0].mxu0 %v1344
      %v1346 = vpop.f32.mrb[0].mxu0
      %v1347 = vadd.f32 0.0, %v1346
      %v1348 = vpop.f32.mrb[0].mxu0
      %1349 = vmatprep.mubr.f32.mxu0 0.0
      %v1350 = vand.u32 %v1215, 4294901760
      %v1351 = vsub.f32 %v1215, %v1350
      %v1352 = vand.u32 %v1351, 4294901760
      %v1353 = vsub.f32 %v1351, %v1352
      %v1354 = vand.u32 %v1353, 4294901760
      %1355 = vmatmul.mubr.f32.gmra.mrb[0].mxu0 %v1354
      %v1356 = vpop.f32.mrb[0].mxu0
      %v1357 = vadd.f32 0.0, %v1356
      %v1358 = vpop.f32.mrb[0].mxu0
      %1359 = vmatprep.mubr.f32.mxu0 0.0
      %v1360 = vand.u32 %v1218, 4294901760
      %v1361 = vsub.f32 %v1218, %v1360
      %v1362 = vand.u32 %v1361, 4294901760
      %v1363 = vsub.f32 %v1361, %v1362
      %v1364 = vand.u32 %v1363, 4294901760
      %1365 = vmatmul.mubr.f32.gmra.mrb[0].mxu0 %v1364
      %v1366 = vpop.f32.mrb[0].mxu0
      %v1367 = vadd.f32 0.0, %v1366
      %v1368 = vpop.f32.mrb[0].mxu0
      %1369 = vdwg.mxu0
      %1370 = vmatprep.subr.mxu0 0.0
      %v1371 = vand.u32 %v1222, 4294901760
      %v1372 = vsub.f32 %v1222, %v1371
      %v1373 = vand.u32 %v1372, 4294901760
      %v1374 = vsub.f32 %v1372, %v1373
      %v1375 = vand.u32 %v1374, 4294901760
      %1376 = vmatpush1.msra.mxu0 %v1375
      %1377 = vmatprep.subr.mxu0 0.0
      %1378 = vmatpush1.msra.mxu0 0.0
      %1379 = vmatprep.subr.mxu0 0.0
      %1380 = vmatpush1.msra.mxu0 0.0
      %1381 = vmatprep.subr.mxu0 0.0
      %1382 = vmatpush1.msra.mxu0 0.0
      %1383 = vmatprep.subr.mxu0 0.0
      %1384 = vmatpush1.msra.mxu0 0.0
      %1385 = vmatprep.subr.mxu0 0.0
      %1386 = vmatpush1.msra.mxu0 0.0
      %1387 = vmatprep.subr.mxu0 0.0
      %1388 = vmatpush1.msra.mxu0 0.0
      %1389 = vmatprep.subr.mxu0 0.0
      %1390 = vmatpush1.msra.mxu0 0.0
      %1391 = vmatprep.subr.mxu0 0.0
      %1392 = vmatpush1.msra.mxu0 0.0
      %1393 = vmatprep.subr.mxu0 0.0
      %1394 = vmatpush1.msra.mxu0 0.0
      %1395 = vmatprep.subr.mxu0 0.0
      %1396 = vmatpush1.msra.mxu0 0.0
      %1397 = vmatprep.subr.mxu0 0.0
      %1398 = vmatpush1.msra.mxu0 0.0
      %1399 = vmatprep.subr.mxu0 0.0
      %1400 = vmatpush1.msra.mxu0 0.0
      %1401 = vmatprep.subr.mxu0 0.0
      %1402 = vmatpush1.msra.mxu0 0.0
      %1403 = vmatprep.subr.mxu0 0.0
      %1404 = vmatpush1.msra.mxu0 0.0
      %1405 = vmatprep.subr.mxu0 0.0
      %1406 = vmatpush1.msra.mxu0 0.0
      %1407 = vmatprep.subr.mxu0 0.0
      %1408 = vmatpush1.msra.mxu0 0.0
      %1409 = vmatprep.subr.mxu0 0.0
      %1410 = vmatpush1.msra.mxu0 0.0
      %1411 = vmatprep.subr.mxu0 0.0
      %1412 = vmatpush1.msra.mxu0 0.0
      %1413 = vmatprep.subr.mxu0 0.0
      %1414 = vmatpush1.msra.mxu0 0.0
      %1415 = vmatprep.subr.mxu0 0.0
      %1416 = vmatpush1.msra.mxu0 0.0
      %1417 = vmatprep.subr.mxu0 0.0
      %1418 = vmatpush1.msra.mxu0 0.0
      %1419 = vmatprep.subr.mxu0 0.0
      %1420 = vmatpush1.msra.mxu0 0.0
      %1421 = vmatprep.subr.mxu0 0.0
      %1422 = vmatpush1.msra.mxu0 0.0
      %1423 = vmatprep.subr.mxu0 0.0
      %1424 = vmatpush1.msra.mxu0 0.0
      %1425 = vmatprep.subr.mxu0 0.0
      %1426 = vmatpush1.msra.mxu0 0.0
      %1427 = vmatprep.subr.mxu0 0.0
      %1428 = vmatpush1.msra.mxu0 0.0
      %1429 = vmatprep.subr.mxu0 0.0
      %1430 = vmatpush1.msra.mxu0 0.0
      %1431 = vmatprep.subr.mxu0 0.0
      %1432 = vmatpush1.msra.mxu0 0.0
      %1433 = vmatprep.subr.mxu0 0.0
      %1434 = vmatpush1.msra.mxu0 0.0
      %1435 = vmatprep.subr.mxu0 0.0
      %1436 = vmatpush1.msra.mxu0 0.0
      %1437 = vmatprep.subr.mxu0 0.0
      %1438 = vmatpush1.msra.mxu0 0.0
      %1439 = vmatprep.mubr.f32.mxu0 0.0
      %v1440 = vand.u32 %v1197, 4294901760
      %1441 = vmatmul.mubr.f32.gmra.mrb[0].mxu0 %v1440
      %v1442 = vpop.f32.mrb[0].mxu0
      %v1443 = vadd.f32 %v1297, %v1442
      %v1444 = vpop.f32.mrb[0].mxu0
      %1445 = vmatprep.mubr.f32.mxu0 0.0
      %v1446 = vand.u32 %v1200, 4294901760
      %1447 = vmatmul.mubr.f32.gmra.mrb[0].mxu0 %v1446
      %v1448 = vpop.f32.mrb[0].mxu0
      %v1449 = vadd.f32 %v1307, %v1448
      %v1450 = vpop.f32.mrb[0].mxu0
      %1451 = vmatprep.mubr.f32.mxu0 0.0
      %v1452 = vand.u32 %v1203, 4294901760
      %1453 = vmatmul.mubr.f32.gmra.mrb[0].mxu0 %v1452
      %v1454 = vpop.f32.mrb[0].mxu0
      %v1455 = vadd.f32 %v1317, %v1454
      %v1456 = vpop.f32.mrb[0].mxu0
      %1457 = vmatprep.mubr.f32.mxu0 0.0
      %v1458 = vand.u32 %v1206, 4294901760
      %1459 = vmatmul.mubr.f32.gmra.mrb[0].mxu0 %v1458
      %v1460 = vpop.f32.mrb[0].mxu0
      %v1461 = vadd.f32 %v1327, %v1460
      %v1462 = vpop.f32.mrb[0].mxu0
      %1463 = vmatprep.mubr.f32.mxu0 0.0
      %v1464 = vand.u32 %v1209, 4294901760
      %1465 = vmatmul.mubr.f32.gmra.mrb[0].mxu0 %v1464
      %v1466 = vpop.f32.mrb[0].mxu0
      %v1467 = vadd.f32 %v1337, %v1466
      %v1468 = vpop.f32.mrb[0].mxu0
      %1469 = vmatprep.mubr.f32.mxu0 0.0
      %v1470 = vand.u32 %v1212, 4294901760
      %1471 = vmatmul.mubr.f32.gmra.mrb[0].mxu0 %v1470
      %v1472 = vpop.f32.mrb[0].mxu0
      %v1473 = vadd.f32 %v1347, %v1472
      %v1474 = vpop.f32.mrb[0].mxu0
      %1475 = vmatprep.mubr.f32.mxu0 0.0
      %v1476 = vand.u32 %v1215, 4294901760
      %1477 = vmatmul.mubr.f32.gmra.mrb[0].mxu0 %v1476
      %v1478 = vpop.f32.mrb[0].mxu0
      %v1479 = vadd.f32 %v1357, %v1478
      %v1480 = vpop.f32.mrb[0].mxu0
      %1481 = vmatprep.mubr.f32.mxu0 0.0
      %v1482 = vand.u32 %v1218, 4294901760
      %1483 = vmatmul.mubr.f32.gmra.mrb[0].mxu0 %v1482
      %v1484 = vpop.f32.mrb[0].mxu0
      %v1485 = vadd.f32 %v1367, %v1484
      %v1486 = vpop.f32.mrb[0].mxu0
      %1487 = vdwg.mxu0
      %1488 = vmatprep.subr.mxu0 0.0
      %v1489 = vand.u32 %v1222, 4294901760
      %v1490 = vsub.f32 %v1222, %v1489
      %1491 = vmatpush1.msra.mxu0 %v1490
      %1492 = vmatprep.subr.mxu0 0.0
      %1493 = vmatpush1.msra.mxu0 0.0
      %1494 = vmatprep.subr.mxu0 0.0
      %1495 = vmatpush1.msra.mxu0 0.0
      %1496 = vmatprep.subr.mxu0 0.0
      %1497 = vmatpush1.msra.mxu0 0.0
      %1498 = vmatprep.subr.mxu0 0.0
      %1499 = vmatpush1.msra.mxu0 0.0
      %1500 = vmatprep.subr.mxu0 0.0
      %1501 = vmatpush1.msra.mxu0 0.0
      %1502 = vmatprep.subr.mxu0 0.0
      %1503 = vmatpush1.msra.mxu0 0.0
      %1504 = vmatprep.subr.mxu0 0.0
      %1505 = vmatpush1.msra.mxu0 0.0
      %1506 = vmatprep.subr.mxu0 0.0
      %1507 = vmatpush1.msra.mxu0 0.0
      %1508 = vmatprep.subr.mxu0 0.0
      %1509 = vmatpush1.msra.mxu0 0.0
      %1510 = vmatprep.subr.mxu0 0.0
      %1511 = vmatpush1.msra.mxu0 0.0
      %1512 = vmatprep.subr.mxu0 0.0
      %1513 = vmatpush1.msra.mxu0 0.0
      %1514 = vmatprep.subr.mxu0 0.0
      %1515 = vmatpush1.msra.mxu0 0.0
      %1516 = vmatprep.subr.mxu0 0.0
      %1517 = vmatpush1.msra.mxu0 0.0
      %1518 = vmatprep.subr.mxu0 0.0
      %1519 = vmatpush1.msra.mxu0 0.0
      %1520 = vmatprep.subr.mxu0 0.0
      %1521 = vmatpush1.msra.mxu0 0.0
      %1522 = vmatprep.subr.mxu0 0.0
      %1523 = vmatpush1.msra.mxu0 0.0
      %1524 = vmatprep.subr.mxu0 0.0
      %1525 = vmatpush1.msra.mxu0 0.0
      %1526 = vmatprep.subr.mxu0 0.0
      %1527 = vmatpush1.msra.mxu0 0.0
      %1528 = vmatprep.subr.mxu0 0.0
      %1529 = vmatpush1.msra.mxu0 0.0
      %1530 = vmatprep.subr.mxu0 0.0
      %1531 = vmatpush1.msra.mxu0 0.0
      %1532 = vmatprep.subr.mxu0 0.0
      %1533 = vmatpush1.msra.mxu0 0.0
      %1534 = vmatprep.subr.mxu0 0.0
      %1535 = vmatpush1.msra.mxu0 0.0
      %1536 = vmatprep.subr.mxu0 0.0
      %1537 = vmatpush1.msra.mxu0 0.0
      %1538 = vmatprep.subr.mxu0 0.0
      %1539 = vmatpush1.msra.mxu0 0.0
      %1540 = vmatprep.subr.mxu0 0.0
      %1541 = vmatpush1.msra.mxu0 0.0
      %1542 = vmatprep.subr.mxu0 0.0
      %1543 = vmatpush1.msra.mxu0 0.0
      %1544 = vmatprep.subr.mxu0 0.0
      %1545 = vmatpush1.msra.mxu0 0.0
      %1546 = vmatprep.subr.mxu0 0.0
      %1547 = vmatpush1.msra.mxu0 0.0
      %1548 = vmatprep.subr.mxu0 0.0
      %1549 = vmatpush1.msra.mxu0 0.0
      %1550 = vmatprep.subr.mxu0 0.0
      %1551 = vmatpush1.msra.mxu0 0.0
      %1552 = vmatprep.subr.mxu0 0.0
      %1553 = vmatpush1.msra.mxu0 0.0
      %1554 = vmatprep.mubr.f32.mxu0 0.0
      %v1555 = vand.u32 %v1197, 4294901760
      %v1556 = vsub.f32 %v1197, %v1555
      %1557 = vmatmul.mubr.f32.gmra.mrb[0].mxu0 %v1556
      %v1558 = vpop.f32.mrb[0].mxu0
      %v1559 = vadd.f32 %v1443, %v1558
      %v1560 = vpop.f32.mrb[0].mxu0
      %1561 = vmatprep.mubr.f32.mxu0 0.0
      %v1562 = vand.u32 %v1200, 4294901760
      %v1563 = vsub.f32 %v1200, %v1562
      %1564 = vmatmul.mubr.f32.gmra.mrb[0].mxu0 %v1563
      %v1565 = vpop.f32.mrb[0].mxu0
      %v1566 = vadd.f32 %v1449, %v1565
      %v1567 = vpop.f32.mrb[0].mxu0
      %1568 = vmatprep.mubr.f32.mxu0 0.0
      %v1569 = vand.u32 %v1203, 4294901760
      %v1570 = vsub.f32 %v1203, %v1569
      %1571 = vmatmul.mubr.f32.gmra.mrb[0].mxu0 %v1570
      %v1572 = vpop.f32.mrb[0].mxu0
      %v1573 = vadd.f32 %v1455, %v1572
      %v1574 = vpop.f32.mrb[0].mxu0
      %1575 = vmatprep.mubr.f32.mxu0 0.0
      %v1576 = vand.u32 %v1206, 4294901760
      %v1577 = vsub.f32 %v1206, %v1576
      %1578 = vmatmul.mubr.f32.gmra.mrb[0].mxu0 %v1577
      %v1579 = vpop.f32.mrb[0].mxu0
      %v1580 = vadd.f32 %v1461, %v1579
      %v1581 = vpop.f32.mrb[0].mxu0
      %1582 = vmatprep.mubr.f32.mxu0 0.0
      %v1583 = vand.u32 %v1209, 4294901760
      %v1584 = vsub.f32 %v1209, %v1583
      %1585 = vmatmul.mubr.f32.gmra.mrb[0].mxu0 %v1584
      %v1586 = vpop.f32.mrb[0].mxu0
      %v1587 = vadd.f32 %v1467, %v1586
      %v1588 = vpop.f32.mrb[0].mxu0
      %1589 = vmatprep.mubr.f32.mxu0 0.0
      %v1590 = vand.u32 %v1212, 4294901760
      %v1591 = vsub.f32 %v1212, %v1590
      %1592 = vmatmul.mubr.f32.gmra.mrb[0].mxu0 %v1591
      %v1593 = vpop.f32.mrb[0].mxu0
      %v1594 = vadd.f32 %v1473, %v1593
      %v1595 = vpop.f32.mrb[0].mxu0
      %1596 = vmatprep.mubr.f32.mxu0 0.0
      %v1597 = vand.u32 %v1215, 4294901760
      %v1598 = vsub.f32 %v1215, %v1597
      %1599 = vmatmul.mubr.f32.gmra.mrb[0].mxu0 %v1598
      %v1600 = vpop.f32.mrb[0].mxu0
      %v1601 = vadd.f32 %v1479, %v1600
      %v1602 = vpop.f32.mrb[0].mxu0
      %1603 = vmatprep.mubr.f32.mxu0 0.0
      %v1604 = vand.u32 %v1218, 4294901760
      %v1605 = vsub.f32 %v1218, %v1604
      %1606 = vmatmul.mubr.f32.gmra.mrb[0].mxu0 %v1605
      %v1607 = vpop.f32.mrb[0].mxu0
      %v1608 = vadd.f32 %v1485, %v1607
      %v1609 = vpop.f32.mrb[0].mxu0
      %1610 = vdwg.mxu0
      %1611 = vmatprep.subr.mxu0 0.0
      %v1612 = vand.u32 %v1222, 4294901760
      %1613 = vmatpush1.msra.mxu0 %v1612
      %1614 = vmatprep.subr.mxu0 0.0
      %1615 = vmatpush1.msra.mxu0 0.0
      %1616 = vmatprep.subr.mxu0 0.0
      %1617 = vmatpush1.msra.mxu0 0.0
      %1618 = vmatprep.subr.mxu0 0.0
      %1619 = vmatpush1.msra.mxu0 0.0
      %1620 = vmatprep.subr.mxu0 0.0
      %1621 = vmatpush1.msra.mxu0 0.0
      %1622 = vmatprep.subr.mxu0 0.0
      %1623 = vmatpush1.msra.mxu0 0.0
      %1624 = vmatprep.subr.mxu0 0.0
      %1625 = vmatpush1.msra.mxu0 0.0
      %1626 = vmatprep.subr.mxu0 0.0
      %1627 = vmatpush1.msra.mxu0 0.0
      %1628 = vmatprep.subr.mxu0 0.0
      %1629 = vmatpush1.msra.mxu0 0.0
      %1630 = vmatprep.subr.mxu0 0.0
      %1631 = vmatpush1.msra.mxu0 0.0
      %1632 = vmatprep.subr.mxu0 0.0
      %1633 = vmatpush1.msra.mxu0 0.0
      %1634 = vmatprep.subr.mxu0 0.0
      %1635 = vmatpush1.msra.mxu0 0.0
      %1636 = vmatprep.subr.mxu0 0.0
      %1637 = vmatpush1.msra.mxu0 0.0
      %1638 = vmatprep.subr.mxu0 0.0
      %1639 = vmatpush1.msra.mxu0 0.0
      %1640 = vmatprep.subr.mxu0 0.0
      %1641 = vmatpush1.msra.mxu0 0.0
      %1642 = vmatprep.subr.mxu0 0.0
      %1643 = vmatpush1.msra.mxu0 0.0
      %1644 = vmatprep.subr.mxu0 0.0
      %1645 = vmatpush1.msra.mxu0 0.0
      %1646 = vmatprep.subr.mxu0 0.0
      %1647 = vmatpush1.msra.mxu0 0.0
      %1648 = vmatprep.subr.mxu0 0.0
      %1649 = vmatpush1.msra.mxu0 0.0
      %1650 = vmatprep.subr.mxu0 0.0
      %1651 = vmatpush1.msra.mxu0 0.0
      %1652 = vmatprep.subr.mxu0 0.0
      %1653 = vmatpush1.msra.mxu0 0.0
      %1654 = vmatprep.subr.mxu0 0.0
      %1655 = vmatpush1.msra.mxu0 0.0
      %1656 = vmatprep.subr.mxu0 0.0
      %1657 = vmatpush1.msra.mxu0 0.0
      %1658 = vmatprep.subr.mxu0 0.0
      %1659 = vmatpush1.msra.mxu0 0.0
      %1660 = vmatprep.subr.mxu0 0.0
      %1661 = vmatpush1.msra.mxu0 0.0
      %1662 = vmatprep.subr.mxu0 0.0
      %1663 = vmatpush1.msra.mxu0 0.0
      %1664 = vmatprep.subr.mxu0 0.0
      %1665 = vmatpush1.msra.mxu0 0.0
      %1666 = vmatprep.subr.mxu0 0.0
      %1667 = vmatpush1.msra.mxu0 0.0
      %1668 = vmatprep.subr.mxu0 0.0
      %1669 = vmatpush1.msra.mxu0 0.0
      %1670 = vmatprep.subr.mxu0 0.0
      %1671 = vmatpush1.msra.mxu0 0.0
      %1672 = vmatprep.subr.mxu0 0.0
      %1673 = vmatpush1.msra.mxu0 0.0
      %1674 = vmatprep.subr.mxu0 0.0
      %1675 = vmatpush1.msra.mxu0 0.0
      %1676 = vmatprep.mubr.f32.mxu0 0.0
      %v1677 = vand.u32 %v1197, 4294901760
      %v1678 = vsub.f32 %v1197, %v1677
      %v1679 = vand.u32 %v1678, 4294901760
      %1680 = vmatmul.mubr.f32.gmra.mrb[0].mxu0 %v1679
      %v1681 = vpop.f32.mrb[0].mxu0
      %v1682 = vadd.f32 %v1559, %v1681
      %v1683 = vpop.f32.mrb[0].mxu0
      %1684 = vmatprep.mubr.f32.mxu0 0.0
      %v1685 = vand.u32 %v1200, 4294901760
      %v1686 = vsub.f32 %v1200, %v1685
      %v1687 = vand.u32 %v1686, 4294901760
      %1688 = vmatmul.mubr.f32.gmra.mrb[0].mxu0 %v1687
      %v1689 = vpop.f32.mrb[0].mxu0
      %v1690 = vadd.f32 %v1566, %v1689
      %v1691 = vpop.f32.mrb[0].mxu0
      %1692 = vmatprep.mubr.f32.mxu0 0.0
      %v1693 = vand.u32 %v1203, 4294901760
      %v1694 = vsub.f32 %v1203, %v1693
      %v1695 = vand.u32 %v1694, 4294901760
      %1696 = vmatmul.mubr.f32.gmra.mrb[0].mxu0 %v1695
      %v1697 = vpop.f32.mrb[0].mxu0
      %v1698 = vadd.f32 %v1573, %v1697
      %v1699 = vpop.f32.mrb[0].mxu0
      %1700 = vmatprep.mubr.f32.mxu0 0.0
      %v1701 = vand.u32 %v1206, 4294901760
      %v1702 = vsub.f32 %v1206, %v1701
      %v1703 = vand.u32 %v1702, 4294901760
      %1704 = vmatmul.mubr.f32.gmra.mrb[0].mxu0 %v1703
      %v1705 = vpop.f32.mrb[0].mxu0
      %v1706 = vadd.f32 %v1580, %v1705
      %v1707 = vpop.f32.mrb[0].mxu0
      %1708 = vmatprep.mubr.f32.mxu0 0.0
      %v1709 = vand.u32 %v1209, 4294901760
      %v1710 = vsub.f32 %v1209, %v1709
      %v1711 = vand.u32 %v1710, 4294901760
      %1712 = vmatmul.mubr.f32.gmra.mrb[0].mxu0 %v1711
      %v1713 = vpop.f32.mrb[0].mxu0
      %v1714 = vadd.f32 %v1587, %v1713
      %v1715 = vpop.f32.mrb[0].mxu0
      %1716 = vmatprep.mubr.f32.mxu0 0.0
      %v1717 = vand.u32 %v1212, 4294901760
      %v1718 = vsub.f32 %v1212, %v1717
      %v1719 = vand.u32 %v1718, 4294901760
      %1720 = vmatmul.mubr.f32.gmra.mrb[0].mxu0 %v1719
      %v1721 = vpop.f32.mrb[0].mxu0
      %v1722 = vadd.f32 %v1594, %v1721
      %v1723 = vpop.f32.mrb[0].mxu0
      %1724 = vmatprep.mubr.f32.mxu0 0.0
      %v1725 = vand.u32 %v1215, 4294901760
      %v1726 = vsub.f32 %v1215, %v1725
      %v1727 = vand.u32 %v1726, 4294901760
      %1728 = vmatmul.mubr.f32.gmra.mrb[0].mxu0 %v1727
      %v1729 = vpop.f32.mrb[0].mxu0
      %v1730 = vadd.f32 %v1601, %v1729
      %v1731 = vpop.f32.mrb[0].mxu0
      %1732 = vmatprep.mubr.f32.mxu0 0.0
      %v1733 = vand.u32 %v1218, 4294901760
      %v1734 = vsub.f32 %v1218, %v1733
      %v1735 = vand.u32 %v1734, 4294901760
      %1736 = vmatmul.mubr.f32.gmra.mrb[0].mxu0 %v1735
      %v1737 = vpop.f32.mrb[0].mxu0
      %v1738 = vadd.f32 %v1608, %v1737
      %v1739 = vpop.f32.mrb[0].mxu0
      %1740 = vdwg.mxu0
      %1741 = vmatprep.subr.mxu0 0.0
      %v1742 = vand.u32 %v1222, 4294901760
      %v1743 = vsub.f32 %v1222, %v1742
      %v1744 = vand.u32 %v1743, 4294901760
      %1745 = vmatpush1.msra.mxu0 %v1744
      %1746 = vmatprep.subr.mxu0 0.0
      %1747 = vmatpush1.msra.mxu0 0.0
      %1748 = vmatprep.subr.mxu0 0.0
      %1749 = vmatpush1.msra.mxu0 0.0
      %1750 = vmatprep.subr.mxu0 0.0
      %1751 = vmatpush1.msra.mxu0 0.0
      %1752 = vmatprep.subr.mxu0 0.0
      %1753 = vmatpush1.msra.mxu0 0.0
      %1754 = vmatprep.subr.mxu0 0.0
      %1755 = vmatpush1.msra.mxu0 0.0
      %1756 = vmatprep.subr.mxu0 0.0
      %1757 = vmatpush1.msra.mxu0 0.0
      %1758 = vmatprep.subr.mxu0 0.0
      %1759 = vmatpush1.msra.mxu0 0.0
      %1760 = vmatprep.subr.mxu0 0.0
      %1761 = vmatpush1.msra.mxu0 0.0
      %1762 = vmatprep.subr.mxu0 0.0
      %1763 = vmatpush1.msra.mxu0 0.0
      %1764 = vmatprep.subr.mxu0 0.0
      %1765 = vmatpush1.msra.mxu0 0.0
      %1766 = vmatprep.subr.mxu0 0.0
      %1767 = vmatpush1.msra.mxu0 0.0
      %1768 = vmatprep.subr.mxu0 0.0
      %1769 = vmatpush1.msra.mxu0 0.0
      %1770 = vmatprep.subr.mxu0 0.0
      %1771 = vmatpush1.msra.mxu0 0.0
      %1772 = vmatprep.subr.mxu0 0.0
      %1773 = vmatpush1.msra.mxu0 0.0
      %1774 = vmatprep.subr.mxu0 0.0
      %1775 = vmatpush1.msra.mxu0 0.0
      %1776 = vmatprep.subr.mxu0 0.0
      %1777 = vmatpush1.msra.mxu0 0.0
      %1778 = vmatprep.subr.mxu0 0.0
      %1779 = vmatpush1.msra.mxu0 0.0
      %1780 = vmatprep.subr.mxu0 0.0
      %1781 = vmatpush1.msra.mxu0 0.0
      %1782 = vmatprep.subr.mxu0 0.0
      %1783 = vmatpush1.msra.mxu0 0.0
      %1784 = vmatprep.subr.mxu0 0.0
      %1785 = vmatpush1.msra.mxu0 0.0
      %1786 = vmatprep.subr.mxu0 0.0
      %1787 = vmatpush1.msra.mxu0 0.0
      %1788 = vmatprep.subr.mxu0 0.0
      %1789 = vmatpush1.msra.mxu0 0.0
      %1790 = vmatprep.subr.mxu0 0.0
      %1791 = vmatpush1.msra.mxu0 0.0
      %1792 = vmatprep.subr.mxu0 0.0
      %1793 = vmatpush1.msra.mxu0 0.0
      %1794 = vmatprep.subr.mxu0 0.0
      %1795 = vmatpush1.msra.mxu0 0.0
      %1796 = vmatprep.subr.mxu0 0.0
      %1797 = vmatpush1.msra.mxu0 0.0
      %1798 = vmatprep.subr.mxu0 0.0
      %1799 = vmatpush1.msra.mxu0 0.0
      %1800 = vmatprep.subr.mxu0 0.0
      %1801 = vmatpush1.msra.mxu0 0.0
      %1802 = vmatprep.subr.mxu0 0.0
      %1803 = vmatpush1.msra.mxu0 0.0
      %1804 = vmatprep.subr.mxu0 0.0
      %1805 = vmatpush1.msra.mxu0 0.0
      %1806 = vmatprep.subr.mxu0 0.0
      %1807 = vmatpush1.msra.mxu0 0.0
      %1808 = vmatprep.mubr.f32.mxu0 0.0
      %v1809 = vand.u32 %v1197, 4294901760
      %1810 = vmatmul.mubr.f32.gmra.mrb[0].mxu0 %v1809
      %v1811 = vpop.f32.mrb[0].mxu0
      %v1812 = vadd.f32 %v1682, %v1811
      %v1813 = vpop.f32.mrb[0].mxu0
      %1814 = vmatprep.mubr.f32.mxu0 0.0
      %v1815 = vand.u32 %v1200, 4294901760
      %1816 = vmatmul.mubr.f32.gmra.mrb[0].mxu0 %v1815
      %v1817 = vpop.f32.mrb[0].mxu0
      %v1818 = vadd.f32 %v1690, %v1817
      %v1819 = vpop.f32.mrb[0].mxu0
      %1820 = vmatprep.mubr.f32.mxu0 0.0
      %v1821 = vand.u32 %v1203, 4294901760
      %1822 = vmatmul.mubr.f32.gmra.mrb[0].mxu0 %v1821
      %v1823 = vpop.f32.mrb[0].mxu0
      %v1824 = vadd.f32 %v1698, %v1823
      %v1825 = vpop.f32.mrb[0].mxu0
      %1826 = vmatprep.mubr.f32.mxu0 0.0
      %v1827 = vand.u32 %v1206, 4294901760
      %1828 = vmatmul.mubr.f32.gmra.mrb[0].mxu0 %v1827
      %v1829 = vpop.f32.mrb[0].mxu0
      %v1830 = vadd.f32 %v1706, %v1829
      %v1831 = vpop.f32.mrb[0].mxu0
      %1832 = vmatprep.mubr.f32.mxu0 0.0
      %v1833 = vand.u32 %v1209, 4294901760
      %1834 = vmatmul.mubr.f32.gmra.mrb[0].mxu0 %v1833
      %v1835 = vpop.f32.mrb[0].mxu0
      %v1836 = vadd.f32 %v1714, %v1835
      %v1837 = vpop.f32.mrb[0].mxu0
      %1838 = vmatprep.mubr.f32.mxu0 0.0
      %v1839 = vand.u32 %v1212, 4294901760
      %1840 = vmatmul.mubr.f32.gmra.mrb[0].mxu0 %v1839
      %v1841 = vpop.f32.mrb[0].mxu0
      %v1842 = vadd.f32 %v1722, %v1841
      %v1843 = vpop.f32.mrb[0].mxu0
      %1844 = vmatprep.mubr.f32.mxu0 0.0
      %v1845 = vand.u32 %v1215, 4294901760
      %1846 = vmatmul.mubr.f32.gmra.mrb[0].mxu0 %v1845
      %v1847 = vpop.f32.mrb[0].mxu0
      %v1848 = vadd.f32 %v1730, %v1847
      %v1849 = vpop.f32.mrb[0].mxu0
      %1850 = vmatprep.mubr.f32.mxu0 0.0
      %v1851 = vand.u32 %v1218, 4294901760
      %1852 = vmatmul.mubr.f32.gmra.mrb[0].mxu0 %v1851
      %v1853 = vpop.f32.mrb[0].mxu0
      %v1854 = vadd.f32 %v1738, %v1853
      %v1855 = vpop.f32.mrb[0].mxu0
      %1856 = vdwg.mxu0
      %1857 = vmatprep.subr.mxu0 0.0
      %v1858 = vand.u32 %v1222, 4294901760
      %1859 = vmatpush1.msra.mxu0 %v1858
      %1860 = vmatprep.subr.mxu0 0.0
      %1861 = vmatpush1.msra.mxu0 0.0
      %1862 = vmatprep.subr.mxu0 0.0
      %1863 = vmatpush1.msra.mxu0 0.0
      %1864 = vmatprep.subr.mxu0 0.0
      %1865 = vmatpush1.msra.mxu0 0.0
      %1866 = vmatprep.subr.mxu0 0.0
      %1867 = vmatpush1.msra.mxu0 0.0
      %1868 = vmatprep.subr.mxu0 0.0
      %1869 = vmatpush1.msra.mxu0 0.0
      %1870 = vmatprep.subr.mxu0 0.0
      %1871 = vmatpush1.msra.mxu0 0.0
      %1872 = vmatprep.subr.mxu0 0.0
      %1873 = vmatpush1.msra.mxu0 0.0
      %1874 = vmatprep.subr.mxu0 0.0
      %1875 = vmatpush1.msra.mxu0 0.0
      %1876 = vmatprep.subr.mxu0 0.0
      %1877 = vmatpush1.msra.mxu0 0.0
      %1878 = vmatprep.subr.mxu0 0.0
      %1879 = vmatpush1.msra.mxu0 0.0
      %1880 = vmatprep.subr.mxu0 0.0
      %1881 = vmatpush1.msra.mxu0 0.0
      %1882 = vmatprep.subr.mxu0 0.0
      %1883 = vmatpush1.msra.mxu0 0.0
      %1884 = vmatprep.subr.mxu0 0.0
      %1885 = vmatpush1.msra.mxu0 0.0
      %1886 = vmatprep.subr.mxu0 0.0
      %1887 = vmatpush1.msra.mxu0 0.0
      %1888 = vmatprep.subr.mxu0 0.0
      %1889 = vmatpush1.msra.mxu0 0.0
      %1890 = vmatprep.subr.mxu0 0.0
      %1891 = vmatpush1.msra.mxu0 0.0
      %1892 = vmatprep.subr.mxu0 0.0
      %1893 = vmatpush1.msra.mxu0 0.0
      %1894 = vmatprep.subr.mxu0 0.0
      %1895 = vmatpush1.msra.mxu0 0.0
      %1896 = vmatprep.subr.mxu0 0.0
      %1897 = vmatpush1.msra.mxu0 0.0
      %1898 = vmatprep.subr.mxu0 0.0
      %1899 = vmatpush1.msra.mxu0 0.0
      %1900 = vmatprep.subr.mxu0 0.0
      %1901 = vmatpush1.msra.mxu0 0.0
      %1902 = vmatprep.subr.mxu0 0.0
      %1903 = vmatpush1.msra.mxu0 0.0
      %1904 = vmatprep.subr.mxu0 0.0
      %1905 = vmatpush1.msra.mxu0 0.0
      %1906 = vmatprep.subr.mxu0 0.0
      %1907 = vmatpush1.msra.mxu0 0.0
      %1908 = vmatprep.subr.mxu0 0.0
      %1909 = vmatpush1.msra.mxu0 0.0
      %1910 = vmatprep.subr.mxu0 0.0
      %1911 = vmatpush1.msra.mxu0 0.0
      %1912 = vmatprep.subr.mxu0 0.0
      %1913 = vmatpush1.msra.mxu0 0.0
      %1914 = vmatprep.subr.mxu0 0.0
      %1915 = vmatpush1.msra.mxu0 0.0
      %1916 = vmatprep.subr.mxu0 0.0
      %1917 = vmatpush1.msra.mxu0 0.0
      %1918 = vmatprep.subr.mxu0 0.0
      %1919 = vmatpush1.msra.mxu0 0.0
      %1920 = vmatprep.subr.mxu0 0.0
      %1921 = vmatpush1.msra.mxu0 0.0
      %1922 = vmatprep.mubr.f32.mxu0 0.0
      %v1923 = vand.u32 %v1197, 4294901760
      %1924 = vmatmul.mubr.f32.gmra.mrb[0].mxu0 %v1923
      %v1925 = vpop.f32.mrb[0].mxu0
      %v1926 = vadd.f32 %v1812, %v1925
      %v1927 = vpop.f32.mrb[0].mxu0
      %1928 = vmatprep.mubr.f32.mxu0 0.0
      %v1929 = vand.u32 %v1200, 4294901760
      %1930 = vmatmul.mubr.f32.gmra.mrb[0].mxu0 %v1929
      %v1931 = vpop.f32.mrb[0].mxu0
      %v1932 = vadd.f32 %v1818, %v1931
      %v1933 = vpop.f32.mrb[0].mxu0
      %1934 = vmatprep.mubr.f32.mxu0 0.0
      %v1935 = vand.u32 %v1203, 4294901760
      %1936 = vmatmul.mubr.f32.gmra.mrb[0].mxu0 %v1935
      %v1937 = vpop.f32.mrb[0].mxu0
      %v1938 = vadd.f32 %v1824, %v1937
      %v1939 = vpop.f32.mrb[0].mxu0
      %1940 = vmatprep.mubr.f32.mxu0 0.0
      %v1941 = vand.u32 %v1206, 4294901760
      %1942 = vmatmul.mubr.f32.gmra.mrb[0].mxu0 %v1941
      %v1943 = vpop.f32.mrb[0].mxu0
      %v1944 = vadd.f32 %v1830, %v1943
      %v1945 = vpop.f32.mrb[0].mxu0
      %1946 = vmatprep.mubr.f32.mxu0 0.0
      %v1947 = vand.u32 %v1209, 4294901760
      %1948 = vmatmul.mubr.f32.gmra.mrb[0].mxu0 %v1947
      %v1949 = vpop.f32.mrb[0].mxu0
      %v1950 = vadd.f32 %v1836, %v1949
      %v1951 = vpop.f32.mrb[0].mxu0
      %1952 = vmatprep.mubr.f32.mxu0 0.0
      %v1953 = vand.u32 %v1212, 4294901760
      %1954 = vmatmul.mubr.f32.gmra.mrb[0].mxu0 %v1953
      %v1955 = vpop.f32.mrb[0].mxu0
      %v1956 = vadd.f32 %v1842, %v1955
      %v1957 = vpop.f32.mrb[0].mxu0
      %1958 = vmatprep.mubr.f32.mxu0 0.0
      %v1959 = vand.u32 %v1215, 4294901760
      %1960 = vmatmul.mubr.f32.gmra.mrb[0].mxu0 %v1959
      %v1961 = vpop.f32.mrb[0].mxu0
      %v1962 = vadd.f32 %v1848, %v1961
      %v1963 = vpop.f32.mrb[0].mxu0
      %1964 = vmatprep.mubr.f32.mxu0 0.0
      %v1965 = vand.u32 %v1218, 4294901760
      %1966 = vmatmul.mubr.f32.gmra.mrb[0].mxu0 %v1965
      %v1967 = vpop.f32.mrb[0].mxu0
      %v1968 = vadd.f32 %v1854, %v1967
      %v1969 = vpop.f32.mrb[0].mxu0
      %1970 = vdwg.mxu0
      %1971 = vst.msk [vmem:[#allocation2] sm:$0xff] %vm331, %v1926
      %1972 = vst.msk [vmem:[#allocation2 + $0x8] sm:$0xff] %vm331, %v1932
      %1973 = vst.msk [vmem:[#allocation2 + $0x10] sm:$0xff] %vm331, %v1938
      %1974 = vst.msk [vmem:[#allocation2 + $0x18] sm:$0xff] %vm331, %v1944
      %1975 = vst.msk [vmem:[#allocation2 + $0x20] sm:$0xff] %vm331, %v1950
      %1976 = vst.msk [vmem:[#allocation2 + $0x28] sm:$0xff] %vm331, %v1956
      %1977 = vst.msk [vmem:[#allocation2 + $0x30] sm:$0xff] %vm331, %v1962
      %1978 = vst.msk [vmem:[#allocation2 + $0x38] sm:$0xff] %vm331, %v1968
      %1979 = vrot.lane.b32.xlu0 %v1149, 126
      %v1980 = vpop.permute.xlu0 %1979
      %1981 = vrot.lane.b32.xlu0 %v1155, 126
      %v1982 = vpop.permute.xlu0 %1981
      %1983 = vrot.lane.b32.xlu0 %v1161, 126
      %v1984 = vpop.permute.xlu0 %1983
      %1985 = vrot.lane.b32.xlu0 %v1167, 126
      %v1986 = vpop.permute.xlu0 %1985
      %1987 = vrot.lane.b32.xlu0 %v1173, 126
      %v1988 = vpop.permute.xlu0 %1987
      %1989 = vrot.lane.b32.xlu0 %v1179, 126
      %v1990 = vpop.permute.xlu0 %1989
      %1991 = vrot.lane.b32.xlu0 %v1185, 126
      %v1992 = vpop.permute.xlu0 %1991
      %1993 = vrot.lane.b32.xlu0 %v1191, 126
      %v1994 = vpop.permute.xlu0 %1993
      %vm2003 = vcmask 130048
      %2004 = vst.msk [vmem:[#allocation3] sm:$0xff] %vm2003, %v1980
      %2005 = vst.msk [vmem:[#allocation3 + $0x8] sm:$0xff] %vm2003, %v1982
      %2006 = vst.msk [vmem:[#allocation3 + $0x10] sm:$0xff] %vm2003, %v1984
      %2007 = vst.msk [vmem:[#allocation3 + $0x18] sm:$0xff] %vm2003, %v1986
      %2008 = vst.msk [vmem:[#allocation3 + $0x20] sm:$0xff] %vm2003, %v1988
      %2009 = vst.msk [vmem:[#allocation3 + $0x28] sm:$0xff] %vm2003, %v1990
      %2010 = vst.msk [vmem:[#allocation3 + $0x30] sm:$0xff] %vm2003, %v1992
      %2011 = vst.msk [vmem:[#allocation3 + $0x38] sm:$0xff] %vm2003, %v1994
      %2012 = vrot.lane.b32.xlu0 %v1149, 110
      %v2013 = vpop.permute.xlu0 %2012
      %2014 = vrot.lane.b32.xlu0 %v1155, 110
      %v2015 = vpop.permute.xlu0 %2014
      %2016 = vrot.lane.b32.xlu0 %v1161, 110
      %v2017 = vpop.permute.xlu0 %2016
      %2018 = vrot.lane.b32.xlu0 %v1167, 110
      %v2019 = vpop.permute.xlu0 %2018
      %2020 = vrot.lane.b32.xlu0 %v1173, 110
      %v2021 = vpop.permute.xlu0 %2020
      %2022 = vrot.lane.b32.xlu0 %v1179, 110
      %v2023 = vpop.permute.xlu0 %2022
      %2024 = vrot.lane.b32.xlu0 %v1185, 110
      %v2025 = vpop.permute.xlu0 %2024
      %2026 = vrot.lane.b32.xlu0 %v1191, 110
      %v2027 = vpop.permute.xlu0 %2026
      %2036 = vst.msk [vmem:[#allocation4] sm:$0xff] %vm2003, %v2013
      %2037 = vst.msk [vmem:[#allocation4 + $0x8] sm:$0xff] %vm2003, %v2015
      %2038 = vst.msk [vmem:[#allocation4 + $0x10] sm:$0xff] %vm2003, %v2017
      %2039 = vst.msk [vmem:[#allocation4 + $0x18] sm:$0xff] %vm2003, %v2019
      %2040 = vst.msk [vmem:[#allocation4 + $0x20] sm:$0xff] %vm2003, %v2021
      %2041 = vst.msk [vmem:[#allocation4 + $0x28] sm:$0xff] %vm2003, %v2023
      %2042 = vst.msk [vmem:[#allocation4 + $0x30] sm:$0xff] %vm2003, %v2025
      %2043 = vst.msk [vmem:[#allocation4 + $0x38] sm:$0xff] %vm2003, %v2027
      %v2044 = vld [vmem:[%s4] sm:$0xff]
      %v2045 = vld [vmem:[%s4 + $0x8] sm:$0xff]
      %v2046 = vld [vmem:[%s5] sm:$0x1]
      %v2047 = vld [vmem:[%s6] sm:$0x1]
      %v2048 = vlaneseq
      %v2049 = vshrl.u32 %v2048, 7
      %v2050 = vadd.s32 %v2049, 8
      %v2051 = vlaneseq
      %v2052 = vand.u32 %v2051, 127
      %vm2053 = vcmp.eq.s32.totalorder %v2049, %v2052
      %vm2054 = vcmp.eq.s32.totalorder %v2050, %v2052
      %v2055 = vsel %vm2053, 1, 0
      %v2056 = vsel %vm2054, 1, 0
      %v2057 = vcvt.s32.f32 %v2055
      %v2058 = vcvt.s32.f32 %v2056
      loop: start=0, step=1, limit=64
      $region49: #{vss_block_forward.7} parent=47 // loop_pre_header
        _
      $region50: #{vss_block_forward.7} parent=47 // loop_header
        %s2060 = sphi 0, %s2064
        %p2061 = scmp.ge.s32.totalorder %s2060, 64
        %v2065 = vphi 0.0, %v2116
        %v2066 = vphi 0.0, %v2117
      $region51: #{vss_block_forward.7} parent=47 // loop_header_branch
        %2063 = sbr.rel (%p2061) target = $region55
      $region52: #{vss_block_forward.7} parent=47 // loop_body
        %s2067 = scalar_lea.vmem %s288, %s2060
        %v2068 = vld [vmem:[%s2067] sm:$0x1]
        %s2069 = scalar_lea.vmem [#allocation2], %s2060
        %v2070 = vld [vmem:[%s2069] sm:$0x1]
        %s2071 = scalar_lea.vmem [#allocation3], %s2060
        %v2072 = vld [vmem:[%s2071] sm:$0x1]
        %s2073 = scalar_lea.vmem [#allocation4], %s2060
        %v2074 = vld [vmem:[%s2073] sm:$0x1]
        %v2075 = vadd.f32 %v2070, %v2046
        %v2076 = vmax.f32 %v2075, 0.0
        %v2077 = vand.u32 2147483647, %v2075
        %v2078 = vsub.f32 0.0, %v2077
        %v2079 = vmul.f32 %v2078, 1.442695
        %v2080 = vpow.pop %v2079
        %v2081 = vadd.f32 %v2080, 1.0
        %v2082 = vlog2.pop %v2081
        %v2083 = vmul.f32 %v2082, 0.6931472
        %v2084 = vadd.f32 %v2076, %v2083
        %v2085 = vlaneseq
        %v2086 = vshrl.u32 %v2085, 7
        %v2087 = vsub.s32 0, %v2086
        %v2088 = vrot.slane %v2084, %v2087
        %v2089 = vmul.f32 %v2044, %v2088
        %v2090 = vmul.f32 %v2045, %v2088
        %v2091 = vmul.f32 %v2089, 1.442695
        %v2092 = vpow.pop %v2091
        %v2093 = vmul.f32 %v2090, 1.442695
        %v2094 = vpow.pop %v2093
        %v2095 = vlaneseq
        %v2096 = vshrl.u32 %v2095, 7
        %v2097 = vsub.s32 0, %v2096
        %v2098 = vrot.slane %v2072, %v2097
        %v2099 = vmul.f32 %v2057, %v2098
        %v2100 = vmul.f32 %v2058, %v2098
        %v2101 = vsel %vm2003, %v2099, 0.0
        %2102 = vadd.xlane.f32.xlu0 %v2101
        %v2103 = vpop.xlane.xlu0 %2102
        %v2104 = vsel %vm2003, %v2100, 0.0
        %2105 = vadd.xlane.f32.xlu0 %v2104
        %v2106 = vpop.xlane.xlu0 %2105
        %v2107 = vmul.f32 %v2092, %v2065
        %v2108 = vmul.f32 %v2094, %v2066
        %v2109 = vmul.f32 %v2084, %v2068
        %v2110 = vlaneseq
        %v2111 = vshrl.u32 %v2110, 7
        %v2112 = vsub.s32 0, %v2111
        %v2113 = vrot.slane %v2109, %v2112
        %v2114 = vmul.f32 %v2103, %v2113
        %v2115 = vmul.f32 %v2106, %v2113
        %v2116 = vadd.f32 %v2107, %v2114
        %v2117 = vadd.f32 %v2108, %v2115
        %v2118 = vmul.f32 %v2047, %v2068
        %v2120 = vsel %vm2003, %v2074, 0
        %2122 = vmatprep.subr.mxu0 0.0
        %v2123 = vand.u32 %v2116, 4294901760
        %2124 = vmatpush1.msra.mxu0 %v2123
        %2125 = vmatprep.subr.mxu0 0.0
        %v2126 = vand.u32 %v2117, 4294901760
        %2127 = vmatpush1.msra.mxu0 %v2126
        %2128 = vmatprep.subr.mxu0 0.0
        %2129 = vmatpush1.msra.mxu0 0.0
        %2130 = vmatprep.subr.mxu0 0.0
        %2131 = vmatpush1.msra.mxu0 0.0
        %2132 = vmatprep.subr.mxu0 0.0
        %2133 = vmatpush1.msra.mxu0 0.0
        %2134 = vmatprep.subr.mxu0 0.0
        %2135 = vmatpush1.msra.mxu0 0.0
        %2136 = vmatprep.subr.mxu0 0.0
        %2137 = vmatpush1.msra.mxu0 0.0
        %2138 = vmatprep.subr.mxu0 0.0
        %2139 = vmatpush1.msra.mxu0 0.0
        %2140 = vmatprep.subr.mxu0 0.0
        %2141 = vmatpush1.msra.mxu0 0.0
        %2142 = vmatprep.subr.mxu0 0.0
        %2143 = vmatpush1.msra.mxu0 0.0
        %2144 = vmatprep.subr.mxu0 0.0
        %2145 = vmatpush1.msra.mxu0 0.0
        %2146 = vmatprep.subr.mxu0 0.0
        %2147 = vmatpush1.msra.mxu0 0.0
        %2148 = vmatprep.subr.mxu0 0.0
        %2149 = vmatpush1.msra.mxu0 0.0
        %2150 = vmatprep.subr.mxu0 0.0
        %2151 = vmatpush1.msra.mxu0 0.0
        %2152 = vmatprep.subr.mxu0 0.0
        %2153 = vmatpush1.msra.mxu0 0.0
        %2154 = vmatprep.subr.mxu0 0.0
        %2155 = vmatpush1.msra.mxu0 0.0
        %2156 = vmatprep.subr.mxu0 0.0
        %2157 = vmatpush1.msra.mxu0 0.0
        %2158 = vmatprep.subr.mxu0 0.0
        %2159 = vmatpush1.msra.mxu0 0.0
        %2160 = vmatprep.subr.mxu0 0.0
        %2161 = vmatpush1.msra.mxu0 0.0
        %2162 = vmatprep.subr.mxu0 0.0
        %2163 = vmatpush1.msra.mxu0 0.0
        %2164 = vmatprep.subr.mxu0 0.0
        %2165 = vmatpush1.msra.mxu0 0.0
        %2166 = vmatprep.subr.mxu0 0.0
        %2167 = vmatpush1.msra.mxu0 0.0
        %2168 = vmatprep.subr.mxu0 0.0
        %2169 = vmatpush1.msra.mxu0 0.0
        %2170 = vmatprep.subr.mxu0 0.0
        %2171 = vmatpush1.msra.mxu0 0.0
        %2172 = vmatprep.subr.mxu0 0.0
        %2173 = vmatpush1.msra.mxu0 0.0
        %2174 = vmatprep.subr.mxu0 0.0
        %2175 = vmatpush1.msra.mxu0 0.0
        %2176 = vmatprep.subr.mxu0 0.0
        %2177 = vmatpush1.msra.mxu0 0.0
        %2178 = vmatprep.subr.mxu0 0.0
        %2179 = vmatpush1.msra.mxu0 0.0
        %2180 = vmatprep.subr.mxu0 0.0
        %2181 = vmatpush1.msra.mxu0 0.0
        %2182 = vmatprep.subr.mxu0 0.0
        %2183 = vmatpush1.msra.mxu0 0.0
        %2184 = vmatprep.subr.mxu0 0.0
        %2185 = vmatpush1.msra.mxu0 0.0
        %2186 = vmatprep.subr.mxu0 0.0
        %2187 = vmatpush1.msra.mxu0 0.0
        %2188 = vmatprep.mubr.f32.mxu0 0.0
        %v2189 = vand.u32 %v2120, 4294901760
        %v2190 = vsub.f32 %v2120, %v2189
        %v2191 = vand.u32 %v2190, 4294901760
        %v2192 = vsub.f32 %v2190, %v2191
        %v2193 = vand.u32 %v2192, 4294901760
        %2194 = vmatmul.mubr.f32.gmra.mrb[0].mxu0 %v2193
        %v2195 = vpop.f32.mrb[0].mxu0
        %v2196 = vadd.f32 %v2118, %v2195
        %v2197 = vpop.f32.mrb[0].mxu0
        %2198 = vdwg.mxu0
        %2199 = vmatprep.subr.mxu0 0.0
        %v2200 = vand.u32 %v2116, 4294901760
        %v2201 = vsub.f32 %v2116, %v2200
        %v2202 = vand.u32 %v2201, 4294901760
        %v2203 = vsub.f32 %v2201, %v2202
        %v2204 = vand.u32 %v2203, 4294901760
        %2205 = vmatpush1.msra.mxu0 %v2204
        %2206 = vmatprep.subr.mxu0 0.0
        %v2207 = vand.u32 %v2117, 4294901760
        %v2208 = vsub.f32 %v2117, %v2207
        %v2209 = vand.u32 %v2208, 4294901760
        %v2210 = vsub.f32 %v2208, %v2209
        %v2211 = vand.u32 %v2210, 4294901760
        %2212 = vmatpush1.msra.mxu0 %v2211
        %2213 = vmatprep.subr.mxu0 0.0
        %2214 = vmatpush1.msra.mxu0 0.0
        %2215 = vmatprep.subr.mxu0 0.0
        %2216 = vmatpush1.msra.mxu0 0.0
        %2217 = vmatprep.subr.mxu0 0.0
        %2218 = vmatpush1.msra.mxu0 0.0
        %2219 = vmatprep.subr.mxu0 0.0
        %2220 = vmatpush1.msra.mxu0 0.0
        %2221 = vmatprep.subr.mxu0 0.0
        %2222 = vmatpush1.msra.mxu0 0.0
        %2223 = vmatprep.subr.mxu0 0.0
        %2224 = vmatpush1.msra.mxu0 0.0
        %2225 = vmatprep.subr.mxu0 0.0
        %2226 = vmatpush1.msra.mxu0 0.0
        %2227 = vmatprep.subr.mxu0 0.0
        %2228 = vmatpush1.msra.mxu0 0.0
        %2229 = vmatprep.subr.mxu0 0.0
        %2230 = vmatpush1.msra.mxu0 0.0
        %2231 = vmatprep.subr.mxu0 0.0
        %2232 = vmatpush1.msra.mxu0 0.0
        %2233 = vmatprep.subr.mxu0 0.0
        %2234 = vmatpush1.msra.mxu0 0.0
        %2235 = vmatprep.subr.mxu0 0.0
        %2236 = vmatpush1.msra.mxu0 0.0
        %2237 = vmatprep.subr.mxu0 0.0
        %2238 = vmatpush1.msra.mxu0 0.0
        %2239 = vmatprep.subr.mxu0 0.0
        %2240 = vmatpush1.msra.mxu0 0.0
        %2241 = vmatprep.subr.mxu0 0.0
        %2242 = vmatpush1.msra.mxu0 0.0
        %2243 = vmatprep.subr.mxu0 0.0
        %2244 = vmatpush1.msra.mxu0 0.0
        %2245 = vmatprep.subr.mxu0 0.0
        %2246 = vmatpush1.msra.mxu0 0.0
        %2247 = vmatprep.subr.mxu0 0.0
        %2248 = vmatpush1.msra.mxu0 0.0
        %2249 = vmatprep.subr.mxu0 0.0
        %2250 = vmatpush1.msra.mxu0 0.0
        %2251 = vmatprep.subr.mxu0 0.0
        %2252 = vmatpush1.msra.mxu0 0.0
        %2253 = vmatprep.subr.mxu0 0.0
        %2254 = vmatpush1.msra.mxu0 0.0
        %2255 = vmatprep.subr.mxu0 0.0
        %2256 = vmatpush1.msra.mxu0 0.0
        %2257 = vmatprep.subr.mxu0 0.0
        %2258 = vmatpush1.msra.mxu0 0.0
        %2259 = vmatprep.subr.mxu0 0.0
        %2260 = vmatpush1.msra.mxu0 0.0
        %2261 = vmatprep.subr.mxu0 0.0
        %2262 = vmatpush1.msra.mxu0 0.0
        %2263 = vmatprep.subr.mxu0 0.0
        %2264 = vmatpush1.msra.mxu0 0.0
        %2265 = vmatprep.subr.mxu0 0.0
        %2266 = vmatpush1.msra.mxu0 0.0
        %2267 = vmatprep.subr.mxu0 0.0
        %2268 = vmatpush1.msra.mxu0 0.0
        %2269 = vmatprep.subr.mxu0 0.0
        %2270 = vmatpush1.msra.mxu0 0.0
        %2271 = vmatprep.subr.mxu0 0.0
        %2272 = vmatpush1.msra.mxu0 0.0
        %2273 = vmatprep.mubr.f32.mxu0 0.0
        %v2274 = vand.u32 %v2120, 4294901760
        %2275 = vmatmul.mubr.f32.gmra.mrb[0].mxu0 %v2274
        %v2276 = vpop.f32.mrb[0].mxu0
        %v2277 = vadd.f32 %v2196, %v2276
        %v2278 = vpop.f32.mrb[0].mxu0
        %2279 = vdwg.mxu0
        %2280 = vmatprep.subr.mxu0 0.0
        %v2281 = vand.u32 %v2116, 4294901760
        %v2282 = vsub.f32 %v2116, %v2281
        %2283 = vmatpush1.msra.mxu0 %v2282
        %2284 = vmatprep.subr.mxu0 0.0
        %v2285 = vand.u32 %v2117, 4294901760
        %v2286 = vsub.f32 %v2117, %v2285
        %2287 = vmatpush1.msra.mxu0 %v2286
        %2288 = vmatprep.subr.mxu0 0.0
        %2289 = vmatpush1.msra.mxu0 0.0
        %2290 = vmatprep.subr.mxu0 0.0
        %2291 = vmatpush1.msra.mxu0 0.0
        %2292 = vmatprep.subr.mxu0 0.0
        %2293 = vmatpush1.msra.mxu0 0.0
        %2294 = vmatprep.subr.mxu0 0.0
        %2295 = vmatpush1.msra.mxu0 0.0
        %2296 = vmatprep.subr.mxu0 0.0
        %2297 = vmatpush1.msra.mxu0 0.0
        %2298 = vmatprep.subr.mxu0 0.0
        %2299 = vmatpush1.msra.mxu0 0.0
        %2300 = vmatprep.subr.mxu0 0.0
        %2301 = vmatpush1.msra.mxu0 0.0
        %2302 = vmatprep.subr.mxu0 0.0
        %2303 = vmatpush1.msra.mxu0 0.0
        %2304 = vmatprep.subr.mxu0 0.0
        %2305 = vmatpush1.msra.mxu0 0.0
        %2306 = vmatprep.subr.mxu0 0.0
        %2307 = vmatpush1.msra.mxu0 0.0
        %2308 = vmatprep.subr.mxu0 0.0
        %2309 = vmatpush1.msra.mxu0 0.0
        %2310 = vmatprep.subr.mxu0 0.0
        %2311 = vmatpush1.msra.mxu0 0.0
        %2312 = vmatprep.subr.mxu0 0.0
        %2313 = vmatpush1.msra.mxu0 0.0
        %2314 = vmatprep.subr.mxu0 0.0
        %2315 = vmatpush1.msra.mxu0 0.0
        %2316 = vmatprep.subr.mxu0 0.0
        %2317 = vmatpush1.msra.mxu0 0.0
        %2318 = vmatprep.subr.mxu0 0.0
        %2319 = vmatpush1.msra.mxu0 0.0
        %2320 = vmatprep.subr.mxu0 0.0
        %2321 = vmatpush1.msra.mxu0 0.0
        %2322 = vmatprep.subr.mxu0 0.0
        %2323 = vmatpush1.msra.mxu0 0.0
        %2324 = vmatprep.subr.mxu0 0.0
        %2325 = vmatpush1.msra.mxu0 0.0
        %2326 = vmatprep.subr.mxu0 0.0
        %2327 = vmatpush1.msra.mxu0 0.0
        %2328 = vmatprep.subr.mxu0 0.0
        %2329 = vmatpush1.msra.mxu0 0.0
        %2330 = vmatprep.subr.mxu0 0.0
        %2331 = vmatpush1.msra.mxu0 0.0
        %2332 = vmatprep.subr.mxu0 0.0
        %2333 = vmatpush1.msra.mxu0 0.0
        %2334 = vmatprep.subr.mxu0 0.0
        %2335 = vmatpush1.msra.mxu0 0.0
        %2336 = vmatprep.subr.mxu0 0.0
        %2337 = vmatpush1.msra.mxu0 0.0
        %2338 = vmatprep.subr.mxu0 0.0
        %2339 = vmatpush1.msra.mxu0 0.0
        %2340 = vmatprep.subr.mxu0 0.0
        %2341 = vmatpush1.msra.mxu0 0.0
        %2342 = vmatprep.subr.mxu0 0.0
        %2343 = vmatpush1.msra.mxu0 0.0
        %2344 = vmatprep.subr.mxu0 0.0
        %2345 = vmatpush1.msra.mxu0 0.0
        %2346 = vmatprep.subr.mxu0 0.0
        %2347 = vmatpush1.msra.mxu0 0.0
        %2348 = vmatprep.mubr.f32.mxu0 0.0
        %v2349 = vand.u32 %v2120, 4294901760
        %v2350 = vsub.f32 %v2120, %v2349
        %2351 = vmatmul.mubr.f32.gmra.mrb[0].mxu0 %v2350
        %v2352 = vpop.f32.mrb[0].mxu0
        %v2353 = vadd.f32 %v2277, %v2352
        %v2354 = vpop.f32.mrb[0].mxu0
        %2355 = vdwg.mxu0
        %2356 = vmatprep.subr.mxu0 0.0
        %v2357 = vand.u32 %v2116, 4294901760
        %2358 = vmatpush1.msra.mxu0 %v2357
        %2359 = vmatprep.subr.mxu0 0.0
        %v2360 = vand.u32 %v2117, 4294901760
        %2361 = vmatpush1.msra.mxu0 %v2360
        %2362 = vmatprep.subr.mxu0 0.0
        %2363 = vmatpush1.msra.mxu0 0.0
        %2364 = vmatprep.subr.mxu0 0.0
        %2365 = vmatpush1.msra.mxu0 0.0
        %2366 = vmatprep.subr.mxu0 0.0
        %2367 = vmatpush1.msra.mxu0 0.0
        %2368 = vmatprep.subr.mxu0 0.0
        %2369 = vmatpush1.msra.mxu0 0.0
        %2370 = vmatprep.subr.mxu0 0.0
        %2371 = vmatpush1.msra.mxu0 0.0
        %2372 = vmatprep.subr.mxu0 0.0
        %2373 = vmatpush1.msra.mxu0 0.0
        %2374 = vmatprep.subr.mxu0 0.0
        %2375 = vmatpush1.msra.mxu0 0.0
        %2376 = vmatprep.subr.mxu0 0.0
        %2377 = vmatpush1.msra.mxu0 0.0
        %2378 = vmatprep.subr.mxu0 0.0
        %2379 = vmatpush1.msra.mxu0 0.0
        %2380 = vmatprep.subr.mxu0 0.0
        %2381 = vmatpush1.msra.mxu0 0.0
        %2382 = vmatprep.subr.mxu0 0.0
        %2383 = vmatpush1.msra.mxu0 0.0
        %2384 = vmatprep.subr.mxu0 0.0
        %2385 = vmatpush1.msra.mxu0 0.0
        %2386 = vmatprep.subr.mxu0 0.0
        %2387 = vmatpush1.msra.mxu0 0.0
        %2388 = vmatprep.subr.mxu0 0.0
        %2389 = vmatpush1.msra.mxu0 0.0
        %2390 = vmatprep.subr.mxu0 0.0
        %2391 = vmatpush1.msra.mxu0 0.0
        %2392 = vmatprep.subr.mxu0 0.0
        %2393 = vmatpush1.msra.mxu0 0.0
        %2394 = vmatprep.subr.mxu0 0.0
        %2395 = vmatpush1.msra.mxu0 0.0
        %2396 = vmatprep.subr.mxu0 0.0
        %2397 = vmatpush1.msra.mxu0 0.0
        %2398 = vmatprep.subr.mxu0 0.0
        %2399 = vmatpush1.msra.mxu0 0.0
        %2400 = vmatprep.subr.mxu0 0.0
        %2401 = vmatpush1.msra.mxu0 0.0
        %2402 = vmatprep.subr.mxu0 0.0
        %2403 = vmatpush1.msra.mxu0 0.0
        %2404 = vmatprep.subr.mxu0 0.0
        %2405 = vmatpush1.msra.mxu0 0.0
        %2406 = vmatprep.subr.mxu0 0.0
        %2407 = vmatpush1.msra.mxu0 0.0
        %2408 = vmatprep.subr.mxu0 0.0
        %2409 = vmatpush1.msra.mxu0 0.0
        %2410 = vmatprep.subr.mxu0 0.0
        %2411 = vmatpush1.msra.mxu0 0.0
        %2412 = vmatprep.subr.mxu0 0.0
        %2413 = vmatpush1.msra.mxu0 0.0
        %2414 = vmatprep.subr.mxu0 0.0
        %2415 = vmatpush1.msra.mxu0 0.0
        %2416 = vmatprep.subr.mxu0 0.0
        %2417 = vmatpush1.msra.mxu0 0.0
        %2418 = vmatprep.subr.mxu0 0.0
        %2419 = vmatpush1.msra.mxu0 0.0
        %2420 = vmatprep.subr.mxu0 0.0
        %2421 = vmatpush1.msra.mxu0 0.0
        %2422 = vmatprep.mubr.f32.mxu0 0.0
        %v2423 = vand.u32 %v2120, 4294901760
        %v2424 = vsub.f32 %v2120, %v2423
        %v2425 = vand.u32 %v2424, 4294901760
        %2426 = vmatmul.mubr.f32.gmra.mrb[0].mxu0 %v2425
        %v2427 = vpop.f32.mrb[0].mxu0
        %v2428 = vadd.f32 %v2353, %v2427
        %v2429 = vpop.f32.mrb[0].mxu0
        %2430 = vdwg.mxu0
        %2431 = vmatprep.subr.mxu0 0.0
        %v2432 = vand.u32 %v2116, 4294901760
        %v2433 = vsub.f32 %v2116, %v2432
        %v2434 = vand.u32 %v2433, 4294901760
        %2435 = vmatpush1.msra.mxu0 %v2434
        %2436 = vmatprep.subr.mxu0 0.0
        %v2437 = vand.u32 %v2117, 4294901760
        %v2438 = vsub.f32 %v2117, %v2437
        %v2439 = vand.u32 %v2438, 4294901760
        %2440 = vmatpush1.msra.mxu0 %v2439
        %2441 = vmatprep.subr.mxu0 0.0
        %2442 = vmatpush1.msra.mxu0 0.0
        %2443 = vmatprep.subr.mxu0 0.0
        %2444 = vmatpush1.msra.mxu0 0.0
        %2445 = vmatprep.subr.mxu0 0.0
        %2446 = vmatpush1.msra.mxu0 0.0
        %2447 = vmatprep.subr.mxu0 0.0
        %2448 = vmatpush1.msra.mxu0 0.0
        %2449 = vmatprep.subr.mxu0 0.0
        %2450 = vmatpush1.msra.mxu0 0.0
        %2451 = vmatprep.subr.mxu0 0.0
        %2452 = vmatpush1.msra.mxu0 0.0
        %2453 = vmatprep.subr.mxu0 0.0
        %2454 = vmatpush1.msra.mxu0 0.0
        %2455 = vmatprep.subr.mxu0 0.0
        %2456 = vmatpush1.msra.mxu0 0.0
        %2457 = vmatprep.subr.mxu0 0.0
        %2458 = vmatpush1.msra.mxu0 0.0
        %2459 = vmatprep.subr.mxu0 0.0
        %2460 = vmatpush1.msra.mxu0 0.0
        %2461 = vmatprep.subr.mxu0 0.0
        %2462 = vmatpush1.msra.mxu0 0.0
        %2463 = vmatprep.subr.mxu0 0.0
        %2464 = vmatpush1.msra.mxu0 0.0
        %2465 = vmatprep.subr.mxu0 0.0
        %2466 = vmatpush1.msra.mxu0 0.0
        %2467 = vmatprep.subr.mxu0 0.0
        %2468 = vmatpush1.msra.mxu0 0.0
        %2469 = vmatprep.subr.mxu0 0.0
        %2470 = vmatpush1.msra.mxu0 0.0
        %2471 = vmatprep.subr.mxu0 0.0
        %2472 = vmatpush1.msra.mxu0 0.0
        %2473 = vmatprep.subr.mxu0 0.0
        %2474 = vmatpush1.msra.mxu0 0.0
        %2475 = vmatprep.subr.mxu0 0.0
        %2476 = vmatpush1.msra.mxu0 0.0
        %2477 = vmatprep.subr.mxu0 0.0
        %2478 = vmatpush1.msra.mxu0 0.0
        %2479 = vmatprep.subr.mxu0 0.0
        %2480 = vmatpush1.msra.mxu0 0.0
        %2481 = vmatprep.subr.mxu0 0.0
        %2482 = vmatpush1.msra.mxu0 0.0
        %2483 = vmatprep.subr.mxu0 0.0
        %2484 = vmatpush1.msra.mxu0 0.0
        %2485 = vmatprep.subr.mxu0 0.0
        %2486 = vmatpush1.msra.mxu0 0.0
        %2487 = vmatprep.subr.mxu0 0.0
        %2488 = vmatpush1.msra.mxu0 0.0
        %2489 = vmatprep.subr.mxu0 0.0
        %2490 = vmatpush1.msra.mxu0 0.0
        %2491 = vmatprep.subr.mxu0 0.0
        %2492 = vmatpush1.msra.mxu0 0.0
        %2493 = vmatprep.subr.mxu0 0.0
        %2494 = vmatpush1.msra.mxu0 0.0
        %2495 = vmatprep.subr.mxu0 0.0
        %2496 = vmatpush1.msra.mxu0 0.0
        %2497 = vmatprep.subr.mxu0 0.0
        %2498 = vmatpush1.msra.mxu0 0.0
        %2499 = vmatprep.subr.mxu0 0.0
        %2500 = vmatpush1.msra.mxu0 0.0
        %2501 = vmatprep.mubr.f32.mxu0 0.0
        %v2502 = vand.u32 %v2120, 4294901760
        %2503 = vmatmul.mubr.f32.gmra.mrb[0].mxu0 %v2502
        %v2504 = vpop.f32.mrb[0].mxu0
        %v2505 = vadd.f32 %v2428, %v2504
        %v2506 = vpop.f32.mrb[0].mxu0
        %2507 = vdwg.mxu0
        %2508 = vmatprep.subr.mxu0 0.0
        %v2509 = vand.u32 %v2116, 4294901760
        %2510 = vmatpush1.msra.mxu0 %v2509
        %2511 = vmatprep.subr.mxu0 0.0
        %v2512 = vand.u32 %v2117, 4294901760
        %2513 = vmatpush1.msra.mxu0 %v2512
        %2514 = vmatprep.subr.mxu0 0.0
        %2515 = vmatpush1.msra.mxu0 0.0
        %2516 = vmatprep.subr.mxu0 0.0
        %2517 = vmatpush1.msra.mxu0 0.0
        %2518 = vmatprep.subr.mxu0 0.0
        %2519 = vmatpush1.msra.mxu0 0.0
        %2520 = vmatprep.subr.mxu0 0.0
        %2521 = vmatpush1.msra.mxu0 0.0
        %2522 = vmatprep.subr.mxu0 0.0
        %2523 = vmatpush1.msra.mxu0 0.0
        %2524 = vmatprep.subr.mxu0 0.0
        %2525 = vmatpush1.msra.mxu0 0.0
        %2526 = vmatprep.subr.mxu0 0.0
        %2527 = vmatpush1.msra.mxu0 0.0
        %2528 = vmatprep.subr.mxu0 0.0
        %2529 = vmatpush1.msra.mxu0 0.0
        %2530 = vmatprep.subr.mxu0 0.0
        %2531 = vmatpush1.msra.mxu0 0.0
        %2532 = vmatprep.subr.mxu0 0.0
        %2533 = vmatpush1.msra.mxu0 0.0
        %2534 = vmatprep.subr.mxu0 0.0
        %2535 = vmatpush1.msra.mxu0 0.0
        %2536 = vmatprep.subr.mxu0 0.0
        %2537 = vmatpush1.msra.mxu0 0.0
        %2538 = vmatprep.subr.mxu0 0.0
        %2539 = vmatpush1.msra.mxu0 0.0
        %2540 = vmatprep.subr.mxu0 0.0
        %2541 = vmatpush1.msra.mxu0 0.0
        %2542 = vmatprep.subr.mxu0 0.0
        %2543 = vmatpush1.msra.mxu0 0.0
        %2544 = vmatprep.subr.mxu0 0.0
        %2545 = vmatpush1.msra.mxu0 0.0
        %2546 = vmatprep.subr.mxu0 0.0
        %2547 = vmatpush1.msra.mxu0 0.0
        %2548 = vmatprep.subr.mxu0 0.0
        %2549 = vmatpush1.msra.mxu0 0.0
        %2550 = vmatprep.subr.mxu0 0.0
        %2551 = vmatpush1.msra.mxu0 0.0
        %2552 = vmatprep.subr.mxu0 0.0
        %2553 = vmatpush1.msra.mxu0 0.0
        %2554 = vmatprep.subr.mxu0 0.0
        %2555 = vmatpush1.msra.mxu0 0.0
        %2556 = vmatprep.subr.mxu0 0.0
        %2557 = vmatpush1.msra.mxu0 0.0
        %2558 = vmatprep.subr.mxu0 0.0
        %2559 = vmatpush1.msra.mxu0 0.0
        %2560 = vmatprep.subr.mxu0 0.0
        %2561 = vmatpush1.msra.mxu0 0.0
        %2562 = vmatprep.subr.mxu0 0.0
        %2563 = vmatpush1.msra.mxu0 0.0
        %2564 = vmatprep.subr.mxu0 0.0
        %2565 = vmatpush1.msra.mxu0 0.0
        %2566 = vmatprep.subr.mxu0 0.0
        %2567 = vmatpush1.msra.mxu0 0.0
        %2568 = vmatprep.subr.mxu0 0.0
        %2569 = vmatpush1.msra.mxu0 0.0
        %2570 = vmatprep.subr.mxu0 0.0
        %2571 = vmatpush1.msra.mxu0 0.0
        %2572 = vmatprep.subr.mxu0 0.0
        %2573 = vmatpush1.msra.mxu0 0.0
        %2574 = vmatprep.mubr.f32.mxu0 0.0
        %v2575 = vand.u32 %v2120, 4294901760
        %2576 = vmatmul.mubr.f32.gmra.mrb[0].mxu0 %v2575
        %v2577 = vpop.f32.mrb[0].mxu0
        %v2578 = vadd.f32 %v2505, %v2577
        %v2579 = vpop.f32.mrb[0].mxu0
        %2580 = vdwg.mxu0
        %s2581 = scalar_lea.vmem %s298, %s2060
        %vm2582 = vcmask 516096
        %2583 = vst.msk [vmem:[%s2581] sm:$0x1] %vm2582, %v2578
      $region53: #{vss_block_forward.7} parent=47 // loop_footer
        %s2064 = sadd.s32 1, %s2060
      $region54: #{vss_block_forward.7} parent=47 // loop_footer_branch
        %2059 = sbr.rel target = $region50
      $region55: #{vss_block_forward.7} parent=47 // loop_exit
        _
      %p2584 = scmp.lt.s32.totalorder %s18, 1
      %s2585 = scalar_select %p2584, %s18, 1
      %s2586 = smul.addr %s2585, 8
      %s2587 = smul.addr %s2586, 8
      %s2588 = scalar_lea.vmem %s7, %s2587
      // Predicated region
      $region56: #{vss_block_forward.7} parent=47 // pred_check
        %p2589 = pneg %p193
      $region57: #{vss_block_forward.7} parent=47 // pred_check_branch
        %2591 = sbr.rel (%p2589) target = $region59
      $region58: #{vss_block_forward.7} parent=47 // pred_region
        _
      $region59: #{vss_block_forward.7} parent=47 // pred_fallthru
        _
    $region48: #{vss_block_forward.7} parent=5 // pred_fallthru
      _
    %p2592 = scmp.le.s32.totalorder 2, %s13
    // Predicated region
    $region60: #{vss_block_forward.7} parent=5 // pred_check
      %p2593 = pneg %p2592
    $region61: #{vss_block_forward.7} parent=5 // pred_check_branch
      %2595 = sbr.rel (%p2593) target = $region63
    $region62: #{vss_block_forward.7} parent=5 // pred_region
      %s2596 = ssub.s32 %s13, 2
      // Predicated region
      $region64: #{vss_block_forward.7} parent=62 // pred_check
        %p2597 = pneg %p199
      $region65: #{vss_block_forward.7} parent=62 // pred_check_branch
        %2599 = sbr.rel (%p2597) target = $region67
      $region66: #{vss_block_forward.7} parent=62 // pred_region
        %p2600 = scmp.lt.s32.totalorder %s19, 1
        %s2601 = scalar_select %p2600, %s19, 1
        %s2602 = smul.addr %s2601, 8
        %s2603 = smul.addr %s2602, 8
        %s2604 = scalar_lea.vmem %s7, %s2603
      $region67: #{vss_block_forward.7} parent=62 // pred_fallthru
        _
    $region63: #{vss_block_forward.7} parent=5 // pred_fallthru
      _
  $region6: #{vss_block_forward.7} parent=0 // loop_footer
    %s17 = sadd.s32 1, %s13
  $region7: #{vss_block_forward.7} parent=0 // loop_footer_branch
    %12 = sbr.rel target = $region3
  $region8: #{vss_block_forward.7} parent=0 // loop_exit
    _

// kernel: vss_block_forward.8
$region0: #{vss_block_forward.8}
  #allocation0 [shape = 'u32[]', space=smem, size = 0x4, offset = 0x4, fixed_abs, tag = 'smem constant byte address 0x4 - core index']
  #allocation1 [shape = 'u32[144,128]{1,0:T(1,128)}', space=vmem, size = 0x12000, scoped, tag = 'internal scratch']
  %s0 = inlined_call_operand.vmem [shape: f32[128,64], index: 0, kind: input, shape index: {}]
  %s1 = inlined_call_operand.vmem [shape: f32[128,64], index: 1, kind: input, shape index: {}]
  %s2 = inlined_call_operand.vmem [shape: f32[128,32], index: 2, kind: input, shape index: {}]
  %s3 = inlined_call_operand.vmem [shape: f32[1,64], index: 3, kind: input, shape index: {}]
  %s4 = inlined_call_operand.vmem [shape: f32[1,64], index: 4, kind: input, shape index: {}]
  %s5 = inlined_call_operand.vmem [shape: f32[64,32], index: 5, kind: input, shape index: {}]
  %s6 = inlined_call_operand.vmem [shape: f32[128,32], index: 6, kind: output, shape index: {}]
  %s7 = sld [smem:[#allocation0]]
  $region34: #{vss_block_forward.8} parent=0
    _
  %s9 = ssub.s32 1, %s7
  %s10 = scalar_select 0, %s9, %s7
  // Predicated region
  $region2: #{vss_block_forward.8} parent=0 // pred_check
    _
  $region3: #{vss_block_forward.8} parent=0 // pred_check_branch
    %12 = sbr.rel (0) target = $region5
  $region4: #{vss_block_forward.8} parent=0 // pred_region
    _
  $region5: #{vss_block_forward.8} parent=0 // pred_fallthru
    _
  // Predicated region
  $region6: #{vss_block_forward.8} parent=0 // pred_check
    _
  $region7: #{vss_block_forward.8} parent=0 // pred_check_branch
    %14 = sbr.rel (0) target = $region9
  $region8: #{vss_block_forward.8} parent=0 // pred_region
    _
  $region9: #{vss_block_forward.8} parent=0 // pred_fallthru
    _
  // Predicated region
  $region10: #{vss_block_forward.8} parent=0 // pred_check
    _
  $region11: #{vss_block_forward.8} parent=0 // pred_check_branch
    %16 = sbr.rel (0) target = $region13
  $region12: #{vss_block_forward.8} parent=0 // pred_region
    _
  $region13: #{vss_block_forward.8} parent=0 // pred_fallthru
    _
  // Predicated region
  $region14: #{vss_block_forward.8} parent=0 // pred_check
    _
  $region15: #{vss_block_forward.8} parent=0 // pred_check_branch
    %18 = sbr.rel (0) target = $region17
  $region16: #{vss_block_forward.8} parent=0 // pred_region
    _
  $region17: #{vss_block_forward.8} parent=0 // pred_fallthru
    _
  // Predicated region
  $region18: #{vss_block_forward.8} parent=0 // pred_check
    _
  $region19: #{vss_block_forward.8} parent=0 // pred_check_branch
    %20 = sbr.rel (0) target = $region21
  $region20: #{vss_block_forward.8} parent=0 // pred_region
    _
  $region21: #{vss_block_forward.8} parent=0 // pred_fallthru
    _
  // Predicated region
  $region22: #{vss_block_forward.8} parent=0 // pred_check
    _
  $region23: #{vss_block_forward.8} parent=0 // pred_check_branch
    %22 = sbr.rel (0) target = $region25
  $region24: #{vss_block_forward.8} parent=0 // pred_region
    _
  $region25: #{vss_block_forward.8} parent=0 // pred_fallthru
    _
  %v23 = vld [vmem:[%s0] sm:$0xff]
  %v24 = vld [vmem:[%s0 + $0x8] sm:$0xff]
  %v25 = vld [vmem:[%s0 + $0x10] sm:$0xff]
  %v26 = vld [vmem:[%s0 + $0x18] sm:$0xff]
  %v27 = vld [vmem:[%s0 + $0x20] sm:$0xff]
  %v28 = vld [vmem:[%s0 + $0x28] sm:$0xff]
  %v29 = vld [vmem:[%s0 + $0x30] sm:$0xff]
  %v30 = vld [vmem:[%s0 + $0x38] sm:$0xff]
  %v31 = vld [vmem:[%s0 + $0x40] sm:$0xff]
  %v32 = vld [vmem:[%s0 + $0x48] sm:$0xff]
  %v33 = vld [vmem:[%s0 + $0x50] sm:$0xff]
  %v34 = vld [vmem:[%s0 + $0x58] sm:$0xff]
  %v35 = vld [vmem:[%s0 + $0x60] sm:$0xff]
  %v36 = vld [vmem:[%s0 + $0x68] sm:$0xff]
  %v37 = vld [vmem:[%s0 + $0x70] sm:$0xff]
  %v38 = vld [vmem:[%s0 + $0x78] sm:$0xff]
  %vm39 = vcmask 523264
  %v40 = vsel %vm39, %v23, 0.0
  %41 = vadd.xlane.f32.xlu0 %v40
  %v42 = vpop.xlane.xlu0 %41
  %v43 = vsel %vm39, %v24, 0.0
  %44 = vadd.xlane.f32.xlu0 %v43
  %v45 = vpop.xlane.xlu0 %44
  %v46 = vsel %vm39, %v25, 0.0
  %47 = vadd.xlane.f32.xlu0 %v46
  %v48 = vpop.xlane.xlu0 %47
  %v49 = vsel %vm39, %v26, 0.0
  %50 = vadd.xlane.f32.xlu0 %v49
  %v51 = vpop.xlane.xlu0 %50
  %v52 = vsel %vm39, %v27, 0.0
  %53 = vadd.xlane.f32.xlu0 %v52
  %v54 = vpop.xlane.xlu0 %53
  %v55 = vsel %vm39, %v28, 0.0
  %56 = vadd.xlane.f32.xlu0 %v55
  %v57 = vpop.xlane.xlu0 %56
  %v58 = vsel %vm39, %v29, 0.0
  %59 = vadd.xlane.f32.xlu0 %v58
  %v60 = vpop.xlane.xlu0 %59
  %v61 = vsel %vm39, %v30, 0.0
  %62 = vadd.xlane.f32.xlu0 %v61
  %v63 = vpop.xlane.xlu0 %62
  %v64 = vsel %vm39, %v31, 0.0
  %65 = vadd.xlane.f32.xlu0 %v64
  %v66 = vpop.xlane.xlu0 %65
  %v67 = vsel %vm39, %v32, 0.0
  %68 = vadd.xlane.f32.xlu0 %v67
  %v69 = vpop.xlane.xlu0 %68
  %v70 = vsel %vm39, %v33, 0.0
  %71 = vadd.xlane.f32.xlu0 %v70
  %v72 = vpop.xlane.xlu0 %71
  %v73 = vsel %vm39, %v34, 0.0
  %74 = vadd.xlane.f32.xlu0 %v73
  %v75 = vpop.xlane.xlu0 %74
  %v76 = vsel %vm39, %v35, 0.0
  %77 = vadd.xlane.f32.xlu0 %v76
  %v78 = vpop.xlane.xlu0 %77
  %v79 = vsel %vm39, %v36, 0.0
  %80 = vadd.xlane.f32.xlu0 %v79
  %v81 = vpop.xlane.xlu0 %80
  %v82 = vsel %vm39, %v37, 0.0
  %83 = vadd.xlane.f32.xlu0 %v82
  %v84 = vpop.xlane.xlu0 %83
  %v85 = vsel %vm39, %v38, 0.0
  %86 = vadd.xlane.f32.xlu0 %v85
  %v87 = vpop.xlane.xlu0 %86
  %v88 = vrcp.pop 64.0
  %v89 = vmul.f32 %v42, %v88
  %v90 = vmul.f32 %v45, %v88
  %v91 = vmul.f32 %v48, %v88
  %v92 = vmul.f32 %v51, %v88
  %v93 = vmul.f32 %v54, %v88
  %v94 = vmul.f32 %v57, %v88
  %v95 = vmul.f32 %v60, %v88
  %v96 = vmul.f32 %v63, %v88
  %v97 = vmul.f32 %v66, %v88
  %v98 = vmul.f32 %v69, %v88
  %v99 = vmul.f32 %v72, %v88
  %v100 = vmul.f32 %v75, %v88
  %v101 = vmul.f32 %v78, %v88
  %v102 = vmul.f32 %v81, %v88
  %v103 = vmul.f32 %v84, %v88
  %v104 = vmul.f32 %v87, %v88
  %v105 = vmul.f32 %v23, %v23
  %v106 = vmul.f32 %v24, %v24
  %v107 = vmul.f32 %v25, %v25
  %v108 = vmul.f32 %v26, %v26
  %v109 = vmul.f32 %v27, %v27
  %v110 = vmul.f32 %v28, %v28
  %v111 = vmul.f32 %v29, %v29
  %v112 = vmul.f32 %v30, %v30
  %v113 = vmul.f32 %v31, %v31
  %v114 = vmul.f32 %v32, %v32
  %v115 = vmul.f32 %v33, %v33
  %v116 = vmul.f32 %v34, %v34
  %v117 = vmul.f32 %v35, %v35
  %v118 = vmul.f32 %v36, %v36
  %v119 = vmul.f32 %v37, %v37
  %v120 = vmul.f32 %v38, %v38
  %v121 = vsel %vm39, %v105, 0.0
  %122 = vadd.xlane.f32.xlu0 %v121
  %v123 = vpop.xlane.xlu0 %122
  %v124 = vsel %vm39, %v106, 0.0
  %125 = vadd.xlane.f32.xlu0 %v124
  %v126 = vpop.xlane.xlu0 %125
  %v127 = vsel %vm39, %v107, 0.0
  %128 = vadd.xlane.f32.xlu0 %v127
  %v129 = vpop.xlane.xlu0 %128
  %v130 = vsel %vm39, %v108, 0.0
  %131 = vadd.xlane.f32.xlu0 %v130
  %v132 = vpop.xlane.xlu0 %131
  %v133 = vsel %vm39, %v109, 0.0
  %134 = vadd.xlane.f32.xlu0 %v133
  %v135 = vpop.xlane.xlu0 %134
  %v136 = vsel %vm39, %v110, 0.0
  %137 = vadd.xlane.f32.xlu0 %v136
  %v138 = vpop.xlane.xlu0 %137
  %v139 = vsel %vm39, %v111, 0.0
  %140 = vadd.xlane.f32.xlu0 %v139
  %v141 = vpop.xlane.xlu0 %140
  %v142 = vsel %vm39, %v112, 0.0
  %143 = vadd.xlane.f32.xlu0 %v142
  %v144 = vpop.xlane.xlu0 %143
  %v145 = vsel %vm39, %v113, 0.0
  %146 = vadd.xlane.f32.xlu0 %v145
  %v147 = vpop.xlane.xlu0 %146
  %v148 = vsel %vm39, %v114, 0.0
  %149 = vadd.xlane.f32.xlu0 %v148
  %v150 = vpop.xlane.xlu0 %149
  %v151 = vsel %vm39, %v115, 0.0
  %152 = vadd.xlane.f32.xlu0 %v151
  %v153 = vpop.xlane.xlu0 %152
  %v154 = vsel %vm39, %v116, 0.0
  %155 = vadd.xlane.f32.xlu0 %v154
  %v156 = vpop.xlane.xlu0 %155
  %v157 = vsel %vm39, %v117, 0.0
  %158 = vadd.xlane.f32.xlu0 %v157
  %v159 = vpop.xlane.xlu0 %158
  %v160 = vsel %vm39, %v118, 0.0
  %161 = vadd.xlane.f32.xlu0 %v160
  %v162 = vpop.xlane.xlu0 %161
  %v163 = vsel %vm39, %v119, 0.0
  %164 = vadd.xlane.f32.xlu0 %v163
  %v165 = vpop.xlane.xlu0 %164
  %v166 = vsel %vm39, %v120, 0.0
  %167 = vadd.xlane.f32.xlu0 %v166
  %v168 = vpop.xlane.xlu0 %167
  %v169 = vmul.f32 %v123, %v88
  %v170 = vmul.f32 %v126, %v88
  %v171 = vmul.f32 %v129, %v88
  %v172 = vmul.f32 %v132, %v88
  %v173 = vmul.f32 %v135, %v88
  %v174 = vmul.f32 %v138, %v88
  %v175 = vmul.f32 %v141, %v88
  %v176 = vmul.f32 %v144, %v88
  %v177 = vmul.f32 %v147, %v88
  %v178 = vmul.f32 %v150, %v88
  %v179 = vmul.f32 %v153, %v88
  %v180 = vmul.f32 %v156, %v88
  %v181 = vmul.f32 %v159, %v88
  %v182 = vmul.f32 %v162, %v88
  %v183 = vmul.f32 %v165, %v88
  %v184 = vmul.f32 %v168, %v88
  %v185 = vsub.f32 %v23, %v89
  %v186 = vsub.f32 %v24, %v90
  %v187 = vsub.f32 %v25, %v91
  %v188 = vsub.f32 %v26, %v92
  %v189 = vsub.f32 %v27, %v93
  %v190 = vsub.f32 %v28, %v94
  %v191 = vsub.f32 %v29, %v95
  %v192 = vsub.f32 %v30, %v96
  %v193 = vsub.f32 %v31, %v97
  %v194 = vsub.f32 %v32, %v98
  %v195 = vsub.f32 %v33, %v99
  %v196 = vsub.f32 %v34, %v100
  %v197 = vsub.f32 %v35, %v101
  %v198 = vsub.f32 %v36, %v102
  %v199 = vsub.f32 %v37, %v103
  %v200 = vsub.f32 %v38, %v104
  %v201 = vmul.f32 %v89, %v89
  %v202 = vmul.f32 %v90, %v90
  %v203 = vmul.f32 %v91, %v91
  %v204 = vmul.f32 %v92, %v92
  %v205 = vmul.f32 %v93, %v93
  %v206 = vmul.f32 %v94, %v94
  %v207 = vmul.f32 %v95, %v95
  %v208 = vmul.f32 %v96, %v96
  %v209 = vmul.f32 %v97, %v97
  %v210 = vmul.f32 %v98, %v98
  %v211 = vmul.f32 %v99, %v99
  %v212 = vmul.f32 %v100, %v100
  %v213 = vmul.f32 %v101, %v101
  %v214 = vmul.f32 %v102, %v102
  %v215 = vmul.f32 %v103, %v103
  %v216 = vmul.f32 %v104, %v104
  %v217 = vsub.f32 %v169, %v201
  %v218 = vsub.f32 %v170, %v202
  %v219 = vsub.f32 %v171, %v203
  %v220 = vsub.f32 %v172, %v204
  %v221 = vsub.f32 %v173, %v205
  %v222 = vsub.f32 %v174, %v206
  %v223 = vsub.f32 %v175, %v207
  %v224 = vsub.f32 %v176, %v208
  %v225 = vsub.f32 %v177, %v209
  %v226 = vsub.f32 %v178, %v210
  %v227 = vsub.f32 %v179, %v211
  %v228 = vsub.f32 %v180, %v212
  %v229 = vsub.f32 %v181, %v213
  %v230 = vsub.f32 %v182, %v214
  %v231 = vsub.f32 %v183, %v215
  %v232 = vsub.f32 %v184, %v216
  %v233 = vadd.f32 %v217, 1e-05
  %v234 = vadd.f32 %v218, 1e-05
  %v235 = vadd.f32 %v219, 1e-05
  %v236 = vadd.f32 %v220, 1e-05
  %v237 = vadd.f32 %v221, 1e-05
  %v238 = vadd.f32 %v222, 1e-05
  %v239 = vadd.f32 %v223, 1e-05
  %v240 = vadd.f32 %v224, 1e-05
  %v241 = vadd.f32 %v225, 1e-05
  %v242 = vadd.f32 %v226, 1e-05
  %v243 = vadd.f32 %v227, 1e-05
  %v244 = vadd.f32 %v228, 1e-05
  %v245 = vadd.f32 %v229, 1e-05
  %v246 = vadd.f32 %v230, 1e-05
  %v247 = vadd.f32 %v231, 1e-05
  %v248 = vadd.f32 %v232, 1e-05
  %v249 = vrsqrt.pop %v233
  %v250 = vrsqrt.pop %v234
  %v251 = vrsqrt.pop %v235
  %v252 = vrsqrt.pop %v236
  %v253 = vrsqrt.pop %v237
  %v254 = vrsqrt.pop %v238
  %v255 = vrsqrt.pop %v239
  %v256 = vrsqrt.pop %v240
  %v257 = vrsqrt.pop %v241
  %v258 = vrsqrt.pop %v242
  %v259 = vrsqrt.pop %v243
  %v260 = vrsqrt.pop %v244
  %v261 = vrsqrt.pop %v245
  %v262 = vrsqrt.pop %v246
  %v263 = vrsqrt.pop %v247
  %v264 = vrsqrt.pop %v248
  %v265 = vmul.f32 %v185, %v249
  %v266 = vmul.f32 %v186, %v250
  %v267 = vmul.f32 %v187, %v251
  %v268 = vmul.f32 %v188, %v252
  %v269 = vmul.f32 %v189, %v253
  %v270 = vmul.f32 %v190, %v254
  %v271 = vmul.f32 %v191, %v255
  %v272 = vmul.f32 %v192, %v256
  %v273 = vmul.f32 %v193, %v257
  %v274 = vmul.f32 %v194, %v258
  %v275 = vmul.f32 %v195, %v259
  %v276 = vmul.f32 %v196, %v260
  %v277 = vmul.f32 %v197, %v261
  %v278 = vmul.f32 %v198, %v262
  %v279 = vmul.f32 %v199, %v263
  %v280 = vmul.f32 %v200, %v264
  %v281 = vld [vmem:[%s3] sm:$0x1]
  %v283 = vlaneseq
  %v284 = vshrl.u32 %v283, 7
  %v285 = vsub.s32 0, %v284
  %v286 = vrot.slane %v281, %v285
  %v288 = vmul.f32 %v265, %v286
  %v289 = vmul.f32 %v266, %v286
  %v290 = vmul.f32 %v267, %v286
  %v291 = vmul.f32 %v268, %v286
  %v292 = vmul.f32 %v269, %v286
  %v293 = vmul.f32 %v270, %v286
  %v294 = vmul.f32 %v271, %v286
  %v295 = vmul.f32 %v272, %v286
  %v296 = vmul.f32 %v273, %v286
  %v297 = vmul.f32 %v274, %v286
  %v298 = vmul.f32 %v275, %v286
  %v299 = vmul.f32 %v276, %v286
  %v300 = vmul.f32 %v277, %v286
  %v301 = vmul.f32 %v278, %v286
  %v302 = vmul.f32 %v279, %v286
  %v303 = vmul.f32 %v280, %v286
  %v304 = vld [vmem:[%s4] sm:$0x1]
  %v306 = vlaneseq
  %v307 = vshrl.u32 %v306, 7
  %v308 = vsub.s32 0, %v307
  %v309 = vrot.slane %v304, %v308
  %v311 = vadd.f32 %v288, %v309
  %v312 = vadd.f32 %v289, %v309
  %v313 = vadd.f32 %v290, %v309
  %v314 = vadd.f32 %v291, %v309
  %v315 = vadd.f32 %v292, %v309
  %v316 = vadd.f32 %v293, %v309
  %v317 = vadd.f32 %v294, %v309
  %v318 = vadd.f32 %v295, %v309
  %v319 = vadd.f32 %v296, %v309
  %v320 = vadd.f32 %v297, %v309
  %v321 = vadd.f32 %v298, %v309
  %v322 = vadd.f32 %v299, %v309
  %v323 = vadd.f32 %v300, %v309
  %v324 = vadd.f32 %v301, %v309
  %v325 = vadd.f32 %v302, %v309
  %v326 = vadd.f32 %v303, %v309
  %v327 = vld [vmem:[%s1] sm:$0xff]
  %v328 = vld [vmem:[%s1 + $0x8] sm:$0xff]
  %v329 = vld [vmem:[%s1 + $0x10] sm:$0xff]
  %v330 = vld [vmem:[%s1 + $0x18] sm:$0xff]
  %v331 = vld [vmem:[%s1 + $0x20] sm:$0xff]
  %v332 = vld [vmem:[%s1 + $0x28] sm:$0xff]
  %v333 = vld [vmem:[%s1 + $0x30] sm:$0xff]
  %v334 = vld [vmem:[%s1 + $0x38] sm:$0xff]
  %v335 = vld [vmem:[%s1 + $0x40] sm:$0xff]
  %v336 = vld [vmem:[%s1 + $0x48] sm:$0xff]
  %v337 = vld [vmem:[%s1 + $0x50] sm:$0xff]
  %v338 = vld [vmem:[%s1 + $0x58] sm:$0xff]
  %v339 = vld [vmem:[%s1 + $0x60] sm:$0xff]
  %v340 = vld [vmem:[%s1 + $0x68] sm:$0xff]
  %v341 = vld [vmem:[%s1 + $0x70] sm:$0xff]
  %v342 = vld [vmem:[%s1 + $0x78] sm:$0xff]
  %v343 = vsub.f32 0.0, %v327
  %v344 = vsub.f32 0.0, %v328
  %v345 = vsub.f32 0.0, %v329
  %v346 = vsub.f32 0.0, %v330
  %v347 = vsub.f32 0.0, %v331
  %v348 = vsub.f32 0.0, %v332
  %v349 = vsub.f32 0.0, %v333
  %v350 = vsub.f32 0.0, %v334
  %v351 = vsub.f32 0.0, %v335
  %v352 = vsub.f32 0.0, %v336
  %v353 = vsub.f32 0.0, %v337
  %v354 = vsub.f32 0.0, %v338
  %v355 = vsub.f32 0.0, %v339
  %v356 = vsub.f32 0.0, %v340
  %v357 = vsub.f32 0.0, %v341
  %v358 = vsub.f32 0.0, %v342
  %v359 = vmul.f32 %v343, 1.442695
  %v360 = vpow.pop %v359
  %v361 = vmul.f32 %v344, 1.442695
  %v362 = vpow.pop %v361
  %v363 = vmul.f32 %v345, 1.442695
  %v364 = vpow.pop %v363
  %v365 = vmul.f32 %v346, 1.442695
  %v366 = vpow.pop %v365
  %v367 = vmul.f32 %v347, 1.442695
  %v368 = vpow.pop %v367
  %v369 = vmul.f32 %v348, 1.442695
  %v370 = vpow.pop %v369
  %v371 = vmul.f32 %v349, 1.442695
  %v372 = vpow.pop %v371
  %v373 = vmul.f32 %v350, 1.442695
  %v374 = vpow.pop %v373
  %v375 = vmul.f32 %v351, 1.442695
  %v376 = vpow.pop %v375
  %v377 = vmul.f32 %v352, 1.442695
  %v378 = vpow.pop %v377
  %v379 = vmul.f32 %v353, 1.442695
  %v380 = vpow.pop %v379
  %v381 = vmul.f32 %v354, 1.442695
  %v382 = vpow.pop %v381
  %v383 = vmul.f32 %v355, 1.442695
  %v384 = vpow.pop %v383
  %v385 = vmul.f32 %v356, 1.442695
  %v386 = vpow.pop %v385
  %v387 = vmul.f32 %v357, 1.442695
  %v388 = vpow.pop %v387
  %v389 = vmul.f32 %v358, 1.442695
  %v390 = vpow.pop %v389
  %v391 = vadd.f32 %v360, 1.0
  %v392 = vadd.f32 %v362, 1.0
  %v393 = vadd.f32 %v364, 1.0
  %v394 = vadd.f32 %v366, 1.0
  %v395 = vadd.f32 %v368, 1.0
  %v396 = vadd.f32 %v370, 1.0
  %v397 = vadd.f32 %v372, 1.0
  %v398 = vadd.f32 %v374, 1.0
  %v399 = vadd.f32 %v376, 1.0
  %v400 = vadd.f32 %v378, 1.0
  %v401 = vadd.f32 %v380, 1.0
  %v402 = vadd.f32 %v382, 1.0
  %v403 = vadd.f32 %v384, 1.0
  %v404 = vadd.f32 %v386, 1.0
  %v405 = vadd.f32 %v388, 1.0
  %v406 = vadd.f32 %v390, 1.0
  %v407 = vrcp.pop %v391
  %v408 = vmul.f32 1.0, %v407
  %v409 = vrcp.pop %v392
  %v410 = vmul.f32 1.0, %v409
  %v411 = vrcp.pop %v393
  %v412 = vmul.f32 1.0, %v411
  %v413 = vrcp.pop %v394
  %v414 = vmul.f32 1.0, %v413
  %v415 = vrcp.pop %v395
  %v416 = vmul.f32 1.0, %v415
  %v417 = vrcp.pop %v396
  %v418 = vmul.f32 1.0, %v417
  %v419 = vrcp.pop %v397
  %v420 = vmul.f32 1.0, %v419
  %v421 = vrcp.pop %v398
  %v422 = vmul.f32 1.0, %v421
  %v423 = vrcp.pop %v399
  %v424 = vmul.f32 1.0, %v423
  %v425 = vrcp.pop %v400
  %v426 = vmul.f32 1.0, %v425
  %v427 = vrcp.pop %v401
  %v428 = vmul.f32 1.0, %v427
  %v429 = vrcp.pop %v402
  %v430 = vmul.f32 1.0, %v429
  %v431 = vrcp.pop %v403
  %v432 = vmul.f32 1.0, %v431
  %v433 = vrcp.pop %v404
  %v434 = vmul.f32 1.0, %v433
  %v435 = vrcp.pop %v405
  %v436 = vmul.f32 1.0, %v435
  %v437 = vrcp.pop %v406
  %v438 = vmul.f32 1.0, %v437
  %v439 = vmul.f32 %v327, %v408
  %v440 = vmul.f32 %v328, %v410
  %v441 = vmul.f32 %v329, %v412
  %v442 = vmul.f32 %v330, %v414
  %v443 = vmul.f32 %v331, %v416
  %v444 = vmul.f32 %v332, %v418
  %v445 = vmul.f32 %v333, %v420
  %v446 = vmul.f32 %v334, %v422
  %v447 = vmul.f32 %v335, %v424
  %v448 = vmul.f32 %v336, %v426
  %v449 = vmul.f32 %v337, %v428
  %v450 = vmul.f32 %v338, %v430
  %v451 = vmul.f32 %v339, %v432
  %v452 = vmul.f32 %v340, %v434
  %v453 = vmul.f32 %v341, %v436
  %v454 = vmul.f32 %v342, %v438
  %v455 = vmul.f32 %v311, %v439
  %v456 = vmul.f32 %v312, %v440
  %v457 = vmul.f32 %v313, %v441
  %v458 = vmul.f32 %v314, %v442
  %v459 = vmul.f32 %v315, %v443
  %v460 = vmul.f32 %v316, %v444
  %v461 = vmul.f32 %v317, %v445
  %v462 = vmul.f32 %v318, %v446
  %v463 = vmul.f32 %v319, %v447
  %v464 = vmul.f32 %v320, %v448
  %v465 = vmul.f32 %v321, %v449
  %v466 = vmul.f32 %v322, %v450
  %v467 = vmul.f32 %v323, %v451
  %v468 = vmul.f32 %v324, %v452
  %v469 = vmul.f32 %v325, %v453
  %v470 = vmul.f32 %v326, %v454
  %v471 = vld [vmem:[%s5] sm:$0xff]
  %v472 = vld [vmem:[%s5 + $0x8] sm:$0xff]
  %v473 = vld [vmem:[%s5 + $0x10] sm:$0xff]
  %v474 = vld [vmem:[%s5 + $0x18] sm:$0xff]
  %v475 = vld [vmem:[%s5 + $0x20] sm:$0xff]
  %v476 = vld [vmem:[%s5 + $0x28] sm:$0xff]
  %v477 = vld [vmem:[%s5 + $0x30] sm:$0xff]
  %v478 = vld [vmem:[%s5 + $0x38] sm:$0xff]
  %v480 = vsel %vm39, %v455, 0
  %v483 = vsel %vm39, %v456, 0
  %v486 = vsel %vm39, %v457, 0
  %v489 = vsel %vm39, %v458, 0
  %v492 = vsel %vm39, %v459, 0
  %v495 = vsel %vm39, %v460, 0
  %v498 = vsel %vm39, %v461, 0
  %v501 = vsel %vm39, %v462, 0
  %v504 = vsel %vm39, %v463, 0
  %v507 = vsel %vm39, %v464, 0
  %v510 = vsel %vm39, %v465, 0
  %v513 = vsel %vm39, %v466, 0
  %v516 = vsel %vm39, %v467, 0
  %v519 = vsel %vm39, %v468, 0
  %v522 = vsel %vm39, %v469, 0
  %v525 = vsel %vm39, %v470, 0
  %527 = vmatprep.subr.mxu0 0.0
  %v528 = vand.u32 %v471, 4294901760
  %529 = vmatpush1.msra.mxu0 %v528
  %530 = vmatprep.subr.mxu0 0.0
  %v531 = vand.u32 %v472, 4294901760
  %532 = vmatpush1.msra.mxu0 %v531
  %533 = vmatprep.subr.mxu0 0.0
  %v534 = vand.u32 %v473, 4294901760
  %535 = vmatpush1.msra.mxu0 %v534
  %536 = vmatprep.subr.mxu0 0.0
  %v537 = vand.u32 %v474, 4294901760
  %538 = vmatpush1.msra.mxu0 %v537
  %539 = vmatprep.subr.mxu0 0.0
  %v540 = vand.u32 %v475, 4294901760
  %541 = vmatpush1.msra.mxu0 %v540
  %542 = vmatprep.subr.mxu0 0.0
  %v543 = vand.u32 %v476, 4294901760
  %544 = vmatpush1.msra.mxu0 %v543
  %545 = vmatprep.subr.mxu0 0.0
  %v546 = vand.u32 %v477, 4294901760
  %547 = vmatpush1.msra.mxu0 %v546
  %548 = vmatprep.subr.mxu0 0.0
  %v549 = vand.u32 %v478, 4294901760
  %550 = vmatpush1.msra.mxu0 %v549
  %551 = vmatprep.subr.mxu0 0.0
  %552 = vmatpush1.msra.mxu0 0.0
  %553 = vmatprep.subr.mxu0 0.0
  %554 = vmatpush1.msra.mxu0 0.0
  %555 = vmatprep.subr.mxu0 0.0
  %556 = vmatpush1.msra.mxu0 0.0
  %557 = vmatprep.subr.mxu0 0.0
  %558 = vmatpush1.msra.mxu0 0.0
  %559 = vmatprep.subr.mxu0 0.0
  %560 = vmatpush1.msra.mxu0 0.0
  %561 = vmatprep.subr.mxu0 0.0
  %562 = vmatpush1.msra.mxu0 0.0
  %563 = vmatprep.subr.mxu0 0.0
  %564 = vmatpush1.msra.mxu0 0.0
  %565 = vmatprep.subr.mxu0 0.0
  %566 = vmatpush1.msra.mxu0 0.0
  %567 = vmatprep.subr.mxu0 0.0
  %568 = vmatpush1.msra.mxu0 0.0
  %569 = vmatprep.subr.mxu0 0.0
  %570 = vmatpush1.msra.mxu0 0.0
  %571 = vmatprep.subr.mxu0 0.0
  %572 = vmatpush1.msra.mxu0 0.0
  %573 = vmatprep.subr.mxu0 0.0
  %574 = vmatpush1.msra.mxu0 0.0
  %575 = vmatprep.subr.mxu0 0.0
  %576 = vmatpush1.msra.mxu0 0.0
  %577 = vmatprep.subr.mxu0 0.0
  %578 = vmatpush1.msra.mxu0 0.0
  %579 = vmatprep.subr.mxu0 0.0
  %580 = vmatpush1.msra.mxu0 0.0
  %581 = vmatprep.subr.mxu0 0.0
  %582 = vmatpush1.msra.mxu0 0.0
  %583 = vmatprep.subr.mxu0 0.0
  %584 = vmatpush1.msra.mxu0 0.0
  %585 = vmatprep.subr.mxu0 0.0
  %586 = vmatpush1.msra.mxu0 0.0
  %587 = vmatprep.subr.mxu0 0.0
  %588 = vmatpush1.msra.mxu0 0.0
  %589 = vmatprep.subr.mxu0 0.0
  %590 = vmatpush1.msra.mxu0 0.0
  %591 = vmatprep.subr.mxu0 0.0
  %592 = vmatpush1.msra.mxu0 0.0
  %593 = vmatprep.subr.mxu0 0.0
  %594 = vmatpush1.msra.mxu0 0.0
  %595 = vmatprep.subr.mxu0 0.0
  %596 = vmatpush1.msra.mxu0 0.0
  %597 = vmatprep.subr.mxu0 0.0
  %598 = vmatpush1.msra.mxu0 0.0
  %599 = vmatprep.mubr.f32.mxu0 0.0
  %v600 = vand.u32 %v480, 4294901760
  %v601 = vsub.f32 %v480, %v600
  %v602 = vand.u32 %v601, 4294901760
  %v603 = vsub.f32 %v601, %v602
  %v604 = vand.u32 %v603, 4294901760
  %605 = vmatmul.mubr.f32.gmra.mrb[0].mxu0 %v604
  %v606 = vpop.f32.mrb[0].mxu0
  %v607 = vadd.f32 0.0, %v606
  %v608 = vpop.f32.mrb[0].mxu0
  %609 = vmatprep.mubr.f32.mxu0 0.0
  %v610 = vand.u32 %v483, 4294901760
  %v611 = vsub.f32 %v483, %v610
  %v612 = vand.u32 %v611, 4294901760
  %v613 = vsub.f32 %v611, %v612
  %v614 = vand.u32 %v613, 4294901760
  %615 = vmatmul.mubr.f32.gmra.mrb[0].mxu0 %v614
  %v616 = vpop.f32.mrb[0].mxu0
  %v617 = vadd.f32 0.0, %v616
  %v618 = vpop.f32.mrb[0].mxu0
  %619 = vmatprep.mubr.f32.mxu0 0.0
  %v620 = vand.u32 %v486, 4294901760
  %v621 = vsub.f32 %v486, %v620
  %v622 = vand.u32 %v621, 4294901760
  %v623 = vsub.f32 %v621, %v622
  %v624 = vand.u32 %v623, 4294901760
  %625 = vmatmul.mubr.f32.gmra.mrb[0].mxu0 %v624
  %v626 = vpop.f32.mrb[0].mxu0
  %v627 = vadd.f32 0.0, %v626
  %v628 = vpop.f32.mrb[0].mxu0
  %629 = vmatprep.mubr.f32.mxu0 0.0
  %v630 = vand.u32 %v489, 4294901760
  %v631 = vsub.f32 %v489, %v630
  %v632 = vand.u32 %v631, 4294901760
  %v633 = vsub.f32 %v631, %v632
  %v634 = vand.u32 %v633, 4294901760
  %635 = vmatmul.mubr.f32.gmra.mrb[0].mxu0 %v634
  %v636 = vpop.f32.mrb[0].mxu0
  %v637 = vadd.f32 0.0, %v636
  %v638 = vpop.f32.mrb[0].mxu0
  %639 = vmatprep.mubr.f32.mxu0 0.0
  %v640 = vand.u32 %v492, 4294901760
  %v641 = vsub.f32 %v492, %v640
  %v642 = vand.u32 %v641, 4294901760
  %v643 = vsub.f32 %v641, %v642
  %v644 = vand.u32 %v643, 4294901760
  %645 = vmatmul.mubr.f32.gmra.mrb[0].mxu0 %v644
  %v646 = vpop.f32.mrb[0].mxu0
  %v647 = vadd.f32 0.0, %v646
  %v648 = vpop.f32.mrb[0].mxu0
  %649 = vmatprep.mubr.f32.mxu0 0.0
  %v650 = vand.u32 %v495, 4294901760
  %v651 = vsub.f32 %v495, %v650
  %v652 = vand.u32 %v651, 4294901760
  %v653 = vsub.f32 %v651, %v652
  %v654 = vand.u32 %v653, 4294901760
  %655 = vmatmul.mubr.f32.gmra.mrb[0].mxu0 %v654
  %v656 = vpop.f32.mrb[0].mxu0
  %v657 = vadd.f32 0.0, %v656
  %v658 = vpop.f32.mrb[0].mxu0
  %659 = vmatprep.mubr.f32.mxu0 0.0
  %v660 = vand.u32 %v498, 4294901760
  %v661 = vsub.f32 %v498, %v660
  %v662 = vand.u32 %v661, 4294901760
  %v663 = vsub.f32 %v661, %v662
  %v664 = vand.u32 %v663, 4294901760
  %665 = vmatmul.mubr.f32.gmra.mrb[0].mxu0 %v664
  %v666 = vpop.f32.mrb[0].mxu0
  %v667 = vadd.f32 0.0, %v666
  %v668 = vpop.f32.mrb[0].mxu0
  %669 = vmatprep.mubr.f32.mxu0 0.0
  %v670 = vand.u32 %v501, 4294901760
  %v671 = vsub.f32 %v501, %v670
  %v672 = vand.u32 %v671, 4294901760
  %v673 = vsub.f32 %v671, %v672
  %v674 = vand.u32 %v673, 4294901760
  %675 = vmatmul.mubr.f32.gmra.mrb[0].mxu0 %v674
  %v676 = vpop.f32.mrb[0].mxu0
  %v677 = vadd.f32 0.0, %v676
  %v678 = vpop.f32.mrb[0].mxu0
  %679 = vmatprep.mubr.f32.mxu0 0.0
  %v680 = vand.u32 %v504, 4294901760
  %v681 = vsub.f32 %v504, %v680
  %v682 = vand.u32 %v681, 4294901760
  %v683 = vsub.f32 %v681, %v682
  %v684 = vand.u32 %v683, 4294901760
  %685 = vmatmul.mubr.f32.gmra.mrb[0].mxu0 %v684
  %v686 = vpop.f32.mrb[0].mxu0
  %v687 = vadd.f32 0.0, %v686
  %v688 = vpop.f32.mrb[0].mxu0
  %689 = vmatprep.mubr.f32.mxu0 0.0
  %v690 = vand.u32 %v507, 4294901760
  %v691 = vsub.f32 %v507, %v690
  %v692 = vand.u32 %v691, 4294901760
  %v693 = vsub.f32 %v691, %v692
  %v694 = vand.u32 %v693, 4294901760
  %695 = vmatmul.mubr.f32.gmra.mrb[0].mxu0 %v694
  %v696 = vpop.f32.mrb[0].mxu0
  %v697 = vadd.f32 0.0, %v696
  %v698 = vpop.f32.mrb[0].mxu0
  %699 = vmatprep.mubr.f32.mxu0 0.0
  %v700 = vand.u32 %v510, 4294901760
  %v701 = vsub.f32 %v510, %v700
  %v702 = vand.u32 %v701, 4294901760
  %v703 = vsub.f32 %v701, %v702
  %v704 = vand.u32 %v703, 4294901760
  %705 = vmatmul.mubr.f32.gmra.mrb[0].mxu0 %v704
  %v706 = vpop.f32.mrb[0].mxu0
  %v707 = vadd.f32 0.0, %v706
  %v708 = vpop.f32.mrb[0].mxu0
  %709 = vmatprep.mubr.f32.mxu0 0.0
  %v710 = vand.u32 %v513, 4294901760
  %v711 = vsub.f32 %v513, %v710
  %v712 = vand.u32 %v711, 4294901760
  %v713 = vsub.f32 %v711, %v712
  %v714 = vand.u32 %v713, 4294901760
  %715 = vmatmul.mubr.f32.gmra.mrb[0].mxu0 %v714
  %v716 = vpop.f32.mrb[0].mxu0
  %v717 = vadd.f32 0.0, %v716
  %v718 = vpop.f32.mrb[0].mxu0
  %719 = vmatprep.mubr.f32.mxu0 0.0
  %v720 = vand.u32 %v516, 4294901760
  %v721 = vsub.f32 %v516, %v720
  %v722 = vand.u32 %v721, 4294901760
  %v723 = vsub.f32 %v721, %v722
  %v724 = vand.u32 %v723, 4294901760
  %725 = vmatmul.mubr.f32.gmra.mrb[0].mxu0 %v724
  %v726 = vpop.f32.mrb[0].mxu0
  %v727 = vadd.f32 0.0, %v726
  %v728 = vpop.f32.mrb[0].mxu0
  %729 = vmatprep.mubr.f32.mxu0 0.0
  %v730 = vand.u32 %v519, 4294901760
  %v731 = vsub.f32 %v519, %v730
  %v732 = vand.u32 %v731, 4294901760
  %v733 = vsub.f32 %v731, %v732
  %v734 = vand.u32 %v733, 4294901760
  %735 = vmatmul.mubr.f32.gmra.mrb[0].mxu0 %v734
  %v736 = vpop.f32.mrb[0].mxu0
  %v737 = vadd.f32 0.0, %v736
  %v738 = vpop.f32.mrb[0].mxu0
  %739 = vmatprep.mubr.f32.mxu0 0.0
  %v740 = vand.u32 %v522, 4294901760
  %v741 = vsub.f32 %v522, %v740
  %v742 = vand.u32 %v741, 4294901760
  %v743 = vsub.f32 %v741, %v742
  %v744 = vand.u32 %v743, 4294901760
  %745 = vmatmul.mubr.f32.gmra.mrb[0].mxu0 %v744
  %v746 = vpop.f32.mrb[0].mxu0
  %v747 = vadd.f32 0.0, %v746
  %v748 = vpop.f32.mrb[0].mxu0
  %749 = vmatprep.mubr.f32.mxu0 0.0
  %v750 = vand.u32 %v525, 4294901760
  %v751 = vsub.f32 %v525, %v750
  %v752 = vand.u32 %v751, 4294901760
  %v753 = vsub.f32 %v751, %v752
  %v754 = vand.u32 %v753, 4294901760
  %755 = vmatmul.mubr.f32.gmra.mrb[0].mxu0 %v754
  %v756 = vpop.f32.mrb[0].mxu0
  %v757 = vadd.f32 0.0, %v756
  %v758 = vpop.f32.mrb[0].mxu0
  %759 = vdwg.mxu0
  %760 = vmatprep.subr.mxu0 0.0
  %v761 = vand.u32 %v471, 4294901760
  %v762 = vsub.f32 %v471, %v761
  %v763 = vand.u32 %v762, 4294901760
  %v764 = vsub.f32 %v762, %v763
  %v765 = vand.u32 %v764, 4294901760
  %766 = vmatpush1.msra.mxu0 %v765
  %767 = vmatprep.subr.mxu0 0.0
  %v768 = vand.u32 %v472, 4294901760
  %v769 = vsub.f32 %v472, %v768
  %v770 = vand.u32 %v769, 4294901760
  %v771 = vsub.f32 %v769, %v770
  %v772 = vand.u32 %v771, 4294901760
  %773 = vmatpush1.msra.mxu0 %v772
  %774 = vmatprep.subr.mxu0 0.0
  %v775 = vand.u32 %v473, 4294901760
  %v776 = vsub.f32 %v473, %v775
  %v777 = vand.u32 %v776, 4294901760
  %v778 = vsub.f32 %v776, %v777
  %v779 = vand.u32 %v778, 4294901760
  %780 = vmatpush1.msra.mxu0 %v779
  %781 = vmatprep.subr.mxu0 0.0
  %v782 = vand.u32 %v474, 4294901760
  %v783 = vsub.f32 %v474, %v782
  %v784 = vand.u32 %v783, 4294901760
  %v785 = vsub.f32 %v783, %v784
  %v786 = vand.u32 %v785, 4294901760
  %787 = vmatpush1.msra.mxu0 %v786
  %788 = vmatprep.subr.mxu0 0.0
  %v789 = vand.u32 %v475, 4294901760
  %v790 = vsub.f32 %v475, %v789
  %v791 = vand.u32 %v790, 4294901760
  %v792 = vsub.f32 %v790, %v791
  %v793 = vand.u32 %v792, 4294901760
  %794 = vmatpush1.msra.mxu0 %v793
  %795 = vmatprep.subr.mxu0 0.0
  %v796 = vand.u32 %v476, 4294901760
  %v797 = vsub.f32 %v476, %v796
  %v798 = vand.u32 %v797, 4294901760
  %v799 = vsub.f32 %v797, %v798
  %v800 = vand.u32 %v799, 4294901760
  %801 = vmatpush1.msra.mxu0 %v800
  %802 = vmatprep.subr.mxu0 0.0
  %v803 = vand.u32 %v477, 4294901760
  %v804 = vsub.f32 %v477, %v803
  %v805 = vand.u32 %v804, 4294901760
  %v806 = vsub.f32 %v804, %v805
  %v807 = vand.u32 %v806, 4294901760
  %808 = vmatpush1.msra.mxu0 %v807
  %809 = vmatprep.subr.mxu0 0.0
  %v810 = vand.u32 %v478, 4294901760
  %v811 = vsub.f32 %v478, %v810
  %v812 = vand.u32 %v811, 4294901760
  %v813 = vsub.f32 %v811, %v812
  %v814 = vand.u32 %v813, 4294901760
  %815 = vmatpush1.msra.mxu0 %v814
  %816 = vmatprep.subr.mxu0 0.0
  %817 = vmatpush1.msra.mxu0 0.0
  %818 = vmatprep.subr.mxu0 0.0
  %819 = vmatpush1.msra.mxu0 0.0
  %820 = vmatprep.subr.mxu0 0.0
  %821 = vmatpush1.msra.mxu0 0.0
  %822 = vmatprep.subr.mxu0 0.0
  %823 = vmatpush1.msra.mxu0 0.0
  %824 = vmatprep.subr.mxu0 0.0
  %825 = vmatpush1.msra.mxu0 0.0
  %826 = vmatprep.subr.mxu0 0.0
  %827 = vmatpush1.msra.mxu0 0.0
  %828 = vmatprep.subr.mxu0 0.0
  %829 = vmatpush1.msra.mxu0 0.0
  %830 = vmatprep.subr.mxu0 0.0
  %831 = vmatpush1.msra.mxu0 0.0
  %832 = vmatprep.subr.mxu0 0.0
  %833 = vmatpush1.msra.mxu0 0.0
  %834 = vmatprep.subr.mxu0 0.0
  %835 = vmatpush1.msra.mxu0 0.0
  %836 = vmatprep.subr.mxu0 0.0
  %837 = vmatpush1.msra.mxu0 0.0
  %838 = vmatprep.subr.mxu0 0.0
  %839 = vmatpush1.msra.mxu0 0.0
  %840 = vmatprep.subr.mxu0 0.0
  %841 = vmatpush1.msra.mxu0 0.0
  %842 = vmatprep.subr.mxu0 0.0
  %843 = vmatpush1.msra.mxu0 0.0
  %844 = vmatprep.subr.mxu0 0.0
  %845 = vmatpush1.msra.mxu0 0.0
  %846 = vmatprep.subr.mxu0 0.0
  %847 = vmatpush1.msra.mxu0 0.0
  %848 = vmatprep.subr.mxu0 0.0
  %849 = vmatpush1.msra.mxu0 0.0
  %850 = vmatprep.subr.mxu0 0.0
  %851 = vmatpush1.msra.mxu0 0.0
  %852 = vmatprep.subr.mxu0 0.0
  %853 = vmatpush1.msra.mxu0 0.0
  %854 = vmatprep.subr.mxu0 0.0
  %855 = vmatpush1.msra.mxu0 0.0
  %856 = vmatprep.subr.mxu0 0.0
  %857 = vmatpush1.msra.mxu0 0.0
  %858 = vmatprep.subr.mxu0 0.0
  %859 = vmatpush1.msra.mxu0 0.0
  %860 = vmatprep.subr.mxu0 0.0
  %861 = vmatpush1.msra.mxu0 0.0
  %862 = vmatprep.subr.mxu0 0.0
  %863 = vmatpush1.msra.mxu0 0.0
  %864 = vmatprep.mubr.f32.mxu0 0.0
  %v865 = vand.u32 %v480, 4294901760
  %866 = vmatmul.mubr.f32.gmra.mrb[0].mxu0 %v865
  %v867 = vpop.f32.mrb[0].mxu0
  %v868 = vadd.f32 %v607, %v867
  %v869 = vpop.f32.mrb[0].mxu0
  %870 = vmatprep.mubr.f32.mxu0 0.0
  %v871 = vand.u32 %v483, 4294901760
  %872 = vmatmul.mubr.f32.gmra.mrb[0].mxu0 %v871
  %v873 = vpop.f32.mrb[0].mxu0
  %v874 = vadd.f32 %v617, %v873
  %v875 = vpop.f32.mrb[0].mxu0
  %876 = vmatprep.mubr.f32.mxu0 0.0
  %v877 = vand.u32 %v486, 4294901760
  %878 = vmatmul.mubr.f32.gmra.mrb[0].mxu0 %v877
  %v879 = vpop.f32.mrb[0].mxu0
  %v880 = vadd.f32 %v627, %v879
  %v881 = vpop.f32.mrb[0].mxu0
  %882 = vmatprep.mubr.f32.mxu0 0.0
  %v883 = vand.u32 %v489, 4294901760
  %884 = vmatmul.mubr.f32.gmra.mrb[0].mxu0 %v883
  %v885 = vpop.f32.mrb[0].mxu0
  %v886 = vadd.f32 %v637, %v885
  %v887 = vpop.f32.mrb[0].mxu0
  %888 = vmatprep.mubr.f32.mxu0 0.0
  %v889 = vand.u32 %v492, 4294901760
  %890 = vmatmul.mubr.f32.gmra.mrb[0].mxu0 %v889
  %v891 = vpop.f32.mrb[0].mxu0
  %v892 = vadd.f32 %v647, %v891
  %v893 = vpop.f32.mrb[0].mxu0
  %894 = vmatprep.mubr.f32.mxu0 0.0
  %v895 = vand.u32 %v495, 4294901760
  %896 = vmatmul.mubr.f32.gmra.mrb[0].mxu0 %v895
  %v897 = vpop.f32.mrb[0].mxu0
  %v898 = vadd.f32 %v657, %v897
  %v899 = vpop.f32.mrb[0].mxu0
  %900 = vmatprep.mubr.f32.mxu0 0.0
  %v901 = vand.u32 %v498, 4294901760
  %902 = vmatmul.mubr.f32.gmra.mrb[0].mxu0 %v901
  %v903 = vpop.f32.mrb[0].mxu0
  %v904 = vadd.f32 %v667, %v903
  %v905 = vpop.f32.mrb[0].mxu0
  %906 = vmatprep.mubr.f32.mxu0 0.0
  %v907 = vand.u32 %v501, 4294901760
  %908 = vmatmul.mubr.f32.gmra.mrb[0].mxu0 %v907
  %v909 = vpop.f32.mrb[0].mxu0
  %v910 = vadd.f32 %v677, %v909
  %v911 = vpop.f32.mrb[0].mxu0
  %912 = vmatprep.mubr.f32.mxu0 0.0
  %v913 = vand.u32 %v504, 4294901760
  %914 = vmatmul.mubr.f32.gmra.mrb[0].mxu0 %v913
  %v915 = vpop.f32.mrb[0].mxu0
  %v916 = vadd.f32 %v687, %v915
  %v917 = vpop.f32.mrb[0].mxu0
  %918 = vmatprep.mubr.f32.mxu0 0.0
  %v919 = vand.u32 %v507, 4294901760
  %920 = vmatmul.mubr.f32.gmra.mrb[0].mxu0 %v919
  %v921 = vpop.f32.mrb[0].mxu0
  %v922 = vadd.f32 %v697, %v921
  %v923 = vpop.f32.mrb[0].mxu0
  %924 = vmatprep.mubr.f32.mxu0 0.0
  %v925 = vand.u32 %v510, 4294901760
  %926 = vmatmul.mubr.f32.gmra.mrb[0].mxu0 %v925
  %v927 = vpop.f32.mrb[0].mxu0
  %v928 = vadd.f32 %v707, %v927
  %v929 = vpop.f32.mrb[0].mxu0
  %930 = vmatprep.mubr.f32.mxu0 0.0
  %v931 = vand.u32 %v513, 4294901760
  %932 = vmatmul.mubr.f32.gmra.mrb[0].mxu0 %v931
  %v933 = vpop.f32.mrb[0].mxu0
  %v934 = vadd.f32 %v717, %v933
  %v935 = vpop.f32.mrb[0].mxu0
  %936 = vmatprep.mubr.f32.mxu0 0.0
  %v937 = vand.u32 %v516, 4294901760
  %938 = vmatmul.mubr.f32.gmra.mrb[0].mxu0 %v937
  %v939 = vpop.f32.mrb[0].mxu0
  %v940 = vadd.f32 %v727, %v939
  %v941 = vpop.f32.mrb[0].mxu0
  %942 = vmatprep.mubr.f32.mxu0 0.0
  %v943 = vand.u32 %v519, 4294901760
  %944 = vmatmul.mubr.f32.gmra.mrb[0].mxu0 %v943
  %v945 = vpop.f32.mrb[0].mxu0
  %v946 = vadd.f32 %v737, %v945
  %v947 = vpop.f32.mrb[0].mxu0
  %948 = vmatprep.mubr.f32.mxu0 0.0
  %v949 = vand.u32 %v522, 4294901760
  %950 = vmatmul.mubr.f32.gmra.mrb[0].mxu0 %v949
  %v951 = vpop.f32.mrb[0].mxu0
  %v952 = vadd.f32 %v747, %v951
  %v953 = vpop.f32.mrb[0].mxu0
  %954 = vmatprep.mubr.f32.mxu0 0.0
  %v955 = vand.u32 %v525, 4294901760
  %956 = vmatmul.mubr.f32.gmra.mrb[0].mxu0 %v955
  %v957 = vpop.f32.mrb[0].mxu0
  %v958 = vadd.f32 %v757, %v957
  %v959 = vpop.f32.mrb[0].mxu0
  %960 = vdwg.mxu0
  %961 = vmatprep.subr.mxu0 0.0
  %v962 = vand.u32 %v471, 4294901760
  %v963 = vsub.f32 %v471, %v962
  %964 = vmatpush1.msra.mxu0 %v963
  %965 = vmatprep.subr.mxu0 0.0
  %v966 = vand.u32 %v472, 4294901760
  %v967 = vsub.f32 %v472, %v966
  %968 = vmatpush1.msra.mxu0 %v967
  %969 = vmatprep.subr.mxu0 0.0
  %v970 = vand.u32 %v473, 4294901760
  %v971 = vsub.f32 %v473, %v970
  %972 = vmatpush1.msra.mxu0 %v971
  %973 = vmatprep.subr.mxu0 0.0
  %v974 = vand.u32 %v474, 4294901760
  %v975 = vsub.f32 %v474, %v974
  %976 = vmatpush1.msra.mxu0 %v975
  %977 = vmatprep.subr.mxu0 0.0
  %v978 = vand.u32 %v475, 4294901760
  %v979 = vsub.f32 %v475, %v978
  %980 = vmatpush1.msra.mxu0 %v979
  %981 = vmatprep.subr.mxu0 0.0
  %v982 = vand.u32 %v476, 4294901760
  %v983 = vsub.f32 %v476, %v982
  %984 = vmatpush1.msra.mxu0 %v983
  %985 = vmatprep.subr.mxu0 0.0
  %v986 = vand.u32 %v477, 4294901760
  %v987 = vsub.f32 %v477, %v986
  %988 = vmatpush1.msra.mxu0 %v987
  %989 = vmatprep.subr.mxu0 0.0
  %v990 = vand.u32 %v478, 4294901760
  %v991 = vsub.f32 %v478, %v990
  %992 = vmatpush1.msra.mxu0 %v991
  %993 = vmatprep.subr.mxu0 0.0
  %994 = vmatpush1.msra.mxu0 0.0
  %995 = vmatprep.subr.mxu0 0.0
  %996 = vmatpush1.msra.mxu0 0.0
  %997 = vmatprep.subr.mxu0 0.0
  %998 = vmatpush1.msra.mxu0 0.0
  %999 = vmatprep.subr.mxu0 0.0
  %1000 = vmatpush1.msra.mxu0 0.0
  %1001 = vmatprep.subr.mxu0 0.0
  %1002 = vmatpush1.msra.mxu0 0.0
  %1003 = vmatprep.subr.mxu0 0.0
  %1004 = vmatpush1.msra.mxu0 0.0
  %1005 = vmatprep.subr.mxu0 0.0
  %1006 = vmatpush1.msra.mxu0 0.0
  %1007 = vmatprep.subr.mxu0 0.0
  %1008 = vmatpush1.msra.mxu0 0.0
  %1009 = vmatprep.subr.mxu0 0.0
  %1010 = vmatpush1.msra.mxu0 0.0
  %1011 = vmatprep.subr.mxu0 0.0
  %1012 = vmatpush1.msra.mxu0 0.0
  %1013 = vmatprep.subr.mxu0 0.0
  %1014 = vmatpush1.msra.mxu0 0.0
  %1015 = vmatprep.subr.mxu0 0.0
  %1016 = vmatpush1.msra.mxu0 0.0
  %1017 = vmatprep.subr.mxu0 0.0
  %1018 = vmatpush1.msra.mxu0 0.0
  %1019 = vmatprep.subr.mxu0 0.0
  %1020 = vmatpush1.msra.mxu0 0.0
  %1021 = vmatprep.subr.mxu0 0.0
  %1022 = vmatpush1.msra.mxu0 0.0
  %1023 = vmatprep.subr.mxu0 0.0
  %1024 = vmatpush1.msra.mxu0 0.0
  %1025 = vmatprep.subr.mxu0 0.0
  %1026 = vmatpush1.msra.mxu0 0.0
  %1027 = vmatprep.subr.mxu0 0.0
  %1028 = vmatpush1.msra.mxu0 0.0
  %1029 = vmatprep.subr.mxu0 0.0
  %1030 = vmatpush1.msra.mxu0 0.0
  %1031 = vmatprep.subr.mxu0 0.0
  %1032 = vmatpush1.msra.mxu0 0.0
  %1033 = vmatprep.subr.mxu0 0.0
  %1034 = vmatpush1.msra.mxu0 0.0
  %1035 = vmatprep.subr.mxu0 0.0
  %1036 = vmatpush1.msra.mxu0 0.0
  %1037 = vmatprep.subr.mxu0 0.0
  %1038 = vmatpush1.msra.mxu0 0.0
  %1039 = vmatprep.subr.mxu0 0.0
  %1040 = vmatpush1.msra.mxu0 0.0
  %1041 = vmatprep.mubr.f32.mxu0 0.0
  %v1042 = vand.u32 %v480, 4294901760
  %v1043 = vsub.f32 %v480, %v1042
  %1044 = vmatmul.mubr.f32.gmra.mrb[0].mxu0 %v1043
  %v1045 = vpop.f32.mrb[0].mxu0
  %v1046 = vadd.f32 %v868, %v1045
  %v1047 = vpop.f32.mrb[0].mxu0
  %1048 = vmatprep.mubr.f32.mxu0 0.0
  %v1049 = vand.u32 %v483, 4294901760
  %v1050 = vsub.f32 %v483, %v1049
  %1051 = vmatmul.mubr.f32.gmra.mrb[0].mxu0 %v1050
  %v1052 = vpop.f32.mrb[0].mxu0
  %v1053 = vadd.f32 %v874, %v1052
  %v1054 = vpop.f32.mrb[0].mxu0
  %1055 = vmatprep.mubr.f32.mxu0 0.0
  %v1056 = vand.u32 %v486, 4294901760
  %v1057 = vsub.f32 %v486, %v1056
  %1058 = vmatmul.mubr.f32.gmra.mrb[0].mxu0 %v1057
  %v1059 = vpop.f32.mrb[0].mxu0
  %v1060 = vadd.f32 %v880, %v1059
  %v1061 = vpop.f32.mrb[0].mxu0
  %1062 = vmatprep.mubr.f32.mxu0 0.0
  %v1063 = vand.u32 %v489, 4294901760
  %v1064 = vsub.f32 %v489, %v1063
  %1065 = vmatmul.mubr.f32.gmra.mrb[0].mxu0 %v1064
  %v1066 = vpop.f32.mrb[0].mxu0
  %v1067 = vadd.f32 %v886, %v1066
  %v1068 = vpop.f32.mrb[0].mxu0
  %1069 = vmatprep.mubr.f32.mxu0 0.0
  %v1070 = vand.u32 %v492, 4294901760
  %v1071 = vsub.f32 %v492, %v1070
  %1072 = vmatmul.mubr.f32.gmra.mrb[0].mxu0 %v1071
  %v1073 = vpop.f32.mrb[0].mxu0
  %v1074 = vadd.f32 %v892, %v1073
  %v1075 = vpop.f32.mrb[0].mxu0
  %1076 = vmatprep.mubr.f32.mxu0 0.0
  %v1077 = vand.u32 %v495, 4294901760
  %v1078 = vsub.f32 %v495, %v1077
  %1079 = vmatmul.mubr.f32.gmra.mrb[0].mxu0 %v1078
  %v1080 = vpop.f32.mrb[0].mxu0
  %v1081 = vadd.f32 %v898, %v1080
  %v1082 = vpop.f32.mrb[0].mxu0
  %1083 = vmatprep.mubr.f32.mxu0 0.0
  %v1084 = vand.u32 %v498, 4294901760
  %v1085 = vsub.f32 %v498, %v1084
  %1086 = vmatmul.mubr.f32.gmra.mrb[0].mxu0 %v1085
  %v1087 = vpop.f32.mrb[0].mxu0
  %v1088 = vadd.f32 %v904, %v1087
  %v1089 = vpop.f32.mrb[0].mxu0
  %1090 = vmatprep.mubr.f32.mxu0 0.0
  %v1091 = vand.u32 %v501, 4294901760
  %v1092 = vsub.f32 %v501, %v1091
  %1093 = vmatmul.mubr.f32.gmra.mrb[0].mxu0 %v1092
  %v1094 = vpop.f32.mrb[0].mxu0
  %v1095 = vadd.f32 %v910, %v1094
  %v1096 = vpop.f32.mrb[0].mxu0
  %1097 = vmatprep.mubr.f32.mxu0 0.0
  %v1098 = vand.u32 %v504, 4294901760
  %v1099 = vsub.f32 %v504, %v1098
  %1100 = vmatmul.mubr.f32.gmra.mrb[0].mxu0 %v1099
  %v1101 = vpop.f32.mrb[0].mxu0
  %v1102 = vadd.f32 %v916, %v1101
  %v1103 = vpop.f32.mrb[0].mxu0
  %1104 = vmatprep.mubr.f32.mxu0 0.0
  %v1105 = vand.u32 %v507, 4294901760
  %v1106 = vsub.f32 %v507, %v1105
  %1107 = vmatmul.mubr.f32.gmra.mrb[0].mxu0 %v1106
  %v1108 = vpop.f32.mrb[0].mxu0
  %v1109 = vadd.f32 %v922, %v1108
  %v1110 = vpop.f32.mrb[0].mxu0
  %1111 = vmatprep.mubr.f32.mxu0 0.0
  %v1112 = vand.u32 %v510, 4294901760
  %v1113 = vsub.f32 %v510, %v1112
  %1114 = vmatmul.mubr.f32.gmra.mrb[0].mxu0 %v1113
  %v1115 = vpop.f32.mrb[0].mxu0
  %v1116 = vadd.f32 %v928, %v1115
  %v1117 = vpop.f32.mrb[0].mxu0
  %1118 = vmatprep.mubr.f32.mxu0 0.0
  %v1119 = vand.u32 %v513, 4294901760
  %v1120 = vsub.f32 %v513, %v1119
  %1121 = vmatmul.mubr.f32.gmra.mrb[0].mxu0 %v1120
  %v1122 = vpop.f32.mrb[0].mxu0
  %v1123 = vadd.f32 %v934, %v1122
  %v1124 = vpop.f32.mrb[0].mxu0
  %1125 = vmatprep.mubr.f32.mxu0 0.0
  %v1126 = vand.u32 %v516, 4294901760
  %v1127 = vsub.f32 %v516, %v1126
  %1128 = vmatmul.mubr.f32.gmra.mrb[0].mxu0 %v1127
  %v1129 = vpop.f32.mrb[0].mxu0
  %v1130 = vadd.f32 %v940, %v1129
  %v1131 = vpop.f32.mrb[0].mxu0
  %1132 = vmatprep.mubr.f32.mxu0 0.0
  %v1133 = vand.u32 %v519, 4294901760
  %v1134 = vsub.f32 %v519, %v1133
  %1135 = vmatmul.mubr.f32.gmra.mrb[0].mxu0 %v1134
  %v1136 = vpop.f32.mrb[0].mxu0
  %v1137 = vadd.f32 %v946, %v1136
  %v1138 = vpop.f32.mrb[0].mxu0
  %1139 = vmatprep.mubr.f32.mxu0 0.0
  %v1140 = vand.u32 %v522, 4294901760
  %v1141 = vsub.f32 %v522, %v1140
  %1142 = vmatmul.mubr.f32.gmra.mrb[0].mxu0 %v1141
  %v1143 = vpop.f32.mrb[0].mxu0
  %v1144 = vadd.f32 %v952, %v1143
  %v1145 = vpop.f32.mrb[0].mxu0
  %1146 = vmatprep.mubr.f32.mxu0 0.0
  %v1147 = vand.u32 %v525, 4294901760
  %v1148 = vsub.f32 %v525, %v1147
  %1149 = vmatmul.mubr.f32.gmra.mrb[0].mxu0 %v1148
  %v1150 = vpop.f32.mrb[0].mxu0
  %v1151 = vadd.f32 %v958, %v1150
  %v1152 = vpop.f32.mrb[0].mxu0
  %1153 = vdwg.mxu0
  %1154 = vmatprep.subr.mxu0 0.0
  %v1155 = vand.u32 %v471, 4294901760
  %1156 = vmatpush1.msra.mxu0 %v1155
  %1157 = vmatprep.subr.mxu0 0.0
  %v1158 = vand.u32 %v472, 4294901760
  %1159 = vmatpush1.msra.mxu0 %v1158
  %1160 = vmatprep.subr.mxu0 0.0
  %v1161 = vand.u32 %v473, 4294901760
  %1162 = vmatpush1.msra.mxu0 %v1161
  %1163 = vmatprep.subr.mxu0 0.0
  %v1164 = vand.u32 %v474, 4294901760
  %1165 = vmatpush1.msra.mxu0 %v1164
  %1166 = vmatprep.subr.mxu0 0.0
  %v1167 = vand.u32 %v475, 4294901760
  %1168 = vmatpush1.msra.mxu0 %v1167
  %1169 = vmatprep.subr.mxu0 0.0
  %v1170 = vand.u32 %v476, 4294901760
  %1171 = vmatpush1.msra.mxu0 %v1170
  %1172 = vmatprep.subr.mxu0 0.0
  %v1173 = vand.u32 %v477, 4294901760
  %1174 = vmatpush1.msra.mxu0 %v1173
  %1175 = vmatprep.subr.mxu0 0.0
  %v1176 = vand.u32 %v478, 4294901760
  %1177 = vmatpush1.msra.mxu0 %v1176
  %1178 = vmatprep.subr.mxu0 0.0
  %1179 = vmatpush1.msra.mxu0 0.0
  %1180 = vmatprep.subr.mxu0 0.0
  %1181 = vmatpush1.msra.mxu0 0.0
  %1182 = vmatprep.subr.mxu0 0.0
  %1183 = vmatpush1.msra.mxu0 0.0
  %1184 = vmatprep.subr.mxu0 0.0
  %1185 = vmatpush1.msra.mxu0 0.0
  %1186 = vmatprep.subr.mxu0 0.0
  %1187 = vmatpush1.msra.mxu0 0.0
  %1188 = vmatprep.subr.mxu0 0.0
  %1189 = vmatpush1.msra.mxu0 0.0
  %1190 = vmatprep.subr.mxu0 0.0
  %1191 = vmatpush1.msra.mxu0 0.0
  %1192 = vmatprep.subr.mxu0 0.0
  %1193 = vmatpush1.msra.mxu0 0.0
  %1194 = vmatprep.subr.mxu0 0.0
  %1195 = vmatpush1.msra.mxu0 0.0
  %1196 = vmatprep.subr.mxu0 0.0
  %1197 = vmatpush1.msra.mxu0 0.0
  %1198 = vmatprep.subr.mxu0 0.0
  %1199 = vmatpush1.msra.mxu0 0.0
  %1200 = vmatprep.subr.mxu0 0.0
  %1201 = vmatpush1.msra.mxu0 0.0
  %1202 = vmatprep.subr.mxu0 0.0
  %1203 = vmatpush1.msra.mxu0 0.0
  %1204 = vmatprep.subr.mxu0 0.0
  %1205 = vmatpush1.msra.mxu0 0.0
  %1206 = vmatprep.subr.mxu0 0.0
  %1207 = vmatpush1.msra.mxu0 0.0
  %1208 = vmatprep.subr.mxu0 0.0
  %1209 = vmatpush1.msra.mxu0 0.0
  %1210 = vmatprep.subr.mxu0 0.0
  %1211 = vmatpush1.msra.mxu0 0.0
  %1212 = vmatprep.subr.mxu0 0.0
  %1213 = vmatpush1.msra.mxu0 0.0
  %1214 = vmatprep.subr.mxu0 0.0
  %1215 = vmatpush1.msra.mxu0 0.0
  %1216 = vmatprep.subr.mxu0 0.0
  %1217 = vmatpush1.msra.mxu0 0.0
  %1218 = vmatprep.subr.mxu0 0.0
  %1219 = vmatpush1.msra.mxu0 0.0
  %1220 = vmatprep.subr.mxu0 0.0
  %1221 = vmatpush1.msra.mxu0 0.0
  %1222 = vmatprep.subr.mxu0 0.0
  %1223 = vmatpush1.msra.mxu0 0.0
  %1224 = vmatprep.subr.mxu0 0.0
  %1225 = vmatpush1.msra.mxu0 0.0
  %1226 = vmatprep.mubr.f32.mxu0 0.0
  %v1227 = vand.u32 %v480, 4294901760
  %v1228 = vsub.f32 %v480, %v1227
  %v1229 = vand.u32 %v1228, 4294901760
  %1230 = vmatmul.mubr.f32.gmra.mrb[0].mxu0 %v1229
  %v1231 = vpop.f32.mrb[0].mxu0
  %v1232 = vadd.f32 %v1046, %v1231
  %v1233 = vpop.f32.mrb[0].mxu0
  %1234 = vmatprep.mubr.f32.mxu0 0.0
  %v1235 = vand.u32 %v483, 4294901760
  %v1236 = vsub.f32 %v483, %v1235
  %v1237 = vand.u32 %v1236, 4294901760
  %1238 = vmatmul.mubr.f32.gmra.mrb[0].mxu0 %v1237
  %v1239 = vpop.f32.mrb[0].mxu0
  %v1240 = vadd.f32 %v1053, %v1239
  %v1241 = vpop.f32.mrb[0].mxu0
  %1242 = vmatprep.mubr.f32.mxu0 0.0
  %v1243 = vand.u32 %v486, 4294901760
  %v1244 = vsub.f32 %v486, %v1243
  %v1245 = vand.u32 %v1244, 4294901760
  %1246 = vmatmul.mubr.f32.gmra.mrb[0].mxu0 %v1245
  %v1247 = vpop.f32.mrb[0].mxu0
  %v1248 = vadd.f32 %v1060, %v1247
  %v1249 = vpop.f32.mrb[0].mxu0
  %1250 = vmatprep.mubr.f32.mxu0 0.0
  %v1251 = vand.u32 %v489, 4294901760
  %v1252 = vsub.f32 %v489, %v1251
  %v1253 = vand.u32 %v1252, 4294901760
  %1254 = vmatmul.mubr.f32.gmra.mrb[0].mxu0 %v1253
  %v1255 = vpop.f32.mrb[0].mxu0
  %v1256 = vadd.f32 %v1067, %v1255
  %v1257 = vpop.f32.mrb[0].mxu0
  %1258 = vmatprep.mubr.f32.mxu0 0.0
  %v1259 = vand.u32 %v492, 4294901760
  %v1260 = vsub.f32 %v492, %v1259
  %v1261 = vand.u32 %v1260, 4294901760
  %1262 = vmatmul.mubr.f32.gmra.mrb[0].mxu0 %v1261
  %v1263 = vpop.f32.mrb[0].mxu0
  %v1264 = vadd.f32 %v1074, %v1263
  %v1265 = vpop.f32.mrb[0].mxu0
  %1266 = vmatprep.mubr.f32.mxu0 0.0
  %v1267 = vand.u32 %v495, 4294901760
  %v1268 = vsub.f32 %v495, %v1267
  %v1269 = vand.u32 %v1268, 4294901760
  %1270 = vmatmul.mubr.f32.gmra.mrb[0].mxu0 %v1269
  %v1271 = vpop.f32.mrb[0].mxu0
  %v1272 = vadd.f32 %v1081, %v1271
  %v1273 = vpop.f32.mrb[0].mxu0
  %1274 = vmatprep.mubr.f32.mxu0 0.0
  %v1275 = vand.u32 %v498, 4294901760
  %v1276 = vsub.f32 %v498, %v1275
  %v1277 = vand.u32 %v1276, 4294901760
  %1278 = vmatmul.mubr.f32.gmra.mrb[0].mxu0 %v1277
  %v1279 = vpop.f32.mrb[0].mxu0
  %v1280 = vadd.f32 %v1088, %v1279
  %v1281 = vpop.f32.mrb[0].mxu0
  %1282 = vmatprep.mubr.f32.mxu0 0.0
  %v1283 = vand.u32 %v501, 4294901760
  %v1284 = vsub.f32 %v501, %v1283
  %v1285 = vand.u32 %v1284, 4294901760
  %1286 = vmatmul.mubr.f32.gmra.mrb[0].mxu0 %v1285
  %v1287 = vpop.f32.mrb[0].mxu0
  %v1288 = vadd.f32 %v1095, %v1287
  %v1289 = vpop.f32.mrb[0].mxu0
  %1290 = vmatprep.mubr.f32.mxu0 0.0
  %v1291 = vand.u32 %v504, 4294901760
  %v1292 = vsub.f32 %v504, %v1291
  %v1293 = vand.u32 %v1292, 4294901760
  %1294 = vmatmul.mubr.f32.gmra.mrb[0].mxu0 %v1293
  %v1295 = vpop.f32.mrb[0].mxu0
  %v1296 = vadd.f32 %v1102, %v1295
  %v1297 = vpop.f32.mrb[0].mxu0
  %1298 = vmatprep.mubr.f32.mxu0 0.0
  %v1299 = vand.u32 %v507, 4294901760
  %v1300 = vsub.f32 %v507, %v1299
  %v1301 = vand.u32 %v1300, 4294901760
  %1302 = vmatmul.mubr.f32.gmra.mrb[0].mxu0 %v1301
  %v1303 = vpop.f32.mrb[0].mxu0
  %v1304 = vadd.f32 %v1109, %v1303
  %v1305 = vpop.f32.mrb[0].mxu0
  %1306 = vmatprep.mubr.f32.mxu0 0.0
  %v1307 = vand.u32 %v510, 4294901760
  %v1308 = vsub.f32 %v510, %v1307
  %v1309 = vand.u32 %v1308, 4294901760
  %1310 = vmatmul.mubr.f32.gmra.mrb[0].mxu0 %v1309
  %v1311 = vpop.f32.mrb[0].mxu0
  %v1312 = vadd.f32 %v1116, %v1311
  %v1313 = vpop.f32.mrb[0].mxu0
  %1314 = vmatprep.mubr.f32.mxu0 0.0
  %v1315 = vand.u32 %v513, 4294901760
  %v1316 = vsub.f32 %v513, %v1315
  %v1317 = vand.u32 %v1316, 4294901760
  %1318 = vmatmul.mubr.f32.gmra.mrb[0].mxu0 %v1317
  %v1319 = vpop.f32.mrb[0].mxu0
  %v1320 = vadd.f32 %v1123, %v1319
  %v1321 = vpop.f32.mrb[0].mxu0
  %1322 = vmatprep.mubr.f32.mxu0 0.0
  %v1323 = vand.u32 %v516, 4294901760
  %v1324 = vsub.f32 %v516, %v1323
  %v1325 = vand.u32 %v1324, 4294901760
  %1326 = vmatmul.mubr.f32.gmra.mrb[0].mxu0 %v1325
  %v1327 = vpop.f32.mrb[0].mxu0
  %v1328 = vadd.f32 %v1130, %v1327
  %v1329 = vpop.f32.mrb[0].mxu0
  %1330 = vmatprep.mubr.f32.mxu0 0.0
  %v1331 = vand.u32 %v519, 4294901760
  %v1332 = vsub.f32 %v519, %v1331
  %v1333 = vand.u32 %v1332, 4294901760
  %1334 = vmatmul.mubr.f32.gmra.mrb[0].mxu0 %v1333
  %v1335 = vpop.f32.mrb[0].mxu0
  %v1336 = vadd.f32 %v1137, %v1335
  %v1337 = vpop.f32.mrb[0].mxu0
  %1338 = vmatprep.mubr.f32.mxu0 0.0
  %v1339 = vand.u32 %v522, 4294901760
  %v1340 = vsub.f32 %v522, %v1339
  %v1341 = vand.u32 %v1340, 4294901760
  %1342 = vmatmul.mubr.f32.gmra.mrb[0].mxu0 %v1341
  %v1343 = vpop.f32.mrb[0].mxu0
  %v1344 = vadd.f32 %v1144, %v1343
  %v1345 = vpop.f32.mrb[0].mxu0
  %1346 = vmatprep.mubr.f32.mxu0 0.0
  %v1347 = vand.u32 %v525, 4294901760
  %v1348 = vsub.f32 %v525, %v1347
  %v1349 = vand.u32 %v1348, 4294901760
  %1350 = vmatmul.mubr.f32.gmra.mrb[0].mxu0 %v1349
  %v1351 = vpop.f32.mrb[0].mxu0
  %v1352 = vadd.f32 %v1151, %v1351
  %v1353 = vpop.f32.mrb[0].mxu0
  %1354 = vdwg.mxu0
  %1355 = vmatprep.subr.mxu0 0.0
  %v1356 = vand.u32 %v471, 4294901760
  %v1357 = vsub.f32 %v471, %v1356
  %v1358 = vand.u32 %v1357, 4294901760
  %1359 = vmatpush1.msra.mxu0 %v1358
  %1360 = vmatprep.subr.mxu0 0.0
  %v1361 = vand.u32 %v472, 4294901760
  %v1362 = vsub.f32 %v472, %v1361
  %v1363 = vand.u32 %v1362, 4294901760
  %1364 = vmatpush1.msra.mxu0 %v1363
  %1365 = vmatprep.subr.mxu0 0.0
  %v1366 = vand.u32 %v473, 4294901760
  %v1367 = vsub.f32 %v473, %v1366
  %v1368 = vand.u32 %v1367, 4294901760
  %1369 = vmatpush1.msra.mxu0 %v1368
  %1370 = vmatprep.subr.mxu0 0.0
  %v1371 = vand.u32 %v474, 4294901760
  %v1372 = vsub.f32 %v474, %v1371
  %v1373 = vand.u32 %v1372, 4294901760
  %1374 = vmatpush1.msra.mxu0 %v1373
  %1375 = vmatprep.subr.mxu0 0.0
  %v1376 = vand.u32 %v475, 4294901760
  %v1377 = vsub.f32 %v475, %v1376
  %v1378 = vand.u32 %v1377, 4294901760
  %1379 = vmatpush1.msra.mxu0 %v1378
  %1380 = vmatprep.subr.mxu0 0.0
  %v1381 = vand.u32 %v476, 4294901760
  %v1382 = vsub.f32 %v476, %v1381
  %v1383 = vand.u32 %v1382, 4294901760
  %1384 = vmatpush1.msra.mxu0 %v1383
  %1385 = vmatprep.subr.mxu0 0.0
  %v1386 = vand.u32 %v477, 4294901760
  %v1387 = vsub.f32 %v477, %v1386
  %v1388 = vand.u32 %v1387, 4294901760
  %1389 = vmatpush1.msra.mxu0 %v1388
  %1390 = vmatprep.subr.mxu0 0.0
  %v1391 = vand.u32 %v478, 4294901760
  %v1392 = vsub.f32 %v478, %v1391
  %v1393 = vand.u32 %v1392, 4294901760
  %1394 = vmatpush1.msra.mxu0 %v1393
  %1395 = vmatprep.subr.mxu0 0.0
  %1396 = vmatpush1.msra.mxu0 0.0
  %1397 = vmatprep.subr.mxu0 0.0
  %1398 = vmatpush1.msra.mxu0 0.0
  %1399 = vmatprep.subr.mxu0 0.0
  %1400 = vmatpush1.msra.mxu0 0.0
  %1401 = vmatprep.subr.mxu0 0.0
  %1402 = vmatpush1.msra.mxu0 0.0
  %1403 = vmatprep.subr.mxu0 0.0
  %1404 = vmatpush1.msra.mxu0 0.0
  %1405 = vmatprep.subr.mxu0 0.0
  %1406 = vmatpush1.msra.mxu0 0.0
  %1407 = vmatprep.subr.mxu0 0.0
  %1408 = vmatpush1.msra.mxu0 0.0
  %1409 = vmatprep.subr.mxu0 0.0
  %1410 = vmatpush1.msra.mxu0 0.0
  %1411 = vmatprep.subr.mxu0 0.0
  %1412 = vmatpush1.msra.mxu0 0.0
  %1413 = vmatprep.subr.mxu0 0.0
  %1414 = vmatpush1.msra.mxu0 0.0
  %1415 = vmatprep.subr.mxu0 0.0
  %1416 = vmatpush1.msra.mxu0 0.0
  %1417 = vmatprep.subr.mxu0 0.0
  %1418 = vmatpush1.msra.mxu0 0.0
  %1419 = vmatprep.subr.mxu0 0.0
  %1420 = vmatpush1.msra.mxu0 0.0
  %1421 = vmatprep.subr.mxu0 0.0
  %1422 = vmatpush1.msra.mxu0 0.0
  %1423 = vmatprep.subr.mxu0 0.0
  %1424 = vmatpush1.msra.mxu0 0.0
  %1425 = vmatprep.subr.mxu0 0.0
  %1426 = vmatpush1.msra.mxu0 0.0
  %1427 = vmatprep.subr.mxu0 0.0
  %1428 = vmatpush1.msra.mxu0 0.0
  %1429 = vmatprep.subr.mxu0 0.0
  %1430 = vmatpush1.msra.mxu0 0.0
  %1431 = vmatprep.subr.mxu0 0.0
  %1432 = vmatpush1.msra.mxu0 0.0
  %1433 = vmatprep.subr.mxu0 0.0
  %1434 = vmatpush1.msra.mxu0 0.0
  %1435 = vmatprep.subr.mxu0 0.0
  %1436 = vmatpush1.msra.mxu0 0.0
  %1437 = vmatprep.subr.mxu0 0.0
  %1438 = vmatpush1.msra.mxu0 0.0
  %1439 = vmatprep.subr.mxu0 0.0
  %1440 = vmatpush1.msra.mxu0 0.0
  %1441 = vmatprep.subr.mxu0 0.0
  %1442 = vmatpush1.msra.mxu0 0.0
  %1443 = vmatprep.mubr.f32.mxu0 0.0
  %v1444 = vand.u32 %v480, 4294901760
  %1445 = vmatmul.mubr.f32.gmra.mrb[0].mxu0 %v1444
  %v1446 = vpop.f32.mrb[0].mxu0
  %v1447 = vadd.f32 %v1232, %v1446
  %v1448 = vpop.f32.mrb[0].mxu0
  %1449 = vmatprep.mubr.f32.mxu0 0.0
  %v1450 = vand.u32 %v483, 4294901760
  %1451 = vmatmul.mubr.f32.gmra.mrb[0].mxu0 %v1450
  %v1452 = vpop.f32.mrb[0].mxu0
  %v1453 = vadd.f32 %v1240, %v1452
  %v1454 = vpop.f32.mrb[0].mxu0
  %1455 = vmatprep.mubr.f32.mxu0 0.0
  %v1456 = vand.u32 %v486, 4294901760
  %1457 = vmatmul.mubr.f32.gmra.mrb[0].mxu0 %v1456
  %v1458 = vpop.f32.mrb[0].mxu0
  %v1459 = vadd.f32 %v1248, %v1458
  %v1460 = vpop.f32.mrb[0].mxu0
  %1461 = vmatprep.mubr.f32.mxu0 0.0
  %v1462 = vand.u32 %v489, 4294901760
  %1463 = vmatmul.mubr.f32.gmra.mrb[0].mxu0 %v1462
  %v1464 = vpop.f32.mrb[0].mxu0
  %v1465 = vadd.f32 %v1256, %v1464
  %v1466 = vpop.f32.mrb[0].mxu0
  %1467 = vmatprep.mubr.f32.mxu0 0.0
  %v1468 = vand.u32 %v492, 4294901760
  %1469 = vmatmul.mubr.f32.gmra.mrb[0].mxu0 %v1468
  %v1470 = vpop.f32.mrb[0].mxu0
  %v1471 = vadd.f32 %v1264, %v1470
  %v1472 = vpop.f32.mrb[0].mxu0
  %1473 = vmatprep.mubr.f32.mxu0 0.0
  %v1474 = vand.u32 %v495, 4294901760
  %1475 = vmatmul.mubr.f32.gmra.mrb[0].mxu0 %v1474
  %v1476 = vpop.f32.mrb[0].mxu0
  %v1477 = vadd.f32 %v1272, %v1476
  %v1478 = vpop.f32.mrb[0].mxu0
  %1479 = vmatprep.mubr.f32.mxu0 0.0
  %v1480 = vand.u32 %v498, 4294901760
  %1481 = vmatmul.mubr.f32.gmra.mrb[0].mxu0 %v1480
  %v1482 = vpop.f32.mrb[0].mxu0
  %v1483 = vadd.f32 %v1280, %v1482
  %v1484 = vpop.f32.mrb[0].mxu0
  %1485 = vmatprep.mubr.f32.mxu0 0.0
  %v1486 = vand.u32 %v501, 4294901760
  %1487 = vmatmul.mubr.f32.gmra.mrb[0].mxu0 %v1486
  %v1488 = vpop.f32.mrb[0].mxu0
  %v1489 = vadd.f32 %v1288, %v1488
  %v1490 = vpop.f32.mrb[0].mxu0
  %1491 = vmatprep.mubr.f32.mxu0 0.0
  %v1492 = vand.u32 %v504, 4294901760
  %1493 = vmatmul.mubr.f32.gmra.mrb[0].mxu0 %v1492
  %v1494 = vpop.f32.mrb[0].mxu0
  %v1495 = vadd.f32 %v1296, %v1494
  %v1496 = vpop.f32.mrb[0].mxu0
  %1497 = vmatprep.mubr.f32.mxu0 0.0
  %v1498 = vand.u32 %v507, 4294901760
  %1499 = vmatmul.mubr.f32.gmra.mrb[0].mxu0 %v1498
  %v1500 = vpop.f32.mrb[0].mxu0
  %v1501 = vadd.f32 %v1304, %v1500
  %v1502 = vpop.f32.mrb[0].mxu0
  %1503 = vmatprep.mubr.f32.mxu0 0.0
  %v1504 = vand.u32 %v510, 4294901760
  %1505 = vmatmul.mubr.f32.gmra.mrb[0].mxu0 %v1504
  %v1506 = vpop.f32.mrb[0].mxu0
  %v1507 = vadd.f32 %v1312, %v1506
  %v1508 = vpop.f32.mrb[0].mxu0
  %1509 = vmatprep.mubr.f32.mxu0 0.0
  %v1510 = vand.u32 %v513, 4294901760
  %1511 = vmatmul.mubr.f32.gmra.mrb[0].mxu0 %v1510
  %v1512 = vpop.f32.mrb[0].mxu0
  %v1513 = vadd.f32 %v1320, %v1512
  %v1514 = vpop.f32.mrb[0].mxu0
  %1515 = vmatprep.mubr.f32.mxu0 0.0
  %v1516 = vand.u32 %v516, 4294901760
  %1517 = vmatmul.mubr.f32.gmra.mrb[0].mxu0 %v1516
  %v1518 = vpop.f32.mrb[0].mxu0
  %v1519 = vadd.f32 %v1328, %v1518
  %v1520 = vpop.f32.mrb[0].mxu0
  %1521 = vmatprep.mubr.f32.mxu0 0.0
  %v1522 = vand.u32 %v519, 4294901760
  %1523 = vmatmul.mubr.f32.gmra.mrb[0].mxu0 %v1522
  %v1524 = vpop.f32.mrb[0].mxu0
  %v1525 = vadd.f32 %v1336, %v1524
  %v1526 = vpop.f32.mrb[0].mxu0
  %1527 = vmatprep.mubr.f32.mxu0 0.0
  %v1528 = vand.u32 %v522, 4294901760
  %1529 = vmatmul.mubr.f32.gmra.mrb[0].mxu0 %v1528
  %v1530 = vpop.f32.mrb[0].mxu0
  %v1531 = vadd.f32 %v1344, %v1530
  %v1532 = vpop.f32.mrb[0].mxu0
  %1533 = vmatprep.mubr.f32.mxu0 0.0
  %v1534 = vand.u32 %v525, 4294901760
  %1535 = vmatmul.mubr.f32.gmra.mrb[0].mxu0 %v1534
  %v1536 = vpop.f32.mrb[0].mxu0
  %v1537 = vadd.f32 %v1352, %v1536
  %v1538 = vpop.f32.mrb[0].mxu0
  %1539 = vdwg.mxu0
  %1540 = vmatprep.subr.mxu0 0.0
  %v1541 = vand.u32 %v471, 4294901760
  %1542 = vmatpush1.msra.mxu0 %v1541
  %1543 = vmatprep.subr.mxu0 0.0
  %v1544 = vand.u32 %v472, 4294901760
  %1545 = vmatpush1.msra.mxu0 %v1544
  %1546 = vmatprep.subr.mxu0 0.0
  %v1547 = vand.u32 %v473, 4294901760
  %1548 = vmatpush1.msra.mxu0 %v1547
  %1549 = vmatprep.subr.mxu0 0.0
  %v1550 = vand.u32 %v474, 4294901760
  %1551 = vmatpush1.msra.mxu0 %v1550
  %1552 = vmatprep.subr.mxu0 0.0
  %v1553 = vand.u32 %v475, 4294901760
  %1554 = vmatpush1.msra.mxu0 %v1553
  %1555 = vmatprep.subr.mxu0 0.0
  %v1556 = vand.u32 %v476, 4294901760
  %1557 = vmatpush1.msra.mxu0 %v1556
  %1558 = vmatprep.subr.mxu0 0.0
  %v1559 = vand.u32 %v477, 4294901760
  %1560 = vmatpush1.msra.mxu0 %v1559
  %1561 = vmatprep.subr.mxu0 0.0
  %v1562 = vand.u32 %v478, 4294901760
  %1563 = vmatpush1.msra.mxu0 %v1562
  %1564 = vmatprep.subr.mxu0 0.0
  %1565 = vmatpush1.msra.mxu0 0.0
  %1566 = vmatprep.subr.mxu0 0.0
  %1567 = vmatpush1.msra.mxu0 0.0
  %1568 = vmatprep.subr.mxu0 0.0
  %1569 = vmatpush1.msra.mxu0 0.0
  %1570 = vmatprep.subr.mxu0 0.0
  %1571 = vmatpush1.msra.mxu0 0.0
  %1572 = vmatprep.subr.mxu0 0.0
  %1573 = vmatpush1.msra.mxu0 0.0
  %1574 = vmatprep.subr.mxu0 0.0
  %1575 = vmatpush1.msra.mxu0 0.0
  %1576 = vmatprep.subr.mxu0 0.0
  %1577 = vmatpush1.msra.mxu0 0.0
  %1578 = vmatprep.subr.mxu0 0.0
  %1579 = vmatpush1.msra.mxu0 0.0
  %1580 = vmatprep.subr.mxu0 0.0
  %1581 = vmatpush1.msra.mxu0 0.0
  %1582 = vmatprep.subr.mxu0 0.0
  %1583 = vmatpush1.msra.mxu0 0.0
  %1584 = vmatprep.subr.mxu0 0.0
  %1585 = vmatpush1.msra.mxu0 0.0
  %1586 = vmatprep.subr.mxu0 0.0
  %1587 = vmatpush1.msra.mxu0 0.0
  %1588 = vmatprep.subr.mxu0 0.0
  %1589 = vmatpush1.msra.mxu0 0.0
  %1590 = vmatprep.subr.mxu0 0.0
  %1591 = vmatpush1.msra.mxu0 0.0
  %1592 = vmatprep.subr.mxu0 0.0
  %1593 = vmatpush1.msra.mxu0 0.0
  %1594 = vmatprep.subr.mxu0 0.0
  %1595 = vmatpush1.msra.mxu0 0.0
  %1596 = vmatprep.subr.mxu0 0.0
  %1597 = vmatpush1.msra.mxu0 0.0
  %1598 = vmatprep.subr.mxu0 0.0
  %1599 = vmatpush1.msra.mxu0 0.0
  %1600 = vmatprep.subr.mxu0 0.0
  %1601 = vmatpush1.msra.mxu0 0.0
  %1602 = vmatprep.subr.mxu0 0.0
  %1603 = vmatpush1.msra.mxu0 0.0
  %1604 = vmatprep.subr.mxu0 0.0
  %1605 = vmatpush1.msra.mxu0 0.0
  %1606 = vmatprep.subr.mxu0 0.0
  %1607 = vmatpush1.msra.mxu0 0.0
  %1608 = vmatprep.subr.mxu0 0.0
  %1609 = vmatpush1.msra.mxu0 0.0
  %1610 = vmatprep.subr.mxu0 0.0
  %1611 = vmatpush1.msra.mxu0 0.0
  %1612 = vmatprep.mubr.f32.mxu0 0.0
  %v1613 = vand.u32 %v480, 4294901760
  %1614 = vmatmul.mubr.f32.gmra.mrb[0].mxu0 %v1613
  %v1615 = vpop.f32.mrb[0].mxu0
  %v1616 = vadd.f32 %v1447, %v1615
  %v1617 = vpop.f32.mrb[0].mxu0
  %1618 = vmatprep.mubr.f32.mxu0 0.0
  %v1619 = vand.u32 %v483, 4294901760
  %1620 = vmatmul.mubr.f32.gmra.mrb[0].mxu0 %v1619
  %v1621 = vpop.f32.mrb[0].mxu0
  %v1622 = vadd.f32 %v1453, %v1621
  %v1623 = vpop.f32.mrb[0].mxu0
  %1624 = vmatprep.mubr.f32.mxu0 0.0
  %v1625 = vand.u32 %v486, 4294901760
  %1626 = vmatmul.mubr.f32.gmra.mrb[0].mxu0 %v1625
  %v1627 = vpop.f32.mrb[0].mxu0
  %v1628 = vadd.f32 %v1459, %v1627
  %v1629 = vpop.f32.mrb[0].mxu0
  %1630 = vmatprep.mubr.f32.mxu0 0.0
  %v1631 = vand.u32 %v489, 4294901760
  %1632 = vmatmul.mubr.f32.gmra.mrb[0].mxu0 %v1631
  %v1633 = vpop.f32.mrb[0].mxu0
  %v1634 = vadd.f32 %v1465, %v1633
  %v1635 = vpop.f32.mrb[0].mxu0
  %1636 = vmatprep.mubr.f32.mxu0 0.0
  %v1637 = vand.u32 %v492, 4294901760
  %1638 = vmatmul.mubr.f32.gmra.mrb[0].mxu0 %v1637
  %v1639 = vpop.f32.mrb[0].mxu0
  %v1640 = vadd.f32 %v1471, %v1639
  %v1641 = vpop.f32.mrb[0].mxu0
  %1642 = vmatprep.mubr.f32.mxu0 0.0
  %v1643 = vand.u32 %v495, 4294901760
  %1644 = vmatmul.mubr.f32.gmra.mrb[0].mxu0 %v1643
  %v1645 = vpop.f32.mrb[0].mxu0
  %v1646 = vadd.f32 %v1477, %v1645
  %v1647 = vpop.f32.mrb[0].mxu0
  %1648 = vmatprep.mubr.f32.mxu0 0.0
  %v1649 = vand.u32 %v498, 4294901760
  %1650 = vmatmul.mubr.f32.gmra.mrb[0].mxu0 %v1649
  %v1651 = vpop.f32.mrb[0].mxu0
  %v1652 = vadd.f32 %v1483, %v1651
  %v1653 = vpop.f32.mrb[0].mxu0
  %1654 = vmatprep.mubr.f32.mxu0 0.0
  %v1655 = vand.u32 %v501, 4294901760
  %1656 = vmatmul.mubr.f32.gmra.mrb[0].mxu0 %v1655
  %v1657 = vpop.f32.mrb[0].mxu0
  %v1658 = vadd.f32 %v1489, %v1657
  %v1659 = vpop.f32.mrb[0].mxu0
  %1660 = vmatprep.mubr.f32.mxu0 0.0
  %v1661 = vand.u32 %v504, 4294901760
  %1662 = vmatmul.mubr.f32.gmra.mrb[0].mxu0 %v1661
  %v1663 = vpop.f32.mrb[0].mxu0
  %v1664 = vadd.f32 %v1495, %v1663
  %v1665 = vpop.f32.mrb[0].mxu0
  %1666 = vmatprep.mubr.f32.mxu0 0.0
  %v1667 = vand.u32 %v507, 4294901760
  %1668 = vmatmul.mubr.f32.gmra.mrb[0].mxu0 %v1667
  %v1669 = vpop.f32.mrb[0].mxu0
  %v1670 = vadd.f32 %v1501, %v1669
  %v1671 = vpop.f32.mrb[0].mxu0
  %1672 = vmatprep.mubr.f32.mxu0 0.0
  %v1673 = vand.u32 %v510, 4294901760
  %1674 = vmatmul.mubr.f32.gmra.mrb[0].mxu0 %v1673
  %v1675 = vpop.f32.mrb[0].mxu0
  %v1676 = vadd.f32 %v1507, %v1675
  %v1677 = vpop.f32.mrb[0].mxu0
  %1678 = vmatprep.mubr.f32.mxu0 0.0
  %v1679 = vand.u32 %v513, 4294901760
  %1680 = vmatmul.mubr.f32.gmra.mrb[0].mxu0 %v1679
  %v1681 = vpop.f32.mrb[0].mxu0
  %v1682 = vadd.f32 %v1513, %v1681
  %v1683 = vpop.f32.mrb[0].mxu0
  %1684 = vmatprep.mubr.f32.mxu0 0.0
  %v1685 = vand.u32 %v516, 4294901760
  %1686 = vmatmul.mubr.f32.gmra.mrb[0].mxu0 %v1685
  %v1687 = vpop.f32.mrb[0].mxu0
  %v1688 = vadd.f32 %v1519, %v1687
  %v1689 = vpop.f32.mrb[0].mxu0
  %1690 = vmatprep.mubr.f32.mxu0 0.0
  %v1691 = vand.u32 %v519, 4294901760
  %1692 = vmatmul.mubr.f32.gmra.mrb[0].mxu0 %v1691
  %v1693 = vpop.f32.mrb[0].mxu0
  %v1694 = vadd.f32 %v1525, %v1693
  %v1695 = vpop.f32.mrb[0].mxu0
  %1696 = vmatprep.mubr.f32.mxu0 0.0
  %v1697 = vand.u32 %v522, 4294901760
  %1698 = vmatmul.mubr.f32.gmra.mrb[0].mxu0 %v1697
  %v1699 = vpop.f32.mrb[0].mxu0
  %v1700 = vadd.f32 %v1531, %v1699
  %v1701 = vpop.f32.mrb[0].mxu0
  %1702 = vmatprep.mubr.f32.mxu0 0.0
  %v1703 = vand.u32 %v525, 4294901760
  %1704 = vmatmul.mubr.f32.gmra.mrb[0].mxu0 %v1703
  %v1705 = vpop.f32.mrb[0].mxu0
  %v1706 = vadd.f32 %v1537, %v1705
  %v1707 = vpop.f32.mrb[0].mxu0
  %1708 = vdwg.mxu0
  %v1709 = vld [vmem:[%s2] sm:$0xff]
  %v1710 = vld [vmem:[%s2 + $0x8] sm:$0xff]
  %v1711 = vld [vmem:[%s2 + $0x10] sm:$0xff]
  %v1712 = vld [vmem:[%s2 + $0x18] sm:$0xff]
  %v1713 = vld [vmem:[%s2 + $0x20] sm:$0xff]
  %v1714 = vld [vmem:[%s2 + $0x28] sm:$0xff]
  %v1715 = vld [vmem:[%s2 + $0x30] sm:$0xff]
  %v1716 = vld [vmem:[%s2 + $0x38] sm:$0xff]
  %v1717 = vld [vmem:[%s2 + $0x40] sm:$0xff]
  %v1718 = vld [vmem:[%s2 + $0x48] sm:$0xff]
  %v1719 = vld [vmem:[%s2 + $0x50] sm:$0xff]
  %v1720 = vld [vmem:[%s2 + $0x58] sm:$0xff]
  %v1721 = vld [vmem:[%s2 + $0x60] sm:$0xff]
  %v1722 = vld [vmem:[%s2 + $0x68] sm:$0xff]
  %v1723 = vld [vmem:[%s2 + $0x70] sm:$0xff]
  %v1724 = vld [vmem:[%s2 + $0x78] sm:$0xff]
  %v1725 = vadd.f32 %v1709, %v1616
  %v1726 = vadd.f32 %v1710, %v1622
  %v1727 = vadd.f32 %v1711, %v1628
  %v1728 = vadd.f32 %v1712, %v1634
  %v1729 = vadd.f32 %v1713, %v1640
  %v1730 = vadd.f32 %v1714, %v1646
  %v1731 = vadd.f32 %v1715, %v1652
  %v1732 = vadd.f32 %v1716, %v1658
  %v1733 = vadd.f32 %v1717, %v1664
  %v1734 = vadd.f32 %v1718, %v1670
  %v1735 = vadd.f32 %v1719, %v1676
  %v1736 = vadd.f32 %v1720, %v1682
  %v1737 = vadd.f32 %v1721, %v1688
  %v1738 = vadd.f32 %v1722, %v1694
  %v1739 = vadd.f32 %v1723, %v1700
  %v1740 = vadd.f32 %v1724, %v1706
  %vm1741 = vcmask 261120
  %1742 = vst.msk [vmem:[%s6] sm:$0xff] %vm1741, %v1725
  %1743 = vst.msk [vmem:[%s6 + $0x8] sm:$0xff] %vm1741, %v1726
  %1744 = vst.msk [vmem:[%s6 + $0x10] sm:$0xff] %vm1741, %v1727
  %1745 = vst.msk [vmem:[%s6 + $0x18] sm:$0xff] %vm1741, %v1728
  %1746 = vst.msk [vmem:[%s6 + $0x20] sm:$0xff] %vm1741, %v1729
  %1747 = vst.msk [vmem:[%s6 + $0x28] sm:$0xff] %vm1741, %v1730
  %1748 = vst.msk [vmem:[%s6 + $0x30] sm:$0xff] %vm1741, %v1731
  %1749 = vst.msk [vmem:[%s6 + $0x38] sm:$0xff] %vm1741, %v1732
  %1750 = vst.msk [vmem:[%s6 + $0x40] sm:$0xff] %vm1741, %v1733
  %1751 = vst.msk [vmem:[%s6 + $0x48] sm:$0xff] %vm1741, %v1734
  %1752 = vst.msk [vmem:[%s6 + $0x50] sm:$0xff] %vm1741, %v1735
  %1753 = vst.msk [vmem:[%s6 + $0x58] sm:$0xff] %vm1741, %v1736
  %1754 = vst.msk [vmem:[%s6 + $0x60] sm:$0xff] %vm1741, %v1737
  %1755 = vst.msk [vmem:[%s6 + $0x68] sm:$0xff] %vm1741, %v1738
  %1756 = vst.msk [vmem:[%s6 + $0x70] sm:$0xff] %vm1741, %v1739
  %1757 = vst.msk [vmem:[%s6 + $0x78] sm:$0xff] %vm1741, %v1740
  // Predicated region
  $region26: #{vss_block_forward.8} parent=0 // pred_check
    _
  $region27: #{vss_block_forward.8} parent=0 // pred_check_branch
    %1759 = sbr.rel (0) target = $region29
  $region28: #{vss_block_forward.8} parent=0 // pred_region
    _
  $region29: #{vss_block_forward.8} parent=0 // pred_fallthru
    _
  // Predicated region
  $region30: #{vss_block_forward.8} parent=0 // pred_check
    _
  $region31: #{vss_block_forward.8} parent=0 // pred_check_branch
    %1761 = sbr.rel (0) target = $region33
  $region32: #{vss_block_forward.8} parent=0 // pred_region
    _
  $region33: #{vss_block_forward.8} parent=0 // pred_fallthru
    _

// kernel: vss_block_forward.9
$region0: #{vss_block_forward.9}
  #allocation0 [shape = 'u32[]', space=smem, size = 0x4, offset = 0x4, fixed_abs, tag = 'smem constant byte address 0x4 - core index']
  #allocation1 [shape = 'u32[144,128]{1,0:T(1,128)}', space=vmem, size = 0x12000, scoped, tag = 'internal scratch']
  %s0 = inlined_call_operand.vmem [shape: f32[128,32], index: 0, kind: input, shape index: {}]
  %s1 = inlined_call_operand.vmem [shape: f32[32,128], index: 1, kind: input, shape index: {}]
  %s2 = inlined_call_operand.vmem [shape: f32[1,128], index: 2, kind: input, shape index: {}]
  %s3 = inlined_call_operand.vmem [shape: f32[128,32], index: 3, kind: input, shape index: {}]
  %s4 = inlined_call_operand.vmem [shape: f32[1,32], index: 4, kind: input, shape index: {}]
  %s5 = inlined_call_operand.hbm [shape: f32[128,32], index: 5, kind: output, shape index: {}]
  %s6 = sld [smem:[#allocation0]]
  $region30: #{vss_block_forward.9} parent=0
    _
  %s8 = ssub.s32 1, %s6
  %s9 = scalar_select 0, %s8, %s6
  $region1: #{vss_block_forward.9} parent=0
    #allocation2 [shape = 'u8[65536]{0}', space=vmem, size = 0x10000, scoped, tag = 'output window, operand 0, single buffered']
    #allocation3 [shape = 's32[1]{0}', space=sflag, size = 0x4, scoped, tag = 'scoped memory for vss_block_forward.9']
    %10 = vsyncpa [#allocation3], 0
    // Predicated region
    $region2: #{vss_block_forward.9} parent=1 // pred_check
      _
    $region3: #{vss_block_forward.9} parent=1 // pred_check_branch
      %12 = sbr.rel (0) target = $region5
    $region4: #{vss_block_forward.9} parent=1 // pred_region
      _
    $region5: #{vss_block_forward.9} parent=1 // pred_fallthru
      _
    // Predicated region
    $region6: #{vss_block_forward.9} parent=1 // pred_check
      _
    $region7: #{vss_block_forward.9} parent=1 // pred_check_branch
      %14 = sbr.rel (0) target = $region9
    $region8: #{vss_block_forward.9} parent=1 // pred_region
      _
    $region9: #{vss_block_forward.9} parent=1 // pred_fallthru
      _
    // Predicated region
    $region10: #{vss_block_forward.9} parent=1 // pred_check
      _
    $region11: #{vss_block_forward.9} parent=1 // pred_check_branch
      %16 = sbr.rel (0) target = $region13
    $region12: #{vss_block_forward.9} parent=1 // pred_region
      _
    $region13: #{vss_block_forward.9} parent=1 // pred_fallthru
      _
    // Predicated region
    $region14: #{vss_block_forward.9} parent=1 // pred_check
      _
    $region15: #{vss_block_forward.9} parent=1 // pred_check_branch
      %18 = sbr.rel (0) target = $region17
    $region16: #{vss_block_forward.9} parent=1 // pred_region
      _
    $region17: #{vss_block_forward.9} parent=1 // pred_fallthru
      _
    // Predicated region
    $region18: #{vss_block_forward.9} parent=1 // pred_check
      _
    $region19: #{vss_block_forward.9} parent=1 // pred_check_branch
      %20 = sbr.rel (0) target = $region21
    $region20: #{vss_block_forward.9} parent=1 // pred_region
      _
    $region21: #{vss_block_forward.9} parent=1 // pred_fallthru
      _
    %v21 = vld [vmem:[%s0] sm:$0xff]
    %v22 = vld [vmem:[%s0 + $0x8] sm:$0xff]
    %v23 = vld [vmem:[%s0 + $0x10] sm:$0xff]
    %v24 = vld [vmem:[%s0 + $0x18] sm:$0xff]
    %v25 = vld [vmem:[%s0 + $0x20] sm:$0xff]
    %v26 = vld [vmem:[%s0 + $0x28] sm:$0xff]
    %v27 = vld [vmem:[%s0 + $0x30] sm:$0xff]
    %v28 = vld [vmem:[%s0 + $0x38] sm:$0xff]
    %v29 = vld [vmem:[%s0 + $0x40] sm:$0xff]
    %v30 = vld [vmem:[%s0 + $0x48] sm:$0xff]
    %v31 = vld [vmem:[%s0 + $0x50] sm:$0xff]
    %v32 = vld [vmem:[%s0 + $0x58] sm:$0xff]
    %v33 = vld [vmem:[%s0 + $0x60] sm:$0xff]
    %v34 = vld [vmem:[%s0 + $0x68] sm:$0xff]
    %v35 = vld [vmem:[%s0 + $0x70] sm:$0xff]
    %v36 = vld [vmem:[%s0 + $0x78] sm:$0xff]
    %vm37 = vcmask 261120
    %v38 = vsel %vm37, %v21, 0.0
    %39 = vadd.xlane.f32.xlu0 %v38
    %v40 = vpop.xlane.xlu0 %39
    %v41 = vsel %vm37, %v22, 0.0
    %42 = vadd.xlane.f32.xlu0 %v41
    %v43 = vpop.xlane.xlu0 %42
    %v44 = vsel %vm37, %v23, 0.0
    %45 = vadd.xlane.f32.xlu0 %v44
    %v46 = vpop.xlane.xlu0 %45
    %v47 = vsel %vm37, %v24, 0.0
    %48 = vadd.xlane.f32.xlu0 %v47
    %v49 = vpop.xlane.xlu0 %48
    %v50 = vsel %vm37, %v25, 0.0
    %51 = vadd.xlane.f32.xlu0 %v50
    %v52 = vpop.xlane.xlu0 %51
    %v53 = vsel %vm37, %v26, 0.0
    %54 = vadd.xlane.f32.xlu0 %v53
    %v55 = vpop.xlane.xlu0 %54
    %v56 = vsel %vm37, %v27, 0.0
    %57 = vadd.xlane.f32.xlu0 %v56
    %v58 = vpop.xlane.xlu0 %57
    %v59 = vsel %vm37, %v28, 0.0
    %60 = vadd.xlane.f32.xlu0 %v59
    %v61 = vpop.xlane.xlu0 %60
    %v62 = vsel %vm37, %v29, 0.0
    %63 = vadd.xlane.f32.xlu0 %v62
    %v64 = vpop.xlane.xlu0 %63
    %v65 = vsel %vm37, %v30, 0.0
    %66 = vadd.xlane.f32.xlu0 %v65
    %v67 = vpop.xlane.xlu0 %66
    %v68 = vsel %vm37, %v31, 0.0
    %69 = vadd.xlane.f32.xlu0 %v68
    %v70 = vpop.xlane.xlu0 %69
    %v71 = vsel %vm37, %v32, 0.0
    %72 = vadd.xlane.f32.xlu0 %v71
    %v73 = vpop.xlane.xlu0 %72
    %v74 = vsel %vm37, %v33, 0.0
    %75 = vadd.xlane.f32.xlu0 %v74
    %v76 = vpop.xlane.xlu0 %75
    %v77 = vsel %vm37, %v34, 0.0
    %78 = vadd.xlane.f32.xlu0 %v77
    %v79 = vpop.xlane.xlu0 %78
    %v80 = vsel %vm37, %v35, 0.0
    %81 = vadd.xlane.f32.xlu0 %v80
    %v82 = vpop.xlane.xlu0 %81
    %v83 = vsel %vm37, %v36, 0.0
    %84 = vadd.xlane.f32.xlu0 %v83
    %v85 = vpop.xlane.xlu0 %84
    %v86 = vrcp.pop 32.0
    %v87 = vmul.f32 %v40, %v86
    %v88 = vmul.f32 %v43, %v86
    %v89 = vmul.f32 %v46, %v86
    %v90 = vmul.f32 %v49, %v86
    %v91 = vmul.f32 %v52, %v86
    %v92 = vmul.f32 %v55, %v86
    %v93 = vmul.f32 %v58, %v86
    %v94 = vmul.f32 %v61, %v86
    %v95 = vmul.f32 %v64, %v86
    %v96 = vmul.f32 %v67, %v86
    %v97 = vmul.f32 %v70, %v86
    %v98 = vmul.f32 %v73, %v86
    %v99 = vmul.f32 %v76, %v86
    %v100 = vmul.f32 %v79, %v86
    %v101 = vmul.f32 %v82, %v86
    %v102 = vmul.f32 %v85, %v86
    %v103 = vmul.f32 %v21, %v21
    %v104 = vmul.f32 %v22, %v22
    %v105 = vmul.f32 %v23, %v23
    %v106 = vmul.f32 %v24, %v24
    %v107 = vmul.f32 %v25, %v25
    %v108 = vmul.f32 %v26, %v26
    %v109 = vmul.f32 %v27, %v27
    %v110 = vmul.f32 %v28, %v28
    %v111 = vmul.f32 %v29, %v29
    %v112 = vmul.f32 %v30, %v30
    %v113 = vmul.f32 %v31, %v31
    %v114 = vmul.f32 %v32, %v32
    %v115 = vmul.f32 %v33, %v33
    %v116 = vmul.f32 %v34, %v34
    %v117 = vmul.f32 %v35, %v35
    %v118 = vmul.f32 %v36, %v36
    %v119 = vsel %vm37, %v103, 0.0
    %120 = vadd.xlane.f32.xlu0 %v119
    %v121 = vpop.xlane.xlu0 %120
    %v122 = vsel %vm37, %v104, 0.0
    %123 = vadd.xlane.f32.xlu0 %v122
    %v124 = vpop.xlane.xlu0 %123
    %v125 = vsel %vm37, %v105, 0.0
    %126 = vadd.xlane.f32.xlu0 %v125
    %v127 = vpop.xlane.xlu0 %126
    %v128 = vsel %vm37, %v106, 0.0
    %129 = vadd.xlane.f32.xlu0 %v128
    %v130 = vpop.xlane.xlu0 %129
    %v131 = vsel %vm37, %v107, 0.0
    %132 = vadd.xlane.f32.xlu0 %v131
    %v133 = vpop.xlane.xlu0 %132
    %v134 = vsel %vm37, %v108, 0.0
    %135 = vadd.xlane.f32.xlu0 %v134
    %v136 = vpop.xlane.xlu0 %135
    %v137 = vsel %vm37, %v109, 0.0
    %138 = vadd.xlane.f32.xlu0 %v137
    %v139 = vpop.xlane.xlu0 %138
    %v140 = vsel %vm37, %v110, 0.0
    %141 = vadd.xlane.f32.xlu0 %v140
    %v142 = vpop.xlane.xlu0 %141
    %v143 = vsel %vm37, %v111, 0.0
    %144 = vadd.xlane.f32.xlu0 %v143
    %v145 = vpop.xlane.xlu0 %144
    %v146 = vsel %vm37, %v112, 0.0
    %147 = vadd.xlane.f32.xlu0 %v146
    %v148 = vpop.xlane.xlu0 %147
    %v149 = vsel %vm37, %v113, 0.0
    %150 = vadd.xlane.f32.xlu0 %v149
    %v151 = vpop.xlane.xlu0 %150
    %v152 = vsel %vm37, %v114, 0.0
    %153 = vadd.xlane.f32.xlu0 %v152
    %v154 = vpop.xlane.xlu0 %153
    %v155 = vsel %vm37, %v115, 0.0
    %156 = vadd.xlane.f32.xlu0 %v155
    %v157 = vpop.xlane.xlu0 %156
    %v158 = vsel %vm37, %v116, 0.0
    %159 = vadd.xlane.f32.xlu0 %v158
    %v160 = vpop.xlane.xlu0 %159
    %v161 = vsel %vm37, %v117, 0.0
    %162 = vadd.xlane.f32.xlu0 %v161
    %v163 = vpop.xlane.xlu0 %162
    %v164 = vsel %vm37, %v118, 0.0
    %165 = vadd.xlane.f32.xlu0 %v164
    %v166 = vpop.xlane.xlu0 %165
    %v167 = vmul.f32 %v121, %v86
    %v168 = vmul.f32 %v124, %v86
    %v169 = vmul.f32 %v127, %v86
    %v170 = vmul.f32 %v130, %v86
    %v171 = vmul.f32 %v133, %v86
    %v172 = vmul.f32 %v136, %v86
    %v173 = vmul.f32 %v139, %v86
    %v174 = vmul.f32 %v142, %v86
    %v175 = vmul.f32 %v145, %v86
    %v176 = vmul.f32 %v148, %v86
    %v177 = vmul.f32 %v151, %v86
    %v178 = vmul.f32 %v154, %v86
    %v179 = vmul.f32 %v157, %v86
    %v180 = vmul.f32 %v160, %v86
    %v181 = vmul.f32 %v163, %v86
    %v182 = vmul.f32 %v166, %v86
    %v183 = vsub.f32 %v21, %v87
    %v184 = vsub.f32 %v22, %v88
    %v185 = vsub.f32 %v23, %v89
    %v186 = vsub.f32 %v24, %v90
    %v187 = vsub.f32 %v25, %v91
    %v188 = vsub.f32 %v26, %v92
    %v189 = vsub.f32 %v27, %v93
    %v190 = vsub.f32 %v28, %v94
    %v191 = vsub.f32 %v29, %v95
    %v192 = vsub.f32 %v30, %v96
    %v193 = vsub.f32 %v31, %v97
    %v194 = vsub.f32 %v32, %v98
    %v195 = vsub.f32 %v33, %v99
    %v196 = vsub.f32 %v34, %v100
    %v197 = vsub.f32 %v35, %v101
    %v198 = vsub.f32 %v36, %v102
    %v199 = vmul.f32 %v87, %v87
    %v200 = vmul.f32 %v88, %v88
    %v201 = vmul.f32 %v89, %v89
    %v202 = vmul.f32 %v90, %v90
    %v203 = vmul.f32 %v91, %v91
    %v204 = vmul.f32 %v92, %v92
    %v205 = vmul.f32 %v93, %v93
    %v206 = vmul.f32 %v94, %v94
    %v207 = vmul.f32 %v95, %v95
    %v208 = vmul.f32 %v96, %v96
    %v209 = vmul.f32 %v97, %v97
    %v210 = vmul.f32 %v98, %v98
    %v211 = vmul.f32 %v99, %v99
    %v212 = vmul.f32 %v100, %v100
    %v213 = vmul.f32 %v101, %v101
    %v214 = vmul.f32 %v102, %v102
    %v215 = vsub.f32 %v167, %v199
    %v216 = vsub.f32 %v168, %v200
    %v217 = vsub.f32 %v169, %v201
    %v218 = vsub.f32 %v170, %v202
    %v219 = vsub.f32 %v171, %v203
    %v220 = vsub.f32 %v172, %v204
    %v221 = vsub.f32 %v173, %v205
    %v222 = vsub.f32 %v174, %v206
    %v223 = vsub.f32 %v175, %v207
    %v224 = vsub.f32 %v176, %v208
    %v225 = vsub.f32 %v177, %v209
    %v226 = vsub.f32 %v178, %v210
    %v227 = vsub.f32 %v179, %v211
    %v228 = vsub.f32 %v180, %v212
    %v229 = vsub.f32 %v181, %v213
    %v230 = vsub.f32 %v182, %v214
    %v231 = vadd.f32 %v215, 1e-05
    %v232 = vadd.f32 %v216, 1e-05
    %v233 = vadd.f32 %v217, 1e-05
    %v234 = vadd.f32 %v218, 1e-05
    %v235 = vadd.f32 %v219, 1e-05
    %v236 = vadd.f32 %v220, 1e-05
    %v237 = vadd.f32 %v221, 1e-05
    %v238 = vadd.f32 %v222, 1e-05
    %v239 = vadd.f32 %v223, 1e-05
    %v240 = vadd.f32 %v224, 1e-05
    %v241 = vadd.f32 %v225, 1e-05
    %v242 = vadd.f32 %v226, 1e-05
    %v243 = vadd.f32 %v227, 1e-05
    %v244 = vadd.f32 %v228, 1e-05
    %v245 = vadd.f32 %v229, 1e-05
    %v246 = vadd.f32 %v230, 1e-05
    %v247 = vrsqrt.pop %v231
    %v248 = vrsqrt.pop %v232
    %v249 = vrsqrt.pop %v233
    %v250 = vrsqrt.pop %v234
    %v251 = vrsqrt.pop %v235
    %v252 = vrsqrt.pop %v236
    %v253 = vrsqrt.pop %v237
    %v254 = vrsqrt.pop %v238
    %v255 = vrsqrt.pop %v239
    %v256 = vrsqrt.pop %v240
    %v257 = vrsqrt.pop %v241
    %v258 = vrsqrt.pop %v242
    %v259 = vrsqrt.pop %v243
    %v260 = vrsqrt.pop %v244
    %v261 = vrsqrt.pop %v245
    %v262 = vrsqrt.pop %v246
    %v263 = vmul.f32 %v183, %v247
    %v264 = vmul.f32 %v184, %v248
    %v265 = vmul.f32 %v185, %v249
    %v266 = vmul.f32 %v186, %v250
    %v267 = vmul.f32 %v187, %v251
    %v268 = vmul.f32 %v188, %v252
    %v269 = vmul.f32 %v189, %v253
    %v270 = vmul.f32 %v190, %v254
    %v271 = vmul.f32 %v191, %v255
    %v272 = vmul.f32 %v192, %v256
    %v273 = vmul.f32 %v193, %v257
    %v274 = vmul.f32 %v194, %v258
    %v275 = vmul.f32 %v195, %v259
    %v276 = vmul.f32 %v196, %v260
    %v277 = vmul.f32 %v197, %v261
    %v278 = vmul.f32 %v198, %v262
    %v279 = vld [vmem:[%s1] sm:$0xff]
    %v280 = vld [vmem:[%s1 + $0x8] sm:$0xff]
    %v281 = vld [vmem:[%s1 + $0x10] sm:$0xff]
    %v282 = vld [vmem:[%s1 + $0x18] sm:$0xff]
    %v283 = vld [vmem:[%s2] sm:$0x1]
    %v285 = vlaneseq
    %v286 = vshrl.u32 %v285, 7
    %v287 = vsub.s32 0, %v286
    %v288 = vrot.slane %v283, %v287
    %v291 = vsel %vm37, %v263, 0
    %v294 = vsel %vm37, %v264, 0
    %v297 = vsel %vm37, %v265, 0
    %v300 = vsel %vm37, %v266, 0
    %v303 = vsel %vm37, %v267, 0
    %v306 = vsel %vm37, %v268, 0
    %v309 = vsel %vm37, %v269, 0
    %v312 = vsel %vm37, %v270, 0
    %v315 = vsel %vm37, %v271, 0
    %v318 = vsel %vm37, %v272, 0
    %v321 = vsel %vm37, %v273, 0
    %v324 = vsel %vm37, %v274, 0
    %v327 = vsel %vm37, %v275, 0
    %v330 = vsel %vm37, %v276, 0
    %v333 = vsel %vm37, %v277, 0
    %v336 = vsel %vm37, %v278, 0
    %338 = vmatprep.subr.mxu0 0.0
    %v339 = vand.u32 %v279, 4294901760
    %340 = vmatpush1.msra.mxu0 %v339
    %341 = vmatprep.subr.mxu0 0.0
    %v342 = vand.u32 %v280, 4294901760
    %343 = vmatpush1.msra.mxu0 %v342
    %344 = vmatprep.subr.mxu0 0.0
    %v345 = vand.u32 %v281, 4294901760
    %346 = vmatpush1.msra.mxu0 %v345
    %347 = vmatprep.subr.mxu0 0.0
    %v348 = vand.u32 %v282, 4294901760
    %349 = vmatpush1.msra.mxu0 %v348
    %350 = vmatprep.subr.mxu0 0.0
    %351 = vmatpush1.msra.mxu0 0.0
    %352 = vmatprep.subr.mxu0 0.0
    %353 = vmatpush1.msra.mxu0 0.0
    %354 = vmatprep.subr.mxu0 0.0
    %355 = vmatpush1.msra.mxu0 0.0
    %356 = vmatprep.subr.mxu0 0.0
    %357 = vmatpush1.msra.mxu0 0.0
    %358 = vmatprep.subr.mxu0 0.0
    %359 = vmatpush1.msra.mxu0 0.0
    %360 = vmatprep.subr.mxu0 0.0
    %361 = vmatpush1.msra.mxu0 0.0
    %362 = vmatprep.subr.mxu0 0.0
    %363 = vmatpush1.msra.mxu0 0.0
    %364 = vmatprep.subr.mxu0 0.0
    %365 = vmatpush1.msra.mxu0 0.0
    %366 = vmatprep.subr.mxu0 0.0
    %367 = vmatpush1.msra.mxu0 0.0
    %368 = vmatprep.subr.mxu0 0.0
    %369 = vmatpush1.msra.mxu0 0.0
    %370 = vmatprep.subr.mxu0 0.0
    %371 = vmatpush1.msra.mxu0 0.0
    %372 = vmatprep.subr.mxu0 0.0
    %373 = vmatpush1.msra.mxu0 0.0
    %374 = vmatprep.subr.mxu0 0.0
    %375 = vmatpush1.msra.mxu0 0.0
    %376 = vmatprep.subr.mxu0 0.0
    %377 = vmatpush1.msra.mxu0 0.0
    %378 = vmatprep.subr.mxu0 0.0
    %379 = vmatpush1.msra.mxu0 0.0
    %380 = vmatprep.subr.mxu0 0.0
    %381 = vmatpush1.msra.mxu0 0.0
    %382 = vmatprep.subr.mxu0 0.0
    %383 = vmatpush1.msra.mxu0 0.0
    %384 = vmatprep.subr.mxu0 0.0
    %385 = vmatpush1.msra.mxu0 0.0
    %386 = vmatprep.subr.mxu0 0.0
    %387 = vmatpush1.msra.mxu0 0.0
    %388 = vmatprep.subr.mxu0 0.0
    %389 = vmatpush1.msra.mxu0 0.0
    %390 = vmatprep.subr.mxu0 0.0
    %391 = vmatpush1.msra.mxu0 0.0
    %392 = vmatprep.subr.mxu0 0.0
    %393 = vmatpush1.msra.mxu0 0.0
    %394 = vmatprep.subr.mxu0 0.0
    %395 = vmatpush1.msra.mxu0 0.0
    %396 = vmatprep.subr.mxu0 0.0
    %397 = vmatpush1.msra.mxu0 0.0
    %398 = vmatprep.subr.mxu0 0.0
    %399 = vmatpush1.msra.mxu0 0.0
    %400 = vmatprep.subr.mxu0 0.0
    %401 = vmatpush1.msra.mxu0 0.0
    %402 = vmatprep.subr.mxu0 0.0
    %403 = vmatpush1.msra.mxu0 0.0
    %404 = vmatprep.subr.mxu0 0.0
    %405 = vmatpush1.msra.mxu0 0.0
    %406 = vmatprep.mubr.f32.mxu0 0.0
    %v407 = vand.u32 %v291, 4294901760
    %v408 = vsub.f32 %v291, %v407
    %v409 = vand.u32 %v408, 4294901760
    %v410 = vsub.f32 %v408, %v409
    %v411 = vand.u32 %v410, 4294901760
    %412 = vmatmul.mubr.f32.gmra.mrb[0].mxu0 %v411
    %v413 = vpop.f32.mrb[0].mxu0
    %v414 = vadd.f32 %v288, %v413
    %v415 = vpop.f32.mrb[0].mxu0
    %416 = vmatprep.mubr.f32.mxu0 0.0
    %v417 = vand.u32 %v294, 4294901760
    %v418 = vsub.f32 %v294, %v417
    %v419 = vand.u32 %v418, 4294901760
    %v420 = vsub.f32 %v418, %v419
    %v421 = vand.u32 %v420, 4294901760
    %422 = vmatmul.mubr.f32.gmra.mrb[0].mxu0 %v421
    %v423 = vpop.f32.mrb[0].mxu0
    %v424 = vadd.f32 %v288, %v423
    %v425 = vpop.f32.mrb[0].mxu0
    %426 = vmatprep.mubr.f32.mxu0 0.0
    %v427 = vand.u32 %v297, 4294901760
    %v428 = vsub.f32 %v297, %v427
    %v429 = vand.u32 %v428, 4294901760
    %v430 = vsub.f32 %v428, %v429
    %v431 = vand.u32 %v430, 4294901760
    %432 = vmatmul.mubr.f32.gmra.mrb[0].mxu0 %v431
    %v433 = vpop.f32.mrb[0].mxu0
    %v434 = vadd.f32 %v288, %v433
    %v435 = vpop.f32.mrb[0].mxu0
    %436 = vmatprep.mubr.f32.mxu0 0.0
    %v437 = vand.u32 %v300, 4294901760
    %v438 = vsub.f32 %v300, %v437
    %v439 = vand.u32 %v438, 4294901760
    %v440 = vsub.f32 %v438, %v439
    %v441 = vand.u32 %v440, 4294901760
    %442 = vmatmul.mubr.f32.gmra.mrb[0].mxu0 %v441
    %v443 = vpop.f32.mrb[0].mxu0
    %v444 = vadd.f32 %v288, %v443
    %v445 = vpop.f32.mrb[0].mxu0
    %446 = vmatprep.mubr.f32.mxu0 0.0
    %v447 = vand.u32 %v303, 4294901760
    %v448 = vsub.f32 %v303, %v447
    %v449 = vand.u32 %v448, 4294901760
    %v450 = vsub.f32 %v448, %v449
    %v451 = vand.u32 %v450, 4294901760
    %452 = vmatmul.mubr.f32.gmra.mrb[0].mxu0 %v451
    %v453 = vpop.f32.mrb[0].mxu0
    %v454 = vadd.f32 %v288, %v453
    %v455 = vpop.f32.mrb[0].mxu0
    %456 = vmatprep.mubr.f32.mxu0 0.0
    %v457 = vand.u32 %v306, 4294901760
    %v458 = vsub.f32 %v306, %v457
    %v459 = vand.u32 %v458, 4294901760
    %v460 = vsub.f32 %v458, %v459
    %v461 = vand.u32 %v460, 4294901760
    %462 = vmatmul.mubr.f32.gmra.mrb[0].mxu0 %v461
    %v463 = vpop.f32.mrb[0].mxu0
    %v464 = vadd.f32 %v288, %v463
    %v465 = vpop.f32.mrb[0].mxu0
    %466 = vmatprep.mubr.f32.mxu0 0.0
    %v467 = vand.u32 %v309, 4294901760
    %v468 = vsub.f32 %v309, %v467
    %v469 = vand.u32 %v468, 4294901760
    %v470 = vsub.f32 %v468, %v469
    %v471 = vand.u32 %v470, 4294901760
    %472 = vmatmul.mubr.f32.gmra.mrb[0].mxu0 %v471
    %v473 = vpop.f32.mrb[0].mxu0
    %v474 = vadd.f32 %v288, %v473
    %v475 = vpop.f32.mrb[0].mxu0
    %476 = vmatprep.mubr.f32.mxu0 0.0
    %v477 = vand.u32 %v312, 4294901760
    %v478 = vsub.f32 %v312, %v477
    %v479 = vand.u32 %v478, 4294901760
    %v480 = vsub.f32 %v478, %v479
    %v481 = vand.u32 %v480, 4294901760
    %482 = vmatmul.mubr.f32.gmra.mrb[0].mxu0 %v481
    %v483 = vpop.f32.mrb[0].mxu0
    %v484 = vadd.f32 %v288, %v483
    %v485 = vpop.f32.mrb[0].mxu0
    %486 = vmatprep.mubr.f32.mxu0 0.0
    %v487 = vand.u32 %v315, 4294901760
    %v488 = vsub.f32 %v315, %v487
    %v489 = vand.u32 %v488, 4294901760
    %v490 = vsub.f32 %v488, %v489
    %v491 = vand.u32 %v490, 4294901760
    %492 = vmatmul.mubr.f32.gmra.mrb[0].mxu0 %v491
    %v493 = vpop.f32.mrb[0].mxu0
    %v494 = vadd.f32 %v288, %v493
    %v495 = vpop.f32.mrb[0].mxu0
    %496 = vmatprep.mubr.f32.mxu0 0.0
    %v497 = vand.u32 %v318, 4294901760
    %v498 = vsub.f32 %v318, %v497
    %v499 = vand.u32 %v498, 4294901760
    %v500 = vsub.f32 %v498, %v499
    %v501 = vand.u32 %v500, 4294901760
    %502 = vmatmul.mubr.f32.gmra.mrb[0].mxu0 %v501
    %v503 = vpop.f32.mrb[0].mxu0
    %v504 = vadd.f32 %v288, %v503
    %v505 = vpop.f32.mrb[0].mxu0
    %506 = vmatprep.mubr.f32.mxu0 0.0
    %v507 = vand.u32 %v321, 4294901760
    %v508 = vsub.f32 %v321, %v507
    %v509 = vand.u32 %v508, 4294901760
    %v510 = vsub.f32 %v508, %v509
    %v511 = vand.u32 %v510, 4294901760
    %512 = vmatmul.mubr.f32.gmra.mrb[0].mxu0 %v511
    %v513 = vpop.f32.mrb[0].mxu0
    %v514 = vadd.f32 %v288, %v513
    %v515 = vpop.f32.mrb[0].mxu0
    %516 = vmatprep.mubr.f32.mxu0 0.0
    %v517 = vand.u32 %v324, 4294901760
    %v518 = vsub.f32 %v324, %v517
    %v519 = vand.u32 %v518, 4294901760
    %v520 = vsub.f32 %v518, %v519
    %v521 = vand.u32 %v520, 4294901760
    %522 = vmatmul.mubr.f32.gmra.mrb[0].mxu0 %v521
    %v523 = vpop.f32.mrb[0].mxu0
    %v524 = vadd.f32 %v288, %v523
    %v525 = vpop.f32.mrb[0].mxu0
    %526 = vmatprep.mubr.f32.mxu0 0.0
    %v527 = vand.u32 %v327, 4294901760
    %v528 = vsub.f32 %v327, %v527
    %v529 = vand.u32 %v528, 4294901760
    %v530 = vsub.f32 %v528, %v529
    %v531 = vand.u32 %v530, 4294901760
    %532 = vmatmul.mubr.f32.gmra.mrb[0].mxu0 %v531
    %v533 = vpop.f32.mrb[0].mxu0
    %v534 = vadd.f32 %v288, %v533
    %v535 = vpop.f32.mrb[0].mxu0
    %536 = vmatprep.mubr.f32.mxu0 0.0
    %v537 = vand.u32 %v330, 4294901760
    %v538 = vsub.f32 %v330, %v537
    %v539 = vand.u32 %v538, 4294901760
    %v540 = vsub.f32 %v538, %v539
    %v541 = vand.u32 %v540, 4294901760
    %542 = vmatmul.mubr.f32.gmra.mrb[0].mxu0 %v541
    %v543 = vpop.f32.mrb[0].mxu0
    %v544 = vadd.f32 %v288, %v543
    %v545 = vpop.f32.mrb[0].mxu0
    %546 = vmatprep.mubr.f32.mxu0 0.0
    %v547 = vand.u32 %v333, 4294901760
    %v548 = vsub.f32 %v333, %v547
    %v549 = vand.u32 %v548, 4294901760
    %v550 = vsub.f32 %v548, %v549
    %v551 = vand.u32 %v550, 4294901760
    %552 = vmatmul.mubr.f32.gmra.mrb[0].mxu0 %v551
    %v553 = vpop.f32.mrb[0].mxu0
    %v554 = vadd.f32 %v288, %v553
    %v555 = vpop.f32.mrb[0].mxu0
    %556 = vmatprep.mubr.f32.mxu0 0.0
    %v557 = vand.u32 %v336, 4294901760
    %v558 = vsub.f32 %v336, %v557
    %v559 = vand.u32 %v558, 4294901760
    %v560 = vsub.f32 %v558, %v559
    %v561 = vand.u32 %v560, 4294901760
    %562 = vmatmul.mubr.f32.gmra.mrb[0].mxu0 %v561
    %v563 = vpop.f32.mrb[0].mxu0
    %v564 = vadd.f32 %v288, %v563
    %v565 = vpop.f32.mrb[0].mxu0
    %566 = vdwg.mxu0
    %567 = vmatprep.subr.mxu0 0.0
    %v568 = vand.u32 %v279, 4294901760
    %v569 = vsub.f32 %v279, %v568
    %v570 = vand.u32 %v569, 4294901760
    %v571 = vsub.f32 %v569, %v570
    %v572 = vand.u32 %v571, 4294901760
    %573 = vmatpush1.msra.mxu0 %v572
    %574 = vmatprep.subr.mxu0 0.0
    %v575 = vand.u32 %v280, 4294901760
    %v576 = vsub.f32 %v280, %v575
    %v577 = vand.u32 %v576, 4294901760
    %v578 = vsub.f32 %v576, %v577
    %v579 = vand.u32 %v578, 4294901760
    %580 = vmatpush1.msra.mxu0 %v579
    %581 = vmatprep.subr.mxu0 0.0
    %v582 = vand.u32 %v281, 4294901760
    %v583 = vsub.f32 %v281, %v582
    %v584 = vand.u32 %v583, 4294901760
    %v585 = vsub.f32 %v583, %v584
    %v586 = vand.u32 %v585, 4294901760
    %587 = vmatpush1.msra.mxu0 %v586
    %588 = vmatprep.subr.mxu0 0.0
    %v589 = vand.u32 %v282, 4294901760
    %v590 = vsub.f32 %v282, %v589
    %v591 = vand.u32 %v590, 4294901760
    %v592 = vsub.f32 %v590, %v591
    %v593 = vand.u32 %v592, 4294901760
    %594 = vmatpush1.msra.mxu0 %v593
    %595 = vmatprep.subr.mxu0 0.0
    %596 = vmatpush1.msra.mxu0 0.0
    %597 = vmatprep.subr.mxu0 0.0
    %598 = vmatpush1.msra.mxu0 0.0
    %599 = vmatprep.subr.mxu0 0.0
    %600 = vmatpush1.msra.mxu0 0.0
    %601 = vmatprep.subr.mxu0 0.0
    %602 = vmatpush1.msra.mxu0 0.0
    %603 = vmatprep.subr.mxu0 0.0
    %604 = vmatpush1.msra.mxu0 0.0
    %605 = vmatprep.subr.mxu0 0.0
    %606 = vmatpush1.msra.mxu0 0.0
    %607 = vmatprep.subr.mxu0 0.0
    %608 = vmatpush1.msra.mxu0 0.0
    %609 = vmatprep.subr.mxu0 0.0
    %610 = vmatpush1.msra.mxu0 0.0
    %611 = vmatprep.subr.mxu0 0.0
    %612 = vmatpush1.msra.mxu0 0.0
    %613 = vmatprep.subr.mxu0 0.0
    %614 = vmatpush1.msra.mxu0 0.0
    %615 = vmatprep.subr.mxu0 0.0
    %616 = vmatpush1.msra.mxu0 0.0
    %617 = vmatprep.subr.mxu0 0.0
    %618 = vmatpush1.msra.mxu0 0.0
    %619 = vmatprep.subr.mxu0 0.0
    %620 = vmatpush1.msra.mxu0 0.0
    %621 = vmatprep.subr.mxu0 0.0
    %622 = vmatpush1.msra.mxu0 0.0
    %623 = vmatprep.subr.mxu0 0.0
    %624 = vmatpush1.msra.mxu0 0.0
    %625 = vmatprep.subr.mxu0 0.0
    %626 = vmatpush1.msra.mxu0 0.0
    %627 = vmatprep.subr.mxu0 0.0
    %628 = vmatpush1.msra.mxu0 0.0
    %629 = vmatprep.subr.mxu0 0.0
    %630 = vmatpush1.msra.mxu0 0.0
    %631 = vmatprep.subr.mxu0 0.0
    %632 = vmatpush1.msra.mxu0 0.0
    %633 = vmatprep.subr.mxu0 0.0
    %634 = vmatpush1.msra.mxu0 0.0
    %635 = vmatprep.subr.mxu0 0.0
    %636 = vmatpush1.msra.mxu0 0.0
    %637 = vmatprep.subr.mxu0 0.0
    %638 = vmatpush1.msra.mxu0 0.0
    %639 = vmatprep.subr.mxu0 0.0
    %640 = vmatpush1.msra.mxu0 0.0
    %641 = vmatprep.subr.mxu0 0.0
    %642 = vmatpush1.msra.mxu0 0.0
    %643 = vmatprep.subr.mxu0 0.0
    %644 = vmatpush1.msra.mxu0 0.0
    %645 = vmatprep.subr.mxu0 0.0
    %646 = vmatpush1.msra.mxu0 0.0
    %647 = vmatprep.subr.mxu0 0.0
    %648 = vmatpush1.msra.mxu0 0.0
    %649 = vmatprep.subr.mxu0 0.0
    %650 = vmatpush1.msra.mxu0 0.0
    %651 = vmatprep.mubr.f32.mxu0 0.0
    %v652 = vand.u32 %v291, 4294901760
    %653 = vmatmul.mubr.f32.gmra.mrb[0].mxu0 %v652
    %v654 = vpop.f32.mrb[0].mxu0
    %v655 = vadd.f32 %v414, %v654
    %v656 = vpop.f32.mrb[0].mxu0
    %657 = vmatprep.mubr.f32.mxu0 0.0
    %v658 = vand.u32 %v294, 4294901760
    %659 = vmatmul.mubr.f32.gmra.mrb[0].mxu0 %v658
    %v660 = vpop.f32.mrb[0].mxu0
    %v661 = vadd.f32 %v424, %v660
    %v662 = vpop.f32.mrb[0].mxu0
    %663 = vmatprep.mubr.f32.mxu0 0.0
    %v664 = vand.u32 %v297, 4294901760
    %665 = vmatmul.mubr.f32.gmra.mrb[0].mxu0 %v664
    %v666 = vpop.f32.mrb[0].mxu0
    %v667 = vadd.f32 %v434, %v666
    %v668 = vpop.f32.mrb[0].mxu0
    %669 = vmatprep.mubr.f32.mxu0 0.0
    %v670 = vand.u32 %v300, 4294901760
    %671 = vmatmul.mubr.f32.gmra.mrb[0].mxu0 %v670
    %v672 = vpop.f32.mrb[0].mxu0
    %v673 = vadd.f32 %v444, %v672
    %v674 = vpop.f32.mrb[0].mxu0
    %675 = vmatprep.mubr.f32.mxu0 0.0
    %v676 = vand.u32 %v303, 4294901760
    %677 = vmatmul.mubr.f32.gmra.mrb[0].mxu0 %v676
    %v678 = vpop.f32.mrb[0].mxu0
    %v679 = vadd.f32 %v454, %v678
    %v680 = vpop.f32.mrb[0].mxu0
    %681 = vmatprep.mubr.f32.mxu0 0.0
    %v682 = vand.u32 %v306, 4294901760
    %683 = vmatmul.mubr.f32.gmra.mrb[0].mxu0 %v682
    %v684 = vpop.f32.mrb[0].mxu0
    %v685 = vadd.f32 %v464, %v684
    %v686 = vpop.f32.mrb[0].mxu0
    %687 = vmatprep.mubr.f32.mxu0 0.0
    %v688 = vand.u32 %v309, 4294901760
    %689 = vmatmul.mubr.f32.gmra.mrb[0].mxu0 %v688
    %v690 = vpop.f32.mrb[0].mxu0
    %v691 = vadd.f32 %v474, %v690
    %v692 = vpop.f32.mrb[0].mxu0
    %693 = vmatprep.mubr.f32.mxu0 0.0
    %v694 = vand.u32 %v312, 4294901760
    %695 = vmatmul.mubr.f32.gmra.mrb[0].mxu0 %v694
    %v696 = vpop.f32.mrb[0].mxu0
    %v697 = vadd.f32 %v484, %v696
    %v698 = vpop.f32.mrb[0].mxu0
    %699 = vmatprep.mubr.f32.mxu0 0.0
    %v700 = vand.u32 %v315, 4294901760
    %701 = vmatmul.mubr.f32.gmra.mrb[0].mxu0 %v700
    %v702 = vpop.f32.mrb[0].mxu0
    %v703 = vadd.f32 %v494, %v702
    %v704 = vpop.f32.mrb[0].mxu0
    %705 = vmatprep.mubr.f32.mxu0 0.0
    %v706 = vand.u32 %v318, 4294901760
    %707 = vmatmul.mubr.f32.gmra.mrb[0].mxu0 %v706
    %v708 = vpop.f32.mrb[0].mxu0
    %v709 = vadd.f32 %v504, %v708
    %v710 = vpop.f32.mrb[0].mxu0
    %711 = vmatprep.mubr.f32.mxu0 0.0
    %v712 = vand.u32 %v321, 4294901760
    %713 = vmatmul.mubr.f32.gmra.mrb[0].mxu0 %v712
    %v714 = vpop.f32.mrb[0].mxu0
    %v715 = vadd.f32 %v514, %v714
    %v716 = vpop.f32.mrb[0].mxu0
    %717 = vmatprep.mubr.f32.mxu0 0.0
    %v718 = vand.u32 %v324, 4294901760
    %719 = vmatmul.mubr.f32.gmra.mrb[0].mxu0 %v718
    %v720 = vpop.f32.mrb[0].mxu0
    %v721 = vadd.f32 %v524, %v720
    %v722 = vpop.f32.mrb[0].mxu0
    %723 = vmatprep.mubr.f32.mxu0 0.0
    %v724 = vand.u32 %v327, 4294901760
    %725 = vmatmul.mubr.f32.gmra.mrb[0].mxu0 %v724
    %v726 = vpop.f32.mrb[0].mxu0
    %v727 = vadd.f32 %v534, %v726
    %v728 = vpop.f32.mrb[0].mxu0
    %729 = vmatprep.mubr.f32.mxu0 0.0
    %v730 = vand.u32 %v330, 4294901760
    %731 = vmatmul.mubr.f32.gmra.mrb[0].mxu0 %v730
    %v732 = vpop.f32.mrb[0].mxu0
    %v733 = vadd.f32 %v544, %v732
    %v734 = vpop.f32.mrb[0].mxu0
    %735 = vmatprep.mubr.f32.mxu0 0.0
    %v736 = vand.u32 %v333, 4294901760
    %737 = vmatmul.mubr.f32.gmra.mrb[0].mxu0 %v736
    %v738 = vpop.f32.mrb[0].mxu0
    %v739 = vadd.f32 %v554, %v738
    %v740 = vpop.f32.mrb[0].mxu0
    %741 = vmatprep.mubr.f32.mxu0 0.0
    %v742 = vand.u32 %v336, 4294901760
    %743 = vmatmul.mubr.f32.gmra.mrb[0].mxu0 %v742
    %v744 = vpop.f32.mrb[0].mxu0
    %v745 = vadd.f32 %v564, %v744
    %v746 = vpop.f32.mrb[0].mxu0
    %747 = vdwg.mxu0
    %748 = vmatprep.subr.mxu0 0.0
    %v749 = vand.u32 %v279, 4294901760
    %v750 = vsub.f32 %v279, %v749
    %751 = vmatpush1.msra.mxu0 %v750
    %752 = vmatprep.subr.mxu0 0.0
    %v753 = vand.u32 %v280, 4294901760
    %v754 = vsub.f32 %v280, %v753
    %755 = vmatpush1.msra.mxu0 %v754
    %756 = vmatprep.subr.mxu0 0.0
    %v757 = vand.u32 %v281, 4294901760
    %v758 = vsub.f32 %v281, %v757
    %759 = vmatpush1.msra.mxu0 %v758
    %760 = vmatprep.subr.mxu0 0.0
    %v761 = vand.u32 %v282, 4294901760
    %v762 = vsub.f32 %v282, %v761
    %763 = vmatpush1.msra.mxu0 %v762
    %764 = vmatprep.subr.mxu0 0.0
    %765 = vmatpush1.msra.mxu0 0.0
    %766 = vmatprep.subr.mxu0 0.0
    %767 = vmatpush1.msra.mxu0 0.0
    %768 = vmatprep.subr.mxu0 0.0
    %769 = vmatpush1.msra.mxu0 0.0
    %770 = vmatprep.subr.mxu0 0.0
    %771 = vmatpush1.msra.mxu0 0.0
    %772 = vmatprep.subr.mxu0 0.0
    %773 = vmatpush1.msra.mxu0 0.0
    %774 = vmatprep.subr.mxu0 0.0
    %775 = vmatpush1.msra.mxu0 0.0
    %776 = vmatprep.subr.mxu0 0.0
    %777 = vmatpush1.msra.mxu0 0.0
    %778 = vmatprep.subr.mxu0 0.0
    %779 = vmatpush1.msra.mxu0 0.0
    %780 = vmatprep.subr.mxu0 0.0
    %781 = vmatpush1.msra.mxu0 0.0
    %782 = vmatprep.subr.mxu0 0.0
    %783 = vmatpush1.msra.mxu0 0.0
    %784 = vmatprep.subr.mxu0 0.0
    %785 = vmatpush1.msra.mxu0 0.0
    %786 = vmatprep.subr.mxu0 0.0
    %787 = vmatpush1.msra.mxu0 0.0
    %788 = vmatprep.subr.mxu0 0.0
    %789 = vmatpush1.msra.mxu0 0.0
    %790 = vmatprep.subr.mxu0 0.0
    %791 = vmatpush1.msra.mxu0 0.0
    %792 = vmatprep.subr.mxu0 0.0
    %793 = vmatpush1.msra.mxu0 0.0
    %794 = vmatprep.subr.mxu0 0.0
    %795 = vmatpush1.msra.mxu0 0.0
    %796 = vmatprep.subr.mxu0 0.0
    %797 = vmatpush1.msra.mxu0 0.0
    %798 = vmatprep.subr.mxu0 0.0
    %799 = vmatpush1.msra.mxu0 0.0
    %800 = vmatprep.subr.mxu0 0.0
    %801 = vmatpush1.msra.mxu0 0.0
    %802 = vmatprep.subr.mxu0 0.0
    %803 = vmatpush1.msra.mxu0 0.0
    %804 = vmatprep.subr.mxu0 0.0
    %805 = vmatpush1.msra.mxu0 0.0
    %806 = vmatprep.subr.mxu0 0.0
    %807 = vmatpush1.msra.mxu0 0.0
    %808 = vmatprep.subr.mxu0 0.0
    %809 = vmatpush1.msra.mxu0 0.0
    %810 = vmatprep.subr.mxu0 0.0
    %811 = vmatpush1.msra.mxu0 0.0
    %812 = vmatprep.subr.mxu0 0.0
    %813 = vmatpush1.msra.mxu0 0.0
    %814 = vmatprep.subr.mxu0 0.0
    %815 = vmatpush1.msra.mxu0 0.0
    %816 = vmatprep.subr.mxu0 0.0
    %817 = vmatpush1.msra.mxu0 0.0
    %818 = vmatprep.subr.mxu0 0.0
    %819 = vmatpush1.msra.mxu0 0.0
    %820 = vmatprep.mubr.f32.mxu0 0.0
    %v821 = vand.u32 %v291, 4294901760
    %v822 = vsub.f32 %v291, %v821
    %823 = vmatmul.mubr.f32.gmra.mrb[0].mxu0 %v822
    %v824 = vpop.f32.mrb[0].mxu0
    %v825 = vadd.f32 %v655, %v824
    %v826 = vpop.f32.mrb[0].mxu0
    %827 = vmatprep.mubr.f32.mxu0 0.0
    %v828 = vand.u32 %v294, 4294901760
    %v829 = vsub.f32 %v294, %v828
    %830 = vmatmul.mubr.f32.gmra.mrb[0].mxu0 %v829
    %v831 = vpop.f32.mrb[0].mxu0
    %v832 = vadd.f32 %v661, %v831
    %v833 = vpop.f32.mrb[0].mxu0
    %834 = vmatprep.mubr.f32.mxu0 0.0
    %v835 = vand.u32 %v297, 4294901760
    %v836 = vsub.f32 %v297, %v835
    %837 = vmatmul.mubr.f32.gmra.mrb[0].mxu0 %v836
    %v838 = vpop.f32.mrb[0].mxu0
    %v839 = vadd.f32 %v667, %v838
    %v840 = vpop.f32.mrb[0].mxu0
    %841 = vmatprep.mubr.f32.mxu0 0.0
    %v842 = vand.u32 %v300, 4294901760
    %v843 = vsub.f32 %v300, %v842
    %844 = vmatmul.mubr.f32.gmra.mrb[0].mxu0 %v843
    %v845 = vpop.f32.mrb[0].mxu0
    %v846 = vadd.f32 %v673, %v845
    %v847 = vpop.f32.mrb[0].mxu0
    %848 = vmatprep.mubr.f32.mxu0 0.0
    %v849 = vand.u32 %v303, 4294901760
    %v850 = vsub.f32 %v303, %v849
    %851 = vmatmul.mubr.f32.gmra.mrb[0].mxu0 %v850
    %v852 = vpop.f32.mrb[0].mxu0
    %v853 = vadd.f32 %v679, %v852
    %v854 = vpop.f32.mrb[0].mxu0
    %855 = vmatprep.mubr.f32.mxu0 0.0
    %v856 = vand.u32 %v306, 4294901760
    %v857 = vsub.f32 %v306, %v856
    %858 = vmatmul.mubr.f32.gmra.mrb[0].mxu0 %v857
    %v859 = vpop.f32.mrb[0].mxu0
    %v860 = vadd.f32 %v685, %v859
    %v861 = vpop.f32.mrb[0].mxu0
    %862 = vmatprep.mubr.f32.mxu0 0.0
    %v863 = vand.u32 %v309, 4294901760
    %v864 = vsub.f32 %v309, %v863
    %865 = vmatmul.mubr.f32.gmra.mrb[0].mxu0 %v864
    %v866 = vpop.f32.mrb[0].mxu0
    %v867 = vadd.f32 %v691, %v866
    %v868 = vpop.f32.mrb[0].mxu0
    %869 = vmatprep.mubr.f32.mxu0 0.0
    %v870 = vand.u32 %v312, 4294901760
    %v871 = vsub.f32 %v312, %v870
    %872 = vmatmul.mubr.f32.gmra.mrb[0].mxu0 %v871
    %v873 = vpop.f32.mrb[0].mxu0
    %v874 = vadd.f32 %v697, %v873
    %v875 = vpop.f32.mrb[0].mxu0
    %876 = vmatprep.mubr.f32.mxu0 0.0
    %v877 = vand.u32 %v315, 4294901760
    %v878 = vsub.f32 %v315, %v877
    %879 = vmatmul.mubr.f32.gmra.mrb[0].mxu0 %v878
    %v880 = vpop.f32.mrb[0].mxu0
    %v881 = vadd.f32 %v703, %v880
    %v882 = vpop.f32.mrb[0].mxu0
    %883 = vmatprep.mubr.f32.mxu0 0.0
    %v884 = vand.u32 %v318, 4294901760
    %v885 = vsub.f32 %v318, %v884
    %886 = vmatmul.mubr.f32.gmra.mrb[0].mxu0 %v885
    %v887 = vpop.f32.mrb[0].mxu0
    %v888 = vadd.f32 %v709, %v887
    %v889 = vpop.f32.mrb[0].mxu0
    %890 = vmatprep.mubr.f32.mxu0 0.0
    %v891 = vand.u32 %v321, 4294901760
    %v892 = vsub.f32 %v321, %v891
    %893 = vmatmul.mubr.f32.gmra.mrb[0].mxu0 %v892
    %v894 = vpop.f32.mrb[0].mxu0
    %v895 = vadd.f32 %v715, %v894
    %v896 = vpop.f32.mrb[0].mxu0
    %897 = vmatprep.mubr.f32.mxu0 0.0
    %v898 = vand.u32 %v324, 4294901760
    %v899 = vsub.f32 %v324, %v898
    %900 = vmatmul.mubr.f32.gmra.mrb[0].mxu0 %v899
    %v901 = vpop.f32.mrb[0].mxu0
    %v902 = vadd.f32 %v721, %v901
    %v903 = vpop.f32.mrb[0].mxu0
    %904 = vmatprep.mubr.f32.mxu0 0.0
    %v905 = vand.u32 %v327, 4294901760
    %v906 = vsub.f32 %v327, %v905
    %907 = vmatmul.mubr.f32.gmra.mrb[0].mxu0 %v906
    %v908 = vpop.f32.mrb[0].mxu0
    %v909 = vadd.f32 %v727, %v908
    %v910 = vpop.f32.mrb[0].mxu0
    %911 = vmatprep.mubr.f32.mxu0 0.0
    %v912 = vand.u32 %v330, 4294901760
    %v913 = vsub.f32 %v330, %v912
    %914 = vmatmul.mubr.f32.gmra.mrb[0].mxu0 %v913
    %v915 = vpop.f32.mrb[0].mxu0
    %v916 = vadd.f32 %v733, %v915
    %v917 = vpop.f32.mrb[0].mxu0
    %918 = vmatprep.mubr.f32.mxu0 0.0
    %v919 = vand.u32 %v333, 4294901760
    %v920 = vsub.f32 %v333, %v919
    %921 = vmatmul.mubr.f32.gmra.mrb[0].mxu0 %v920
    %v922 = vpop.f32.mrb[0].mxu0
    %v923 = vadd.f32 %v739, %v922
    %v924 = vpop.f32.mrb[0].mxu0
    %925 = vmatprep.mubr.f32.mxu0 0.0
    %v926 = vand.u32 %v336, 4294901760
    %v927 = vsub.f32 %v336, %v926
    %928 = vmatmul.mubr.f32.gmra.mrb[0].mxu0 %v927
    %v929 = vpop.f32.mrb[0].mxu0
    %v930 = vadd.f32 %v745, %v929
    %v931 = vpop.f32.mrb[0].mxu0
    %932 = vdwg.mxu0
    %933 = vmatprep.subr.mxu0 0.0
    %v934 = vand.u32 %v279, 4294901760
    %935 = vmatpush1.msra.mxu0 %v934
    %936 = vmatprep.subr.mxu0 0.0
    %v937 = vand.u32 %v280, 4294901760
    %938 = vmatpush1.msra.mxu0 %v937
    %939 = vmatprep.subr.mxu0 0.0
    %v940 = vand.u32 %v281, 4294901760
    %941 = vmatpush1.msra.mxu0 %v940
    %942 = vmatprep.subr.mxu0 0.0
    %v943 = vand.u32 %v282, 4294901760
    %944 = vmatpush1.msra.mxu0 %v943
    %945 = vmatprep.subr.mxu0 0.0
    %946 = vmatpush1.msra.mxu0 0.0
    %947 = vmatprep.subr.mxu0 0.0
    %948 = vmatpush1.msra.mxu0 0.0
    %949 = vmatprep.subr.mxu0 0.0
    %950 = vmatpush1.msra.mxu0 0.0
    %951 = vmatprep.subr.mxu0 0.0
    %952 = vmatpush1.msra.mxu0 0.0
    %953 = vmatprep.subr.mxu0 0.0
    %954 = vmatpush1.msra.mxu0 0.0
    %955 = vmatprep.subr.mxu0 0.0
    %956 = vmatpush1.msra.mxu0 0.0
    %957 = vmatprep.subr.mxu0 0.0
    %958 = vmatpush1.msra.mxu0 0.0
    %959 = vmatprep.subr.mxu0 0.0
    %960 = vmatpush1.msra.mxu0 0.0
    %961 = vmatprep.subr.mxu0 0.0
    %962 = vmatpush1.msra.mxu0 0.0
    %963 = vmatprep.subr.mxu0 0.0
    %964 = vmatpush1.msra.mxu0 0.0
    %965 = vmatprep.subr.mxu0 0.0
    %966 = vmatpush1.msra.mxu0 0.0
    %967 = vmatprep.subr.mxu0 0.0
    %968 = vmatpush1.msra.mxu0 0.0
    %969 = vmatprep.subr.mxu0 0.0
    %970 = vmatpush1.msra.mxu0 0.0
    %971 = vmatprep.subr.mxu0 0.0
    %972 = vmatpush1.msra.mxu0 0.0
    %973 = vmatprep.subr.mxu0 0.0
    %974 = vmatpush1.msra.mxu0 0.0
    %975 = vmatprep.subr.mxu0 0.0
    %976 = vmatpush1.msra.mxu0 0.0
    %977 = vmatprep.subr.mxu0 0.0
    %978 = vmatpush1.msra.mxu0 0.0
    %979 = vmatprep.subr.mxu0 0.0
    %980 = vmatpush1.msra.mxu0 0.0
    %981 = vmatprep.subr.mxu0 0.0
    %982 = vmatpush1.msra.mxu0 0.0
    %983 = vmatprep.subr.mxu0 0.0
    %984 = vmatpush1.msra.mxu0 0.0
    %985 = vmatprep.subr.mxu0 0.0
    %986 = vmatpush1.msra.mxu0 0.0
    %987 = vmatprep.subr.mxu0 0.0
    %988 = vmatpush1.msra.mxu0 0.0
    %989 = vmatprep.subr.mxu0 0.0
    %990 = vmatpush1.msra.mxu0 0.0
    %991 = vmatprep.subr.mxu0 0.0
    %992 = vmatpush1.msra.mxu0 0.0
    %993 = vmatprep.subr.mxu0 0.0
    %994 = vmatpush1.msra.mxu0 0.0
    %995 = vmatprep.subr.mxu0 0.0
    %996 = vmatpush1.msra.mxu0 0.0
    %997 = vmatprep.subr.mxu0 0.0
    %998 = vmatpush1.msra.mxu0 0.0
    %999 = vmatprep.subr.mxu0 0.0
    %1000 = vmatpush1.msra.mxu0 0.0
    %1001 = vmatprep.mubr.f32.mxu0 0.0
    %v1002 = vand.u32 %v291, 4294901760
    %v1003 = vsub.f32 %v291, %v1002
    %v1004 = vand.u32 %v1003, 4294901760
    %1005 = vmatmul.mubr.f32.gmra.mrb[0].mxu0 %v1004
    %v1006 = vpop.f32.mrb[0].mxu0
    %v1007 = vadd.f32 %v825, %v1006
    %v1008 = vpop.f32.mrb[0].mxu0
    %1009 = vmatprep.mubr.f32.mxu0 0.0
    %v1010 = vand.u32 %v294, 4294901760
    %v1011 = vsub.f32 %v294, %v1010
    %v1012 = vand.u32 %v1011, 4294901760
    %1013 = vmatmul.mubr.f32.gmra.mrb[0].mxu0 %v1012
    %v1014 = vpop.f32.mrb[0].mxu0
    %v1015 = vadd.f32 %v832, %v1014
    %v1016 = vpop.f32.mrb[0].mxu0
    %1017 = vmatprep.mubr.f32.mxu0 0.0
    %v1018 = vand.u32 %v297, 4294901760
    %v1019 = vsub.f32 %v297, %v1018
    %v1020 = vand.u32 %v1019, 4294901760
    %1021 = vmatmul.mubr.f32.gmra.mrb[0].mxu0 %v1020
    %v1022 = vpop.f32.mrb[0].mxu0
    %v1023 = vadd.f32 %v839, %v1022
    %v1024 = vpop.f32.mrb[0].mxu0
    %1025 = vmatprep.mubr.f32.mxu0 0.0
    %v1026 = vand.u32 %v300, 4294901760
    %v1027 = vsub.f32 %v300, %v1026
    %v1028 = vand.u32 %v1027, 4294901760
    %1029 = vmatmul.mubr.f32.gmra.mrb[0].mxu0 %v1028
    %v1030 = vpop.f32.mrb[0].mxu0
    %v1031 = vadd.f32 %v846, %v1030
    %v1032 = vpop.f32.mrb[0].mxu0
    %1033 = vmatprep.mubr.f32.mxu0 0.0
    %v1034 = vand.u32 %v303, 4294901760
    %v1035 = vsub.f32 %v303, %v1034
    %v1036 = vand.u32 %v1035, 4294901760
    %1037 = vmatmul.mubr.f32.gmra.mrb[0].mxu0 %v1036
    %v1038 = vpop.f32.mrb[0].mxu0
    %v1039 = vadd.f32 %v853, %v1038
    %v1040 = vpop.f32.mrb[0].mxu0
    %1041 = vmatprep.mubr.f32.mxu0 0.0
    %v1042 = vand.u32 %v306, 4294901760
    %v1043 = vsub.f32 %v306, %v1042
    %v1044 = vand.u32 %v1043, 4294901760
    %1045 = vmatmul.mubr.f32.gmra.mrb[0].mxu0 %v1044
    %v1046 = vpop.f32.mrb[0].mxu0
    %v1047 = vadd.f32 %v860, %v1046
    %v1048 = vpop.f32.mrb[0].mxu0
    %1049 = vmatprep.mubr.f32.mxu0 0.0
    %v1050 = vand.u32 %v309, 4294901760
    %v1051 = vsub.f32 %v309, %v1050
    %v1052 = vand.u32 %v1051, 4294901760
    %1053 = vmatmul.mubr.f32.gmra.mrb[0].mxu0 %v1052
    %v1054 = vpop.f32.mrb[0].mxu0
    %v1055 = vadd.f32 %v867, %v1054
    %v1056 = vpop.f32.mrb[0].mxu0
    %1057 = vmatprep.mubr.f32.mxu0 0.0
    %v1058 = vand.u32 %v312, 4294901760
    %v1059 = vsub.f32 %v312, %v1058
    %v1060 = vand.u32 %v1059, 4294901760
    %1061 = vmatmul.mubr.f32.gmra.mrb[0].mxu0 %v1060
    %v1062 = vpop.f32.mrb[0].mxu0
    %v1063 = vadd.f32 %v874, %v1062
    %v1064 = vpop.f32.mrb[0].mxu0
    %1065 = vmatprep.mubr.f32.mxu0 0.0
    %v1066 = vand.u32 %v315, 4294901760
    %v1067 = vsub.f32 %v315, %v1066
    %v1068 = vand.u32 %v1067, 4294901760
    %1069 = vmatmul.mubr.f32.gmra.mrb[0].mxu0 %v1068
    %v1070 = vpop.f32.mrb[0].mxu0
    %v1071 = vadd.f32 %v881, %v1070
    %v1072 = vpop.f32.mrb[0].mxu0
    %1073 = vmatprep.mubr.f32.mxu0 0.0
    %v1074 = vand.u32 %v318, 4294901760
    %v1075 = vsub.f32 %v318, %v1074
    %v1076 = vand.u32 %v1075, 4294901760
    %1077 = vmatmul.mubr.f32.gmra.mrb[0].mxu0 %v1076
    %v1078 = vpop.f32.mrb[0].mxu0
    %v1079 = vadd.f32 %v888, %v1078
    %v1080 = vpop.f32.mrb[0].mxu0
    %1081 = vmatprep.mubr.f32.mxu0 0.0
    %v1082 = vand.u32 %v321, 4294901760
    %v1083 = vsub.f32 %v321, %v1082
    %v1084 = vand.u32 %v1083, 4294901760
    %1085 = vmatmul.mubr.f32.gmra.mrb[0].mxu0 %v1084
    %v1086 = vpop.f32.mrb[0].mxu0
    %v1087 = vadd.f32 %v895, %v1086
    %v1088 = vpop.f32.mrb[0].mxu0
    %1089 = vmatprep.mubr.f32.mxu0 0.0
    %v1090 = vand.u32 %v324, 4294901760
    %v1091 = vsub.f32 %v324, %v1090
    %v1092 = vand.u32 %v1091, 4294901760
    %1093 = vmatmul.mubr.f32.gmra.mrb[0].mxu0 %v1092
    %v1094 = vpop.f32.mrb[0].mxu0
    %v1095 = vadd.f32 %v902, %v1094
    %v1096 = vpop.f32.mrb[0].mxu0
    %1097 = vmatprep.mubr.f32.mxu0 0.0
    %v1098 = vand.u32 %v327, 4294901760
    %v1099 = vsub.f32 %v327, %v1098
    %v1100 = vand.u32 %v1099, 4294901760
    %1101 = vmatmul.mubr.f32.gmra.mrb[0].mxu0 %v1100
    %v1102 = vpop.f32.mrb[0].mxu0
    %v1103 = vadd.f32 %v909, %v1102
    %v1104 = vpop.f32.mrb[0].mxu0
    %1105 = vmatprep.mubr.f32.mxu0 0.0
    %v1106 = vand.u32 %v330, 4294901760
    %v1107 = vsub.f32 %v330, %v1106
    %v1108 = vand.u32 %v1107, 4294901760
    %1109 = vmatmul.mubr.f32.gmra.mrb[0].mxu0 %v1108
    %v1110 = vpop.f32.mrb[0].mxu0
    %v1111 = vadd.f32 %v916, %v1110
    %v1112 = vpop.f32.mrb[0].mxu0
    %1113 = vmatprep.mubr.f32.mxu0 0.0
    %v1114 = vand.u32 %v333, 4294901760
    %v1115 = vsub.f32 %v333, %v1114
    %v1116 = vand.u32 %v1115, 4294901760
    %1117 = vmatmul.mubr.f32.gmra.mrb[0].mxu0 %v1116
    %v1118 = vpop.f32.mrb[0].mxu0
    %v1119 = vadd.f32 %v923, %v1118
    %v1120 = vpop.f32.mrb[0].mxu0
    %1121 = vmatprep.mubr.f32.mxu0 0.0
    %v1122 = vand.u32 %v336, 4294901760
    %v1123 = vsub.f32 %v336, %v1122
    %v1124 = vand.u32 %v1123, 4294901760
    %1125 = vmatmul.mubr.f32.gmra.mrb[0].mxu0 %v1124
    %v1126 = vpop.f32.mrb[0].mxu0
    %v1127 = vadd.f32 %v930, %v1126
    %v1128 = vpop.f32.mrb[0].mxu0
    %1129 = vdwg.mxu0
    %1130 = vmatprep.subr.mxu0 0.0
    %v1131 = vand.u32 %v279, 4294901760
    %v1132 = vsub.f32 %v279, %v1131
    %v1133 = vand.u32 %v1132, 4294901760
    %1134 = vmatpush1.msra.mxu0 %v1133
    %1135 = vmatprep.subr.mxu0 0.0
    %v1136 = vand.u32 %v280, 4294901760
    %v1137 = vsub.f32 %v280, %v1136
    %v1138 = vand.u32 %v1137, 4294901760
    %1139 = vmatpush1.msra.mxu0 %v1138
    %1140 = vmatprep.subr.mxu0 0.0
    %v1141 = vand.u32 %v281, 4294901760
    %v1142 = vsub.f32 %v281, %v1141
    %v1143 = vand.u32 %v1142, 4294901760
    %1144 = vmatpush1.msra.mxu0 %v1143
    %1145 = vmatprep.subr.mxu0 0.0
    %v1146 = vand.u32 %v282, 4294901760
    %v1147 = vsub.f32 %v282, %v1146
    %v1148 = vand.u32 %v1147, 4294901760
    %1149 = vmatpush1.msra.mxu0 %v1148
    %1150 = vmatprep.subr.mxu0 0.0
    %1151 = vmatpush1.msra.mxu0 0.0
    %1152 = vmatprep.subr.mxu0 0.0
    %1153 = vmatpush1.msra.mxu0 0.0
    %1154 = vmatprep.subr.mxu0 0.0
    %1155 = vmatpush1.msra.mxu0 0.0
    %1156 = vmatprep.subr.mxu0 0.0
    %1157 = vmatpush1.msra.mxu0 0.0
    %1158 = vmatprep.subr.mxu0 0.0
    %1159 = vmatpush1.msra.mxu0 0.0
    %1160 = vmatprep.subr.mxu0 0.0
    %1161 = vmatpush1.msra.mxu0 0.0
    %1162 = vmatprep.subr.mxu0 0.0
    %1163 = vmatpush1.msra.mxu0 0.0
    %1164 = vmatprep.subr.mxu0 0.0
    %1165 = vmatpush1.msra.mxu0 0.0
    %1166 = vmatprep.subr.mxu0 0.0
    %1167 = vmatpush1.msra.mxu0 0.0
    %1168 = vmatprep.subr.mxu0 0.0
    %1169 = vmatpush1.msra.mxu0 0.0
    %1170 = vmatprep.subr.mxu0 0.0
    %1171 = vmatpush1.msra.mxu0 0.0
    %1172 = vmatprep.subr.mxu0 0.0
    %1173 = vmatpush1.msra.mxu0 0.0
    %1174 = vmatprep.subr.mxu0 0.0
    %1175 = vmatpush1.msra.mxu0 0.0
    %1176 = vmatprep.subr.mxu0 0.0
    %1177 = vmatpush1.msra.mxu0 0.0
    %1178 = vmatprep.subr.mxu0 0.0
    %1179 = vmatpush1.msra.mxu0 0.0
    %1180 = vmatprep.subr.mxu0 0.0
    %1181 = vmatpush1.msra.mxu0 0.0
    %1182 = vmatprep.subr.mxu0 0.0
    %1183 = vmatpush1.msra.mxu0 0.0
    %1184 = vmatprep.subr.mxu0 0.0
    %1185 = vmatpush1.msra.mxu0 0.0
    %1186 = vmatprep.subr.mxu0 0.0
    %1187 = vmatpush1.msra.mxu0 0.0
    %1188 = vmatprep.subr.mxu0 0.0
    %1189 = vmatpush1.msra.mxu0 0.0
    %1190 = vmatprep.subr.mxu0 0.0
    %1191 = vmatpush1.msra.mxu0 0.0
    %1192 = vmatprep.subr.mxu0 0.0
    %1193 = vmatpush1.msra.mxu0 0.0
    %1194 = vmatprep.subr.mxu0 0.0
    %1195 = vmatpush1.msra.mxu0 0.0
    %1196 = vmatprep.subr.mxu0 0.0
    %1197 = vmatpush1.msra.mxu0 0.0
    %1198 = vmatprep.subr.mxu0 0.0
    %1199 = vmatpush1.msra.mxu0 0.0
    %1200 = vmatprep.subr.mxu0 0.0
    %1201 = vmatpush1.msra.mxu0 0.0
    %1202 = vmatprep.subr.mxu0 0.0
    %1203 = vmatpush1.msra.mxu0 0.0
    %1204 = vmatprep.subr.mxu0 0.0
    %1205 = vmatpush1.msra.mxu0 0.0
    %1206 = vmatprep.mubr.f32.mxu0 0.0
    %v1207 = vand.u32 %v291, 4294901760
    %1208 = vmatmul.mubr.f32.gmra.mrb[0].mxu0 %v1207
    %v1209 = vpop.f32.mrb[0].mxu0
    %v1210 = vadd.f32 %v1007, %v1209
    %v1211 = vpop.f32.mrb[0].mxu0
    %1212 = vmatprep.mubr.f32.mxu0 0.0
    %v1213 = vand.u32 %v294, 4294901760
    %1214 = vmatmul.mubr.f32.gmra.mrb[0].mxu0 %v1213
    %v1215 = vpop.f32.mrb[0].mxu0
    %v1216 = vadd.f32 %v1015, %v1215
    %v1217 = vpop.f32.mrb[0].mxu0
    %1218 = vmatprep.mubr.f32.mxu0 0.0
    %v1219 = vand.u32 %v297, 4294901760
    %1220 = vmatmul.mubr.f32.gmra.mrb[0].mxu0 %v1219
    %v1221 = vpop.f32.mrb[0].mxu0
    %v1222 = vadd.f32 %v1023, %v1221
    %v1223 = vpop.f32.mrb[0].mxu0
    %1224 = vmatprep.mubr.f32.mxu0 0.0
    %v1225 = vand.u32 %v300, 4294901760
    %1226 = vmatmul.mubr.f32.gmra.mrb[0].mxu0 %v1225
    %v1227 = vpop.f32.mrb[0].mxu0
    %v1228 = vadd.f32 %v1031, %v1227
    %v1229 = vpop.f32.mrb[0].mxu0
    %1230 = vmatprep.mubr.f32.mxu0 0.0
    %v1231 = vand.u32 %v303, 4294901760
    %1232 = vmatmul.mubr.f32.gmra.mrb[0].mxu0 %v1231
    %v1233 = vpop.f32.mrb[0].mxu0
    %v1234 = vadd.f32 %v1039, %v1233
    %v1235 = vpop.f32.mrb[0].mxu0
    %1236 = vmatprep.mubr.f32.mxu0 0.0
    %v1237 = vand.u32 %v306, 4294901760
    %1238 = vmatmul.mubr.f32.gmra.mrb[0].mxu0 %v1237
    %v1239 = vpop.f32.mrb[0].mxu0
    %v1240 = vadd.f32 %v1047, %v1239
    %v1241 = vpop.f32.mrb[0].mxu0
    %1242 = vmatprep.mubr.f32.mxu0 0.0
    %v1243 = vand.u32 %v309, 4294901760
    %1244 = vmatmul.mubr.f32.gmra.mrb[0].mxu0 %v1243
    %v1245 = vpop.f32.mrb[0].mxu0
    %v1246 = vadd.f32 %v1055, %v1245
    %v1247 = vpop.f32.mrb[0].mxu0
    %1248 = vmatprep.mubr.f32.mxu0 0.0
    %v1249 = vand.u32 %v312, 4294901760
    %1250 = vmatmul.mubr.f32.gmra.mrb[0].mxu0 %v1249
    %v1251 = vpop.f32.mrb[0].mxu0
    %v1252 = vadd.f32 %v1063, %v1251
    %v1253 = vpop.f32.mrb[0].mxu0
    %1254 = vmatprep.mubr.f32.mxu0 0.0
    %v1255 = vand.u32 %v315, 4294901760
    %1256 = vmatmul.mubr.f32.gmra.mrb[0].mxu0 %v1255
    %v1257 = vpop.f32.mrb[0].mxu0
    %v1258 = vadd.f32 %v1071, %v1257
    %v1259 = vpop.f32.mrb[0].mxu0
    %1260 = vmatprep.mubr.f32.mxu0 0.0
    %v1261 = vand.u32 %v318, 4294901760
    %1262 = vmatmul.mubr.f32.gmra.mrb[0].mxu0 %v1261
    %v1263 = vpop.f32.mrb[0].mxu0
    %v1264 = vadd.f32 %v1079, %v1263
    %v1265 = vpop.f32.mrb[0].mxu0
    %1266 = vmatprep.mubr.f32.mxu0 0.0
    %v1267 = vand.u32 %v321, 4294901760
    %1268 = vmatmul.mubr.f32.gmra.mrb[0].mxu0 %v1267
    %v1269 = vpop.f32.mrb[0].mxu0
    %v1270 = vadd.f32 %v1087, %v1269
    %v1271 = vpop.f32.mrb[0].mxu0
    %1272 = vmatprep.mubr.f32.mxu0 0.0
    %v1273 = vand.u32 %v324, 4294901760
    %1274 = vmatmul.mubr.f32.gmra.mrb[0].mxu0 %v1273
    %v1275 = vpop.f32.mrb[0].mxu0
    %v1276 = vadd.f32 %v1095, %v1275
    %v1277 = vpop.f32.mrb[0].mxu0
    %1278 = vmatprep.mubr.f32.mxu0 0.0
    %v1279 = vand.u32 %v327, 4294901760
    %1280 = vmatmul.mubr.f32.gmra.mrb[0].mxu0 %v1279
    %v1281 = vpop.f32.mrb[0].mxu0
    %v1282 = vadd.f32 %v1103, %v1281
    %v1283 = vpop.f32.mrb[0].mxu0
    %1284 = vmatprep.mubr.f32.mxu0 0.0
    %v1285 = vand.u32 %v330, 4294901760
    %1286 = vmatmul.mubr.f32.gmra.mrb[0].mxu0 %v1285
    %v1287 = vpop.f32.mrb[0].mxu0
    %v1288 = vadd.f32 %v1111, %v1287
    %v1289 = vpop.f32.mrb[0].mxu0
    %1290 = vmatprep.mubr.f32.mxu0 0.0
    %v1291 = vand.u32 %v333, 4294901760
    %1292 = vmatmul.mubr.f32.gmra.mrb[0].mxu0 %v1291
    %v1293 = vpop.f32.mrb[0].mxu0
    %v1294 = vadd.f32 %v1119, %v1293
    %v1295 = vpop.f32.mrb[0].mxu0
    %1296 = vmatprep.mubr.f32.mxu0 0.0
    %v1297 = vand.u32 %v336, 4294901760
    %1298 = vmatmul.mubr.f32.gmra.mrb[0].mxu0 %v1297
    %v1299 = vpop.f32.mrb[0].mxu0
    %v1300 = vadd.f32 %v1127, %v1299
    %v1301 = vpop.f32.mrb[0].mxu0
    %1302 = vdwg.mxu0
    %1303 = vmatprep.subr.mxu0 0.0
    %v1304 = vand.u32 %v279, 4294901760
    %1305 = vmatpush1.msra.mxu0 %v1304
    %1306 = vmatprep.subr.mxu0 0.0
    %v1307 = vand.u32 %v280, 4294901760
    %1308 = vmatpush1.msra.mxu0 %v1307
    %1309 = vmatprep.subr.mxu0 0.0
    %v1310 = vand.u32 %v281, 4294901760
    %1311 = vmatpush1.msra.mxu0 %v1310
    %1312 = vmatprep.subr.mxu0 0.0
    %v1313 = vand.u32 %v282, 4294901760
    %1314 = vmatpush1.msra.mxu0 %v1313
    %1315 = vmatprep.subr.mxu0 0.0
    %1316 = vmatpush1.msra.mxu0 0.0
    %1317 = vmatprep.subr.mxu0 0.0
    %1318 = vmatpush1.msra.mxu0 0.0
    %1319 = vmatprep.subr.mxu0 0.0
    %1320 = vmatpush1.msra.mxu0 0.0
    %1321 = vmatprep.subr.mxu0 0.0
    %1322 = vmatpush1.msra.mxu0 0.0
    %1323 = vmatprep.subr.mxu0 0.0
    %1324 = vmatpush1.msra.mxu0 0.0
    %1325 = vmatprep.subr.mxu0 0.0
    %1326 = vmatpush1.msra.mxu0 0.0
    %1327 = vmatprep.subr.mxu0 0.0
    %1328 = vmatpush1.msra.mxu0 0.0
    %1329 = vmatprep.subr.mxu0 0.0
    %1330 = vmatpush1.msra.mxu0 0.0
    %1331 = vmatprep.subr.mxu0 0.0
    %1332 = vmatpush1.msra.mxu0 0.0
    %1333 = vmatprep.subr.mxu0 0.0
    %1334 = vmatpush1.msra.mxu0 0.0
    %1335 = vmatprep.subr.mxu0 0.0
    %1336 = vmatpush1.msra.mxu0 0.0
    %1337 = vmatprep.subr.mxu0 0.0
    %1338 = vmatpush1.msra.mxu0 0.0
    %1339 = vmatprep.subr.mxu0 0.0
    %1340 = vmatpush1.msra.mxu0 0.0
    %1341 = vmatprep.subr.mxu0 0.0
    %1342 = vmatpush1.msra.mxu0 0.0
    %1343 = vmatprep.subr.mxu0 0.0
    %1344 = vmatpush1.msra.mxu0 0.0
    %1345 = vmatprep.subr.mxu0 0.0
    %1346 = vmatpush1.msra.mxu0 0.0
    %1347 = vmatprep.subr.mxu0 0.0
    %1348 = vmatpush1.msra.mxu0 0.0
    %1349 = vmatprep.subr.mxu0 0.0
    %1350 = vmatpush1.msra.mxu0 0.0
    %1351 = vmatprep.subr.mxu0 0.0
    %1352 = vmatpush1.msra.mxu0 0.0
    %1353 = vmatprep.subr.mxu0 0.0
    %1354 = vmatpush1.msra.mxu0 0.0
    %1355 = vmatprep.subr.mxu0 0.0
    %1356 = vmatpush1.msra.mxu0 0.0
    %1357 = vmatprep.subr.mxu0 0.0
    %1358 = vmatpush1.msra.mxu0 0.0
    %1359 = vmatprep.subr.mxu0 0.0
    %1360 = vmatpush1.msra.mxu0 0.0
    %1361 = vmatprep.subr.mxu0 0.0
    %1362 = vmatpush1.msra.mxu0 0.0
    %1363 = vmatprep.subr.mxu0 0.0
    %1364 = vmatpush1.msra.mxu0 0.0
    %1365 = vmatprep.subr.mxu0 0.0
    %1366 = vmatpush1.msra.mxu0 0.0
    %1367 = vmatprep.subr.mxu0 0.0
    %1368 = vmatpush1.msra.mxu0 0.0
    %1369 = vmatprep.subr.mxu0 0.0
    %1370 = vmatpush1.msra.mxu0 0.0
    %1371 = vmatprep.mubr.f32.mxu0 0.0
    %v1372 = vand.u32 %v291, 4294901760
    %1373 = vmatmul.mubr.f32.gmra.mrb[0].mxu0 %v1372
    %v1374 = vpop.f32.mrb[0].mxu0
    %v1375 = vadd.f32 %v1210, %v1374
    %v1376 = vpop.f32.mrb[0].mxu0
    %1377 = vmatprep.mubr.f32.mxu0 0.0
    %v1378 = vand.u32 %v294, 4294901760
    %1379 = vmatmul.mubr.f32.gmra.mrb[0].mxu0 %v1378
    %v1380 = vpop.f32.mrb[0].mxu0
    %v1381 = vadd.f32 %v1216, %v1380
    %v1382 = vpop.f32.mrb[0].mxu0
    %1383 = vmatprep.mubr.f32.mxu0 0.0
    %v1384 = vand.u32 %v297, 4294901760
    %1385 = vmatmul.mubr.f32.gmra.mrb[0].mxu0 %v1384
    %v1386 = vpop.f32.mrb[0].mxu0
    %v1387 = vadd.f32 %v1222, %v1386
    %v1388 = vpop.f32.mrb[0].mxu0
    %1389 = vmatprep.mubr.f32.mxu0 0.0
    %v1390 = vand.u32 %v300, 4294901760
    %1391 = vmatmul.mubr.f32.gmra.mrb[0].mxu0 %v1390
    %v1392 = vpop.f32.mrb[0].mxu0
    %v1393 = vadd.f32 %v1228, %v1392
    %v1394 = vpop.f32.mrb[0].mxu0
    %1395 = vmatprep.mubr.f32.mxu0 0.0
    %v1396 = vand.u32 %v303, 4294901760
    %1397 = vmatmul.mubr.f32.gmra.mrb[0].mxu0 %v1396
    %v1398 = vpop.f32.mrb[0].mxu0
    %v1399 = vadd.f32 %v1234, %v1398
    %v1400 = vpop.f32.mrb[0].mxu0
    %1401 = vmatprep.mubr.f32.mxu0 0.0
    %v1402 = vand.u32 %v306, 4294901760
    %1403 = vmatmul.mubr.f32.gmra.mrb[0].mxu0 %v1402
    %v1404 = vpop.f32.mrb[0].mxu0
    %v1405 = vadd.f32 %v1240, %v1404
    %v1406 = vpop.f32.mrb[0].mxu0
    %1407 = vmatprep.mubr.f32.mxu0 0.0
    %v1408 = vand.u32 %v309, 4294901760
    %1409 = vmatmul.mubr.f32.gmra.mrb[0].mxu0 %v1408
    %v1410 = vpop.f32.mrb[0].mxu0
    %v1411 = vadd.f32 %v1246, %v1410
    %v1412 = vpop.f32.mrb[0].mxu0
    %1413 = vmatprep.mubr.f32.mxu0 0.0
    %v1414 = vand.u32 %v312, 4294901760
    %1415 = vmatmul.mubr.f32.gmra.mrb[0].mxu0 %v1414
    %v1416 = vpop.f32.mrb[0].mxu0
    %v1417 = vadd.f32 %v1252, %v1416
    %v1418 = vpop.f32.mrb[0].mxu0
    %1419 = vmatprep.mubr.f32.mxu0 0.0
    %v1420 = vand.u32 %v315, 4294901760
    %1421 = vmatmul.mubr.f32.gmra.mrb[0].mxu0 %v1420
    %v1422 = vpop.f32.mrb[0].mxu0
    %v1423 = vadd.f32 %v1258, %v1422
    %v1424 = vpop.f32.mrb[0].mxu0
    %1425 = vmatprep.mubr.f32.mxu0 0.0
    %v1426 = vand.u32 %v318, 4294901760
    %1427 = vmatmul.mubr.f32.gmra.mrb[0].mxu0 %v1426
    %v1428 = vpop.f32.mrb[0].mxu0
    %v1429 = vadd.f32 %v1264, %v1428
    %v1430 = vpop.f32.mrb[0].mxu0
    %1431 = vmatprep.mubr.f32.mxu0 0.0
    %v1432 = vand.u32 %v321, 4294901760
    %1433 = vmatmul.mubr.f32.gmra.mrb[0].mxu0 %v1432
    %v1434 = vpop.f32.mrb[0].mxu0
    %v1435 = vadd.f32 %v1270, %v1434
    %v1436 = vpop.f32.mrb[0].mxu0
    %1437 = vmatprep.mubr.f32.mxu0 0.0
    %v1438 = vand.u32 %v324, 4294901760
    %1439 = vmatmul.mubr.f32.gmra.mrb[0].mxu0 %v1438
    %v1440 = vpop.f32.mrb[0].mxu0
    %v1441 = vadd.f32 %v1276, %v1440
    %v1442 = vpop.f32.mrb[0].mxu0
    %1443 = vmatprep.mubr.f32.mxu0 0.0
    %v1444 = vand.u32 %v327, 4294901760
    %1445 = vmatmul.mubr.f32.gmra.mrb[0].mxu0 %v1444
    %v1446 = vpop.f32.mrb[0].mxu0
    %v1447 = vadd.f32 %v1282, %v1446
    %v1448 = vpop.f32.mrb[0].mxu0
    %1449 = vmatprep.mubr.f32.mxu0 0.0
    %v1450 = vand.u32 %v330, 4294901760
    %1451 = vmatmul.mubr.f32.gmra.mrb[0].mxu0 %v1450
    %v1452 = vpop.f32.mrb[0].mxu0
    %v1453 = vadd.f32 %v1288, %v1452
    %v1454 = vpop.f32.mrb[0].mxu0
    %1455 = vmatprep.mubr.f32.mxu0 0.0
    %v1456 = vand.u32 %v333, 4294901760
    %1457 = vmatmul.mubr.f32.gmra.mrb[0].mxu0 %v1456
    %v1458 = vpop.f32.mrb[0].mxu0
    %v1459 = vadd.f32 %v1294, %v1458
    %v1460 = vpop.f32.mrb[0].mxu0
    %1461 = vmatprep.mubr.f32.mxu0 0.0
    %v1462 = vand.u32 %v336, 4294901760
    %1463 = vmatmul.mubr.f32.gmra.mrb[0].mxu0 %v1462
    %v1464 = vpop.f32.mrb[0].mxu0
    %v1465 = vadd.f32 %v1300, %v1464
    %v1466 = vpop.f32.mrb[0].mxu0
    %1467 = vdwg.mxu0
    %v1468 = vmul.f32 %v1375, 0.5
    %v1469 = vmul.f32 %v1381, 0.5
    %v1470 = vmul.f32 %v1387, 0.5
    %v1471 = vmul.f32 %v1393, 0.5
    %v1472 = vmul.f32 %v1399, 0.5
    %v1473 = vmul.f32 %v1405, 0.5
    %v1474 = vmul.f32 %v1411, 0.5
    %v1475 = vmul.f32 %v1417, 0.5
    %v1476 = vmul.f32 %v1423, 0.5
    %v1477 = vmul.f32 %v1429, 0.5
    %v1478 = vmul.f32 %v1435, 0.5
    %v1479 = vmul.f32 %v1441, 0.5
    %v1480 = vmul.f32 %v1447, 0.5
    %v1481 = vmul.f32 %v1453, 0.5
    %v1482 = vmul.f32 %v1459, 0.5
    %v1483 = vmul.f32 %v1465, 0.5
    %v1484 = vmul.f32 %v1375, 0.70710677
    %v1485 = vmul.f32 %v1381, 0.70710677
    %v1486 = vmul.f32 %v1387, 0.70710677
    %v1487 = vmul.f32 %v1393, 0.70710677
    %v1488 = vmul.f32 %v1399, 0.70710677
    %v1489 = vmul.f32 %v1405, 0.70710677
    %v1490 = vmul.f32 %v1411, 0.70710677
    %v1491 = vmul.f32 %v1417, 0.70710677
    %v1492 = vmul.f32 %v1423, 0.70710677
    %v1493 = vmul.f32 %v1429, 0.70710677
    %v1494 = vmul.f32 %v1435, 0.70710677
    %v1495 = vmul.f32 %v1441, 0.70710677
    %v1496 = vmul.f32 %v1447, 0.70710677
    %v1497 = vmul.f32 %v1453, 0.70710677
    %v1498 = vmul.f32 %v1459, 0.70710677
    %v1499 = vmul.f32 %v1465, 0.70710677
    %v1500 = vand.u32 2147483647, %v1484
    %v1501 = vand.u32 2147483647, %v1485
    %v1502 = vand.u32 2147483647, %v1486
    %v1503 = vand.u32 2147483647, %v1487
    %v1504 = vand.u32 2147483647, %v1488
    %v1505 = vand.u32 2147483647, %v1489
    %v1506 = vand.u32 2147483647, %v1490
    %v1507 = vand.u32 2147483647, %v1491
    %v1508 = vand.u32 2147483647, %v1492
    %v1509 = vand.u32 2147483647, %v1493
    %v1510 = vand.u32 2147483647, %v1494
    %v1511 = vand.u32 2147483647, %v1495
    %v1512 = vand.u32 2147483647, %v1496
    %v1513 = vand.u32 2147483647, %v1497
    %v1514 = vand.u32 2147483647, %v1498
    %v1515 = vand.u32 2147483647, %v1499
    %v1516 = vmul.f32 %v1500, 0.3275911
    %v1517 = vmul.f32 %v1501, 0.3275911
    %v1518 = vmul.f32 %v1502, 0.3275911
    %v1519 = vmul.f32 %v1503, 0.3275911
    %v1520 = vmul.f32 %v1504, 0.3275911
    %v1521 = vmul.f32 %v1505, 0.3275911
    %v1522 = vmul.f32 %v1506, 0.3275911
    %v1523 = vmul.f32 %v1507, 0.3275911
    %v1524 = vmul.f32 %v1508, 0.3275911
    %v1525 = vmul.f32 %v1509, 0.3275911
    %v1526 = vmul.f32 %v1510, 0.3275911
    %v1527 = vmul.f32 %v1511, 0.3275911
    %v1528 = vmul.f32 %v1512, 0.3275911
    %v1529 = vmul.f32 %v1513, 0.3275911
    %v1530 = vmul.f32 %v1514, 0.3275911
    %v1531 = vmul.f32 %v1515, 0.3275911
    %v1532 = vadd.f32 %v1516, 1.0
    %v1533 = vadd.f32 %v1517, 1.0
    %v1534 = vadd.f32 %v1518, 1.0
    %v1535 = vadd.f32 %v1519, 1.0
    %v1536 = vadd.f32 %v1520, 1.0
    %v1537 = vadd.f32 %v1521, 1.0
    %v1538 = vadd.f32 %v1522, 1.0
    %v1539 = vadd.f32 %v1523, 1.0
    %v1540 = vadd.f32 %v1524, 1.0
    %v1541 = vadd.f32 %v1525, 1.0
    %v1542 = vadd.f32 %v1526, 1.0
    %v1543 = vadd.f32 %v1527, 1.0
    %v1544 = vadd.f32 %v1528, 1.0
    %v1545 = vadd.f32 %v1529, 1.0
    %v1546 = vadd.f32 %v1530, 1.0
    %v1547 = vadd.f32 %v1531, 1.0
    %v1548 = vrcp.pop %v1532
    %v1549 = vmul.f32 1.0, %v1548
    %v1550 = vrcp.pop %v1533
    %v1551 = vmul.f32 1.0, %v1550
    %v1552 = vrcp.pop %v1534
    %v1553 = vmul.f32 1.0, %v1552
    %v1554 = vrcp.pop %v1535
    %v1555 = vmul.f32 1.0, %v1554
    %v1556 = vrcp.pop %v1536
    %v1557 = vmul.f32 1.0, %v1556
    %v1558 = vrcp.pop %v1537
    %v1559 = vmul.f32 1.0, %v1558
    %v1560 = vrcp.pop %v1538
    %v1561 = vmul.f32 1.0, %v1560
    %v1562 = vrcp.pop %v1539
    %v1563 = vmul.f32 1.0, %v1562
    %v1564 = vrcp.pop %v1540
    %v1565 = vmul.f32 1.0, %v1564
    %v1566 = vrcp.pop %v1541
    %v1567 = vmul.f32 1.0, %v1566
    %v1568 = vrcp.pop %v1542
    %v1569 = vmul.f32 1.0, %v1568
    %v1570 = vrcp.pop %v1543
    %v1571 = vmul.f32 1.0, %v1570
    %v1572 = vrcp.pop %v1544
    %v1573 = vmul.f32 1.0, %v1572
    %v1574 = vrcp.pop %v1545
    %v1575 = vmul.f32 1.0, %v1574
    %v1576 = vrcp.pop %v1546
    %v1577 = vmul.f32 1.0, %v1576
    %v1578 = vrcp.pop %v1547
    %v1579 = vmul.f32 1.0, %v1578
    %v1580 = vmul.f32 %v1549, 1.0614054
    %v1581 = vmul.f32 %v1551, 1.0614054
    %v1582 = vmul.f32 %v1553, 1.0614054
    %v1583 = vmul.f32 %v1555, 1.0614054
    %v1584 = vmul.f32 %v1557, 1.0614054
    %v1585 = vmul.f32 %v1559, 1.0614054
    %v1586 = vmul.f32 %v1561, 1.0614054
    %v1587 = vmul.f32 %v1563, 1.0614054
    %v1588 = vmul.f32 %v1565, 1.0614054
    %v1589 = vmul.f32 %v1567, 1.0614054
    %v1590 = vmul.f32 %v1569, 1.0614054
    %v1591 = vmul.f32 %v1571, 1.0614054
    %v1592 = vmul.f32 %v1573, 1.0614054
    %v1593 = vmul.f32 %v1575, 1.0614054
    %v1594 = vmul.f32 %v1577, 1.0614054
    %v1595 = vmul.f32 %v1579, 1.0614054
    %v1596 = vadd.f32 %v1580, -1.4531521
    %v1597 = vadd.f32 %v1581, -1.4531521
    %v1598 = vadd.f32 %v1582, -1.4531521
    %v1599 = vadd.f32 %v1583, -1.4531521
    %v1600 = vadd.f32 %v1584, -1.4531521
    %v1601 = vadd.f32 %v1585, -1.4531521
    %v1602 = vadd.f32 %v1586, -1.4531521
    %v1603 = vadd.f32 %v1587, -1.4531521
    %v1604 = vadd.f32 %v1588, -1.4531521
    %v1605 = vadd.f32 %v1589, -1.4531521
    %v1606 = vadd.f32 %v1590, -1.4531521
    %v1607 = vadd.f32 %v1591, -1.4531521
    %v1608 = vadd.f32 %v1592, -1.4531521
    %v1609 = vadd.f32 %v1593, -1.4531521
    %v1610 = vadd.f32 %v1594, -1.4531521
    %v1611 = vadd.f32 %v1595, -1.4531521
    %v1612 = vmul.f32 %v1596, %v1549
    %v1613 = vmul.f32 %v1597, %v1551
    %v1614 = vmul.f32 %v1598, %v1553
    %v1615 = vmul.f32 %v1599, %v1555
    %v1616 = vmul.f32 %v1600, %v1557
    %v1617 = vmul.f32 %v1601, %v1559
    %v1618 = vmul.f32 %v1602, %v1561
    %v1619 = vmul.f32 %v1603, %v1563
    %v1620 = vmul.f32 %v1604, %v1565
    %v1621 = vmul.f32 %v1605, %v1567
    %v1622 = vmul.f32 %v1606, %v1569
    %v1623 = vmul.f32 %v1607, %v1571
    %v1624 = vmul.f32 %v1608, %v1573
    %v1625 = vmul.f32 %v1609, %v1575
    %v1626 = vmul.f32 %v1610, %v1577
    %v1627 = vmul.f32 %v1611, %v1579
    %v1628 = vadd.f32 %v1612, 1.4214138
    %v1629 = vadd.f32 %v1613, 1.4214138
    %v1630 = vadd.f32 %v1614, 1.4214138
    %v1631 = vadd.f32 %v1615, 1.4214138
    %v1632 = vadd.f32 %v1616, 1.4214138
    %v1633 = vadd.f32 %v1617, 1.4214138
    %v1634 = vadd.f32 %v1618, 1.4214138
    %v1635 = vadd.f32 %v1619, 1.4214138
    %v1636 = vadd.f32 %v1620, 1.4214138
    %v1637 = vadd.f32 %v1621, 1.4214138
    %v1638 = vadd.f32 %v1622, 1.4214138
    %v1639 = vadd.f32 %v1623, 1.4214138
    %v1640 = vadd.f32 %v1624, 1.4214138
    %v1641 = vadd.f32 %v1625, 1.4214138
    %v1642 = vadd.f32 %v1626, 1.4214138
    %v1643 = vadd.f32 %v1627, 1.4214138
    %v1644 = vmul.f32 %v1628, %v1549
    %v1645 = vmul.f32 %v1629, %v1551
    %v1646 = vmul.f32 %v1630, %v1553
    %v1647 = vmul.f32 %v1631, %v1555
    %v1648 = vmul.f32 %v1632, %v1557
    %v1649 = vmul.f32 %v1633, %v1559
    %v1650 = vmul.f32 %v1634, %v1561
    %v1651 = vmul.f32 %v1635, %v1563
    %v1652 = vmul.f32 %v1636, %v1565
    %v1653 = vmul.f32 %v1637, %v1567
    %v1654 = vmul.f32 %v1638, %v1569
    %v1655 = vmul.f32 %v1639, %v1571
    %v1656 = vmul.f32 %v1640, %v1573
    %v1657 = vmul.f32 %v1641, %v1575
    %v1658 = vmul.f32 %v1642, %v1577
    %v1659 = vmul.f32 %v1643, %v1579
    %v1660 = vadd.f32 %v1644, -0.28449672
    %v1661 = vadd.f32 %v1645, -0.28449672
    %v1662 = vadd.f32 %v1646, -0.28449672
    %v1663 = vadd.f32 %v1647, -0.28449672
    %v1664 = vadd.f32 %v1648, -0.28449672
    %v1665 = vadd.f32 %v1649, -0.28449672
    %v1666 = vadd.f32 %v1650, -0.28449672
    %v1667 = vadd.f32 %v1651, -0.28449672
    %v1668 = vadd.f32 %v1652, -0.28449672
    %v1669 = vadd.f32 %v1653, -0.28449672
    %v1670 = vadd.f32 %v1654, -0.28449672
    %v1671 = vadd.f32 %v1655, -0.28449672
    %v1672 = vadd.f32 %v1656, -0.28449672
    %v1673 = vadd.f32 %v1657, -0.28449672
    %v1674 = vadd.f32 %v1658, -0.28449672
    %v1675 = vadd.f32 %v1659, -0.28449672
    %v1676 = vmul.f32 %v1660, %v1549
    %v1677 = vmul.f32 %v1661, %v1551
    %v1678 = vmul.f32 %v1662, %v1553
    %v1679 = vmul.f32 %v1663, %v1555
    %v1680 = vmul.f32 %v1664, %v1557
    %v1681 = vmul.f32 %v1665, %v1559
    %v1682 = vmul.f32 %v1666, %v1561
    %v1683 = vmul.f32 %v1667, %v1563
    %v1684 = vmul.f32 %v1668, %v1565
    %v1685 = vmul.f32 %v1669, %v1567
    %v1686 = vmul.f32 %v1670, %v1569
    %v1687 = vmul.f32 %v1671, %v1571
    %v1688 = vmul.f32 %v1672, %v1573
    %v1689 = vmul.f32 %v1673, %v1575
    %v1690 = vmul.f32 %v1674, %v1577
    %v1691 = vmul.f32 %v1675, %v1579
    %v1692 = vadd.f32 %v1676, 0.2548296
    %v1693 = vadd.f32 %v1677, 0.2548296
    %v1694 = vadd.f32 %v1678, 0.2548296
    %v1695 = vadd.f32 %v1679, 0.2548296
    %v1696 = vadd.f32 %v1680, 0.2548296
    %v1697 = vadd.f32 %v1681, 0.2548296
    %v1698 = vadd.f32 %v1682, 0.2548296
    %v1699 = vadd.f32 %v1683, 0.2548296
    %v1700 = vadd.f32 %v1684, 0.2548296
    %v1701 = vadd.f32 %v1685, 0.2548296
    %v1702 = vadd.f32 %v1686, 0.2548296
    %v1703 = vadd.f32 %v1687, 0.2548296
    %v1704 = vadd.f32 %v1688, 0.2548296
    %v1705 = vadd.f32 %v1689, 0.2548296
    %v1706 = vadd.f32 %v1690, 0.2548296
    %v1707 = vadd.f32 %v1691, 0.2548296
    %v1708 = vmul.f32 %v1692, %v1549
    %v1709 = vmul.f32 %v1693, %v1551
    %v1710 = vmul.f32 %v1694, %v1553
    %v1711 = vmul.f32 %v1695, %v1555
    %v1712 = vmul.f32 %v1696, %v1557
    %v1713 = vmul.f32 %v1697, %v1559
    %v1714 = vmul.f32 %v1698, %v1561
    %v1715 = vmul.f32 %v1699, %v1563
    %v1716 = vmul.f32 %v1700, %v1565
    %v1717 = vmul.f32 %v1701, %v1567
    %v1718 = vmul.f32 %v1702, %v1569
    %v1719 = vmul.f32 %v1703, %v1571
    %v1720 = vmul.f32 %v1704, %v1573
    %v1721 = vmul.f32 %v1705, %v1575
    %v1722 = vmul.f32 %v1706, %v1577
    %v1723 = vmul.f32 %v1707, %v1579
    %v1724 = vsub.f32 0.0, %v1500
    %v1725 = vsub.f32 0.0, %v1501
    %v1726 = vsub.f32 0.0, %v1502
    %v1727 = vsub.f32 0.0, %v1503
    %v1728 = vsub.f32 0.0, %v1504
    %v1729 = vsub.f32 0.0, %v1505
    %v1730 = vsub.f32 0.0, %v1506
    %v1731 = vsub.f32 0.0, %v1507
    %v1732 = vsub.f32 0.0, %v1508
    %v1733 = vsub.f32 0.0, %v1509
    %v1734 = vsub.f32 0.0, %v1510
    %v1735 = vsub.f32 0.0, %v1511
    %v1736 = vsub.f32 0.0, %v1512
    %v1737 = vsub.f32 0.0, %v1513
    %v1738 = vsub.f32 0.0, %v1514
    %v1739 = vsub.f32 0.0, %v1515
    %v1740 = vmul.f32 %v1724, %v1500
    %v1741 = vmul.f32 %v1725, %v1501
    %v1742 = vmul.f32 %v1726, %v1502
    %v1743 = vmul.f32 %v1727, %v1503
    %v1744 = vmul.f32 %v1728, %v1504
    %v1745 = vmul.f32 %v1729, %v1505
    %v1746 = vmul.f32 %v1730, %v1506
    %v1747 = vmul.f32 %v1731, %v1507
    %v1748 = vmul.f32 %v1732, %v1508
    %v1749 = vmul.f32 %v1733, %v1509
    %v1750 = vmul.f32 %v1734, %v1510
    %v1751 = vmul.f32 %v1735, %v1511
    %v1752 = vmul.f32 %v1736, %v1512
    %v1753 = vmul.f32 %v1737, %v1513
    %v1754 = vmul.f32 %v1738, %v1514
    %v1755 = vmul.f32 %v1739, %v1515
    %v1756 = vmul.f32 %v1740, 1.442695
    %v1757 = vpow.pop %v1756
    %v1758 = vmul.f32 %v1741, 1.442695
    %v1759 = vpow.pop %v1758
    %v1760 = vmul.f32 %v1742, 1.442695
    %v1761 = vpow.pop %v1760
    %v1762 = vmul.f32 %v1743, 1.442695
    %v1763 = vpow.pop %v1762
    %v1764 = vmul.f32 %v1744, 1.442695
    %v1765 = vpow.pop %v1764
    %v1766 = vmul.f32 %v1745, 1.442695
    %v1767 = vpow.pop %v1766
    %v1768 = vmul.f32 %v1746, 1.442695
    %v1769 = vpow.pop %v1768
    %v1770 = vmul.f32 %v1747, 1.442695
    %v1771 = vpow.pop %v1770
    %v1772 = vmul.f32 %v1748, 1.442695
    %v1773 = vpow.pop %v1772
    %v1774 = vmul.f32 %v1749, 1.442695
    %v1775 = vpow.pop %v1774
    %v1776 = vmul.f32 %v1750, 1.442695
    %v1777 = vpow.pop %v1776
    %v1778 = vmul.f32 %v1751, 1.442695
    %v1779 = vpow.pop %v1778
    %v1780 = vmul.f32 %v1752, 1.442695
    %v1781 = vpow.pop %v1780
    %v1782 = vmul.f32 %v1753, 1.442695
    %v1783 = vpow.pop %v1782
    %v1784 = vmul.f32 %v1754, 1.442695
    %v1785 = vpow.pop %v1784
    %v1786 = vmul.f32 %v1755, 1.442695
    %v1787 = vpow.pop %v1786
    %v1788 = vmul.f32 %v1708, %v1757
    %v1789 = vmul.f32 %v1709, %v1759
    %v1790 = vmul.f32 %v1710, %v1761
    %v1791 = vmul.f32 %v1711, %v1763
    %v1792 = vmul.f32 %v1712, %v1765
    %v1793 = vmul.f32 %v1713, %v1767
    %v1794 = vmul.f32 %v1714, %v1769
    %v1795 = vmul.f32 %v1715, %v1771
    %v1796 = vmul.f32 %v1716, %v1773
    %v1797 = vmul.f32 %v1717, %v1775
    %v1798 = vmul.f32 %v1718, %v1777
    %v1799 = vmul.f32 %v1719, %v1779
    %v1800 = vmul.f32 %v1720, %v1781
    %v1801 = vmul.f32 %v1721, %v1783
    %v1802 = vmul.f32 %v1722, %v1785
    %v1803 = vmul.f32 %v1723, %v1787
    %v1804 = vsub.f32 1.0, %v1788
    %v1805 = vsub.f32 1.0, %v1789
    %v1806 = vsub.f32 1.0, %v1790
    %v1807 = vsub.f32 1.0, %v1791
    %v1808 = vsub.f32 1.0, %v1792
    %v1809 = vsub.f32 1.0, %v1793
    %v1810 = vsub.f32 1.0, %v1794
    %v1811 = vsub.f32 1.0, %v1795
    %v1812 = vsub.f32 1.0, %v1796
    %v1813 = vsub.f32 1.0, %v1797
    %v1814 = vsub.f32 1.0, %v1798
    %v1815 = vsub.f32 1.0, %v1799
    %v1816 = vsub.f32 1.0, %v1800
    %v1817 = vsub.f32 1.0, %v1801
    %v1818 = vsub.f32 1.0, %v1802
    %v1819 = vsub.f32 1.0, %v1803
    %vm1820 = vcmp.ge.f32.partialorder %v1484, 0.0
    %vm1821 = vcmp.ge.f32.partialorder %v1485, 0.0
    %vm1822 = vcmp.ge.f32.partialorder %v1486, 0.0
    %vm1823 = vcmp.ge.f32.partialorder %v1487, 0.0
    %vm1824 = vcmp.ge.f32.partialorder %v1488, 0.0
    %vm1825 = vcmp.ge.f32.partialorder %v1489, 0.0
    %vm1826 = vcmp.ge.f32.partialorder %v1490, 0.0
    %vm1827 = vcmp.ge.f32.partialorder %v1491, 0.0
    %vm1828 = vcmp.ge.f32.partialorder %v1492, 0.0
    %vm1829 = vcmp.ge.f32.partialorder %v1493, 0.0
    %vm1830 = vcmp.ge.f32.partialorder %v1494, 0.0
    %vm1831 = vcmp.ge.f32.partialorder %v1495, 0.0
    %vm1832 = vcmp.ge.f32.partialorder %v1496, 0.0
    %vm1833 = vcmp.ge.f32.partialorder %v1497, 0.0
    %vm1834 = vcmp.ge.f32.partialorder %v1498, 0.0
    %vm1835 = vcmp.ge.f32.partialorder %v1499, 0.0
    %v1836 = vsub.f32 0.0, %v1804
    %v1837 = vsub.f32 0.0, %v1805
    %v1838 = vsub.f32 0.0, %v1806
    %v1839 = vsub.f32 0.0, %v1807
    %v1840 = vsub.f32 0.0, %v1808
    %v1841 = vsub.f32 0.0, %v1809
    %v1842 = vsub.f32 0.0, %v1810
    %v1843 = vsub.f32 0.0, %v1811
    %v1844 = vsub.f32 0.0, %v1812
    %v1845 = vsub.f32 0.0, %v1813
    %v1846 = vsub.f32 0.0, %v1814
    %v1847 = vsub.f32 0.0, %v1815
    %v1848 = vsub.f32 0.0, %v1816
    %v1849 = vsub.f32 0.0, %v1817
    %v1850 = vsub.f32 0.0, %v1818
    %v1851 = vsub.f32 0.0, %v1819
    %v1852 = vsel %vm1820, %v1804, %v1836
    %v1853 = vsel %vm1821, %v1805, %v1837
    %v1854 = vsel %vm1822, %v1806, %v1838
    %v1855 = vsel %vm1823, %v1807, %v1839
    %v1856 = vsel %vm1824, %v1808, %v1840
    %v1857 = vsel %vm1825, %v1809, %v1841
    %v1858 = vsel %vm1826, %v1810, %v1842
    %v1859 = vsel %vm1827, %v1811, %v1843
    %v1860 = vsel %vm1828, %v1812, %v1844
    %v1861 = vsel %vm1829, %v1813, %v1845
    %v1862 = vsel %vm1830, %v1814, %v1846
    %v1863 = vsel %vm1831, %v1815, %v1847
    %v1864 = vsel %vm1832, %v1816, %v1848
    %v1865 = vsel %vm1833, %v1817, %v1849
    %v1866 = vsel %vm1834, %v1818, %v1850
    %v1867 = vsel %vm1835, %v1819, %v1851
    %v1868 = vadd.f32 %v1852, 1.0
    %v1869 = vadd.f32 %v1853, 1.0
    %v1870 = vadd.f32 %v1854, 1.0
    %v1871 = vadd.f32 %v1855, 1.0
    %v1872 = vadd.f32 %v1856, 1.0
    %v1873 = vadd.f32 %v1857, 1.0
    %v1874 = vadd.f32 %v1858, 1.0
    %v1875 = vadd.f32 %v1859, 1.0
    %v1876 = vadd.f32 %v1860, 1.0
    %v1877 = vadd.f32 %v1861, 1.0
    %v1878 = vadd.f32 %v1862, 1.0
    %v1879 = vadd.f32 %v1863, 1.0
    %v1880 = vadd.f32 %v1864, 1.0
    %v1881 = vadd.f32 %v1865, 1.0
    %v1882 = vadd.f32 %v1866, 1.0
    %v1883 = vadd.f32 %v1867, 1.0
    %v1884 = vmul.f32 %v1468, %v1868
    %v1885 = vmul.f32 %v1469, %v1869
    %v1886 = vmul.f32 %v1470, %v1870
    %v1887 = vmul.f32 %v1471, %v1871
    %v1888 = vmul.f32 %v1472, %v1872
    %v1889 = vmul.f32 %v1473, %v1873
    %v1890 = vmul.f32 %v1474, %v1874
    %v1891 = vmul.f32 %v1475, %v1875
    %v1892 = vmul.f32 %v1476, %v1876
    %v1893 = vmul.f32 %v1477, %v1877
    %v1894 = vmul.f32 %v1478, %v1878
    %v1895 = vmul.f32 %v1479, %v1879
    %v1896 = vmul.f32 %v1480, %v1880
    %v1897 = vmul.f32 %v1481, %v1881
    %v1898 = vmul.f32 %v1482, %v1882
    %v1899 = vmul.f32 %v1483, %v1883
    %v1900 = vld [vmem:[%s3] sm:$0xff]
    %v1901 = vld [vmem:[%s3 + $0x8] sm:$0xff]
    %v1902 = vld [vmem:[%s3 + $0x10] sm:$0xff]
    %v1903 = vld [vmem:[%s3 + $0x18] sm:$0xff]
    %v1904 = vld [vmem:[%s3 + $0x20] sm:$0xff]
    %v1905 = vld [vmem:[%s3 + $0x28] sm:$0xff]
    %v1906 = vld [vmem:[%s3 + $0x30] sm:$0xff]
    %v1907 = vld [vmem:[%s3 + $0x38] sm:$0xff]
    %v1908 = vld [vmem:[%s3 + $0x40] sm:$0xff]
    %v1909 = vld [vmem:[%s3 + $0x48] sm:$0xff]
    %v1910 = vld [vmem:[%s3 + $0x50] sm:$0xff]
    %v1911 = vld [vmem:[%s3 + $0x58] sm:$0xff]
    %v1912 = vld [vmem:[%s3 + $0x60] sm:$0xff]
    %v1913 = vld [vmem:[%s3 + $0x68] sm:$0xff]
    %v1914 = vld [vmem:[%s3 + $0x70] sm:$0xff]
    %v1915 = vld [vmem:[%s3 + $0x78] sm:$0xff]
    %1916 = vmatprep.subr.mxu0 0.0
    %v1917 = vand.u32 %v1900, 4294901760
    %1918 = vmatpush1.msra.mxu0 %v1917
    %1919 = vmatprep.subr.mxu0 0.0
    %v1920 = vand.u32 %v1901, 4294901760
    %1921 = vmatpush1.msra.mxu0 %v1920
    %1922 = vmatprep.subr.mxu0 0.0
    %v1923 = vand.u32 %v1902, 4294901760
    %1924 = vmatpush1.msra.mxu0 %v1923
    %1925 = vmatprep.subr.mxu0 0.0
    %v1926 = vand.u32 %v1903, 4294901760
    %1927 = vmatpush1.msra.mxu0 %v1926
    %1928 = vmatprep.subr.mxu0 0.0
    %v1929 = vand.u32 %v1904, 4294901760
    %1930 = vmatpush1.msra.mxu0 %v1929
    %1931 = vmatprep.subr.mxu0 0.0
    %v1932 = vand.u32 %v1905, 4294901760
    %1933 = vmatpush1.msra.mxu0 %v1932
    %1934 = vmatprep.subr.mxu0 0.0
    %v1935 = vand.u32 %v1906, 4294901760
    %1936 = vmatpush1.msra.mxu0 %v1935
    %1937 = vmatprep.subr.mxu0 0.0
    %v1938 = vand.u32 %v1907, 4294901760
    %1939 = vmatpush1.msra.mxu0 %v1938
    %1940 = vmatprep.subr.mxu0 0.0
    %v1941 = vand.u32 %v1908, 4294901760
    %1942 = vmatpush1.msra.mxu0 %v1941
    %1943 = vmatprep.subr.mxu0 0.0
    %v1944 = vand.u32 %v1909, 4294901760
    %1945 = vmatpush1.msra.mxu0 %v1944
    %1946 = vmatprep.subr.mxu0 0.0
    %v1947 = vand.u32 %v1910, 4294901760
    %1948 = vmatpush1.msra.mxu0 %v1947
    %1949 = vmatprep.subr.mxu0 0.0
    %v1950 = vand.u32 %v1911, 4294901760
    %1951 = vmatpush1.msra.mxu0 %v1950
    %1952 = vmatprep.subr.mxu0 0.0
    %v1953 = vand.u32 %v1912, 4294901760
    %1954 = vmatpush1.msra.mxu0 %v1953
    %1955 = vmatprep.subr.mxu0 0.0
    %v1956 = vand.u32 %v1913, 4294901760
    %1957 = vmatpush1.msra.mxu0 %v1956
    %1958 = vmatprep.subr.mxu0 0.0
    %v1959 = vand.u32 %v1914, 4294901760
    %1960 = vmatpush1.msra.mxu0 %v1959
    %1961 = vmatprep.subr.mxu0 0.0
    %v1962 = vand.u32 %v1915, 4294901760
    %1963 = vmatpush1.msra.mxu0 %v1962
    %1964 = vmatprep.subr.mxu0 0.0
    %1965 = vmatpush1.msra.mxu0 0.0
    %1966 = vmatprep.subr.mxu0 0.0
    %1967 = vmatpush1.msra.mxu0 0.0
    %1968 = vmatprep.subr.mxu0 0.0
    %1969 = vmatpush1.msra.mxu0 0.0
    %1970 = vmatprep.subr.mxu0 0.0
    %1971 = vmatpush1.msra.mxu0 0.0
    %1972 = vmatprep.subr.mxu0 0.0
    %1973 = vmatpush1.msra.mxu0 0.0
    %1974 = vmatprep.subr.mxu0 0.0
    %1975 = vmatpush1.msra.mxu0 0.0
    %1976 = vmatprep.subr.mxu0 0.0
    %1977 = vmatpush1.msra.mxu0 0.0
    %1978 = vmatprep.subr.mxu0 0.0
    %1979 = vmatpush1.msra.mxu0 0.0
    %1980 = vmatprep.subr.mxu0 0.0
    %1981 = vmatpush1.msra.mxu0 0.0
    %1982 = vmatprep.subr.mxu0 0.0
    %1983 = vmatpush1.msra.mxu0 0.0
    %1984 = vmatprep.subr.mxu0 0.0
    %1985 = vmatpush1.msra.mxu0 0.0
    %1986 = vmatprep.subr.mxu0 0.0
    %1987 = vmatpush1.msra.mxu0 0.0
    %1988 = vmatprep.subr.mxu0 0.0
    %1989 = vmatpush1.msra.mxu0 0.0
    %1990 = vmatprep.subr.mxu0 0.0
    %1991 = vmatpush1.msra.mxu0 0.0
    %1992 = vmatprep.subr.mxu0 0.0
    %1993 = vmatpush1.msra.mxu0 0.0
    %1994 = vmatprep.subr.mxu0 0.0
    %1995 = vmatpush1.msra.mxu0 0.0
    %1996 = vmatprep.mubr.f32.mxu0 0.0
    %v1997 = vand.u32 %v1884, 4294901760
    %v1998 = vsub.f32 %v1884, %v1997
    %v1999 = vand.u32 %v1998, 4294901760
    %v2000 = vsub.f32 %v1998, %v1999
    %v2001 = vand.u32 %v2000, 4294901760
    %2002 = vmatmul.mubr.f32.gmra.mrb[0].mxu0 %v2001
    %v2003 = vpop.f32.mrb[0].mxu0
    %v2004 = vadd.f32 0.0, %v2003
    %v2005 = vpop.f32.mrb[0].mxu0
    %2006 = vmatprep.mubr.f32.mxu0 0.0
    %v2007 = vand.u32 %v1885, 4294901760
    %v2008 = vsub.f32 %v1885, %v2007
    %v2009 = vand.u32 %v2008, 4294901760
    %v2010 = vsub.f32 %v2008, %v2009
    %v2011 = vand.u32 %v2010, 4294901760
    %2012 = vmatmul.mubr.f32.gmra.mrb[0].mxu0 %v2011
    %v2013 = vpop.f32.mrb[0].mxu0
    %v2014 = vadd.f32 0.0, %v2013
    %v2015 = vpop.f32.mrb[0].mxu0
    %2016 = vmatprep.mubr.f32.mxu0 0.0
    %v2017 = vand.u32 %v1886, 4294901760
    %v2018 = vsub.f32 %v1886, %v2017
    %v2019 = vand.u32 %v2018, 4294901760
    %v2020 = vsub.f32 %v2018, %v2019
    %v2021 = vand.u32 %v2020, 4294901760
    %2022 = vmatmul.mubr.f32.gmra.mrb[0].mxu0 %v2021
    %v2023 = vpop.f32.mrb[0].mxu0
    %v2024 = vadd.f32 0.0, %v2023
    %v2025 = vpop.f32.mrb[0].mxu0
    %2026 = vmatprep.mubr.f32.mxu0 0.0
    %v2027 = vand.u32 %v1887, 4294901760
    %v2028 = vsub.f32 %v1887, %v2027
    %v2029 = vand.u32 %v2028, 4294901760
    %v2030 = vsub.f32 %v2028, %v2029
    %v2031 = vand.u32 %v2030, 4294901760
    %2032 = vmatmul.mubr.f32.gmra.mrb[0].mxu0 %v2031
    %v2033 = vpop.f32.mrb[0].mxu0
    %v2034 = vadd.f32 0.0, %v2033
    %v2035 = vpop.f32.mrb[0].mxu0
    %2036 = vmatprep.mubr.f32.mxu0 0.0
    %v2037 = vand.u32 %v1888, 4294901760
    %v2038 = vsub.f32 %v1888, %v2037
    %v2039 = vand.u32 %v2038, 4294901760
    %v2040 = vsub.f32 %v2038, %v2039
    %v2041 = vand.u32 %v2040, 4294901760
    %2042 = vmatmul.mubr.f32.gmra.mrb[0].mxu0 %v2041
    %v2043 = vpop.f32.mrb[0].mxu0
    %v2044 = vadd.f32 0.0, %v2043
    %v2045 = vpop.f32.mrb[0].mxu0
    %2046 = vmatprep.mubr.f32.mxu0 0.0
    %v2047 = vand.u32 %v1889, 4294901760
    %v2048 = vsub.f32 %v1889, %v2047
    %v2049 = vand.u32 %v2048, 4294901760
    %v2050 = vsub.f32 %v2048, %v2049
    %v2051 = vand.u32 %v2050, 4294901760
    %2052 = vmatmul.mubr.f32.gmra.mrb[0].mxu0 %v2051
    %v2053 = vpop.f32.mrb[0].mxu0
    %v2054 = vadd.f32 0.0, %v2053
    %v2055 = vpop.f32.mrb[0].mxu0
    %2056 = vmatprep.mubr.f32.mxu0 0.0
    %v2057 = vand.u32 %v1890, 4294901760
    %v2058 = vsub.f32 %v1890, %v2057
    %v2059 = vand.u32 %v2058, 4294901760
    %v2060 = vsub.f32 %v2058, %v2059
    %v2061 = vand.u32 %v2060, 4294901760
    %2062 = vmatmul.mubr.f32.gmra.mrb[0].mxu0 %v2061
    %v2063 = vpop.f32.mrb[0].mxu0
    %v2064 = vadd.f32 0.0, %v2063
    %v2065 = vpop.f32.mrb[0].mxu0
    %2066 = vmatprep.mubr.f32.mxu0 0.0
    %v2067 = vand.u32 %v1891, 4294901760
    %v2068 = vsub.f32 %v1891, %v2067
    %v2069 = vand.u32 %v2068, 4294901760
    %v2070 = vsub.f32 %v2068, %v2069
    %v2071 = vand.u32 %v2070, 4294901760
    %2072 = vmatmul.mubr.f32.gmra.mrb[0].mxu0 %v2071
    %v2073 = vpop.f32.mrb[0].mxu0
    %v2074 = vadd.f32 0.0, %v2073
    %v2075 = vpop.f32.mrb[0].mxu0
    %2076 = vmatprep.mubr.f32.mxu0 0.0
    %v2077 = vand.u32 %v1892, 4294901760
    %v2078 = vsub.f32 %v1892, %v2077
    %v2079 = vand.u32 %v2078, 4294901760
    %v2080 = vsub.f32 %v2078, %v2079
    %v2081 = vand.u32 %v2080, 4294901760
    %2082 = vmatmul.mubr.f32.gmra.mrb[0].mxu0 %v2081
    %v2083 = vpop.f32.mrb[0].mxu0
    %v2084 = vadd.f32 0.0, %v2083
    %v2085 = vpop.f32.mrb[0].mxu0
    %2086 = vmatprep.mubr.f32.mxu0 0.0
    %v2087 = vand.u32 %v1893, 4294901760
    %v2088 = vsub.f32 %v1893, %v2087
    %v2089 = vand.u32 %v2088, 4294901760
    %v2090 = vsub.f32 %v2088, %v2089
    %v2091 = vand.u32 %v2090, 4294901760
    %2092 = vmatmul.mubr.f32.gmra.mrb[0].mxu0 %v2091
    %v2093 = vpop.f32.mrb[0].mxu0
    %v2094 = vadd.f32 0.0, %v2093
    %v2095 = vpop.f32.mrb[0].mxu0
    %2096 = vmatprep.mubr.f32.mxu0 0.0
    %v2097 = vand.u32 %v1894, 4294901760
    %v2098 = vsub.f32 %v1894, %v2097
    %v2099 = vand.u32 %v2098, 4294901760
    %v2100 = vsub.f32 %v2098, %v2099
    %v2101 = vand.u32 %v2100, 4294901760
    %2102 = vmatmul.mubr.f32.gmra.mrb[0].mxu0 %v2101
    %v2103 = vpop.f32.mrb[0].mxu0
    %v2104 = vadd.f32 0.0, %v2103
    %v2105 = vpop.f32.mrb[0].mxu0
    %2106 = vmatprep.mubr.f32.mxu0 0.0
    %v2107 = vand.u32 %v1895, 4294901760
    %v2108 = vsub.f32 %v1895, %v2107
    %v2109 = vand.u32 %v2108, 4294901760
    %v2110 = vsub.f32 %v2108, %v2109
    %v2111 = vand.u32 %v2110, 4294901760
    %2112 = vmatmul.mubr.f32.gmra.mrb[0].mxu0 %v2111
    %v2113 = vpop.f32.mrb[0].mxu0
    %v2114 = vadd.f32 0.0, %v2113
    %v2115 = vpop.f32.mrb[0].mxu0
    %2116 = vmatprep.mubr.f32.mxu0 0.0
    %v2117 = vand.u32 %v1896, 4294901760
    %v2118 = vsub.f32 %v1896, %v2117
    %v2119 = vand.u32 %v2118, 4294901760
    %v2120 = vsub.f32 %v2118, %v2119
    %v2121 = vand.u32 %v2120, 4294901760
    %2122 = vmatmul.mubr.f32.gmra.mrb[0].mxu0 %v2121
    %v2123 = vpop.f32.mrb[0].mxu0
    %v2124 = vadd.f32 0.0, %v2123
    %v2125 = vpop.f32.mrb[0].mxu0
    %2126 = vmatprep.mubr.f32.mxu0 0.0
    %v2127 = vand.u32 %v1897, 4294901760
    %v2128 = vsub.f32 %v1897, %v2127
    %v2129 = vand.u32 %v2128, 4294901760
    %v2130 = vsub.f32 %v2128, %v2129
    %v2131 = vand.u32 %v2130, 4294901760
    %2132 = vmatmul.mubr.f32.gmra.mrb[0].mxu0 %v2131
    %v2133 = vpop.f32.mrb[0].mxu0
    %v2134 = vadd.f32 0.0, %v2133
    %v2135 = vpop.f32.mrb[0].mxu0
    %2136 = vmatprep.mubr.f32.mxu0 0.0
    %v2137 = vand.u32 %v1898, 4294901760
    %v2138 = vsub.f32 %v1898, %v2137
    %v2139 = vand.u32 %v2138, 4294901760
    %v2140 = vsub.f32 %v2138, %v2139
    %v2141 = vand.u32 %v2140, 4294901760
    %2142 = vmatmul.mubr.f32.gmra.mrb[0].mxu0 %v2141
    %v2143 = vpop.f32.mrb[0].mxu0
    %v2144 = vadd.f32 0.0, %v2143
    %v2145 = vpop.f32.mrb[0].mxu0
    %2146 = vmatprep.mubr.f32.mxu0 0.0
    %v2147 = vand.u32 %v1899, 4294901760
    %v2148 = vsub.f32 %v1899, %v2147
    %v2149 = vand.u32 %v2148, 4294901760
    %v2150 = vsub.f32 %v2148, %v2149
    %v2151 = vand.u32 %v2150, 4294901760
    %2152 = vmatmul.mubr.f32.gmra.mrb[0].mxu0 %v2151
    %v2153 = vpop.f32.mrb[0].mxu0
    %v2154 = vadd.f32 0.0, %v2153
    %v2155 = vpop.f32.mrb[0].mxu0
    %2156 = vdwg.mxu0
    %2157 = vmatprep.subr.mxu0 0.0
    %v2158 = vand.u32 %v1900, 4294901760
    %v2159 = vsub.f32 %v1900, %v2158
    %v2160 = vand.u32 %v2159, 4294901760
    %v2161 = vsub.f32 %v2159, %v2160
    %v2162 = vand.u32 %v2161, 4294901760
    %2163 = vmatpush1.msra.mxu0 %v2162
    %2164 = vmatprep.subr.mxu0 0.0
    %v2165 = vand.u32 %v1901, 4294901760
    %v2166 = vsub.f32 %v1901, %v2165
    %v2167 = vand.u32 %v2166, 4294901760
    %v2168 = vsub.f32 %v2166, %v2167
    %v2169 = vand.u32 %v2168, 4294901760
    %2170 = vmatpush1.msra.mxu0 %v2169
    %2171 = vmatprep.subr.mxu0 0.0
    %v2172 = vand.u32 %v1902, 4294901760
    %v2173 = vsub.f32 %v1902, %v2172
    %v2174 = vand.u32 %v2173, 4294901760
    %v2175 = vsub.f32 %v2173, %v2174
    %v2176 = vand.u32 %v2175, 4294901760
    %2177 = vmatpush1.msra.mxu0 %v2176
    %2178 = vmatprep.subr.mxu0 0.0
    %v2179 = vand.u32 %v1903, 4294901760
    %v2180 = vsub.f32 %v1903, %v2179
    %v2181 = vand.u32 %v2180, 4294901760
    %v2182 = vsub.f32 %v2180, %v2181
    %v2183 = vand.u32 %v2182, 4294901760
    %2184 = vmatpush1.msra.mxu0 %v2183
    %2185 = vmatprep.subr.mxu0 0.0
    %v2186 = vand.u32 %v1904, 4294901760
    %v2187 = vsub.f32 %v1904, %v2186
    %v2188 = vand.u32 %v2187, 4294901760
    %v2189 = vsub.f32 %v2187, %v2188
    %v2190 = vand.u32 %v2189, 4294901760
    %2191 = vmatpush1.msra.mxu0 %v2190
    %2192 = vmatprep.subr.mxu0 0.0
    %v2193 = vand.u32 %v1905, 4294901760
    %v2194 = vsub.f32 %v1905, %v2193
    %v2195 = vand.u32 %v2194, 4294901760
    %v2196 = vsub.f32 %v2194, %v2195
    %v2197 = vand.u32 %v2196, 4294901760
    %2198 = vmatpush1.msra.mxu0 %v2197
    %2199 = vmatprep.subr.mxu0 0.0
    %v2200 = vand.u32 %v1906, 4294901760
    %v2201 = vsub.f32 %v1906, %v2200
    %v2202 = vand.u32 %v2201, 4294901760
    %v2203 = vsub.f32 %v2201, %v2202
    %v2204 = vand.u32 %v2203, 4294901760
    %2205 = vmatpush1.msra.mxu0 %v2204
    %2206 = vmatprep.subr.mxu0 0.0
    %v2207 = vand.u32 %v1907, 4294901760
    %v2208 = vsub.f32 %v1907, %v2207
    %v2209 = vand.u32 %v2208, 4294901760
    %v2210 = vsub.f32 %v2208, %v2209
    %v2211 = vand.u32 %v2210, 4294901760
    %2212 = vmatpush1.msra.mxu0 %v2211
    %2213 = vmatprep.subr.mxu0 0.0
    %v2214 = vand.u32 %v1908, 4294901760
    %v2215 = vsub.f32 %v1908, %v2214
    %v2216 = vand.u32 %v2215, 4294901760
    %v2217 = vsub.f32 %v2215, %v2216
    %v2218 = vand.u32 %v2217, 4294901760
    %2219 = vmatpush1.msra.mxu0 %v2218
    %2220 = vmatprep.subr.mxu0 0.0
    %v2221 = vand.u32 %v1909, 4294901760
    %v2222 = vsub.f32 %v1909, %v2221
    %v2223 = vand.u32 %v2222, 4294901760
    %v2224 = vsub.f32 %v2222, %v2223
    %v2225 = vand.u32 %v2224, 4294901760
    %2226 = vmatpush1.msra.mxu0 %v2225
    %2227 = vmatprep.subr.mxu0 0.0
    %v2228 = vand.u32 %v1910, 4294901760
    %v2229 = vsub.f32 %v1910, %v2228
    %v2230 = vand.u32 %v2229, 4294901760
    %v2231 = vsub.f32 %v2229, %v2230
    %v2232 = vand.u32 %v2231, 4294901760
    %2233 = vmatpush1.msra.mxu0 %v2232
    %2234 = vmatprep.subr.mxu0 0.0
    %v2235 = vand.u32 %v1911, 4294901760
    %v2236 = vsub.f32 %v1911, %v2235
    %v2237 = vand.u32 %v2236, 4294901760
    %v2238 = vsub.f32 %v2236, %v2237
    %v2239 = vand.u32 %v2238, 4294901760
    %2240 = vmatpush1.msra.mxu0 %v2239
    %2241 = vmatprep.subr.mxu0 0.0
    %v2242 = vand.u32 %v1912, 4294901760
    %v2243 = vsub.f32 %v1912, %v2242
    %v2244 = vand.u32 %v2243, 4294901760
    %v2245 = vsub.f32 %v2243, %v2244
    %v2246 = vand.u32 %v2245, 4294901760
    %2247 = vmatpush1.msra.mxu0 %v2246
    %2248 = vmatprep.subr.mxu0 0.0
    %v2249 = vand.u32 %v1913, 4294901760
    %v2250 = vsub.f32 %v1913, %v2249
    %v2251 = vand.u32 %v2250, 4294901760
    %v2252 = vsub.f32 %v2250, %v2251
    %v2253 = vand.u32 %v2252, 4294901760
    %2254 = vmatpush1.msra.mxu0 %v2253
    %2255 = vmatprep.subr.mxu0 0.0
    %v2256 = vand.u32 %v1914, 4294901760
    %v2257 = vsub.f32 %v1914, %v2256
    %v2258 = vand.u32 %v2257, 4294901760
    %v2259 = vsub.f32 %v2257, %v2258
    %v2260 = vand.u32 %v2259, 4294901760
    %2261 = vmatpush1.msra.mxu0 %v2260
    %2262 = vmatprep.subr.mxu0 0.0
    %v2263 = vand.u32 %v1915, 4294901760
    %v2264 = vsub.f32 %v1915, %v2263
    %v2265 = vand.u32 %v2264, 4294901760
    %v2266 = vsub.f32 %v2264, %v2265
    %v2267 = vand.u32 %v2266, 4294901760
    %2268 = vmatpush1.msra.mxu0 %v2267
    %2269 = vmatprep.subr.mxu0 0.0
    %2270 = vmatpush1.msra.mxu0 0.0
    %2271 = vmatprep.subr.mxu0 0.0
    %2272 = vmatpush1.msra.mxu0 0.0
    %2273 = vmatprep.subr.mxu0 0.0
    %2274 = vmatpush1.msra.mxu0 0.0
    %2275 = vmatprep.subr.mxu0 0.0
    %2276 = vmatpush1.msra.mxu0 0.0
    %2277 = vmatprep.subr.mxu0 0.0
    %2278 = vmatpush1.msra.mxu0 0.0
    %2279 = vmatprep.subr.mxu0 0.0
    %2280 = vmatpush1.msra.mxu0 0.0
    %2281 = vmatprep.subr.mxu0 0.0
    %2282 = vmatpush1.msra.mxu0 0.0
    %2283 = vmatprep.subr.mxu0 0.0
    %2284 = vmatpush1.msra.mxu0 0.0
    %2285 = vmatprep.subr.mxu0 0.0
    %2286 = vmatpush1.msra.mxu0 0.0
    %2287 = vmatprep.subr.mxu0 0.0
    %2288 = vmatpush1.msra.mxu0 0.0
    %2289 = vmatprep.subr.mxu0 0.0
    %2290 = vmatpush1.msra.mxu0 0.0
    %2291 = vmatprep.subr.mxu0 0.0
    %2292 = vmatpush1.msra.mxu0 0.0
    %2293 = vmatprep.subr.mxu0 0.0
    %2294 = vmatpush1.msra.mxu0 0.0
    %2295 = vmatprep.subr.mxu0 0.0
    %2296 = vmatpush1.msra.mxu0 0.0
    %2297 = vmatprep.subr.mxu0 0.0
    %2298 = vmatpush1.msra.mxu0 0.0
    %2299 = vmatprep.subr.mxu0 0.0
    %2300 = vmatpush1.msra.mxu0 0.0
    %2301 = vmatprep.mubr.f32.mxu0 0.0
    %v2302 = vand.u32 %v1884, 4294901760
    %2303 = vmatmul.mubr.f32.gmra.mrb[0].mxu0 %v2302
    %v2304 = vpop.f32.mrb[0].mxu0
    %v2305 = vadd.f32 %v2004, %v2304
    %v2306 = vpop.f32.mrb[0].mxu0
    %2307 = vmatprep.mubr.f32.mxu0 0.0
    %v2308 = vand.u32 %v1885, 4294901760
    %2309 = vmatmul.mubr.f32.gmra.mrb[0].mxu0 %v2308
    %v2310 = vpop.f32.mrb[0].mxu0
    %v2311 = vadd.f32 %v2014, %v2310
    %v2312 = vpop.f32.mrb[0].mxu0
    %2313 = vmatprep.mubr.f32.mxu0 0.0
    %v2314 = vand.u32 %v1886, 4294901760
    %2315 = vmatmul.mubr.f32.gmra.mrb[0].mxu0 %v2314
    %v2316 = vpop.f32.mrb[0].mxu0
    %v2317 = vadd.f32 %v2024, %v2316
    %v2318 = vpop.f32.mrb[0].mxu0
    %2319 = vmatprep.mubr.f32.mxu0 0.0
    %v2320 = vand.u32 %v1887, 4294901760
    %2321 = vmatmul.mubr.f32.gmra.mrb[0].mxu0 %v2320
    %v2322 = vpop.f32.mrb[0].mxu0
    %v2323 = vadd.f32 %v2034, %v2322
    %v2324 = vpop.f32.mrb[0].mxu0
    %2325 = vmatprep.mubr.f32.mxu0 0.0
    %v2326 = vand.u32 %v1888, 4294901760
    %2327 = vmatmul.mubr.f32.gmra.mrb[0].mxu0 %v2326
    %v2328 = vpop.f32.mrb[0].mxu0
    %v2329 = vadd.f32 %v2044, %v2328
    %v2330 = vpop.f32.mrb[0].mxu0
    %2331 = vmatprep.mubr.f32.mxu0 0.0
    %v2332 = vand.u32 %v1889, 4294901760
    %2333 = vmatmul.mubr.f32.gmra.mrb[0].mxu0 %v2332
    %v2334 = vpop.f32.mrb[0].mxu0
    %v2335 = vadd.f32 %v2054, %v2334
    %v2336 = vpop.f32.mrb[0].mxu0
    %2337 = vmatprep.mubr.f32.mxu0 0.0
    %v2338 = vand.u32 %v1890, 4294901760
    %2339 = vmatmul.mubr.f32.gmra.mrb[0].mxu0 %v2338
    %v2340 = vpop.f32.mrb[0].mxu0
    %v2341 = vadd.f32 %v2064, %v2340
    %v2342 = vpop.f32.mrb[0].mxu0
    %2343 = vmatprep.mubr.f32.mxu0 0.0
    %v2344 = vand.u32 %v1891, 4294901760
    %2345 = vmatmul.mubr.f32.gmra.mrb[0].mxu0 %v2344
    %v2346 = vpop.f32.mrb[0].mxu0
    %v2347 = vadd.f32 %v2074, %v2346
    %v2348 = vpop.f32.mrb[0].mxu0
    %2349 = vmatprep.mubr.f32.mxu0 0.0
    %v2350 = vand.u32 %v1892, 4294901760
    %2351 = vmatmul.mubr.f32.gmra.mrb[0].mxu0 %v2350
    %v2352 = vpop.f32.mrb[0].mxu0
    %v2353 = vadd.f32 %v2084, %v2352
    %v2354 = vpop.f32.mrb[0].mxu0
    %2355 = vmatprep.mubr.f32.mxu0 0.0
    %v2356 = vand.u32 %v1893, 4294901760
    %2357 = vmatmul.mubr.f32.gmra.mrb[0].mxu0 %v2356
    %v2358 = vpop.f32.mrb[0].mxu0
    %v2359 = vadd.f32 %v2094, %v2358
    %v2360 = vpop.f32.mrb[0].mxu0
    %2361 = vmatprep.mubr.f32.mxu0 0.0
    %v2362 = vand.u32 %v1894, 4294901760
    %2363 = vmatmul.mubr.f32.gmra.mrb[0].mxu0 %v2362
    %v2364 = vpop.f32.mrb[0].mxu0
    %v2365 = vadd.f32 %v2104, %v2364
    %v2366 = vpop.f32.mrb[0].mxu0
    %2367 = vmatprep.mubr.f32.mxu0 0.0
    %v2368 = vand.u32 %v1895, 4294901760
    %2369 = vmatmul.mubr.f32.gmra.mrb[0].mxu0 %v2368
    %v2370 = vpop.f32.mrb[0].mxu0
    %v2371 = vadd.f32 %v2114, %v2370
    %v2372 = vpop.f32.mrb[0].mxu0
    %2373 = vmatprep.mubr.f32.mxu0 0.0
    %v2374 = vand.u32 %v1896, 4294901760
    %2375 = vmatmul.mubr.f32.gmra.mrb[0].mxu0 %v2374
    %v2376 = vpop.f32.mrb[0].mxu0
    %v2377 = vadd.f32 %v2124, %v2376
    %v2378 = vpop.f32.mrb[0].mxu0
    %2379 = vmatprep.mubr.f32.mxu0 0.0
    %v2380 = vand.u32 %v1897, 4294901760
    %2381 = vmatmul.mubr.f32.gmra.mrb[0].mxu0 %v2380
    %v2382 = vpop.f32.mrb[0].mxu0
    %v2383 = vadd.f32 %v2134, %v2382
    %v2384 = vpop.f32.mrb[0].mxu0
    %2385 = vmatprep.mubr.f32.mxu0 0.0
    %v2386 = vand.u32 %v1898, 4294901760
    %2387 = vmatmul.mubr.f32.gmra.mrb[0].mxu0 %v2386
    %v2388 = vpop.f32.mrb[0].mxu0
    %v2389 = vadd.f32 %v2144, %v2388
    %v2390 = vpop.f32.mrb[0].mxu0
    %2391 = vmatprep.mubr.f32.mxu0 0.0
    %v2392 = vand.u32 %v1899, 4294901760
    %2393 = vmatmul.mubr.f32.gmra.mrb[0].mxu0 %v2392
    %v2394 = vpop.f32.mrb[0].mxu0
    %v2395 = vadd.f32 %v2154, %v2394
    %v2396 = vpop.f32.mrb[0].mxu0
    %2397 = vdwg.mxu0
    %2398 = vmatprep.subr.mxu0 0.0
    %v2399 = vand.u32 %v1900, 4294901760
    %v2400 = vsub.f32 %v1900, %v2399
    %2401 = vmatpush1.msra.mxu0 %v2400
    %2402 = vmatprep.subr.mxu0 0.0
    %v2403 = vand.u32 %v1901, 4294901760
    %v2404 = vsub.f32 %v1901, %v2403
    %2405 = vmatpush1.msra.mxu0 %v2404
    %2406 = vmatprep.subr.mxu0 0.0
    %v2407 = vand.u32 %v1902, 4294901760
    %v2408 = vsub.f32 %v1902, %v2407
    %2409 = vmatpush1.msra.mxu0 %v2408
    %2410 = vmatprep.subr.mxu0 0.0
    %v2411 = vand.u32 %v1903, 4294901760
    %v2412 = vsub.f32 %v1903, %v2411
    %2413 = vmatpush1.msra.mxu0 %v2412
    %2414 = vmatprep.subr.mxu0 0.0
    %v2415 = vand.u32 %v1904, 4294901760
    %v2416 = vsub.f32 %v1904, %v2415
    %2417 = vmatpush1.msra.mxu0 %v2416
    %2418 = vmatprep.subr.mxu0 0.0
    %v2419 = vand.u32 %v1905, 4294901760
    %v2420 = vsub.f32 %v1905, %v2419
    %2421 = vmatpush1.msra.mxu0 %v2420
    %2422 = vmatprep.subr.mxu0 0.0
    %v2423 = vand.u32 %v1906, 4294901760
    %v2424 = vsub.f32 %v1906, %v2423
    %2425 = vmatpush1.msra.mxu0 %v2424
    %2426 = vmatprep.subr.mxu0 0.0
    %v2427 = vand.u32 %v1907, 4294901760
    %v2428 = vsub.f32 %v1907, %v2427
    %2429 = vmatpush1.msra.mxu0 %v2428
    %2430 = vmatprep.subr.mxu0 0.0
    %v2431 = vand.u32 %v1908, 4294901760
    %v2432 = vsub.f32 %v1908, %v2431
    %2433 = vmatpush1.msra.mxu0 %v2432
    %2434 = vmatprep.subr.mxu0 0.0
    %v2435 = vand.u32 %v1909, 4294901760
    %v2436 = vsub.f32 %v1909, %v2435
    %2437 = vmatpush1.msra.mxu0 %v2436
    %2438 = vmatprep.subr.mxu0 0.0
    %v2439 = vand.u32 %v1910, 4294901760
    %v2440 = vsub.f32 %v1910, %v2439
    %2441 = vmatpush1.msra.mxu0 %v2440
    %2442 = vmatprep.subr.mxu0 0.0
    %v2443 = vand.u32 %v1911, 4294901760
    %v2444 = vsub.f32 %v1911, %v2443
    %2445 = vmatpush1.msra.mxu0 %v2444
    %2446 = vmatprep.subr.mxu0 0.0
    %v2447 = vand.u32 %v1912, 4294901760
    %v2448 = vsub.f32 %v1912, %v2447
    %2449 = vmatpush1.msra.mxu0 %v2448
    %2450 = vmatprep.subr.mxu0 0.0
    %v2451 = vand.u32 %v1913, 4294901760
    %v2452 = vsub.f32 %v1913, %v2451
    %2453 = vmatpush1.msra.mxu0 %v2452
    %2454 = vmatprep.subr.mxu0 0.0
    %v2455 = vand.u32 %v1914, 4294901760
    %v2456 = vsub.f32 %v1914, %v2455
    %2457 = vmatpush1.msra.mxu0 %v2456
    %2458 = vmatprep.subr.mxu0 0.0
    %v2459 = vand.u32 %v1915, 4294901760
    %v2460 = vsub.f32 %v1915, %v2459
    %2461 = vmatpush1.msra.mxu0 %v2460
    %2462 = vmatprep.subr.mxu0 0.0
    %2463 = vmatpush1.msra.mxu0 0.0
    %2464 = vmatprep.subr.mxu0 0.0
    %2465 = vmatpush1.msra.mxu0 0.0
    %2466 = vmatprep.subr.mxu0 0.0
    %2467 = vmatpush1.msra.mxu0 0.0
    %2468 = vmatprep.subr.mxu0 0.0
    %2469 = vmatpush1.msra.mxu0 0.0
    %2470 = vmatprep.subr.mxu0 0.0
    %2471 = vmatpush1.msra.mxu0 0.0
    %2472 = vmatprep.subr.mxu0 0.0
    %2473 = vmatpush1.msra.mxu0 0.0
    %2474 = vmatprep.subr.mxu0 0.0
    %2475 = vmatpush1.msra.mxu0 0.0
    %2476 = vmatprep.subr.mxu0 0.0
    %2477 = vmatpush1.msra.mxu0 0.0
    %2478 = vmatprep.subr.mxu0 0.0
    %2479 = vmatpush1.msra.mxu0 0.0
    %2480 = vmatprep.subr.mxu0 0.0
    %2481 = vmatpush1.msra.mxu0 0.0
    %2482 = vmatprep.subr.mxu0 0.0
    %2483 = vmatpush1.msra.mxu0 0.0
    %2484 = vmatprep.subr.mxu0 0.0
    %2485 = vmatpush1.msra.mxu0 0.0
    %2486 = vmatprep.subr.mxu0 0.0
    %2487 = vmatpush1.msra.mxu0 0.0
    %2488 = vmatprep.subr.mxu0 0.0
    %2489 = vmatpush1.msra.mxu0 0.0
    %2490 = vmatprep.subr.mxu0 0.0
    %2491 = vmatpush1.msra.mxu0 0.0
    %2492 = vmatprep.subr.mxu0 0.0
    %2493 = vmatpush1.msra.mxu0 0.0
    %2494 = vmatprep.mubr.f32.mxu0 0.0
    %v2495 = vand.u32 %v1884, 4294901760
    %v2496 = vsub.f32 %v1884, %v2495
    %2497 = vmatmul.mubr.f32.gmra.mrb[0].mxu0 %v2496
    %v2498 = vpop.f32.mrb[0].mxu0
    %v2499 = vadd.f32 %v2305, %v2498
    %v2500 = vpop.f32.mrb[0].mxu0
    %2501 = vmatprep.mubr.f32.mxu0 0.0
    %v2502 = vand.u32 %v1885, 4294901760
    %v2503 = vsub.f32 %v1885, %v2502
    %2504 = vmatmul.mubr.f32.gmra.mrb[0].mxu0 %v2503
    %v2505 = vpop.f32.mrb[0].mxu0
    %v2506 = vadd.f32 %v2311, %v2505
    %v2507 = vpop.f32.mrb[0].mxu0
    %2508 = vmatprep.mubr.f32.mxu0 0.0
    %v2509 = vand.u32 %v1886, 4294901760
    %v2510 = vsub.f32 %v1886, %v2509
    %2511 = vmatmul.mubr.f32.gmra.mrb[0].mxu0 %v2510
    %v2512 = vpop.f32.mrb[0].mxu0
    %v2513 = vadd.f32 %v2317, %v2512
    %v2514 = vpop.f32.mrb[0].mxu0
    %2515 = vmatprep.mubr.f32.mxu0 0.0
    %v2516 = vand.u32 %v1887, 4294901760
    %v2517 = vsub.f32 %v1887, %v2516
    %2518 = vmatmul.mubr.f32.gmra.mrb[0].mxu0 %v2517
    %v2519 = vpop.f32.mrb[0].mxu0
    %v2520 = vadd.f32 %v2323, %v2519
    %v2521 = vpop.f32.mrb[0].mxu0
    %2522 = vmatprep.mubr.f32.mxu0 0.0
    %v2523 = vand.u32 %v1888, 4294901760
    %v2524 = vsub.f32 %v1888, %v2523
    %2525 = vmatmul.mubr.f32.gmra.mrb[0].mxu0 %v2524
    %v2526 = vpop.f32.mrb[0].mxu0
    %v2527 = vadd.f32 %v2329, %v2526
    %v2528 = vpop.f32.mrb[0].mxu0
    %2529 = vmatprep.mubr.f32.mxu0 0.0
    %v2530 = vand.u32 %v1889, 4294901760
    %v2531 = vsub.f32 %v1889, %v2530
    %2532 = vmatmul.mubr.f32.gmra.mrb[0].mxu0 %v2531
    %v2533 = vpop.f32.mrb[0].mxu0
    %v2534 = vadd.f32 %v2335, %v2533
    %v2535 = vpop.f32.mrb[0].mxu0
    %2536 = vmatprep.mubr.f32.mxu0 0.0
    %v2537 = vand.u32 %v1890, 4294901760
    %v2538 = vsub.f32 %v1890, %v2537
    %2539 = vmatmul.mubr.f32.gmra.mrb[0].mxu0 %v2538
    %v2540 = vpop.f32.mrb[0].mxu0
    %v2541 = vadd.f32 %v2341, %v2540
    %v2542 = vpop.f32.mrb[0].mxu0
    %2543 = vmatprep.mubr.f32.mxu0 0.0
    %v2544 = vand.u32 %v1891, 4294901760
    %v2545 = vsub.f32 %v1891, %v2544
    %2546 = vmatmul.mubr.f32.gmra.mrb[0].mxu0 %v2545
    %v2547 = vpop.f32.mrb[0].mxu0
    %v2548 = vadd.f32 %v2347, %v2547
    %v2549 = vpop.f32.mrb[0].mxu0
    %2550 = vmatprep.mubr.f32.mxu0 0.0
    %v2551 = vand.u32 %v1892, 4294901760
    %v2552 = vsub.f32 %v1892, %v2551
    %2553 = vmatmul.mubr.f32.gmra.mrb[0].mxu0 %v2552
    %v2554 = vpop.f32.mrb[0].mxu0
    %v2555 = vadd.f32 %v2353, %v2554
    %v2556 = vpop.f32.mrb[0].mxu0
    %2557 = vmatprep.mubr.f32.mxu0 0.0
    %v2558 = vand.u32 %v1893, 4294901760
    %v2559 = vsub.f32 %v1893, %v2558
    %2560 = vmatmul.mubr.f32.gmra.mrb[0].mxu0 %v2559
    %v2561 = vpop.f32.mrb[0].mxu0
    %v2562 = vadd.f32 %v2359, %v2561
    %v2563 = vpop.f32.mrb[0].mxu0
    %2564 = vmatprep.mubr.f32.mxu0 0.0
    %v2565 = vand.u32 %v1894, 4294901760
    %v2566 = vsub.f32 %v1894, %v2565
    %2567 = vmatmul.mubr.f32.gmra.mrb[0].mxu0 %v2566
    %v2568 = vpop.f32.mrb[0].mxu0
    %v2569 = vadd.f32 %v2365, %v2568
    %v2570 = vpop.f32.mrb[0].mxu0
    %2571 = vmatprep.mubr.f32.mxu0 0.0
    %v2572 = vand.u32 %v1895, 4294901760
    %v2573 = vsub.f32 %v1895, %v2572
    %2574 = vmatmul.mubr.f32.gmra.mrb[0].mxu0 %v2573
    %v2575 = vpop.f32.mrb[0].mxu0
    %v2576 = vadd.f32 %v2371, %v2575
    %v2577 = vpop.f32.mrb[0].mxu0
    %2578 = vmatprep.mubr.f32.mxu0 0.0
    %v2579 = vand.u32 %v1896, 4294901760
    %v2580 = vsub.f32 %v1896, %v2579
    %2581 = vmatmul.mubr.f32.gmra.mrb[0].mxu0 %v2580
    %v2582 = vpop.f32.mrb[0].mxu0
    %v2583 = vadd.f32 %v2377, %v2582
    %v2584 = vpop.f32.mrb[0].mxu0
    %2585 = vmatprep.mubr.f32.mxu0 0.0
    %v2586 = vand.u32 %v1897, 4294901760
    %v2587 = vsub.f32 %v1897, %v2586
    %2588 = vmatmul.mubr.f32.gmra.mrb[0].mxu0 %v2587
    %v2589 = vpop.f32.mrb[0].mxu0
    %v2590 = vadd.f32 %v2383, %v2589
    %v2591 = vpop.f32.mrb[0].mxu0
    %2592 = vmatprep.mubr.f32.mxu0 0.0
    %v2593 = vand.u32 %v1898, 4294901760
    %v2594 = vsub.f32 %v1898, %v2593
    %2595 = vmatmul.mubr.f32.gmra.mrb[0].mxu0 %v2594
    %v2596 = vpop.f32.mrb[0].mxu0
    %v2597 = vadd.f32 %v2389, %v2596
    %v2598 = vpop.f32.mrb[0].mxu0
    %2599 = vmatprep.mubr.f32.mxu0 0.0
    %v2600 = vand.u32 %v1899, 4294901760
    %v2601 = vsub.f32 %v1899, %v2600
    %2602 = vmatmul.mubr.f32.gmra.mrb[0].mxu0 %v2601
    %v2603 = vpop.f32.mrb[0].mxu0
    %v2604 = vadd.f32 %v2395, %v2603
    %v2605 = vpop.f32.mrb[0].mxu0
    %2606 = vdwg.mxu0
    %2607 = vmatprep.subr.mxu0 0.0
    %v2608 = vand.u32 %v1900, 4294901760
    %2609 = vmatpush1.msra.mxu0 %v2608
    %2610 = vmatprep.subr.mxu0 0.0
    %v2611 = vand.u32 %v1901, 4294901760
    %2612 = vmatpush1.msra.mxu0 %v2611
    %2613 = vmatprep.subr.mxu0 0.0
    %v2614 = vand.u32 %v1902, 4294901760
    %2615 = vmatpush1.msra.mxu0 %v2614
    %2616 = vmatprep.subr.mxu0 0.0
    %v2617 = vand.u32 %v1903, 4294901760
    %2618 = vmatpush1.msra.mxu0 %v2617
    %2619 = vmatprep.subr.mxu0 0.0
    %v2620 = vand.u32 %v1904, 4294901760
    %2621 = vmatpush1.msra.mxu0 %v2620
    %2622 = vmatprep.subr.mxu0 0.0
    %v2623 = vand.u32 %v1905, 4294901760
    %2624 = vmatpush1.msra.mxu0 %v2623
    %2625 = vmatprep.subr.mxu0 0.0
    %v2626 = vand.u32 %v1906, 4294901760
    %2627 = vmatpush1.msra.mxu0 %v2626
    %2628 = vmatprep.subr.mxu0 0.0
    %v2629 = vand.u32 %v1907, 4294901760
    %2630 = vmatpush1.msra.mxu0 %v2629
    %2631 = vmatprep.subr.mxu0 0.0
    %v2632 = vand.u32 %v1908, 4294901760
    %2633 = vmatpush1.msra.mxu0 %v2632
    %2634 = vmatprep.subr.mxu0 0.0
    %v2635 = vand.u32 %v1909, 4294901760
    %2636 = vmatpush1.msra.mxu0 %v2635
    %2637 = vmatprep.subr.mxu0 0.0
    %v2638 = vand.u32 %v1910, 4294901760
    %2639 = vmatpush1.msra.mxu0 %v2638
    %2640 = vmatprep.subr.mxu0 0.0
    %v2641 = vand.u32 %v1911, 4294901760
    %2642 = vmatpush1.msra.mxu0 %v2641
    %2643 = vmatprep.subr.mxu0 0.0
    %v2644 = vand.u32 %v1912, 4294901760
    %2645 = vmatpush1.msra.mxu0 %v2644
    %2646 = vmatprep.subr.mxu0 0.0
    %v2647 = vand.u32 %v1913, 4294901760
    %2648 = vmatpush1.msra.mxu0 %v2647
    %2649 = vmatprep.subr.mxu0 0.0
    %v2650 = vand.u32 %v1914, 4294901760
    %2651 = vmatpush1.msra.mxu0 %v2650
    %2652 = vmatprep.subr.mxu0 0.0
    %v2653 = vand.u32 %v1915, 4294901760
    %2654 = vmatpush1.msra.mxu0 %v2653
    %2655 = vmatprep.subr.mxu0 0.0
    %2656 = vmatpush1.msra.mxu0 0.0
    %2657 = vmatprep.subr.mxu0 0.0
    %2658 = vmatpush1.msra.mxu0 0.0
    %2659 = vmatprep.subr.mxu0 0.0
    %2660 = vmatpush1.msra.mxu0 0.0
    %2661 = vmatprep.subr.mxu0 0.0
    %2662 = vmatpush1.msra.mxu0 0.0
    %2663 = vmatprep.subr.mxu0 0.0
    %2664 = vmatpush1.msra.mxu0 0.0
    %2665 = vmatprep.subr.mxu0 0.0
    %2666 = vmatpush1.msra.mxu0 0.0
    %2667 = vmatprep.subr.mxu0 0.0
    %2668 = vmatpush1.msra.mxu0 0.0
    %2669 = vmatprep.subr.mxu0 0.0
    %2670 = vmatpush1.msra.mxu0 0.0
    %2671 = vmatprep.subr.mxu0 0.0
    %2672 = vmatpush1.msra.mxu0 0.0
    %2673 = vmatprep.subr.mxu0 0.0
    %2674 = vmatpush1.msra.mxu0 0.0
    %2675 = vmatprep.subr.mxu0 0.0
    %2676 = vmatpush1.msra.mxu0 0.0
    %2677 = vmatprep.subr.mxu0 0.0
    %2678 = vmatpush1.msra.mxu0 0.0
    %2679 = vmatprep.subr.mxu0 0.0
    %2680 = vmatpush1.msra.mxu0 0.0
    %2681 = vmatprep.subr.mxu0 0.0
    %2682 = vmatpush1.msra.mxu0 0.0
    %2683 = vmatprep.subr.mxu0 0.0
    %2684 = vmatpush1.msra.mxu0 0.0
    %2685 = vmatprep.subr.mxu0 0.0
    %2686 = vmatpush1.msra.mxu0 0.0
    %2687 = vmatprep.mubr.f32.mxu0 0.0
    %v2688 = vand.u32 %v1884, 4294901760
    %v2689 = vsub.f32 %v1884, %v2688
    %v2690 = vand.u32 %v2689, 4294901760
    %2691 = vmatmul.mubr.f32.gmra.mrb[0].mxu0 %v2690
    %v2692 = vpop.f32.mrb[0].mxu0
    %v2693 = vadd.f32 %v2499, %v2692
    %v2694 = vpop.f32.mrb[0].mxu0
    %2695 = vmatprep.mubr.f32.mxu0 0.0
    %v2696 = vand.u32 %v1885, 4294901760
    %v2697 = vsub.f32 %v1885, %v2696
    %v2698 = vand.u32 %v2697, 4294901760
    %2699 = vmatmul.mubr.f32.gmra.mrb[0].mxu0 %v2698
    %v2700 = vpop.f32.mrb[0].mxu0
    %v2701 = vadd.f32 %v2506, %v2700
    %v2702 = vpop.f32.mrb[0].mxu0
    %2703 = vmatprep.mubr.f32.mxu0 0.0
    %v2704 = vand.u32 %v1886, 4294901760
    %v2705 = vsub.f32 %v1886, %v2704
    %v2706 = vand.u32 %v2705, 4294901760
    %2707 = vmatmul.mubr.f32.gmra.mrb[0].mxu0 %v2706
    %v2708 = vpop.f32.mrb[0].mxu0
    %v2709 = vadd.f32 %v2513, %v2708
    %v2710 = vpop.f32.mrb[0].mxu0
    %2711 = vmatprep.mubr.f32.mxu0 0.0
    %v2712 = vand.u32 %v1887, 4294901760
    %v2713 = vsub.f32 %v1887, %v2712
    %v2714 = vand.u32 %v2713, 4294901760
    %2715 = vmatmul.mubr.f32.gmra.mrb[0].mxu0 %v2714
    %v2716 = vpop.f32.mrb[0].mxu0
    %v2717 = vadd.f32 %v2520, %v2716
    %v2718 = vpop.f32.mrb[0].mxu0
    %2719 = vmatprep.mubr.f32.mxu0 0.0
    %v2720 = vand.u32 %v1888, 4294901760
    %v2721 = vsub.f32 %v1888, %v2720
    %v2722 = vand.u32 %v2721, 4294901760
    %2723 = vmatmul.mubr.f32.gmra.mrb[0].mxu0 %v2722
    %v2724 = vpop.f32.mrb[0].mxu0
    %v2725 = vadd.f32 %v2527, %v2724
    %v2726 = vpop.f32.mrb[0].mxu0
    %2727 = vmatprep.mubr.f32.mxu0 0.0
    %v2728 = vand.u32 %v1889, 4294901760
    %v2729 = vsub.f32 %v1889, %v2728
    %v2730 = vand.u32 %v2729, 4294901760
    %2731 = vmatmul.mubr.f32.gmra.mrb[0].mxu0 %v2730
    %v2732 = vpop.f32.mrb[0].mxu0
    %v2733 = vadd.f32 %v2534, %v2732
    %v2734 = vpop.f32.mrb[0].mxu0
    %2735 = vmatprep.mubr.f32.mxu0 0.0
    %v2736 = vand.u32 %v1890, 4294901760
    %v2737 = vsub.f32 %v1890, %v2736
    %v2738 = vand.u32 %v2737, 4294901760
    %2739 = vmatmul.mubr.f32.gmra.mrb[0].mxu0 %v2738
    %v2740 = vpop.f32.mrb[0].mxu0
    %v2741 = vadd.f32 %v2541, %v2740
    %v2742 = vpop.f32.mrb[0].mxu0
    %2743 = vmatprep.mubr.f32.mxu0 0.0
    %v2744 = vand.u32 %v1891, 4294901760
    %v2745 = vsub.f32 %v1891, %v2744
    %v2746 = vand.u32 %v2745, 4294901760
    %2747 = vmatmul.mubr.f32.gmra.mrb[0].mxu0 %v2746
    %v2748 = vpop.f32.mrb[0].mxu0
    %v2749 = vadd.f32 %v2548, %v2748
    %v2750 = vpop.f32.mrb[0].mxu0
    %2751 = vmatprep.mubr.f32.mxu0 0.0
    %v2752 = vand.u32 %v1892, 4294901760
    %v2753 = vsub.f32 %v1892, %v2752
    %v2754 = vand.u32 %v2753, 4294901760
    %2755 = vmatmul.mubr.f32.gmra.mrb[0].mxu0 %v2754
    %v2756 = vpop.f32.mrb[0].mxu0
    %v2757 = vadd.f32 %v2555, %v2756
    %v2758 = vpop.f32.mrb[0].mxu0
    %2759 = vmatprep.mubr.f32.mxu0 0.0
    %v2760 = vand.u32 %v1893, 4294901760
    %v2761 = vsub.f32 %v1893, %v2760
    %v2762 = vand.u32 %v2761, 4294901760
    %2763 = vmatmul.mubr.f32.gmra.mrb[0].mxu0 %v2762
    %v2764 = vpop.f32.mrb[0].mxu0
    %v2765 = vadd.f32 %v2562, %v2764
    %v2766 = vpop.f32.mrb[0].mxu0
    %2767 = vmatprep.mubr.f32.mxu0 0.0
    %v2768 = vand.u32 %v1894, 4294901760
    %v2769 = vsub.f32 %v1894, %v2768
    %v2770 = vand.u32 %v2769, 4294901760
    %2771 = vmatmul.mubr.f32.gmra.mrb[0].mxu0 %v2770
    %v2772 = vpop.f32.mrb[0].mxu0
    %v2773 = vadd.f32 %v2569, %v2772
    %v2774 = vpop.f32.mrb[0].mxu0
    %2775 = vmatprep.mubr.f32.mxu0 0.0
    %v2776 = vand.u32 %v1895, 4294901760
    %v2777 = vsub.f32 %v1895, %v2776
    %v2778 = vand.u32 %v2777, 4294901760
    %2779 = vmatmul.mubr.f32.gmra.mrb[0].mxu0 %v2778
    %v2780 = vpop.f32.mrb[0].mxu0
    %v2781 = vadd.f32 %v2576, %v2780
    %v2782 = vpop.f32.mrb[0].mxu0
    %2783 = vmatprep.mubr.f32.mxu0 0.0
    %v2784 = vand.u32 %v1896, 4294901760
    %v2785 = vsub.f32 %v1896, %v2784
    %v2786 = vand.u32 %v2785, 4294901760
    %2787 = vmatmul.mubr.f32.gmra.mrb[0].mxu0 %v2786
    %v2788 = vpop.f32.mrb[0].mxu0
    %v2789 = vadd.f32 %v2583, %v2788
    %v2790 = vpop.f32.mrb[0].mxu0
    %2791 = vmatprep.mubr.f32.mxu0 0.0
    %v2792 = vand.u32 %v1897, 4294901760
    %v2793 = vsub.f32 %v1897, %v2792
    %v2794 = vand.u32 %v2793, 4294901760
    %2795 = vmatmul.mubr.f32.gmra.mrb[0].mxu0 %v2794
    %v2796 = vpop.f32.mrb[0].mxu0
    %v2797 = vadd.f32 %v2590, %v2796
    %v2798 = vpop.f32.mrb[0].mxu0
    %2799 = vmatprep.mubr.f32.mxu0 0.0
    %v2800 = vand.u32 %v1898, 4294901760
    %v2801 = vsub.f32 %v1898, %v2800
    %v2802 = vand.u32 %v2801, 4294901760
    %2803 = vmatmul.mubr.f32.gmra.mrb[0].mxu0 %v2802
    %v2804 = vpop.f32.mrb[0].mxu0
    %v2805 = vadd.f32 %v2597, %v2804
    %v2806 = vpop.f32.mrb[0].mxu0
    %2807 = vmatprep.mubr.f32.mxu0 0.0
    %v2808 = vand.u32 %v1899, 4294901760
    %v2809 = vsub.f32 %v1899, %v2808
    %v2810 = vand.u32 %v2809, 4294901760
    %2811 = vmatmul.mubr.f32.gmra.mrb[0].mxu0 %v2810
    %v2812 = vpop.f32.mrb[0].mxu0
    %v2813 = vadd.f32 %v2604, %v2812
    %v2814 = vpop.f32.mrb[0].mxu0
    %2815 = vdwg.mxu0
    %2816 = vmatprep.subr.mxu0 0.0
    %v2817 = vand.u32 %v1900, 4294901760
    %v2818 = vsub.f32 %v1900, %v2817
    %v2819 = vand.u32 %v2818, 4294901760
    %2820 = vmatpush1.msra.mxu0 %v2819
    %2821 = vmatprep.subr.mxu0 0.0
    %v2822 = vand.u32 %v1901, 4294901760
    %v2823 = vsub.f32 %v1901, %v2822
    %v2824 = vand.u32 %v2823, 4294901760
    %2825 = vmatpush1.msra.mxu0 %v2824
    %2826 = vmatprep.subr.mxu0 0.0
    %v2827 = vand.u32 %v1902, 4294901760
    %v2828 = vsub.f32 %v1902, %v2827
    %v2829 = vand.u32 %v2828, 4294901760
    %2830 = vmatpush1.msra.mxu0 %v2829
    %2831 = vmatprep.subr.mxu0 0.0
    %v2832 = vand.u32 %v1903, 4294901760
    %v2833 = vsub.f32 %v1903, %v2832
    %v2834 = vand.u32 %v2833, 4294901760
    %2835 = vmatpush1.msra.mxu0 %v2834
    %2836 = vmatprep.subr.mxu0 0.0
    %v2837 = vand.u32 %v1904, 4294901760
    %v2838 = vsub.f32 %v1904, %v2837
    %v2839 = vand.u32 %v2838, 4294901760
    %2840 = vmatpush1.msra.mxu0 %v2839
    %2841 = vmatprep.subr.mxu0 0.0
    %v2842 = vand.u32 %v1905, 4294901760
    %v2843 = vsub.f32 %v1905, %v2842
    %v2844 = vand.u32 %v2843, 4294901760
    %2845 = vmatpush1.msra.mxu0 %v2844
    %2846 = vmatprep.subr.mxu0 0.0
    %v2847 = vand.u32 %v1906, 4294901760
    %v2848 = vsub.f32 %v1906, %v2847
    %v2849 = vand.u32 %v2848, 4294901760
    %2850 = vmatpush1.msra.mxu0 %v2849
    %2851 = vmatprep.subr.mxu0 0.0
    %v2852 = vand.u32 %v1907, 4294901760
    %v2853 = vsub.f32 %v1907, %v2852
    %v2854 = vand.u32 %v2853, 4294901760
    %2855 = vmatpush1.msra.mxu0 %v2854
    %2856 = vmatprep.subr.mxu0 0.0
    %v2857 = vand.u32 %v1908, 4294901760
    %v2858 = vsub.f32 %v1908, %v2857
    %v2859 = vand.u32 %v2858, 4294901760
    %2860 = vmatpush1.msra.mxu0 %v2859
    %2861 = vmatprep.subr.mxu0 0.0
    %v2862 = vand.u32 %v1909, 4294901760
    %v2863 = vsub.f32 %v1909, %v2862
    %v2864 = vand.u32 %v2863, 4294901760
    %2865 = vmatpush1.msra.mxu0 %v2864
    %2866 = vmatprep.subr.mxu0 0.0
    %v2867 = vand.u32 %v1910, 4294901760
    %v2868 = vsub.f32 %v1910, %v2867
    %v2869 = vand.u32 %v2868, 4294901760
    %2870 = vmatpush1.msra.mxu0 %v2869
    %2871 = vmatprep.subr.mxu0 0.0
    %v2872 = vand.u32 %v1911, 4294901760
    %v2873 = vsub.f32 %v1911, %v2872
    %v2874 = vand.u32 %v2873, 4294901760
    %2875 = vmatpush1.msra.mxu0 %v2874
    %2876 = vmatprep.subr.mxu0 0.0
    %v2877 = vand.u32 %v1912, 4294901760
    %v2878 = vsub.f32 %v1912, %v2877
    %v2879 = vand.u32 %v2878, 4294901760
    %2880 = vmatpush1.msra.mxu0 %v2879
    %2881 = vmatprep.subr.mxu0 0.0
    %v2882 = vand.u32 %v1913, 4294901760
    %v2883 = vsub.f32 %v1913, %v2882
    %v2884 = vand.u32 %v2883, 4294901760
    %2885 = vmatpush1.msra.mxu0 %v2884
    %2886 = vmatprep.subr.mxu0 0.0
    %v2887 = vand.u32 %v1914, 4294901760
    %v2888 = vsub.f32 %v1914, %v2887
    %v2889 = vand.u32 %v2888, 4294901760
    %2890 = vmatpush1.msra.mxu0 %v2889
    %2891 = vmatprep.subr.mxu0 0.0
    %v2892 = vand.u32 %v1915, 4294901760
    %v2893 = vsub.f32 %v1915, %v2892
    %v2894 = vand.u32 %v2893, 4294901760
    %2895 = vmatpush1.msra.mxu0 %v2894
    %2896 = vmatprep.subr.mxu0 0.0
    %2897 = vmatpush1.msra.mxu0 0.0
    %2898 = vmatprep.subr.mxu0 0.0
    %2899 = vmatpush1.msra.mxu0 0.0
    %2900 = vmatprep.subr.mxu0 0.0
    %2901 = vmatpush1.msra.mxu0 0.0
    %2902 = vmatprep.subr.mxu0 0.0
    %2903 = vmatpush1.msra.mxu0 0.0
    %2904 = vmatprep.subr.mxu0 0.0
    %2905 = vmatpush1.msra.mxu0 0.0
    %2906 = vmatprep.subr.mxu0 0.0
    %2907 = vmatpush1.msra.mxu0 0.0
    %2908 = vmatprep.subr.mxu0 0.0
    %2909 = vmatpush1.msra.mxu0 0.0
    %2910 = vmatprep.subr.mxu0 0.0
    %2911 = vmatpush1.msra.mxu0 0.0
    %2912 = vmatprep.subr.mxu0 0.0
    %2913 = vmatpush1.msra.mxu0 0.0
    %2914 = vmatprep.subr.mxu0 0.0
    %2915 = vmatpush1.msra.mxu0 0.0
    %2916 = vmatprep.subr.mxu0 0.0
    %2917 = vmatpush1.msra.mxu0 0.0
    %2918 = vmatprep.subr.mxu0 0.0
    %2919 = vmatpush1.msra.mxu0 0.0
    %2920 = vmatprep.subr.mxu0 0.0
    %2921 = vmatpush1.msra.mxu0 0.0
    %2922 = vmatprep.subr.mxu0 0.0
    %2923 = vmatpush1.msra.mxu0 0.0
    %2924 = vmatprep.subr.mxu0 0.0
    %2925 = vmatpush1.msra.mxu0 0.0
    %2926 = vmatprep.subr.mxu0 0.0
    %2927 = vmatpush1.msra.mxu0 0.0
    %2928 = vmatprep.mubr.f32.mxu0 0.0
    %v2929 = vand.u32 %v1884, 4294901760
    %2930 = vmatmul.mubr.f32.gmra.mrb[0].mxu0 %v2929
    %v2931 = vpop.f32.mrb[0].mxu0
    %v2932 = vadd.f32 %v2693, %v2931
    %v2933 = vpop.f32.mrb[0].mxu0
    %2934 = vmatprep.mubr.f32.mxu0 0.0
    %v2935 = vand.u32 %v1885, 4294901760
    %2936 = vmatmul.mubr.f32.gmra.mrb[0].mxu0 %v2935
    %v2937 = vpop.f32.mrb[0].mxu0
    %v2938 = vadd.f32 %v2701, %v2937
    %v2939 = vpop.f32.mrb[0].mxu0
    %2940 = vmatprep.mubr.f32.mxu0 0.0
    %v2941 = vand.u32 %v1886, 4294901760
    %2942 = vmatmul.mubr.f32.gmra.mrb[0].mxu0 %v2941
    %v2943 = vpop.f32.mrb[0].mxu0
    %v2944 = vadd.f32 %v2709, %v2943
    %v2945 = vpop.f32.mrb[0].mxu0
    %2946 = vmatprep.mubr.f32.mxu0 0.0
    %v2947 = vand.u32 %v1887, 4294901760
    %2948 = vmatmul.mubr.f32.gmra.mrb[0].mxu0 %v2947
    %v2949 = vpop.f32.mrb[0].mxu0
    %v2950 = vadd.f32 %v2717, %v2949
    %v2951 = vpop.f32.mrb[0].mxu0
    %2952 = vmatprep.mubr.f32.mxu0 0.0
    %v2953 = vand.u32 %v1888, 4294901760
    %2954 = vmatmul.mubr.f32.gmra.mrb[0].mxu0 %v2953
    %v2955 = vpop.f32.mrb[0].mxu0
    %v2956 = vadd.f32 %v2725, %v2955
    %v2957 = vpop.f32.mrb[0].mxu0
    %2958 = vmatprep.mubr.f32.mxu0 0.0
    %v2959 = vand.u32 %v1889, 4294901760
    %2960 = vmatmul.mubr.f32.gmra.mrb[0].mxu0 %v2959
    %v2961 = vpop.f32.mrb[0].mxu0
    %v2962 = vadd.f32 %v2733, %v2961
    %v2963 = vpop.f32.mrb[0].mxu0
    %2964 = vmatprep.mubr.f32.mxu0 0.0
    %v2965 = vand.u32 %v1890, 4294901760
    %2966 = vmatmul.mubr.f32.gmra.mrb[0].mxu0 %v2965
    %v2967 = vpop.f32.mrb[0].mxu0
    %v2968 = vadd.f32 %v2741, %v2967
    %v2969 = vpop.f32.mrb[0].mxu0
    %2970 = vmatprep.mubr.f32.mxu0 0.0
    %v2971 = vand.u32 %v1891, 4294901760
    %2972 = vmatmul.mubr.f32.gmra.mrb[0].mxu0 %v2971
    %v2973 = vpop.f32.mrb[0].mxu0
    %v2974 = vadd.f32 %v2749, %v2973
    %v2975 = vpop.f32.mrb[0].mxu0
    %2976 = vmatprep.mubr.f32.mxu0 0.0
    %v2977 = vand.u32 %v1892, 4294901760
    %2978 = vmatmul.mubr.f32.gmra.mrb[0].mxu0 %v2977
    %v2979 = vpop.f32.mrb[0].mxu0
    %v2980 = vadd.f32 %v2757, %v2979
    %v2981 = vpop.f32.mrb[0].mxu0
    %2982 = vmatprep.mubr.f32.mxu0 0.0
    %v2983 = vand.u32 %v1893, 4294901760
    %2984 = vmatmul.mubr.f32.gmra.mrb[0].mxu0 %v2983
    %v2985 = vpop.f32.mrb[0].mxu0
    %v2986 = vadd.f32 %v2765, %v2985
    %v2987 = vpop.f32.mrb[0].mxu0
    %2988 = vmatprep.mubr.f32.mxu0 0.0
    %v2989 = vand.u32 %v1894, 4294901760
    %2990 = vmatmul.mubr.f32.gmra.mrb[0].mxu0 %v2989
    %v2991 = vpop.f32.mrb[0].mxu0
    %v2992 = vadd.f32 %v2773, %v2991
    %v2993 = vpop.f32.mrb[0].mxu0
    %2994 = vmatprep.mubr.f32.mxu0 0.0
    %v2995 = vand.u32 %v1895, 4294901760
    %2996 = vmatmul.mubr.f32.gmra.mrb[0].mxu0 %v2995
    %v2997 = vpop.f32.mrb[0].mxu0
    %v2998 = vadd.f32 %v2781, %v2997
    %v2999 = vpop.f32.mrb[0].mxu0
    %3000 = vmatprep.mubr.f32.mxu0 0.0
    %v3001 = vand.u32 %v1896, 4294901760
    %3002 = vmatmul.mubr.f32.gmra.mrb[0].mxu0 %v3001
    %v3003 = vpop.f32.mrb[0].mxu0
    %v3004 = vadd.f32 %v2789, %v3003
    %v3005 = vpop.f32.mrb[0].mxu0
    %3006 = vmatprep.mubr.f32.mxu0 0.0
    %v3007 = vand.u32 %v1897, 4294901760
    %3008 = vmatmul.mubr.f32.gmra.mrb[0].mxu0 %v3007
    %v3009 = vpop.f32.mrb[0].mxu0
    %v3010 = vadd.f32 %v2797, %v3009
    %v3011 = vpop.f32.mrb[0].mxu0
    %3012 = vmatprep.mubr.f32.mxu0 0.0
    %v3013 = vand.u32 %v1898, 4294901760
    %3014 = vmatmul.mubr.f32.gmra.mrb[0].mxu0 %v3013
    %v3015 = vpop.f32.mrb[0].mxu0
    %v3016 = vadd.f32 %v2805, %v3015
    %v3017 = vpop.f32.mrb[0].mxu0
    %3018 = vmatprep.mubr.f32.mxu0 0.0
    %v3019 = vand.u32 %v1899, 4294901760
    %3020 = vmatmul.mubr.f32.gmra.mrb[0].mxu0 %v3019
    %v3021 = vpop.f32.mrb[0].mxu0
    %v3022 = vadd.f32 %v2813, %v3021
    %v3023 = vpop.f32.mrb[0].mxu0
    %3024 = vdwg.mxu0
    %3025 = vmatprep.subr.mxu0 0.0
    %v3026 = vand.u32 %v1900, 4294901760
    %3027 = vmatpush1.msra.mxu0 %v3026
    %3028 = vmatprep.subr.mxu0 0.0
    %v3029 = vand.u32 %v1901, 4294901760
    %3030 = vmatpush1.msra.mxu0 %v3029
    %3031 = vmatprep.subr.mxu0 0.0
    %v3032 = vand.u32 %v1902, 4294901760
    %3033 = vmatpush1.msra.mxu0 %v3032
    %3034 = vmatprep.subr.mxu0 0.0
    %v3035 = vand.u32 %v1903, 4294901760
    %3036 = vmatpush1.msra.mxu0 %v3035
    %3037 = vmatprep.subr.mxu0 0.0
    %v3038 = vand.u32 %v1904, 4294901760
    %3039 = vmatpush1.msra.mxu0 %v3038
    %3040 = vmatprep.subr.mxu0 0.0
    %v3041 = vand.u32 %v1905, 4294901760
    %3042 = vmatpush1.msra.mxu0 %v3041
    %3043 = vmatprep.subr.mxu0 0.0
    %v3044 = vand.u32 %v1906, 4294901760
    %3045 = vmatpush1.msra.mxu0 %v3044
    %3046 = vmatprep.subr.mxu0 0.0
    %v3047 = vand.u32 %v1907, 4294901760
    %3048 = vmatpush1.msra.mxu0 %v3047
    %3049 = vmatprep.subr.mxu0 0.0
    %v3050 = vand.u32 %v1908, 4294901760
    %3051 = vmatpush1.msra.mxu0 %v3050
    %3052 = vmatprep.subr.mxu0 0.0
    %v3053 = vand.u32 %v1909, 4294901760
    %3054 = vmatpush1.msra.mxu0 %v3053
    %3055 = vmatprep.subr.mxu0 0.0
    %v3056 = vand.u32 %v1910, 4294901760
    %3057 = vmatpush1.msra.mxu0 %v3056
    %3058 = vmatprep.subr.mxu0 0.0
    %v3059 = vand.u32 %v1911, 4294901760
    %3060 = vmatpush1.msra.mxu0 %v3059
    %3061 = vmatprep.subr.mxu0 0.0
    %v3062 = vand.u32 %v1912, 4294901760
    %3063 = vmatpush1.msra.mxu0 %v3062
    %3064 = vmatprep.subr.mxu0 0.0
    %v3065 = vand.u32 %v1913, 4294901760
    %3066 = vmatpush1.msra.mxu0 %v3065
    %3067 = vmatprep.subr.mxu0 0.0
    %v3068 = vand.u32 %v1914, 4294901760
    %3069 = vmatpush1.msra.mxu0 %v3068
    %3070 = vmatprep.subr.mxu0 0.0
    %v3071 = vand.u32 %v1915, 4294901760
    %3072 = vmatpush1.msra.mxu0 %v3071
    %3073 = vmatprep.subr.mxu0 0.0
    %3074 = vmatpush1.msra.mxu0 0.0
    %3075 = vmatprep.subr.mxu0 0.0
    %3076 = vmatpush1.msra.mxu0 0.0
    %3077 = vmatprep.subr.mxu0 0.0
    %3078 = vmatpush1.msra.mxu0 0.0
    %3079 = vmatprep.subr.mxu0 0.0
    %3080 = vmatpush1.msra.mxu0 0.0
    %3081 = vmatprep.subr.mxu0 0.0
    %3082 = vmatpush1.msra.mxu0 0.0
    %3083 = vmatprep.subr.mxu0 0.0
    %3084 = vmatpush1.msra.mxu0 0.0
    %3085 = vmatprep.subr.mxu0 0.0
    %3086 = vmatpush1.msra.mxu0 0.0
    %3087 = vmatprep.subr.mxu0 0.0
    %3088 = vmatpush1.msra.mxu0 0.0
    %3089 = vmatprep.subr.mxu0 0.0
    %3090 = vmatpush1.msra.mxu0 0.0
    %3091 = vmatprep.subr.mxu0 0.0
    %3092 = vmatpush1.msra.mxu0 0.0
    %3093 = vmatprep.subr.mxu0 0.0
    %3094 = vmatpush1.msra.mxu0 0.0
    %3095 = vmatprep.subr.mxu0 0.0
    %3096 = vmatpush1.msra.mxu0 0.0
    %3097 = vmatprep.subr.mxu0 0.0
    %3098 = vmatpush1.msra.mxu0 0.0
    %3099 = vmatprep.subr.mxu0 0.0
    %3100 = vmatpush1.msra.mxu0 0.0
    %3101 = vmatprep.subr.mxu0 0.0
    %3102 = vmatpush1.msra.mxu0 0.0
    %3103 = vmatprep.subr.mxu0 0.0
    %3104 = vmatpush1.msra.mxu0 0.0
    %3105 = vmatprep.mubr.f32.mxu0 0.0
    %v3106 = vand.u32 %v1884, 4294901760
    %3107 = vmatmul.mubr.f32.gmra.mrb[0].mxu0 %v3106
    %v3108 = vpop.f32.mrb[0].mxu0
    %v3109 = vadd.f32 %v2932, %v3108
    %v3110 = vpop.f32.mrb[0].mxu0
    %3111 = vmatprep.mubr.f32.mxu0 0.0
    %v3112 = vand.u32 %v1885, 4294901760
    %3113 = vmatmul.mubr.f32.gmra.mrb[0].mxu0 %v3112
    %v3114 = vpop.f32.mrb[0].mxu0
    %v3115 = vadd.f32 %v2938, %v3114
    %v3116 = vpop.f32.mrb[0].mxu0
    %3117 = vmatprep.mubr.f32.mxu0 0.0
    %v3118 = vand.u32 %v1886, 4294901760
    %3119 = vmatmul.mubr.f32.gmra.mrb[0].mxu0 %v3118
    %v3120 = vpop.f32.mrb[0].mxu0
    %v3121 = vadd.f32 %v2944, %v3120
    %v3122 = vpop.f32.mrb[0].mxu0
    %3123 = vmatprep.mubr.f32.mxu0 0.0
    %v3124 = vand.u32 %v1887, 4294901760
    %3125 = vmatmul.mubr.f32.gmra.mrb[0].mxu0 %v3124
    %v3126 = vpop.f32.mrb[0].mxu0
    %v3127 = vadd.f32 %v2950, %v3126
    %v3128 = vpop.f32.mrb[0].mxu0
    %3129 = vmatprep.mubr.f32.mxu0 0.0
    %v3130 = vand.u32 %v1888, 4294901760
    %3131 = vmatmul.mubr.f32.gmra.mrb[0].mxu0 %v3130
    %v3132 = vpop.f32.mrb[0].mxu0
    %v3133 = vadd.f32 %v2956, %v3132
    %v3134 = vpop.f32.mrb[0].mxu0
    %3135 = vmatprep.mubr.f32.mxu0 0.0
    %v3136 = vand.u32 %v1889, 4294901760
    %3137 = vmatmul.mubr.f32.gmra.mrb[0].mxu0 %v3136
    %v3138 = vpop.f32.mrb[0].mxu0
    %v3139 = vadd.f32 %v2962, %v3138
    %v3140 = vpop.f32.mrb[0].mxu0
    %3141 = vmatprep.mubr.f32.mxu0 0.0
    %v3142 = vand.u32 %v1890, 4294901760
    %3143 = vmatmul.mubr.f32.gmra.mrb[0].mxu0 %v3142
    %v3144 = vpop.f32.mrb[0].mxu0
    %v3145 = vadd.f32 %v2968, %v3144
    %v3146 = vpop.f32.mrb[0].mxu0
    %3147 = vmatprep.mubr.f32.mxu0 0.0
    %v3148 = vand.u32 %v1891, 4294901760
    %3149 = vmatmul.mubr.f32.gmra.mrb[0].mxu0 %v3148
    %v3150 = vpop.f32.mrb[0].mxu0
    %v3151 = vadd.f32 %v2974, %v3150
    %v3152 = vpop.f32.mrb[0].mxu0
    %3153 = vmatprep.mubr.f32.mxu0 0.0
    %v3154 = vand.u32 %v1892, 4294901760
    %3155 = vmatmul.mubr.f32.gmra.mrb[0].mxu0 %v3154
    %v3156 = vpop.f32.mrb[0].mxu0
    %v3157 = vadd.f32 %v2980, %v3156
    %v3158 = vpop.f32.mrb[0].mxu0
    %3159 = vmatprep.mubr.f32.mxu0 0.0
    %v3160 = vand.u32 %v1893, 4294901760
    %3161 = vmatmul.mubr.f32.gmra.mrb[0].mxu0 %v3160
    %v3162 = vpop.f32.mrb[0].mxu0
    %v3163 = vadd.f32 %v2986, %v3162
    %v3164 = vpop.f32.mrb[0].mxu0
    %3165 = vmatprep.mubr.f32.mxu0 0.0
    %v3166 = vand.u32 %v1894, 4294901760
    %3167 = vmatmul.mubr.f32.gmra.mrb[0].mxu0 %v3166
    %v3168 = vpop.f32.mrb[0].mxu0
    %v3169 = vadd.f32 %v2992, %v3168
    %v3170 = vpop.f32.mrb[0].mxu0
    %3171 = vmatprep.mubr.f32.mxu0 0.0
    %v3172 = vand.u32 %v1895, 4294901760
    %3173 = vmatmul.mubr.f32.gmra.mrb[0].mxu0 %v3172
    %v3174 = vpop.f32.mrb[0].mxu0
    %v3175 = vadd.f32 %v2998, %v3174
    %v3176 = vpop.f32.mrb[0].mxu0
    %3177 = vmatprep.mubr.f32.mxu0 0.0
    %v3178 = vand.u32 %v1896, 4294901760
    %3179 = vmatmul.mubr.f32.gmra.mrb[0].mxu0 %v3178
    %v3180 = vpop.f32.mrb[0].mxu0
    %v3181 = vadd.f32 %v3004, %v3180
    %v3182 = vpop.f32.mrb[0].mxu0
    %3183 = vmatprep.mubr.f32.mxu0 0.0
    %v3184 = vand.u32 %v1897, 4294901760
    %3185 = vmatmul.mubr.f32.gmra.mrb[0].mxu0 %v3184
    %v3186 = vpop.f32.mrb[0].mxu0
    %v3187 = vadd.f32 %v3010, %v3186
    %v3188 = vpop.f32.mrb[0].mxu0
    %3189 = vmatprep.mubr.f32.mxu0 0.0
    %v3190 = vand.u32 %v1898, 4294901760
    %3191 = vmatmul.mubr.f32.gmra.mrb[0].mxu0 %v3190
    %v3192 = vpop.f32.mrb[0].mxu0
    %v3193 = vadd.f32 %v3016, %v3192
    %v3194 = vpop.f32.mrb[0].mxu0
    %3195 = vmatprep.mubr.f32.mxu0 0.0
    %v3196 = vand.u32 %v1899, 4294901760
    %3197 = vmatmul.mubr.f32.gmra.mrb[0].mxu0 %v3196
    %v3198 = vpop.f32.mrb[0].mxu0
    %v3199 = vadd.f32 %v3022, %v3198
    %v3200 = vpop.f32.mrb[0].mxu0
    %3201 = vdwg.mxu0
    %v3202 = vadd.f32 %v21, %v3109
    %v3203 = vadd.f32 %v22, %v3115
    %v3204 = vadd.f32 %v23, %v3121
    %v3205 = vadd.f32 %v24, %v3127
    %v3206 = vadd.f32 %v25, %v3133
    %v3207 = vadd.f32 %v26, %v3139
    %v3208 = vadd.f32 %v27, %v3145
    %v3209 = vadd.f32 %v28, %v3151
    %v3210 = vadd.f32 %v29, %v3157
    %v3211 = vadd.f32 %v30, %v3163
    %v3212 = vadd.f32 %v31, %v3169
    %v3213 = vadd.f32 %v32, %v3175
    %v3214 = vadd.f32 %v33, %v3181
    %v3215 = vadd.f32 %v34, %v3187
    %v3216 = vadd.f32 %v35, %v3193
    %v3217 = vadd.f32 %v36, %v3199
    %v3218 = vld [vmem:[%s4] sm:$0x1]
    %v3220 = vlaneseq
    %v3221 = vshrl.u32 %v3220, 7
    %v3222 = vsub.s32 0, %v3221
    %v3223 = vrot.slane %v3218, %v3222
    %v3225 = vadd.f32 %v3202, %v3223
    %v3226 = vadd.f32 %v3203, %v3223
    %v3227 = vadd.f32 %v3204, %v3223
    %v3228 = vadd.f32 %v3205, %v3223
    %v3229 = vadd.f32 %v3206, %v3223
    %v3230 = vadd.f32 %v3207, %v3223
    %v3231 = vadd.f32 %v3208, %v3223
    %v3232 = vadd.f32 %v3209, %v3223
    %v3233 = vadd.f32 %v3210, %v3223
    %v3234 = vadd.f32 %v3211, %v3223
    %v3235 = vadd.f32 %v3212, %v3223
    %v3236 = vadd.f32 %v3213, %v3223
    %v3237 = vadd.f32 %v3214, %v3223
    %v3238 = vadd.f32 %v3215, %v3223
    %v3239 = vadd.f32 %v3216, %v3223
    %v3240 = vadd.f32 %v3217, %v3223
    %3241 = vst.msk [vmem:[#allocation2] sm:$0xff] %vm37, %v3225
    %3242 = vst.msk [vmem:[#allocation2 + $0x8] sm:$0xff] %vm37, %v3226
    %3243 = vst.msk [vmem:[#allocation2 + $0x10] sm:$0xff] %vm37, %v3227
    %3244 = vst.msk [vmem:[#allocation2 + $0x18] sm:$0xff] %vm37, %v3228
    %3245 = vst.msk [vmem:[#allocation2 + $0x20] sm:$0xff] %vm37, %v3229
    %3246 = vst.msk [vmem:[#allocation2 + $0x28] sm:$0xff] %vm37, %v3230
    %3247 = vst.msk [vmem:[#allocation2 + $0x30] sm:$0xff] %vm37, %v3231
    %3248 = vst.msk [vmem:[#allocation2 + $0x38] sm:$0xff] %vm37, %v3232
    %3249 = vst.msk [vmem:[#allocation2 + $0x40] sm:$0xff] %vm37, %v3233
    %3250 = vst.msk [vmem:[#allocation2 + $0x48] sm:$0xff] %vm37, %v3234
    %3251 = vst.msk [vmem:[#allocation2 + $0x50] sm:$0xff] %vm37, %v3235
    %3252 = vst.msk [vmem:[#allocation2 + $0x58] sm:$0xff] %vm37, %v3236
    %3253 = vst.msk [vmem:[#allocation2 + $0x60] sm:$0xff] %vm37, %v3237
    %3254 = vst.msk [vmem:[#allocation2 + $0x68] sm:$0xff] %vm37, %v3238
    %3255 = vst.msk [vmem:[#allocation2 + $0x70] sm:$0xff] %vm37, %v3239
    %3256 = vst.msk [vmem:[#allocation2 + $0x78] sm:$0xff] %vm37, %v3240
    // Predicated region
    $region22: #{vss_block_forward.9} parent=1 // pred_check
      _
    $region23: #{vss_block_forward.9} parent=1 // pred_check_branch
      %3258 = sbr.rel (0) target = $region25
    $region24: #{vss_block_forward.9} parent=1 // pred_region
      %s3260 = ssub.s32 2048, 2048
      %3261 = vsyncadd [#allocation3], %s3260
      %s3262 = sshll.u32 [#allocation2], 4
      %s3263 = int_to_ptr.vmem [resolvable:$true] %s3262
      %3268 = dma.vmem_to_hbm [thread:$0]  %s3263, 2048, %s5, [#allocation3], 128, 128, 8
    $region25: #{vss_block_forward.9} parent=1 // pred_fallthru
      _
    // Predicated region
    $region26: #{vss_block_forward.9} parent=1 // pred_check
      _
    $region27: #{vss_block_forward.9} parent=1 // pred_check_branch
      %3270 = sbr.rel (0) target = $region29
    $region28: #{vss_block_forward.9} parent=1 // pred_region
      %3271 = dma.done [#allocation3], 2048
    $region29: #{vss_block_forward.9} parent=1 // pred_fallthru
      _
    %3272 = vsyncpa [#allocation3], 1

</llo_original>
